<compile_context>
chip_gen: v7x
topology: tpu7x:2x2x1
jax: 0.10.0
libtpu: 0.0.40
codegen_flags: <defaults>
</compile_context>

<pallas_src>
import functools
import random

import numpy as np
import jax
import jax.numpy as jnp
from jax.experimental import pallas as pl
from jax.experimental.pallas import tpu as pltpu


NF_Z = 3
VMEM_LIMIT = 32 * 1024 * 1024     # safe on v5e/v6e (128 MiB) and v7x (64 MiB)


def _round_up(x, m):
    return (x + m - 1) // m * m


def _choose_tile(m):
    """Row tiling.  Small M: one full-extent block (no row padding, valid even
    for ragged M).  M >= 128: at least two tiles (feeds both TensorCores on
    v7x), capped at 512 rows per tile (HBM-roofline sweet spot on v5e/v6e)."""
    if m < 128:
        return m, m
    ntiles = max(2, pl.cdiv(m, 512))
    tile = _round_up(pl.cdiv(m, ntiles), 16)
    return tile, tile * ntiles


# ---------------------------------------------------------------------------
# Pallas kernels
# ---------------------------------------------------------------------------

@functools.lru_cache(maxsize=None)
def _get_mm_kernel(activation, split):
    """bf16 MXU matmul + bias with a fused pointwise epilogue and output cast."""
    def kern(a_ref, b_ref, bias_ref, o_ref):
        acc = jnp.dot(a_ref[...], b_ref[...],
                      preferred_element_type=jnp.float32) + bias_ref[...]
        if activation == "relu":
            acc = jnp.maximum(acc, 0.0)
        elif activation == "mu_softplus":
            # cols < split: identity (mu); cols >= split: softplus(x)+1e-4 (std)
            col = jax.lax.broadcasted_iota(jnp.int32, acc.shape, 1)
            sp = jnp.maximum(acc, 0.0) + jnp.log(1.0 + jnp.exp(-jnp.abs(acc)))
            acc = jnp.where(col < split, acc, sp + 1e-4)
        o_ref[...] = acc.astype(o_ref.dtype)
    return kern


def _lstm_mm_kernel(a_ref, b_ref, bias_ref, hc_ref, hc_out_ref):
    """patches @ W_gates + b (bf16 MXU, f32 acc) fused with the ConvLSTM update.

    Gate panel order is [i, g, f, o] (256 cols), so the two 128-lane halves of
    the result are [i|g] and [f|o].  The recurrent state is packed [h|c]
    (128 lanes).  All band realignment is done with pltpu.roll (XLU) and one
    lane-masked select -- no misaligned sub-128 slices, one aligned 128-wide
    store."""
    sw = hc_ref.shape[-1]            # 2*nh == 128
    nh = sw // 2
    g = jnp.dot(a_ref[...], b_ref[...],
                preferred_element_type=jnp.float32) + bias_ref[...]
    ga = g[:, :sw]                   # [ i | g ] pre-activations (aligned slice)
    gb = g[:, sw:]                   # [ f | o ] pre-activations (aligned slice)
    col = jax.lax.broadcasted_iota(jnp.int32, ga.shape, 1)
    in_lo = col < nh
    act_a = jnp.where(in_lo, jax.nn.sigmoid(ga), jnp.tanh(ga))   # [ si | tg ]
    act_b = jax.nn.sigmoid(gb)                                   # [ sf | so ]
    hc = hc_ref[...]                                             # [ h  | c  ]
    t = act_b * pltpu.roll(hc, nh, axis=1)                       # [ sf*c | . ]
    u = act_a * pltpu.roll(act_a, nh, axis=1)                    # [ si*tg| . ]
    s = t + u                                                    # [ c_new| . ]
    h_new = pltpu.roll(act_b, nh, axis=1) * jnp.tanh(s)          # [ h_new| . ]
    hc_out_ref[...] = jnp.where(in_lo, h_new, pltpu.roll(s, nh, axis=1))


def _sqerr_kernel(a_ref, b_ref, o_ref):
    @pl.when(pl.program_id(1) == 0)
    def _():
        o_ref[...] = jnp.zeros_like(o_ref)
    d = a_ref[...] - b_ref[...]
    s = jnp.sum(d * d, axis=-1, keepdims=True)
    o_ref[...] += jnp.broadcast_to(s, o_ref.shape)


# ---------------------------------------------------------------------------
# Pallas call wrappers
# ---------------------------------------------------------------------------

def matmul_bias_act(a, wp, bp, activation="none", split=0,
                    out_dtype=jnp.float32):
    """(M,K) rows @ pre-packed (K,Np) bf16 panel + bias, fused epilogue."""
    M, K = a.shape
    Kp, Np = wp.shape
    assert K == Kp, (K, Kp)
    tile_m, Mp = _choose_tile(M)
    a = a.astype(jnp.bfloat16)
    if Mp != M:
        a = jnp.pad(a, ((0, Mp - M), (0, 0)))
    kernel = _get_mm_kernel(activation, split)
    out = pl.pallas_call(
        kernel,
        out_shape=jax.ShapeDtypeStruct((Mp, Np), out_dtype),
        grid_spec=pltpu.PrefetchScalarGridSpec(
            num_scalar_prefetch=0,
            grid=(Mp // tile_m,),
            in_specs=[pl.BlockSpec((tile_m, Kp), lambda i: (i, 0)),
                      pl.BlockSpec((Kp, Np), lambda i: (0, 0)),
                      pl.BlockSpec((1, Np), lambda i: (0, 0))],
            out_specs=pl.BlockSpec((tile_m, Np), lambda i: (i, 0))),
        compiler_params=pltpu.CompilerParams(
            dimension_semantics=("parallel",),
            vmem_limit_bytes=VMEM_LIMIT),
    )(a, wp, bp)
    return out[:M] if Mp != M else out


def conv_lstm(patches, wp, bp, hc):
    """Fused gates-conv matmul + ConvLSTM update on a packed [h|c] state."""
    M, Kp = patches.shape
    assert Kp == wp.shape[0]
    NP = wp.shape[1]                # 4*nh (== 256)
    SW = NP // 2                    # packed [h|c] state width (== 128)
    tile_m, Mp = _choose_tile(M)
    assert hc.shape == (Mp, SW), (hc.shape, Mp, SW)
    a = patches.astype(jnp.bfloat16)
    if Mp != M:
        a = jnp.pad(a, ((0, Mp - M), (0, 0)))
    hc_new = pl.pallas_call(
        _lstm_mm_kernel,
        out_shape=jax.ShapeDtypeStruct((Mp, SW), jnp.float32),
        grid_spec=pltpu.PrefetchScalarGridSpec(
            num_scalar_prefetch=0,
            grid=(Mp // tile_m,),
            in_specs=[pl.BlockSpec((tile_m, Kp), lambda i: (i, 0)),
                      pl.BlockSpec((Kp, NP), lambda i: (0, 0)),
                      pl.BlockSpec((1, NP), lambda i: (0, 0)),
                      pl.BlockSpec((tile_m, SW), lambda i: (i, 0))],
            out_specs=pl.BlockSpec((tile_m, SW), lambda i: (i, 0))),
        compiler_params=pltpu.CompilerParams(
            dimension_semantics=("parallel",),
            vmem_limit_bytes=VMEM_LIMIT),
    )(a, wp, bp, hc)
    return hc_new


def sq_err_sum(a, b):
    """Per-row sum of squared error, tiled over the feature dim."""
    B = a.shape[0]
    a2 = a.reshape(B, -1).astype(jnp.float32)
    b2 = b.reshape(B, -1).astype(jnp.float32)
    D = a2.shape[1]
    Bp = _round_up(B, 8)
    tile_r = Bp if Bp <= 256 else 256
    Bp = _round_up(Bp, tile_r)
    Dp = _round_up(D, 128)
    td = Dp if Dp <= 8192 else 4096
    Dp = _round_up(Dp, td)
    pad = lambda t: jnp.pad(t, ((0, Bp - B), (0, Dp - D)))
    out = pl.pallas_call(
        _sqerr_kernel,
        out_shape=jax.ShapeDtypeStruct((Bp, 128), jnp.float32),
        grid_spec=pltpu.PrefetchScalarGridSpec(
            num_scalar_prefetch=0,
            grid=(Bp // tile_r, Dp // td),
            in_specs=[pl.BlockSpec((tile_r, td), lambda i, d: (i, d)),
                      pl.BlockSpec((tile_r, td), lambda i, d: (i, d))],
            out_specs=pl.BlockSpec((tile_r, 128), lambda i, d: (i, 0))),
        compiler_params=pltpu.CompilerParams(
            dimension_semantics=("parallel", "arbitrary"),
            vmem_limit_bytes=VMEM_LIMIT),
    )(pad(a2), pad(b2))
    return out[:B, 0]


def kl_normal_sum(mu_q, std_q, mu_p, std_p):
    """KL(N(mu_q,std_q) || N(mu_p,std_p)) summed over non-batch dims.
    D = Hh*Wh*nf_z is tiny -> plain jnp (no per-step pallas launch)."""
    kl = (jnp.log(std_p) - jnp.log(std_q)
          + (std_q * std_q + (mu_q - mu_p) ** 2) / (2.0 * std_p * std_p) - 0.5)
    return jnp.sum(kl, axis=tuple(range(1, kl.ndim)))


# ---------------------------------------------------------------------------
# im2col (NHWC) + conv wrappers
# ---------------------------------------------------------------------------

def _im2col_nhwc(x, k, stride, pad, kp=None):
    """NHWC im2col; the zero-pad up to the packed panel width kp is fused into
    the single concatenate (no separate pad copy)."""
    B, H, W, C = x.shape
    if pad:
        x = jnp.pad(x, ((0, 0), (pad, pad), (pad, pad), (0, 0)))
    Hp, Wp = H + 2 * pad, W + 2 * pad
    Ho = (Hp - k) // stride + 1
    Wo = (Wp - k) // stride + 1
    cols = []
    for di in range(k):
        for dj in range(k):
            cols.append(x[:, di:di + stride * (Ho - 1) + 1:stride,
                          dj:dj + stride * (Wo - 1) + 1:stride, :])
    K = k * k * C
    if kp is not None and kp > K:
        cols.append(jnp.zeros((B, Ho, Wo, kp - K), x.dtype))
    patches = jnp.concatenate(cols, axis=-1)
    return patches.reshape(B * Ho * Wo, patches.shape[-1]), Ho, Wo


def conv2d_act(x, layer, stride, pad, activation="none", split=0,
               out_dtype=jnp.float32):
    """NHWC conv via im2col (bf16) + Pallas matmul with fused epilogue."""
    B = x.shape[0]
    x = x.astype(jnp.bfloat16)
    patches, Ho, Wo = _im2col_nhwc(x, layer['k'], stride, pad,
                                   kp=layer['w'].shape[0])
    y = matmul_bias_act(patches, layer['w'], layer['b'], activation, split,
                        out_dtype=out_dtype)
    Cout = layer['cout']
    return y[:, :Cout].reshape(B, Ho, Wo, Cout)


def conv_transpose2d(x, layer, out_dtype=jnp.float32):
    """kernel_size == stride == k, NHWC."""
    B, H, W, Cin = x.shape
    k, Cout, N = layer['k'], layer['cout'], layer['n']
    rows = x.reshape(B * H * W, Cin)
    y = matmul_bias_act(rows, layer['w'], layer['b'], "none",
                        out_dtype=out_dtype)[:, :N]
    y = y.reshape(B, H, W, k, k, Cout).transpose(0, 1, 3, 2, 4, 5)
    return y.reshape(B, H * k, W * k, Cout)


# ---------------------------------------------------------------------------
# Weight panel packing (done ONCE, before the forward)
# ---------------------------------------------------------------------------

def pack_conv(w, b):
    Cout, Cin, k, _ = w.shape
    K = k * k * Cin
    Kp, Np = _round_up(K, 128), _round_up(Cout, 128)
    w2 = jnp.transpose(w, (2, 3, 1, 0)).reshape(K, Cout)      # (ki,kj,cin) x cout
    wp = jnp.zeros((Kp, Np), jnp.float32).at[:K, :Cout].set(w2).astype(jnp.bfloat16)
    bp = jnp.zeros((1, Np), jnp.float32).at[0, :Cout].set(b)
    return {'w': wp, 'b': bp, 'k': int(k), 'cout': int(Cout)}


def pack_gate_conv(w, b):
    """Gates conv weight (torch gate order [i, f, g, o]) -> bf16 (Kp, 4*nh)
    panel in kernel order [i, g, f, o], so the two 128-lane halves of the
    matmul result are [i|g] and [f|o]."""
    Cout, Cin, k, _ = w.shape
    nh = Cout // 4
    assert 2 * nh == 128, "packed [h|c] state layout assumes nf_to_hidden == 64"
    K = k * k * Cin
    Kp = _round_up(K, 128)
    w2 = jnp.transpose(w, (2, 3, 1, 0)).reshape(K, Cout)
    order = (0, 2, 1, 3)                       # dst band <- torch gate index
    wp = jnp.zeros((Kp, 4 * nh), jnp.float32)
    bp = jnp.zeros((1, 4 * nh), jnp.float32)
    for dst, src in enumerate(order):
        wp = wp.at[:K, dst * nh:(dst + 1) * nh].set(w2[:, src * nh:(src + 1) * nh])
        bp = bp.at[0, dst * nh:(dst + 1) * nh].set(b[src * nh:(src + 1) * nh])
    return {'w': wp.astype(jnp.bfloat16), 'b': bp, 'k': int(k), 'nh': int(nh)}


def pack_convT(w, b):
    Cin, Cout, k, _ = w.shape
    N = k * k * Cout
    Np = _round_up(N, 128)
    w2 = jnp.transpose(w, (0, 2, 3, 1)).reshape(Cin, N)       # cin x (ki,kj,cout)
    wp = jnp.zeros((Cin, Np), jnp.float32).at[:, :N].set(w2).astype(jnp.bfloat16)
    bp = jnp.zeros((1, Np), jnp.float32).at[0, :N].set(jnp.tile(b, k * k))
    return {'w': wp, 'b': bp, 'k': int(k), 'cout': int(Cout), 'n': int(N)}


def pack_params(p):
    return {
        'enc1': pack_conv(p['enc1_w'], p['enc1_b']),
        'enc2': pack_conv(p['enc2_w'], p['enc2_b']),
        'enc3': pack_conv(p['enc3_w'], p['enc3_b']),
        'pri_rdown': pack_conv(p['pri_rdown_w'], p['pri_rdown_b']),
        'pri_gates': pack_gate_conv(p['pri_gates_w'], p['pri_gates_b']),
        'pri_stats': pack_conv(p['pri_stats_w'], p['pri_stats_b']),
        'pos_rdown': pack_conv(p['pos_rdown_w'], p['pos_rdown_b']),
        'pos_gates': pack_gate_conv(p['pos_gates_w'], p['pos_gates_b']),
        'pos_stats': pack_conv(p['pos_stats_w'], p['pos_stats_b']),
        'ren_cdown': pack_conv(p['ren_cdown_w'], p['ren_cdown_b']),
        'ren_gates': pack_gate_conv(p['ren_gates_w'], p['ren_gates_b']),
        'ren_up': pack_convT(p['ren_up_w'], p['ren_up_b']),
        'tc': pack_convT(p['tc_w'], p['tc_b']),
    }


# ---------------------------------------------------------------------------
# JUMP submodules (NHWC / bf16 activations; architectures inferred, see TODO)
# ---------------------------------------------------------------------------

def encoder(packed, v, f):
    # v: (B, M, nf_v), f: (B, M, C, H, W) NCHW in -> NHWC bf16 internally
    B, Mn, C, H, W = f.shape
    x = f.reshape(B * Mn, C, H, W).transpose(0, 2, 3, 1).astype(jnp.bfloat16)
    x = conv2d_act(x, packed['enc1'], stride=2, pad=1, activation="relu",
                   out_dtype=jnp.bfloat16)
    vmap_ = jnp.broadcast_to(v.reshape(B * Mn, 1, 1, -1).astype(jnp.bfloat16),
                             (B * Mn, H // 2, W // 2, v.shape[-1]))
    x = jnp.concatenate([x, vmap_], axis=-1)
    x = conv2d_act(x, packed['enc2'], stride=2, pad=1, activation="relu",
                   out_dtype=jnp.bfloat16)
    x = conv2d_act(x, packed['enc3'], stride=1, pad=1, out_dtype=jnp.bfloat16)
    return x                                     # (B*M, H//4, W//4, 32) bf16


def _lstm_core(layer, x, hc):
    B, Hh, Wh, _ = x.shape
    patches, _, _ = _im2col_nhwc(x, 3, 1, 1, kp=layer['w'].shape[0])
    hc_new = conv_lstm(patches, layer['w'], layer['b'], hc)
    nh = layer['nh']
    h_new = hc_new[:B * Hh * Wh, :nh].astype(jnp.bfloat16).reshape(B, Hh, Wh, nh)
    return h_new, hc_new


def prior_step(packed, r_down, z_b, h_map, hc, nf_z):
    x = jnp.concatenate([r_down, z_b, h_map], axis=-1)
    h_new, hc_new = _lstm_core(packed['pri_gates'], x, hc)
    stats = conv2d_act(h_new, packed['pri_stats'], stride=1, pad=1,
                       activation="mu_softplus", split=nf_z,
                       out_dtype=jnp.float32)
    return h_new, hc_new, stats[..., :nf_z], stats[..., nf_z:2 * nf_z]


def posterior_step(packed, rr_down, z_b, h_map, hc, nf_z):
    x = jnp.concatenate([rr_down, z_b, h_map], axis=-1)
    h_new, hc_new = _lstm_core(packed['pos_gates'], x, hc)
    stats = conv2d_act(h_new, packed['pos_stats'], stride=1, pad=1,
                       activation="mu_softplus", split=nf_z,
                       out_dtype=jnp.float32)
    return h_new, hc_new, stats[..., :nf_z], stats[..., nf_z:2 * nf_z]


def renderer_step(packed, z_b, v_t, canvas, h_map, hc, NmM):
    Bt, Hh, Wh, _ = h_map.shape
    B = z_b.shape[0]
    z_t = jnp.broadcast_to(z_b[:, None], (B, NmM) + z_b.shape[1:]
                           ).reshape(Bt, Hh, Wh, -1)
    canvas_down = conv2d_act(canvas, packed['ren_cdown'], stride=2, pad=0,
                             out_dtype=jnp.bfloat16)
    x = jnp.concatenate([z_t, v_t, canvas_down, h_map], axis=-1)
    h_new, hc_new = _lstm_core(packed['ren_gates'], x, hc)
    delta = conv_transpose2d(h_new, packed['ren_up'], out_dtype=jnp.float32)
    return h_new, hc_new, canvas + delta


# ---------------------------------------------------------------------------
# JUMP forward (device portion — jitted)
# ---------------------------------------------------------------------------

def jump_forward_device(packed, v, f, v_prime, f_prime, key, pixel_var, *,
                        nt, stride_to_hidden, nf_to_hidden, stride_to_obs,
                        nf_to_obs, nf_z):
    B, Mctx, C, H, W = f.shape
    NmM = f_prime.shape[1]
    nh = nf_to_hidden

    enc_ctx = encoder(packed, v, f)
    r = jnp.sum(enc_ctx.reshape(B, Mctx, H // 4, W // 4, 32).astype(jnp.float32),
                axis=1).astype(jnp.bfloat16)
    enc_tgt = encoder(packed, v_prime, f_prime)
    r_prime = jnp.sum(enc_tgt.reshape(B, NmM, H // 4, W // 4, 32).astype(jnp.float32),
                      axis=1).astype(jnp.bfloat16)

    Hh, Wh = H // (4 * stride_to_hidden), W // (4 * stride_to_hidden)
    rows_pp = _choose_tile(B * Hh * Wh)[1]
    rows_ren = _choose_tile(B * NmM * Hh * Wh)[1]

    # Loop-invariant work hoisted out of the nt loop.
    r_down = conv2d_act(r, packed['pri_rdown'], stride=2, pad=0,
                        out_dtype=jnp.bfloat16)
    rr = jnp.concatenate([r, r_prime], axis=-1)
    rr_down = conv2d_act(rr, packed['pos_rdown'], stride=2, pad=0,
                         out_dtype=jnp.bfloat16)
    v_t = jnp.broadcast_to(
        v_prime.reshape(B * NmM, 1, 1, -1).astype(jnp.bfloat16),
        (B * NmM, Hh, Wh, v_prime.shape[-1]))

    h_phi = jnp.zeros((B, Hh, Wh, nh), jnp.bfloat16)
    hc_phi = jnp.zeros((rows_pp, 2 * nh), jnp.float32)
    h_psi = jnp.zeros_like(h_phi)
    hc_psi = jnp.zeros_like(hc_phi)
    z_b = jnp.zeros((B, Hh, Wh, nf_z), jnp.bfloat16)
    h_gamma = jnp.zeros((B * NmM, Hh, Wh, nh), jnp.bfloat16)
    hc_gamma = jnp.zeros((rows_ren, 2 * nh), jnp.float32)
    canvas = jnp.zeros((B * NmM, Hh * stride_to_obs, Wh * stride_to_obs,
                        nf_to_obs), jnp.float32)

    kl = jnp.zeros((B,), jnp.float32)
    for _ in range(nt):
        key, k1 = jax.random.split(key)
        h_phi, hc_phi, mu_phi, std_phi = prior_step(packed, r_down, z_b,
                                                    h_phi, hc_phi, nf_z)
        h_psi, hc_psi, mu_psi, std_psi = posterior_step(packed, rr_down, z_b,
                                                        h_psi, hc_psi, nf_z)
        eps = jax.random.normal(k1, mu_psi.shape, jnp.float32)
        z = mu_psi + std_psi * eps                                   # rsample
        z_b = z.astype(jnp.bfloat16)
        h_gamma, hc_gamma, canvas = renderer_step(packed, z_b, v_t, canvas,
                                                  h_gamma, hc_gamma, NmM)
        kl = kl + kl_normal_sum(mu_psi, std_psi, mu_phi, std_phi)

    f_dec = conv_transpose2d(canvas, packed['tc'], out_dtype=jnp.float32)
    key, k2 = jax.random.split(key)
    noise = jnp.sqrt(pixel_var) * jax.random.normal(k2, f_dec.shape, jnp.float32)
    f_hat = (f_dec + noise).reshape(B, -1)
    f_tgt = f_prime.transpose(0, 1, 3, 4, 2).reshape(B, -1)  # NCHW -> NHWC flat
    mse = sq_err_sum(f_hat, f_tgt)
    elbo = kl + mse / pixel_var
    return elbo, kl, mse


def jump_forward(packed, v_data, f_data, pixel_var, key, nt=4):
    B, N, C, H, W = f_data.shape
    # TODO(synk): host-side RNG context/target split (matches the PyTorch code);
    # each distinct Mctx retraces the jitted graph once.
    Mctx = random.randint(1, N - 1)
    indices = np.random.permutation(range(N))
    context_idx, target_idx = indices[:Mctx], indices[Mctx:]
    v, f = v_data[:, context_idx], f_data[:, context_idx]
    v_prime, f_prime = v_data[:, target_idx], f_data[:, target_idx]

    fwd = jax.jit(functools.partial(
        jump_forward_device, packed,
        nt=nt, stride_to_hidden=2, nf_to_hidden=64,
        stride_to_obs=2, nf_to_obs=128, nf_z=NF_Z))
    return fwd(v, f, v_prime, f_prime, key, jnp.float32(pixel_var))


# ---------------------------------------------------------------------------
# Deterministic parameter init (PyTorch layouts, then packed once)
# ---------------------------------------------------------------------------

def init_params(key):
    key_box = [key]

    def nxt():
        key_box[0], sub = jax.random.split(key_box[0])
        return sub

    def w(shape):
        fan_in = int(np.prod(shape[1:]))
        return (jax.random.normal(nxt(), shape, jnp.float32)
                / jnp.sqrt(float(fan_in))).astype(jnp.float32)

    def b(n):
        return jnp.zeros((n,), jnp.float32)

    p = {}
    # Encoder (m_theta)
    p['enc1_w'] = w((64, 3, 3, 3));         p['enc1_b'] = b(64)
    p['enc2_w'] = w((128, 64 + 1, 3, 3));   p['enc2_b'] = b(128)
    p['enc3_w'] = w((32, 128, 3, 3));       p['enc3_b'] = b(32)
    # Prior
    p['pri_rdown_w'] = w((32, 32, 2, 2));   p['pri_rdown_b'] = b(32)
    p['pri_gates_w'] = w((256, 99, 3, 3));  p['pri_gates_b'] = b(256)
    p['pri_stats_w'] = w((6, 64, 3, 3));    p['pri_stats_b'] = b(6)
    # Posterior
    p['pos_rdown_w'] = w((64, 64, 2, 2));   p['pos_rdown_b'] = b(64)
    p['pos_gates_w'] = w((256, 131, 3, 3)); p['pos_gates_b'] = b(256)
    p['pos_stats_w'] = w((6, 64, 3, 3));    p['pos_stats_b'] = b(6)
    # Renderer (m_gamma)
    p['ren_cdown_w'] = w((64, 128, 2, 2));  p['ren_cdown_b'] = b(64)
    p['ren_gates_w'] = w((256, 132, 3, 3)); p['ren_gates_b'] = b(256)
    p['ren_up_w'] = w((64, 128, 2, 2));     p['ren_up_b'] = b(128)   # ConvT layout
    # transconv: ConvTranspose2d(128, 3, kernel_size=4, stride=4)
    p['tc_w'] = w((128, 3, 4, 4));          p['tc_b'] = b(3)
    return p


if __name__ == "__main__":
    random.seed(0)
    np.random.seed(0)
    key = jax.random.PRNGKey(0)
    kp, kv, kf, krun = jax.random.split(key, 4)

    params = init_params(kp)
    packed = pack_params(params)          # transpose / pad / bf16-cast ONCE

    B, N, C, H, W = 2, 4, 3, 16, 16
    nf_v = 1
    v_data = jax.random.normal(kv, (B, N, nf_v), jnp.float32)
    f_data = jax.random.uniform(kf, (B, N, C, H, W), jnp.float32)
    pixel_var = 0.5

    elbo, kl, mse = jump_forward(packed, v_data, f_data, pixel_var, krun)
    jax.block_until_ready((elbo, kl, mse))

    assert elbo.shape == (B,) and kl.shape == (B,) and mse.shape == (B,)
    assert np.all(np.isfinite(np.asarray(elbo)))
    assert np.all(np.isfinite(np.asarray(kl)))
    assert np.all(np.isfinite(np.asarray(mse)))
    print("KERNEL_OK")
</pallas_src>

<mosaic_0001>
module attributes {stable_mosaic.version = 11 : i64} {
  func.func @kern(%arg0: i32, %arg1: memref<128x128xbf16, #tpu.memory_space<vmem>>, %arg2: memref<128x128xbf16, #tpu.memory_space<vmem>>, %arg3: memref<1x128xf32, #tpu.memory_space<vmem>>, %arg4: memref<128x128xbf16, #tpu.memory_space<vmem>>) attributes {dimension_semantics = [#tpu.dimension_semantics<parallel>], iteration_bounds = array<i64: 2>, scalar_prefetch = 0 : i64, scratch_operands = 0 : i64, tpu.core_type = #tpu.core_type<tc>, window_params = [{transform_indices = @transform_0, window_bounds = array<i64: 128, 128>}, {pipeline_mode = #tpu.pipeline_mode<synchronous>, transform_indices = @transform_1, window_bounds = array<i64: 128, 128>}, {pipeline_mode = #tpu.pipeline_mode<synchronous>, transform_indices = @transform_2, window_bounds = array<i64: 1, 128>}, {transform_indices = @transform_3, window_bounds = array<i64: 128, 128>}]} {
    %c0 = arith.constant 0 : index
    %c0_0 = arith.constant 0 : index
    %0 = vector.load %arg1[%c0, %c0_0] : memref<128x128xbf16, #tpu.memory_space<vmem>>, vector<128x128xbf16>
    %c0_1 = arith.constant 0 : index
    %c0_2 = arith.constant 0 : index
    %1 = vector.load %arg2[%c0_1, %c0_2] : memref<128x128xbf16, #tpu.memory_space<vmem>>, vector<128x128xbf16>
    %cst = arith.constant dense<0.000000e+00> : vector<128x128xf32>
    %2 = tpu.matmul %0, %1, %cst {dimension_numbers = #tpu.dot_dimension_numbers<[1], [0], [0], [1], [0, 0, 1, 1], [], []>} : vector<128x128xbf16>, vector<128x128xbf16>, vector<128x128xf32> -> vector<128x128xf32>
    %c0_3 = arith.constant 0 : index
    %c0_4 = arith.constant 0 : index
    %3 = vector.load %arg3[%c0_3, %c0_4] : memref<1x128xf32, #tpu.memory_space<vmem>>, vector<1x128xf32>
    %4 = vector.broadcast %3 : vector<1x128xf32> to vector<128x128xf32>
    %5 = arith.addf %2, %4 : vector<128x128xf32>
    %cst_5 = arith.constant 0.000000e+00 : f32
    %6 = vector.broadcast %cst_5 : f32 to vector<128x128xf32>
    %7 = arith.maximumf %5, %6 : vector<128x128xf32>
    %8 = arith.truncf %7 : vector<128x128xf32> to vector<128x128xbf16>
    %c0_6 = arith.constant 0 : index
    %c0_7 = arith.constant 0 : index
    %9 = vector.load %arg4[%c0_6, %c0_7] : memref<128x128xbf16, #tpu.memory_space<vmem>>, vector<128x128xbf16>
    tpu.vector_store %arg4[%c0_6, %c0_7], %8 {strides = array<i32>} : memref<128x128xbf16, #tpu.memory_space<vmem>>, vector<128x128xbf16>,
    return
  }
  func.func @transform_0(%arg0: i32) -> (i32, i32) {
    %c0_i32 = arith.constant 0 : i32
    %c0_i32_0 = arith.constant 0 : i32
    return %arg0, %c0_i32 : i32, i32
  }
  func.func @transform_1(%arg0: i32) -> (i32, i32) {
    %c0_i32 = arith.constant 0 : i32
    %c0_i32_0 = arith.constant 0 : i32
    %c0_i32_1 = arith.constant 0 : i32
    return %c0_i32, %c0_i32_0 : i32, i32
  }
  func.func @transform_2(%arg0: i32) -> (i32, i32) {
    %c0_i32 = arith.constant 0 : i32
    %c0_i32_0 = arith.constant 0 : i32
    %c0_i32_1 = arith.constant 0 : i32
    return %c0_i32, %c0_i32_0 : i32, i32
  }
  func.func @transform_3(%arg0: i32) -> (i32, i32) {
    %c0_i32 = arith.constant 0 : i32
    %c0_i32_0 = arith.constant 0 : i32
    return %arg0, %c0_i32 : i32, i32
  }
}

module attributes {stable_mosaic.version = 11 : i64} {
  func.func @kern(%arg0: i32, %arg1: memref<64x640xbf16, #tpu.memory_space<vmem>>, %arg2: memref<640x128xbf16, #tpu.memory_space<vmem>>, %arg3: memref<1x128xf32, #tpu.memory_space<vmem>>, %arg4: memref<64x128xbf16, #tpu.memory_space<vmem>>) attributes {dimension_semantics = [#tpu.dimension_semantics<parallel>], iteration_bounds = array<i64: 1>, scalar_prefetch = 0 : i64, scratch_operands = 0 : i64, tpu.core_type = #tpu.core_type<tc>, window_params = [{transform_indices = @transform_0, window_bounds = array<i64: 64, 640>}, {pipeline_mode = #tpu.pipeline_mode<synchronous>, transform_indices = @transform_1, window_bounds = array<i64: 640, 128>}, {pipeline_mode = #tpu.pipeline_mode<synchronous>, transform_indices = @transform_2, window_bounds = array<i64: 1, 128>}, {transform_indices = @transform_3, window_bounds = array<i64: 64, 128>}]} {
    %c0 = arith.constant 0 : index
    %c0_0 = arith.constant 0 : index
    %0 = vector.load %arg1[%c0, %c0_0] : memref<64x640xbf16, #tpu.memory_space<vmem>>, vector<64x640xbf16>
    %c0_1 = arith.constant 0 : index
    %c0_2 = arith.constant 0 : index
    %1 = vector.load %arg2[%c0_1, %c0_2] : memref<640x128xbf16, #tpu.memory_space<vmem>>, vector<640x128xbf16>
    %cst = arith.constant dense<0.000000e+00> : vector<64x128xf32>
    %2 = tpu.matmul %0, %1, %cst {dimension_numbers = #tpu.dot_dimension_numbers<[1], [0], [0], [1], [0, 0, 1, 1], [], []>} : vector<64x640xbf16>, vector<640x128xbf16>, vector<64x128xf32> -> vector<64x128xf32>
    %c0_3 = arith.constant 0 : index
    %c0_4 = arith.constant 0 : index
    %3 = vector.load %arg3[%c0_3, %c0_4] : memref<1x128xf32, #tpu.memory_space<vmem>>, vector<1x128xf32>
    %4 = vector.broadcast %3 : vector<1x128xf32> to vector<64x128xf32>
    %5 = arith.addf %2, %4 : vector<64x128xf32>
    %cst_5 = arith.constant 0.000000e+00 : f32
    %6 = vector.broadcast %cst_5 : f32 to vector<64x128xf32>
    %7 = arith.maximumf %5, %6 : vector<64x128xf32>
    %8 = arith.truncf %7 : vector<64x128xf32> to vector<64x128xbf16>
    %c0_6 = arith.constant 0 : index
    %c0_7 = arith.constant 0 : index
    %9 = vector.load %arg4[%c0_6, %c0_7] : memref<64x128xbf16, #tpu.memory_space<vmem>>, vector<64x128xbf16>
    tpu.vector_store %arg4[%c0_6, %c0_7], %8 {strides = array<i32>} : memref<64x128xbf16, #tpu.memory_space<vmem>>, vector<64x128xbf16>,
    return
  }
  func.func @transform_0(%arg0: i32) -> (i32, i32) {
    %c0_i32 = arith.constant 0 : i32
    %c0_i32_0 = arith.constant 0 : i32
    return %arg0, %c0_i32 : i32, i32
  }
  func.func @transform_1(%arg0: i32) -> (i32, i32) {
    %c0_i32 = arith.constant 0 : i32
    %c0_i32_0 = arith.constant 0 : i32
    %c0_i32_1 = arith.constant 0 : i32
    return %c0_i32, %c0_i32_0 : i32, i32
  }
  func.func @transform_2(%arg0: i32) -> (i32, i32) {
    %c0_i32 = arith.constant 0 : i32
    %c0_i32_0 = arith.constant 0 : i32
    %c0_i32_1 = arith.constant 0 : i32
    return %c0_i32, %c0_i32_0 : i32, i32
  }
  func.func @transform_3(%arg0: i32) -> (i32, i32) {
    %c0_i32 = arith.constant 0 : i32
    %c0_i32_0 = arith.constant 0 : i32
    return %arg0, %c0_i32 : i32, i32
  }
}

module attributes {stable_mosaic.version = 11 : i64} {
  func.func @kern(%arg0: i32, %arg1: memref<64x1152xbf16, #tpu.memory_space<vmem>>, %arg2: memref<1152x128xbf16, #tpu.memory_space<vmem>>, %arg3: memref<1x128xf32, #tpu.memory_space<vmem>>, %arg4: memref<64x128xbf16, #tpu.memory_space<vmem>>) attributes {dimension_semantics = [#tpu.dimension_semantics<parallel>], iteration_bounds = array<i64: 1>, scalar_prefetch = 0 : i64, scratch_operands = 0 : i64, tpu.core_type = #tpu.core_type<tc>, window_params = [{transform_indices = @transform_0, window_bounds = array<i64: 64, 1152>}, {pipeline_mode = #tpu.pipeline_mode<synchronous>, transform_indices = @transform_1, window_bounds = array<i64: 1152, 128>}, {pipeline_mode = #tpu.pipeline_mode<synchronous>, transform_indices = @transform_2, window_bounds = array<i64: 1, 128>}, {transform_indices = @transform_3, window_bounds = array<i64: 64, 128>}]} {
    %c0 = arith.constant 0 : index
    %c0_0 = arith.constant 0 : index
    %0 = vector.load %arg1[%c0, %c0_0] : memref<64x1152xbf16, #tpu.memory_space<vmem>>, vector<64x1152xbf16>
    %c0_1 = arith.constant 0 : index
    %c0_2 = arith.constant 0 : index
    %1 = vector.load %arg2[%c0_1, %c0_2] : memref<1152x128xbf16, #tpu.memory_space<vmem>>, vector<1152x128xbf16>
    %cst = arith.constant dense<0.000000e+00> : vector<64x128xf32>
    %2 = tpu.matmul %0, %1, %cst {dimension_numbers = #tpu.dot_dimension_numbers<[1], [0], [0], [1], [0, 0, 1, 1], [], []>} : vector<64x1152xbf16>, vector<1152x128xbf16>, vector<64x128xf32> -> vector<64x128xf32>
    %c0_3 = arith.constant 0 : index
    %c0_4 = arith.constant 0 : index
    %3 = vector.load %arg3[%c0_3, %c0_4] : memref<1x128xf32, #tpu.memory_space<vmem>>, vector<1x128xf32>
    %4 = vector.broadcast %3 : vector<1x128xf32> to vector<64x128xf32>
    %5 = arith.addf %2, %4 : vector<64x128xf32>
    %6 = arith.truncf %5 : vector<64x128xf32> to vector<64x128xbf16>
    %c0_5 = arith.constant 0 : index
    %c0_6 = arith.constant 0 : index
    %7 = vector.load %arg4[%c0_5, %c0_6] : memref<64x128xbf16, #tpu.memory_space<vmem>>, vector<64x128xbf16>
    tpu.vector_store %arg4[%c0_5, %c0_6], %6 {strides = array<i32>} : memref<64x128xbf16, #tpu.memory_space<vmem>>, vector<64x128xbf16>,
    return
  }
  func.func @transform_0(%arg0: i32) -> (i32, i32) {
    %c0_i32 = arith.constant 0 : i32
    %c0_i32_0 = arith.constant 0 : i32
    return %arg0, %c0_i32 : i32, i32
  }
  func.func @transform_1(%arg0: i32) -> (i32, i32) {
    %c0_i32 = arith.constant 0 : i32
    %c0_i32_0 = arith.constant 0 : i32
    %c0_i32_1 = arith.constant 0 : i32
    return %c0_i32, %c0_i32_0 : i32, i32
  }
  func.func @transform_2(%arg0: i32) -> (i32, i32) {
    %c0_i32 = arith.constant 0 : i32
    %c0_i32_0 = arith.constant 0 : i32
    %c0_i32_1 = arith.constant 0 : i32
    return %c0_i32, %c0_i32_0 : i32, i32
  }
  func.func @transform_3(%arg0: i32) -> (i32, i32) {
    %c0_i32 = arith.constant 0 : i32
    %c0_i32_0 = arith.constant 0 : i32
    return %arg0, %c0_i32 : i32, i32
  }
}

module attributes {stable_mosaic.version = 11 : i64} {
  func.func @kern(%arg0: i32, %arg1: memref<8x256xbf16, #tpu.memory_space<vmem>>, %arg2: memref<256x128xbf16, #tpu.memory_space<vmem>>, %arg3: memref<1x128xf32, #tpu.memory_space<vmem>>, %arg4: memref<8x128xbf16, #tpu.memory_space<vmem>>) attributes {dimension_semantics = [#tpu.dimension_semantics<parallel>], iteration_bounds = array<i64: 1>, scalar_prefetch = 0 : i64, scratch_operands = 0 : i64, tpu.core_type = #tpu.core_type<tc>, window_params = [{transform_indices = @transform_0, window_bounds = array<i64: 8, 256>}, {pipeline_mode = #tpu.pipeline_mode<synchronous>, transform_indices = @transform_1, window_bounds = array<i64: 256, 128>}, {pipeline_mode = #tpu.pipeline_mode<synchronous>, transform_indices = @transform_2, window_bounds = array<i64: 1, 128>}, {transform_indices = @transform_3, window_bounds = array<i64: 8, 128>}]} {
    %c0 = arith.constant 0 : index
    %c0_0 = arith.constant 0 : index
    %0 = vector.load %arg1[%c0, %c0_0] : memref<8x256xbf16, #tpu.memory_space<vmem>>, vector<8x256xbf16>
    %c0_1 = arith.constant 0 : index
    %c0_2 = arith.constant 0 : index
    %1 = vector.load %arg2[%c0_1, %c0_2] : memref<256x128xbf16, #tpu.memory_space<vmem>>, vector<256x128xbf16>
    %cst = arith.constant dense<0.000000e+00> : vector<8x128xf32>
    %2 = tpu.matmul %0, %1, %cst {dimension_numbers = #tpu.dot_dimension_numbers<[1], [0], [0], [1], [0, 0, 1, 1], [], []>} : vector<8x256xbf16>, vector<256x128xbf16>, vector<8x128xf32> -> vector<8x128xf32>
    %c0_3 = arith.constant 0 : index
    %c0_4 = arith.constant 0 : index
    %3 = vector.load %arg3[%c0_3, %c0_4] : memref<1x128xf32, #tpu.memory_space<vmem>>, vector<1x128xf32>
    %4 = vector.broadcast %3 : vector<1x128xf32> to vector<8x128xf32>
    %5 = arith.addf %2, %4 : vector<8x128xf32>
    %6 = arith.truncf %5 : vector<8x128xf32> to vector<8x128xbf16>
    %c0_5 = arith.constant 0 : index
    %c0_6 = arith.constant 0 : index
    %7 = vector.load %arg4[%c0_5, %c0_6] : memref<8x128xbf16, #tpu.memory_space<vmem>>, vector<8x128xbf16>
    tpu.vector_store %arg4[%c0_5, %c0_6], %6 {strides = array<i32>} : memref<8x128xbf16, #tpu.memory_space<vmem>>, vector<8x128xbf16>,
    return
  }
  func.func @transform_0(%arg0: i32) -> (i32, i32) {
    %c0_i32 = arith.constant 0 : i32
    %c0_i32_0 = arith.constant 0 : i32
    return %arg0, %c0_i32 : i32, i32
  }
  func.func @transform_1(%arg0: i32) -> (i32, i32) {
    %c0_i32 = arith.constant 0 : i32
    %c0_i32_0 = arith.constant 0 : i32
    %c0_i32_1 = arith.constant 0 : i32
    return %c0_i32, %c0_i32_0 : i32, i32
  }
  func.func @transform_2(%arg0: i32) -> (i32, i32) {
    %c0_i32 = arith.constant 0 : i32
    %c0_i32_0 = arith.constant 0 : i32
    %c0_i32_1 = arith.constant 0 : i32
    return %c0_i32, %c0_i32_0 : i32, i32
  }
  func.func @transform_3(%arg0: i32) -> (i32, i32) {
    %c0_i32 = arith.constant 0 : i32
    %c0_i32_0 = arith.constant 0 : i32
    return %arg0, %c0_i32 : i32, i32
  }
}

module attributes {stable_mosaic.version = 11 : i64} {
  func.func @_lstm_mm_kernel(%arg0: i32, %arg1: memref<8x1280xbf16, #tpu.memory_space<vmem>>, %arg2: memref<1280x256xbf16, #tpu.memory_space<vmem>>, %arg3: memref<1x256xf32, #tpu.memory_space<vmem>>, %arg4: memref<8x128xf32, #tpu.memory_space<vmem>>, %arg5: memref<8x128xf32, #tpu.memory_space<vmem>>) attributes {dimension_semantics = [#tpu.dimension_semantics<parallel>], iteration_bounds = array<i64: 1>, scalar_prefetch = 0 : i64, scratch_operands = 0 : i64, tpu.core_type = #tpu.core_type<tc>, window_params = [{transform_indices = @transform_0, window_bounds = array<i64: 8, 1280>}, {pipeline_mode = #tpu.pipeline_mode<synchronous>, transform_indices = @transform_1, window_bounds = array<i64: 1280, 256>}, {pipeline_mode = #tpu.pipeline_mode<synchronous>, transform_indices = @transform_2, window_bounds = array<i64: 1, 256>}, {transform_indices = @transform_3, window_bounds = array<i64: 8, 128>}, {transform_indices = @transform_4, window_bounds = array<i64: 8, 128>}]} {
    %c0 = arith.constant 0 : index
    %c0_0 = arith.constant 0 : index
    %0 = vector.load %arg1[%c0, %c0_0] : memref<8x1280xbf16, #tpu.memory_space<vmem>>, vector<8x1280xbf16>
    %c0_1 = arith.constant 0 : index
    %c0_2 = arith.constant 0 : index
    %1 = vector.load %arg2[%c0_1, %c0_2] : memref<1280x256xbf16, #tpu.memory_space<vmem>>, vector<1280x256xbf16>
    %cst = arith.constant dense<0.000000e+00> : vector<8x256xf32>
    %2 = tpu.matmul %0, %1, %cst {dimension_numbers = #tpu.dot_dimension_numbers<[1], [0], [0], [1], [0, 0, 1, 1], [], []>} : vector<8x1280xbf16>, vector<1280x256xbf16>, vector<8x256xf32> -> vector<8x256xf32>
    %c0_3 = arith.constant 0 : index
    %c0_4 = arith.constant 0 : index
    %3 = vector.load %arg3[%c0_3, %c0_4] : memref<1x256xf32, #tpu.memory_space<vmem>>, vector<1x256xf32>
    %4 = vector.broadcast %3 : vector<1x256xf32> to vector<8x256xf32>
    %5 = arith.addf %2, %4 : vector<8x256xf32>
    %6 = vector.extract_strided_slice %5 {offsets = [0, 0], sizes = [8, 128], strides = [1, 1]} : vector<8x256xf32> to vector<8x128xf32>
    %7 = vector.extract_strided_slice %5 {offsets = [0, 128], sizes = [8, 128], strides = [1, 1]} : vector<8x256xf32> to vector<8x128xf32>
    %8 = tpu.iota {dimensions = array<i32: 1>} : vector<8x128xi32>
    %c64_i32 = arith.constant 64 : i32
    %9 = vector.broadcast %c64_i32 : i32 to vector<8x128xi32>
    %10 = arith.cmpi slt, %8, %9 : vector<8x128xi32>
    %11 = arith.negf %6 : vector<8x128xf32>
    %12 = math.exp %11 : vector<8x128xf32>
    %cst_5 = arith.constant 1.000000e+00 : f32
    %13 = vector.broadcast %cst_5 : f32 to vector<8x128xf32>
    %14 = arith.addf %13, %12 : vector<8x128xf32>
    %15 = arith.divf %13, %14 : vector<8x128xf32>
    %16 = math.tanh %6 : vector<8x128xf32>
    %17 = arith.select %10, %15, %16 : vector<8x128xi1>, vector<8x128xf32>
    %18 = arith.negf %7 : vector<8x128xf32>
    %19 = math.exp %18 : vector<8x128xf32>
    %cst_6 = arith.constant 1.000000e+00 : f32
    %20 = vector.broadcast %cst_6 : f32 to vector<8x128xf32>
    %21 = arith.addf %20, %19 : vector<8x128xf32>
    %22 = arith.divf %20, %21 : vector<8x128xf32>
    %c0_7 = arith.constant 0 : index
    %c0_8 = arith.constant 0 : index
    %23 = vector.load %arg4[%c0_7, %c0_8] : memref<8x128xf32, #tpu.memory_space<vmem>>, vector<8x128xf32>
    %c64_i32_9 = arith.constant 64 : i32
    %24 = tpu.dynamic_rotate %23 by %c64_i32_9 dim 1 : vector<8x128xf32>, i32 -> vector<8x128xf32>
    %25 = arith.mulf %22, %24 : vector<8x128xf32>
    %c64_i32_10 = arith.constant 64 : i32
    %26 = tpu.dynamic_rotate %17 by %c64_i32_10 dim 1 : vector<8x128xf32>, i32 -> vector<8x128xf32>
    %27 = arith.mulf %17, %26 : vector<8x128xf32>
    %28 = arith.addf %25, %27 : vector<8x128xf32>
    %c64_i32_11 = arith.constant 64 : i32
    %29 = tpu.dynamic_rotate %22 by %c64_i32_11 dim 1 : vector<8x128xf32>, i32 -> vector<8x128xf32>
    %30 = math.tanh %28 : vector<8x128xf32>
    %31 = arith.mulf %29, %30 : vector<8x128xf32>
    %c64_i32_12 = arith.constant 64 : i32
    %32 = tpu.dynamic_rotate %28 by %c64_i32_12 dim 1 : vector<8x128xf32>, i32 -> vector<8x128xf32>
    %33 = arith.select %10, %31, %32 : vector<8x128xi1>, vector<8x128xf32>
    %c0_13 = arith.constant 0 : index
    %c0_14 = arith.constant 0 : index
    %34 = vector.load %arg5[%c0_13, %c0_14] : memref<8x128xf32, #tpu.memory_space<vmem>>, vector<8x128xf32>
    tpu.vector_store %arg5[%c0_13, %c0_14], %33 {strides = array<i32>} : memref<8x128xf32, #tpu.memory_space<vmem>>, vector<8x128xf32>,
    return
  }
  func.func @transform_0(%arg0: i32) -> (i32, i32) {
    %c0_i32 = arith.constant 0 : i32
    %c0_i32_0 = arith.constant 0 : i32
    return %arg0, %c0_i32 : i32, i32
  }
  func.func @transform_1(%arg0: i32) -> (i32, i32) {
    %c0_i32 = arith.constant 0 : i32
    %c0_i32_0 = arith.constant 0 : i32
    %c0_i32_1 = arith.constant 0 : i32
    return %c0_i32, %c0_i32_0 : i32, i32
  }
  func.func @transform_2(%arg0: i32) -> (i32, i32) {
    %c0_i32 = arith.constant 0 : i32
    %c0_i32_0 = arith.constant 0 : i32
    %c0_i32_1 = arith.constant 0 : i32
    return %c0_i32, %c0_i32_0 : i32, i32
  }
  func.func @transform_3(%arg0: i32) -> (i32, i32) {
    %c0_i32 = arith.constant 0 : i32
    %c0_i32_0 = arith.constant 0 : i32
    return %arg0, %c0_i32 : i32, i32
  }
  func.func @transform_4(%arg0: i32) -> (i32, i32) {
    %c0_i32 = arith.constant 0 : i32
    %c0_i32_0 = arith.constant 0 : i32
    return %arg0, %c0_i32 : i32, i32
  }
}

module attributes {stable_mosaic.version = 11 : i64} {
  func.func @kern(%arg0: i32, %arg1: memref<8x640xbf16, #tpu.memory_space<vmem>>, %arg2: memref<640x128xbf16, #tpu.memory_space<vmem>>, %arg3: memref<1x128xf32, #tpu.memory_space<vmem>>, %arg4: memref<8x128xf32, #tpu.memory_space<vmem>>) attributes {dimension_semantics = [#tpu.dimension_semantics<parallel>], iteration_bounds = array<i64: 1>, scalar_prefetch = 0 : i64, scratch_operands = 0 : i64, tpu.core_type = #tpu.core_type<tc>, window_params = [{transform_indices = @transform_0, window_bounds = array<i64: 8, 640>}, {pipeline_mode = #tpu.pipeline_mode<synchronous>, transform_indices = @transform_1, window_bounds = array<i64: 640, 128>}, {pipeline_mode = #tpu.pipeline_mode<synchronous>, transform_indices = @transform_2, window_bounds = array<i64: 1, 128>}, {transform_indices = @transform_3, window_bounds = array<i64: 8, 128>}]} {
    %c0 = arith.constant 0 : index
    %c0_0 = arith.constant 0 : index
    %0 = vector.load %arg1[%c0, %c0_0] : memref<8x640xbf16, #tpu.memory_space<vmem>>, vector<8x640xbf16>
    %c0_1 = arith.constant 0 : index
    %c0_2 = arith.constant 0 : index
    %1 = vector.load %arg2[%c0_1, %c0_2] : memref<640x128xbf16, #tpu.memory_space<vmem>>, vector<640x128xbf16>
    %cst = arith.constant dense<0.000000e+00> : vector<8x128xf32>
    %2 = tpu.matmul %0, %1, %cst {dimension_numbers = #tpu.dot_dimension_numbers<[1], [0], [0], [1], [0, 0, 1, 1], [], []>} : vector<8x640xbf16>, vector<640x128xbf16>, vector<8x128xf32> -> vector<8x128xf32>
    %c0_3 = arith.constant 0 : index
    %c0_4 = arith.constant 0 : index
    %3 = vector.load %arg3[%c0_3, %c0_4] : memref<1x128xf32, #tpu.memory_space<vmem>>, vector<1x128xf32>
    %4 = vector.broadcast %3 : vector<1x128xf32> to vector<8x128xf32>
    %5 = arith.addf %2, %4 : vector<8x128xf32>
    %6 = tpu.iota {dimensions = array<i32: 1>} : vector<8x128xi32>
    %cst_5 = arith.constant 0.000000e+00 : f32
    %7 = vector.broadcast %cst_5 : f32 to vector<8x128xf32>
    %8 = arith.maximumf %5, %7 : vector<8x128xf32>
    %9 = math.absf %5 : vector<8x128xf32>
    %cst_6 = arith.constant 0.000000e+00 : f32
    %10 = vector.broadcast %cst_6 : f32 to vector<8x128xf32>
    %11 = arith.subf %10, %9 : vector<8x128xf32>
    %12 = math.exp %11 : vector<8x128xf32>
    %cst_7 = arith.constant 1.000000e+00 : f32
    %13 = vector.broadcast %cst_7 : f32 to vector<8x128xf32>
    %14 = arith.addf %13, %12 : vector<8x128xf32>
    %15 = math.log %14 : vector<8x128xf32>
    %16 = arith.addf %8, %15 : vector<8x128xf32>
    %c3_i32 = arith.constant 3 : i32
    %17 = vector.broadcast %c3_i32 : i32 to vector<8x128xi32>
    %18 = arith.cmpi slt, %6, %17 : vector<8x128xi32>
    %cst_8 = arith.constant 9.99999974E-5 : f32
    %19 = vector.broadcast %cst_8 : f32 to vector<8x128xf32>
    %20 = arith.addf %16, %19 : vector<8x128xf32>
    %21 = arith.select %18, %5, %20 : vector<8x128xi1>, vector<8x128xf32>
    %c0_9 = arith.constant 0 : index
    %c0_10 = arith.constant 0 : index
    %22 = vector.load %arg4[%c0_9, %c0_10] : memref<8x128xf32, #tpu.memory_space<vmem>>, vector<8x128xf32>
    tpu.vector_store %arg4[%c0_9, %c0_10], %21 {strides = array<i32>} : memref<8x128xf32, #tpu.memory_space<vmem>>, vector<8x128xf32>,
    return
  }
  func.func @transform_0(%arg0: i32) -> (i32, i32) {
    %c0_i32 = arith.constant 0 : i32
    %c0_i32_0 = arith.constant 0 : i32
    return %arg0, %c0_i32 : i32, i32
  }
  func.func @transform_1(%arg0: i32) -> (i32, i32) {
    %c0_i32 = arith.constant 0 : i32
    %c0_i32_0 = arith.constant 0 : i32
    %c0_i32_1 = arith.constant 0 : i32
    return %c0_i32, %c0_i32_0 : i32, i32
  }
  func.func @transform_2(%arg0: i32) -> (i32, i32) {
    %c0_i32 = arith.constant 0 : i32
    %c0_i32_0 = arith.constant 0 : i32
    %c0_i32_1 = arith.constant 0 : i32
    return %c0_i32, %c0_i32_0 : i32, i32
  }
  func.func @transform_3(%arg0: i32) -> (i32, i32) {
    %c0_i32 = arith.constant 0 : i32
    %c0_i32_0 = arith.constant 0 : i32
    return %arg0, %c0_i32 : i32, i32
  }
}

module attributes {stable_mosaic.version = 11 : i64} {
  func.func @kern(%arg0: i32, %arg1: memref<8x128xbf16, #tpu.memory_space<vmem>>, %arg2: memref<128x128xbf16, #tpu.memory_space<vmem>>, %arg3: memref<1x128xf32, #tpu.memory_space<vmem>>, %arg4: memref<8x128xbf16, #tpu.memory_space<vmem>>) attributes {dimension_semantics = [#tpu.dimension_semantics<parallel>], iteration_bounds = array<i64: 1>, scalar_prefetch = 0 : i64, scratch_operands = 0 : i64, tpu.core_type = #tpu.core_type<tc>, window_params = [{transform_indices = @transform_0, window_bounds = array<i64: 8, 128>}, {pipeline_mode = #tpu.pipeline_mode<synchronous>, transform_indices = @transform_1, window_bounds = array<i64: 128, 128>}, {pipeline_mode = #tpu.pipeline_mode<synchronous>, transform_indices = @transform_2, window_bounds = array<i64: 1, 128>}, {transform_indices = @transform_3, window_bounds = array<i64: 8, 128>}]} {
    %c0 = arith.constant 0 : index
    %c0_0 = arith.constant 0 : index
    %0 = vector.load %arg1[%c0, %c0_0] : memref<8x128xbf16, #tpu.memory_space<vmem>>, vector<8x128xbf16>
    %c0_1 = arith.constant 0 : index
    %c0_2 = arith.constant 0 : index
    %1 = vector.load %arg2[%c0_1, %c0_2] : memref<128x128xbf16, #tpu.memory_space<vmem>>, vector<128x128xbf16>
    %cst = arith.constant dense<0.000000e+00> : vector<8x128xf32>
    %2 = tpu.matmul %0, %1, %cst {dimension_numbers = #tpu.dot_dimension_numbers<[1], [0], [0], [1], [0, 0, 1, 1], [], []>} : vector<8x128xbf16>, vector<128x128xbf16>, vector<8x128xf32> -> vector<8x128xf32>
    %c0_3 = arith.constant 0 : index
    %c0_4 = arith.constant 0 : index
    %3 = vector.load %arg3[%c0_3, %c0_4] : memref<1x128xf32, #tpu.memory_space<vmem>>, vector<1x128xf32>
    %4 = vector.broadcast %3 : vector<1x128xf32> to vector<8x128xf32>
    %5 = arith.addf %2, %4 : vector<8x128xf32>
    %6 = arith.truncf %5 : vector<8x128xf32> to vector<8x128xbf16>
    %c0_5 = arith.constant 0 : index
    %c0_6 = arith.constant 0 : index
    %7 = vector.load %arg4[%c0_5, %c0_6] : memref<8x128xbf16, #tpu.memory_space<vmem>>, vector<8x128xbf16>
    tpu.vector_store %arg4[%c0_5, %c0_6], %6 {strides = array<i32>} : memref<8x128xbf16, #tpu.memory_space<vmem>>, vector<8x128xbf16>,
    return
  }
  func.func @transform_0(%arg0: i32) -> (i32, i32) {
    %c0_i32 = arith.constant 0 : i32
    %c0_i32_0 = arith.constant 0 : i32
    return %arg0, %c0_i32 : i32, i32
  }
  func.func @transform_1(%arg0: i32) -> (i32, i32) {
    %c0_i32 = arith.constant 0 : i32
    %c0_i32_0 = arith.constant 0 : i32
    %c0_i32_1 = arith.constant 0 : i32
    return %c0_i32, %c0_i32_0 : i32, i32
  }
  func.func @transform_2(%arg0: i32) -> (i32, i32) {
    %c0_i32 = arith.constant 0 : i32
    %c0_i32_0 = arith.constant 0 : i32
    %c0_i32_1 = arith.constant 0 : i32
    return %c0_i32, %c0_i32_0 : i32, i32
  }
  func.func @transform_3(%arg0: i32) -> (i32, i32) {
    %c0_i32 = arith.constant 0 : i32
    %c0_i32_0 = arith.constant 0 : i32
    return %arg0, %c0_i32 : i32, i32
  }
}

module attributes {stable_mosaic.version = 11 : i64} {
  func.func @_lstm_mm_kernel(%arg0: i32, %arg1: memref<8x896xbf16, #tpu.memory_space<vmem>>, %arg2: memref<896x256xbf16, #tpu.memory_space<vmem>>, %arg3: memref<1x256xf32, #tpu.memory_space<vmem>>, %arg4: memref<8x128xf32, #tpu.memory_space<vmem>>, %arg5: memref<8x128xf32, #tpu.memory_space<vmem>>) attributes {dimension_semantics = [#tpu.dimension_semantics<parallel>], iteration_bounds = array<i64: 1>, scalar_prefetch = 0 : i64, scratch_operands = 0 : i64, tpu.core_type = #tpu.core_type<tc>, window_params = [{transform_indices = @transform_0, window_bounds = array<i64: 8, 896>}, {pipeline_mode = #tpu.pipeline_mode<synchronous>, transform_indices = @transform_1, window_bounds = array<i64: 896, 256>}, {pipeline_mode = #tpu.pipeline_mode<synchronous>, transform_indices = @transform_2, window_bounds = array<i64: 1, 256>}, {transform_indices = @transform_3, window_bounds = array<i64: 8, 128>}, {transform_indices = @transform_4, window_bounds = array<i64: 8, 128>}]} {
    %c0 = arith.constant 0 : index
    %c0_0 = arith.constant 0 : index
    %0 = vector.load %arg1[%c0, %c0_0] : memref<8x896xbf16, #tpu.memory_space<vmem>>, vector<8x896xbf16>
    %c0_1 = arith.constant 0 : index
    %c0_2 = arith.constant 0 : index
    %1 = vector.load %arg2[%c0_1, %c0_2] : memref<896x256xbf16, #tpu.memory_space<vmem>>, vector<896x256xbf16>
    %cst = arith.constant dense<0.000000e+00> : vector<8x256xf32>
    %2 = tpu.matmul %0, %1, %cst {dimension_numbers = #tpu.dot_dimension_numbers<[1], [0], [0], [1], [0, 0, 1, 1], [], []>} : vector<8x896xbf16>, vector<896x256xbf16>, vector<8x256xf32> -> vector<8x256xf32>
    %c0_3 = arith.constant 0 : index
    %c0_4 = arith.constant 0 : index
    %3 = vector.load %arg3[%c0_3, %c0_4] : memref<1x256xf32, #tpu.memory_space<vmem>>, vector<1x256xf32>
    %4 = vector.broadcast %3 : vector<1x256xf32> to vector<8x256xf32>
    %5 = arith.addf %2, %4 : vector<8x256xf32>
    %6 = vector.extract_strided_slice %5 {offsets = [0, 0], sizes = [8, 128], strides = [1, 1]} : vector<8x256xf32> to vector<8x128xf32>
    %7 = vector.extract_strided_slice %5 {offsets = [0, 128], sizes = [8, 128], strides = [1, 1]} : vector<8x256xf32> to vector<8x128xf32>
    %8 = tpu.iota {dimensions = array<i32: 1>} : vector<8x128xi32>
    %c64_i32 = arith.constant 64 : i32
    %9 = vector.broadcast %c64_i32 : i32 to vector<8x128xi32>
    %10 = arith.cmpi slt, %8, %9 : vector<8x128xi32>
    %11 = arith.negf %6 : vector<8x128xf32>
    %12 = math.exp %11 : vector<8x128xf32>
    %cst_5 = arith.constant 1.000000e+00 : f32
    %13 = vector.broadcast %cst_5 : f32 to vector<8x128xf32>
    %14 = arith.addf %13, %12 : vector<8x128xf32>
    %15 = arith.divf %13, %14 : vector<8x128xf32>
    %16 = math.tanh %6 : vector<8x128xf32>
    %17 = arith.select %10, %15, %16 : vector<8x128xi1>, vector<8x128xf32>
    %18 = arith.negf %7 : vector<8x128xf32>
    %19 = math.exp %18 : vector<8x128xf32>
    %cst_6 = arith.constant 1.000000e+00 : f32
    %20 = vector.broadcast %cst_6 : f32 to vector<8x128xf32>
    %21 = arith.addf %20, %19 : vector<8x128xf32>
    %22 = arith.divf %20, %21 : vector<8x128xf32>
    %c0_7 = arith.constant 0 : index
    %c0_8 = arith.constant 0 : index
    %23 = vector.load %arg4[%c0_7, %c0_8] : memref<8x128xf32, #tpu.memory_space<vmem>>, vector<8x128xf32>
    %c64_i32_9 = arith.constant 64 : i32
    %24 = tpu.dynamic_rotate %23 by %c64_i32_9 dim 1 : vector<8x128xf32>, i32 -> vector<8x128xf32>
    %25 = arith.mulf %22, %24 : vector<8x128xf32>
    %c64_i32_10 = arith.constant 64 : i32
    %26 = tpu.dynamic_rotate %17 by %c64_i32_10 dim 1 : vector<8x128xf32>, i32 -> vector<8x128xf32>
    %27 = arith.mulf %17, %26 : vector<8x128xf32>
    %28 = arith.addf %25, %27 : vector<8x128xf32>
    %c64_i32_11 = arith.constant 64 : i32
    %29 = tpu.dynamic_rotate %22 by %c64_i32_11 dim 1 : vector<8x128xf32>, i32 -> vector<8x128xf32>
    %30 = math.tanh %28 : vector<8x128xf32>
    %31 = arith.mulf %29, %30 : vector<8x128xf32>
    %c64_i32_12 = arith.constant 64 : i32
    %32 = tpu.dynamic_rotate %28 by %c64_i32_12 dim 1 : vector<8x128xf32>, i32 -> vector<8x128xf32>
    %33 = arith.select %10, %31, %32 : vector<8x128xi1>, vector<8x128xf32>
    %c0_13 = arith.constant 0 : index
    %c0_14 = arith.constant 0 : index
    %34 = vector.load %arg5[%c0_13, %c0_14] : memref<8x128xf32, #tpu.memory_space<vmem>>, vector<8x128xf32>
    tpu.vector_store %arg5[%c0_13, %c0_14], %33 {strides = array<i32>} : memref<8x128xf32, #tpu.memory_space<vmem>>, vector<8x128xf32>,
    return
  }
  func.func @transform_0(%arg0: i32) -> (i32, i32) {
    %c0_i32 = arith.constant 0 : i32
    %c0_i32_0 = arith.constant 0 : i32
    return %arg0, %c0_i32 : i32, i32
  }
  func.func @transform_1(%arg0: i32) -> (i32, i32) {
    %c0_i32 = arith.constant 0 : i32
    %c0_i32_0 = arith.constant 0 : i32
    %c0_i32_1 = arith.constant 0 : i32
    return %c0_i32, %c0_i32_0 : i32, i32
  }
  func.func @transform_2(%arg0: i32) -> (i32, i32) {
    %c0_i32 = arith.constant 0 : i32
    %c0_i32_0 = arith.constant 0 : i32
    %c0_i32_1 = arith.constant 0 : i32
    return %c0_i32, %c0_i32_0 : i32, i32
  }
  func.func @transform_3(%arg0: i32) -> (i32, i32) {
    %c0_i32 = arith.constant 0 : i32
    %c0_i32_0 = arith.constant 0 : i32
    return %arg0, %c0_i32 : i32, i32
  }
  func.func @transform_4(%arg0: i32) -> (i32, i32) {
    %c0_i32 = arith.constant 0 : i32
    %c0_i32_0 = arith.constant 0 : i32
    return %arg0, %c0_i32 : i32, i32
  }
}

module attributes {stable_mosaic.version = 11 : i64} {
  func.func @kern(%arg0: i32, %arg1: memref<16x512xbf16, #tpu.memory_space<vmem>>, %arg2: memref<512x128xbf16, #tpu.memory_space<vmem>>, %arg3: memref<1x128xf32, #tpu.memory_space<vmem>>, %arg4: memref<16x128xbf16, #tpu.memory_space<vmem>>) attributes {dimension_semantics = [#tpu.dimension_semantics<parallel>], iteration_bounds = array<i64: 1>, scalar_prefetch = 0 : i64, scratch_operands = 0 : i64, tpu.core_type = #tpu.core_type<tc>, window_params = [{transform_indices = @transform_0, window_bounds = array<i64: 16, 512>}, {pipeline_mode = #tpu.pipeline_mode<synchronous>, transform_indices = @transform_1, window_bounds = array<i64: 512, 128>}, {pipeline_mode = #tpu.pipeline_mode<synchronous>, transform_indices = @transform_2, window_bounds = array<i64: 1, 128>}, {transform_indices = @transform_3, window_bounds = array<i64: 16, 128>}]} {
    %c0 = arith.constant 0 : index
    %c0_0 = arith.constant 0 : index
    %0 = vector.load %arg1[%c0, %c0_0] : memref<16x512xbf16, #tpu.memory_space<vmem>>, vector<16x512xbf16>
    %c0_1 = arith.constant 0 : index
    %c0_2 = arith.constant 0 : index
    %1 = vector.load %arg2[%c0_1, %c0_2] : memref<512x128xbf16, #tpu.memory_space<vmem>>, vector<512x128xbf16>
    %cst = arith.constant dense<0.000000e+00> : vector<16x128xf32>
    %2 = tpu.matmul %0, %1, %cst {dimension_numbers = #tpu.dot_dimension_numbers<[1], [0], [0], [1], [0, 0, 1, 1], [], []>} : vector<16x512xbf16>, vector<512x128xbf16>, vector<16x128xf32> -> vector<16x128xf32>
    %c0_3 = arith.constant 0 : index
    %c0_4 = arith.constant 0 : index
    %3 = vector.load %arg3[%c0_3, %c0_4] : memref<1x128xf32, #tpu.memory_space<vmem>>, vector<1x128xf32>
    %4 = vector.broadcast %3 : vector<1x128xf32> to vector<16x128xf32>
    %5 = arith.addf %2, %4 : vector<16x128xf32>
    %6 = arith.truncf %5 : vector<16x128xf32> to vector<16x128xbf16>
    %c0_5 = arith.constant 0 : index
    %c0_6 = arith.constant 0 : index
    %7 = vector.load %arg4[%c0_5, %c0_6] : memref<16x128xbf16, #tpu.memory_space<vmem>>, vector<16x128xbf16>
    tpu.vector_store %arg4[%c0_5, %c0_6], %6 {strides = array<i32>} : memref<16x128xbf16, #tpu.memory_space<vmem>>, vector<16x128xbf16>,
    return
  }
  func.func @transform_0(%arg0: i32) -> (i32, i32) {
    %c0_i32 = arith.constant 0 : i32
    %c0_i32_0 = arith.constant 0 : i32
    return %arg0, %c0_i32 : i32, i32
  }
  func.func @transform_1(%arg0: i32) -> (i32, i32) {
    %c0_i32 = arith.constant 0 : i32
    %c0_i32_0 = arith.constant 0 : i32
    %c0_i32_1 = arith.constant 0 : i32
    return %c0_i32, %c0_i32_0 : i32, i32
  }
  func.func @transform_2(%arg0: i32) -> (i32, i32) {
    %c0_i32 = arith.constant 0 : i32
    %c0_i32_0 = arith.constant 0 : i32
    %c0_i32_1 = arith.constant 0 : i32
    return %c0_i32, %c0_i32_0 : i32, i32
  }
  func.func @transform_3(%arg0: i32) -> (i32, i32) {
    %c0_i32 = arith.constant 0 : i32
    %c0_i32_0 = arith.constant 0 : i32
    return %arg0, %c0_i32 : i32, i32
  }
}

module attributes {stable_mosaic.version = 11 : i64} {
  func.func @_lstm_mm_kernel(%arg0: i32, %arg1: memref<16x1280xbf16, #tpu.memory_space<vmem>>, %arg2: memref<1280x256xbf16, #tpu.memory_space<vmem>>, %arg3: memref<1x256xf32, #tpu.memory_space<vmem>>, %arg4: memref<16x128xf32, #tpu.memory_space<vmem>>, %arg5: memref<16x128xf32, #tpu.memory_space<vmem>>) attributes {dimension_semantics = [#tpu.dimension_semantics<parallel>], iteration_bounds = array<i64: 1>, scalar_prefetch = 0 : i64, scratch_operands = 0 : i64, tpu.core_type = #tpu.core_type<tc>, window_params = [{transform_indices = @transform_0, window_bounds = array<i64: 16, 1280>}, {pipeline_mode = #tpu.pipeline_mode<synchronous>, transform_indices = @transform_1, window_bounds = array<i64: 1280, 256>}, {pipeline_mode = #tpu.pipeline_mode<synchronous>, transform_indices = @transform_2, window_bounds = array<i64: 1, 256>}, {transform_indices = @transform_3, window_bounds = array<i64: 16, 128>}, {transform_indices = @transform_4, window_bounds = array<i64: 16, 128>}]} {
    %c0 = arith.constant 0 : index
    %c0_0 = arith.constant 0 : index
    %0 = vector.load %arg1[%c0, %c0_0] : memref<16x1280xbf16, #tpu.memory_space<vmem>>, vector<16x1280xbf16>
    %c0_1 = arith.constant 0 : index
    %c0_2 = arith.constant 0 : index
    %1 = vector.load %arg2[%c0_1, %c0_2] : memref<1280x256xbf16, #tpu.memory_space<vmem>>, vector<1280x256xbf16>
    %cst = arith.constant dense<0.000000e+00> : vector<16x256xf32>
    %2 = tpu.matmul %0, %1, %cst {dimension_numbers = #tpu.dot_dimension_numbers<[1], [0], [0], [1], [0, 0, 1, 1], [], []>} : vector<16x1280xbf16>, vector<1280x256xbf16>, vector<16x256xf32> -> vector<16x256xf32>
    %c0_3 = arith.constant 0 : index
    %c0_4 = arith.constant 0 : index
    %3 = vector.load %arg3[%c0_3, %c0_4] : memref<1x256xf32, #tpu.memory_space<vmem>>, vector<1x256xf32>
    %4 = vector.broadcast %3 : vector<1x256xf32> to vector<16x256xf32>
    %5 = arith.addf %2, %4 : vector<16x256xf32>
    %6 = vector.extract_strided_slice %5 {offsets = [0, 0], sizes = [16, 128], strides = [1, 1]} : vector<16x256xf32> to vector<16x128xf32>
    %7 = vector.extract_strided_slice %5 {offsets = [0, 128], sizes = [16, 128], strides = [1, 1]} : vector<16x256xf32> to vector<16x128xf32>
    %8 = tpu.iota {dimensions = array<i32: 1>} : vector<16x128xi32>
    %c64_i32 = arith.constant 64 : i32
    %9 = vector.broadcast %c64_i32 : i32 to vector<16x128xi32>
    %10 = arith.cmpi slt, %8, %9 : vector<16x128xi32>
    %11 = arith.negf %6 : vector<16x128xf32>
    %12 = math.exp %11 : vector<16x128xf32>
    %cst_5 = arith.constant 1.000000e+00 : f32
    %13 = vector.broadcast %cst_5 : f32 to vector<16x128xf32>
    %14 = arith.addf %13, %12 : vector<16x128xf32>
    %15 = arith.divf %13, %14 : vector<16x128xf32>
    %16 = math.tanh %6 : vector<16x128xf32>
    %17 = arith.select %10, %15, %16 : vector<16x128xi1>, vector<16x128xf32>
    %18 = arith.negf %7 : vector<16x128xf32>
    %19 = math.exp %18 : vector<16x128xf32>
    %cst_6 = arith.constant 1.000000e+00 : f32
    %20 = vector.broadcast %cst_6 : f32 to vector<16x128xf32>
    %21 = arith.addf %20, %19 : vector<16x128xf32>
    %22 = arith.divf %20, %21 : vector<16x128xf32>
    %c0_7 = arith.constant 0 : index
    %c0_8 = arith.constant 0 : index
    %23 = vector.load %arg4[%c0_7, %c0_8] : memref<16x128xf32, #tpu.memory_space<vmem>>, vector<16x128xf32>
    %c64_i32_9 = arith.constant 64 : i32
    %24 = tpu.dynamic_rotate %23 by %c64_i32_9 dim 1 : vector<16x128xf32>, i32 -> vector<16x128xf32>
    %25 = arith.mulf %22, %24 : vector<16x128xf32>
    %c64_i32_10 = arith.constant 64 : i32
    %26 = tpu.dynamic_rotate %17 by %c64_i32_10 dim 1 : vector<16x128xf32>, i32 -> vector<16x128xf32>
    %27 = arith.mulf %17, %26 : vector<16x128xf32>
    %28 = arith.addf %25, %27 : vector<16x128xf32>
    %c64_i32_11 = arith.constant 64 : i32
    %29 = tpu.dynamic_rotate %22 by %c64_i32_11 dim 1 : vector<16x128xf32>, i32 -> vector<16x128xf32>
    %30 = math.tanh %28 : vector<16x128xf32>
    %31 = arith.mulf %29, %30 : vector<16x128xf32>
    %c64_i32_12 = arith.constant 64 : i32
    %32 = tpu.dynamic_rotate %28 by %c64_i32_12 dim 1 : vector<16x128xf32>, i32 -> vector<16x128xf32>
    %33 = arith.select %10, %31, %32 : vector<16x128xi1>, vector<16x128xf32>
    %c0_13 = arith.constant 0 : index
    %c0_14 = arith.constant 0 : index
    %34 = vector.load %arg5[%c0_13, %c0_14] : memref<16x128xf32, #tpu.memory_space<vmem>>, vector<16x128xf32>
    tpu.vector_store %arg5[%c0_13, %c0_14], %33 {strides = array<i32>} : memref<16x128xf32, #tpu.memory_space<vmem>>, vector<16x128xf32>,
    return
  }
  func.func @transform_0(%arg0: i32) -> (i32, i32) {
    %c0_i32 = arith.constant 0 : i32
    %c0_i32_0 = arith.constant 0 : i32
    return %arg0, %c0_i32 : i32, i32
  }
  func.func @transform_1(%arg0: i32) -> (i32, i32) {
    %c0_i32 = arith.constant 0 : i32
    %c0_i32_0 = arith.constant 0 : i32
    %c0_i32_1 = arith.constant 0 : i32
    return %c0_i32, %c0_i32_0 : i32, i32
  }
  func.func @transform_2(%arg0: i32) -> (i32, i32) {
    %c0_i32 = arith.constant 0 : i32
    %c0_i32_0 = arith.constant 0 : i32
    %c0_i32_1 = arith.constant 0 : i32
    return %c0_i32, %c0_i32_0 : i32, i32
  }
  func.func @transform_3(%arg0: i32) -> (i32, i32) {
    %c0_i32 = arith.constant 0 : i32
    %c0_i32_0 = arith.constant 0 : i32
    return %arg0, %c0_i32 : i32, i32
  }
  func.func @transform_4(%arg0: i32) -> (i32, i32) {
    %c0_i32 = arith.constant 0 : i32
    %c0_i32_0 = arith.constant 0 : i32
    return %arg0, %c0_i32 : i32, i32
  }
}

module attributes {stable_mosaic.version = 11 : i64} {
  func.func @kern(%arg0: i32, %arg1: memref<16x64xbf16, #tpu.memory_space<vmem>>, %arg2: memref<64x512xbf16, #tpu.memory_space<vmem>>, %arg3: memref<1x512xf32, #tpu.memory_space<vmem>>, %arg4: memref<16x512xf32, #tpu.memory_space<vmem>>) attributes {dimension_semantics = [#tpu.dimension_semantics<parallel>], iteration_bounds = array<i64: 1>, scalar_prefetch = 0 : i64, scratch_operands = 0 : i64, tpu.core_type = #tpu.core_type<tc>, window_params = [{transform_indices = @transform_0, window_bounds = array<i64: 16, 64>}, {pipeline_mode = #tpu.pipeline_mode<synchronous>, transform_indices = @transform_1, window_bounds = array<i64: 64, 512>}, {pipeline_mode = #tpu.pipeline_mode<synchronous>, transform_indices = @transform_2, window_bounds = array<i64: 1, 512>}, {transform_indices = @transform_3, window_bounds = array<i64: 16, 512>}]} {
    %c0 = arith.constant 0 : index
    %c0_0 = arith.constant 0 : index
    %0 = vector.load %arg1[%c0, %c0_0] : memref<16x64xbf16, #tpu.memory_space<vmem>>, vector<16x64xbf16>
    %c0_1 = arith.constant 0 : index
    %c0_2 = arith.constant 0 : index
    %1 = vector.load %arg2[%c0_1, %c0_2] : memref<64x512xbf16, #tpu.memory_space<vmem>>, vector<64x512xbf16>
    %cst = arith.constant dense<0.000000e+00> : vector<16x512xf32>
    %2 = tpu.matmul %0, %1, %cst {dimension_numbers = #tpu.dot_dimension_numbers<[1], [0], [0], [1], [0, 0, 1, 1], [], []>} : vector<16x64xbf16>, vector<64x512xbf16>, vector<16x512xf32> -> vector<16x512xf32>
    %c0_3 = arith.constant 0 : index
    %c0_4 = arith.constant 0 : index
    %3 = vector.load %arg3[%c0_3, %c0_4] : memref<1x512xf32, #tpu.memory_space<vmem>>, vector<1x512xf32>
    %4 = vector.broadcast %3 : vector<1x512xf32> to vector<16x512xf32>
    %5 = arith.addf %2, %4 : vector<16x512xf32>
    %c0_5 = arith.constant 0 : index
    %c0_6 = arith.constant 0 : index
    %6 = vector.load %arg4[%c0_5, %c0_6] : memref<16x512xf32, #tpu.memory_space<vmem>>, vector<16x512xf32>
    tpu.vector_store %arg4[%c0_5, %c0_6], %5 {strides = array<i32>} : memref<16x512xf32, #tpu.memory_space<vmem>>, vector<16x512xf32>,
    return
  }
  func.func @transform_0(%arg0: i32) -> (i32, i32) {
    %c0_i32 = arith.constant 0 : i32
    %c0_i32_0 = arith.constant 0 : i32
    return %arg0, %c0_i32 : i32, i32
  }
  func.func @transform_1(%arg0: i32) -> (i32, i32) {
    %c0_i32 = arith.constant 0 : i32
    %c0_i32_0 = arith.constant 0 : i32
    %c0_i32_1 = arith.constant 0 : i32
    return %c0_i32, %c0_i32_0 : i32, i32
  }
  func.func @transform_2(%arg0: i32) -> (i32, i32) {
    %c0_i32 = arith.constant 0 : i32
    %c0_i32_0 = arith.constant 0 : i32
    %c0_i32_1 = arith.constant 0 : i32
    return %c0_i32, %c0_i32_0 : i32, i32
  }
  func.func @transform_3(%arg0: i32) -> (i32, i32) {
    %c0_i32 = arith.constant 0 : i32
    %c0_i32_0 = arith.constant 0 : i32
    return %arg0, %c0_i32 : i32, i32
  }
}

module attributes {stable_mosaic.version = 11 : i64} {
  func.func @kern(%arg0: i32, %arg1: memref<64x128xbf16, #tpu.memory_space<vmem>>, %arg2: memref<128x128xbf16, #tpu.memory_space<vmem>>, %arg3: memref<1x128xf32, #tpu.memory_space<vmem>>, %arg4: memref<64x128xf32, #tpu.memory_space<vmem>>) attributes {dimension_semantics = [#tpu.dimension_semantics<parallel>], iteration_bounds = array<i64: 1>, scalar_prefetch = 0 : i64, scratch_operands = 0 : i64, tpu.core_type = #tpu.core_type<tc>, window_params = [{transform_indices = @transform_0, window_bounds = array<i64: 64, 128>}, {pipeline_mode = #tpu.pipeline_mode<synchronous>, transform_indices = @transform_1, window_bounds = array<i64: 128, 128>}, {pipeline_mode = #tpu.pipeline_mode<synchronous>, transform_indices = @transform_2, window_bounds = array<i64: 1, 128>}, {transform_indices = @transform_3, window_bounds = array<i64: 64, 128>}]} {
    %c0 = arith.constant 0 : index
    %c0_0 = arith.constant 0 : index
    %0 = vector.load %arg1[%c0, %c0_0] : memref<64x128xbf16, #tpu.memory_space<vmem>>, vector<64x128xbf16>
    %c0_1 = arith.constant 0 : index
    %c0_2 = arith.constant 0 : index
    %1 = vector.load %arg2[%c0_1, %c0_2] : memref<128x128xbf16, #tpu.memory_space<vmem>>, vector<128x128xbf16>
    %cst = arith.constant dense<0.000000e+00> : vector<64x128xf32>
    %2 = tpu.matmul %0, %1, %cst {dimension_numbers = #tpu.dot_dimension_numbers<[1], [0], [0], [1], [0, 0, 1, 1], [], []>} : vector<64x128xbf16>, vector<128x128xbf16>, vector<64x128xf32> -> vector<64x128xf32>
    %c0_3 = arith.constant 0 : index
    %c0_4 = arith.constant 0 : index
    %3 = vector.load %arg3[%c0_3, %c0_4] : memref<1x128xf32, #tpu.memory_space<vmem>>, vector<1x128xf32>
    %4 = vector.broadcast %3 : vector<1x128xf32> to vector<64x128xf32>
    %5 = arith.addf %2, %4 : vector<64x128xf32>
    %c0_5 = arith.constant 0 : index
    %c0_6 = arith.constant 0 : index
    %6 = vector.load %arg4[%c0_5, %c0_6] : memref<64x128xf32, #tpu.memory_space<vmem>>, vector<64x128xf32>
    tpu.vector_store %arg4[%c0_5, %c0_6], %5 {strides = array<i32>} : memref<64x128xf32, #tpu.memory_space<vmem>>, vector<64x128xf32>,
    return
  }
  func.func @transform_0(%arg0: i32) -> (i32, i32) {
    %c0_i32 = arith.constant 0 : i32
    %c0_i32_0 = arith.constant 0 : i32
    return %arg0, %c0_i32 : i32, i32
  }
  func.func @transform_1(%arg0: i32) -> (i32, i32) {
    %c0_i32 = arith.constant 0 : i32
    %c0_i32_0 = arith.constant 0 : i32
    %c0_i32_1 = arith.constant 0 : i32
    return %c0_i32, %c0_i32_0 : i32, i32
  }
  func.func @transform_2(%arg0: i32) -> (i32, i32) {
    %c0_i32 = arith.constant 0 : i32
    %c0_i32_0 = arith.constant 0 : i32
    %c0_i32_1 = arith.constant 0 : i32
    return %c0_i32, %c0_i32_0 : i32, i32
  }
  func.func @transform_3(%arg0: i32) -> (i32, i32) {
    %c0_i32 = arith.constant 0 : i32
    %c0_i32_0 = arith.constant 0 : i32
    return %arg0, %c0_i32 : i32, i32
  }
}

module attributes {stable_mosaic.version = 11 : i64} {
  func.func @_sqerr_kernel(%arg0: i32, %arg1: i32, %arg2: memref<8x1536xf32, #tpu.memory_space<vmem>>, %arg3: memref<8x1536xf32, #tpu.memory_space<vmem>>, %arg4: memref<8x128xf32, #tpu.memory_space<vmem>>) attributes {dimension_semantics = [#tpu.dimension_semantics<parallel>, #tpu.dimension_semantics<arbitrary>], iteration_bounds = array<i64: 1, 1>, scalar_prefetch = 0 : i64, scratch_operands = 0 : i64, tpu.core_type = #tpu.core_type<tc>, window_params = [{transform_indices = @transform_0, window_bounds = array<i64: 8, 1536>}, {transform_indices = @transform_1, window_bounds = array<i64: 8, 1536>}, {transform_indices = @transform_2, window_bounds = array<i64: 8, 128>}]} {
    %c0_i32 = arith.constant 0 : i32
    %0 = arith.cmpi eq, %arg1, %c0_i32 : i32
    %1 = arith.extui %0 : i1 to i32
    %c0_i32_0 = arith.constant 0 : i32
    %2 = arith.cmpi ne, %1, %c0_i32_0 : i32
    scf.if %2 {
      %cst_8 = arith.constant 0.000000e+00 : f32
      %14 = vector.broadcast %cst_8 : f32 to vector<8x128xf32>
      %c0_9 = arith.constant 0 : index
      %c0_10 = arith.constant 0 : index
      %15 = vector.load %arg4[%c0_9, %c0_10] : memref<8x128xf32, #tpu.memory_space<vmem>>, vector<8x128xf32>
      tpu.vector_store %arg4[%c0_9, %c0_10], %14 {strides = array<i32>} : memref<8x128xf32, #tpu.memory_space<vmem>>, vector<8x128xf32>,
    } else {
    }
    %c0 = arith.constant 0 : index
    %c0_1 = arith.constant 0 : index
    %3 = vector.load %arg2[%c0, %c0_1] : memref<8x1536xf32, #tpu.memory_space<vmem>>, vector<8x1536xf32>
    %c0_2 = arith.constant 0 : index
    %c0_3 = arith.constant 0 : index
    %4 = vector.load %arg3[%c0_2, %c0_3] : memref<8x1536xf32, #tpu.memory_space<vmem>>, vector<8x1536xf32>
    %5 = arith.subf %3, %4 : vector<8x1536xf32>
    %6 = arith.mulf %5, %5 : vector<8x1536xf32>
    %cst = arith.constant dense<0.000000e+00> : vector<8xf32>
    %7 = vector.multi_reduction <add>, %6, %cst [1] : vector<8x1536xf32> to vector<8xf32>
    %8 = vector.shape_cast %7 : vector<8xf32> to vector<8x1xf32>
    %c0_4 = arith.constant 0 : index
    %c0_5 = arith.constant 0 : index
    %9 = vector.load %arg4[%c0_4, %c0_5] : memref<8x128xf32, #tpu.memory_space<vmem>>, vector<8x128xf32>
    %10 = vector.shape_cast %8 : vector<8x1xf32> to vector<8x1xf32>
    %11 = vector.broadcast %10 : vector<8x1xf32> to vector<8x128xf32>
    %12 = arith.addf %9, %11 : vector<8x128xf32>
    %c0_6 = arith.constant 0 : index
    %c0_7 = arith.constant 0 : index
    %13 = vector.load %arg4[%c0_6, %c0_7] : memref<8x128xf32, #tpu.memory_space<vmem>>, vector<8x128xf32>
    tpu.vector_store %arg4[%c0_6, %c0_7], %12 {strides = array<i32>} : memref<8x128xf32, #tpu.memory_space<vmem>>, vector<8x128xf32>,
    return
  }
  func.func @transform_0(%arg0: i32, %arg1: i32) -> (i32, i32) {
    %c0_i32 = arith.constant 0 : i32
    return %arg0, %arg1 : i32, i32
  }
  func.func @transform_1(%arg0: i32, %arg1: i32) -> (i32, i32) {
    %c0_i32 = arith.constant 0 : i32
    return %arg0, %arg1 : i32, i32
  }
  func.func @transform_2(%arg0: i32, %arg1: i32) -> (i32, i32) {
    %c0_i32 = arith.constant 0 : i32
    %c0_i32_0 = arith.constant 0 : i32
    return %arg0, %c0_i32 : i32, i32
  }
}

</mosaic_0001>

<llo_original>
// kernel: jump_forward_device.46
$region0: #{jump_forward_device.46}
  #allocation0 [shape = 'u32[]', space=smem, size = 0x4, offset = 0x4, fixed_abs, tag = 'smem constant byte address 0x4 - core index']
  #allocation1 [shape = 'u32[144,128]{1,0:T(1,128)}', space=vmem, size = 0x12000, scoped, tag = 'internal scratch']
  %s0 = inlined_call_operand.vmem [shape: bf16[256,128], index: 0, kind: input, shape index: {}]
  %s1 = inlined_call_operand.vmem [shape: bf16[128,128], index: 1, kind: input, shape index: {}]
  %s2 = inlined_call_operand.vmem [shape: f32[1,128], index: 2, kind: input, shape index: {}]
  %s3 = inlined_call_operand.vmem [shape: bf16[256,128], index: 3, kind: output, shape index: {}]
  %s4 = sld [smem:[#allocation0]]
  $region45: #{jump_forward_device.46} parent=0
    _
  %s6 = ssub.s32 1, %s4
  %s7 = scalar_select 0, %s6, %s4
  loop: start=0, step=1, limit=4
  $region2: #{jump_forward_device.46} parent=0 // loop_pre_header
    _
  $region3: #{jump_forward_device.46} parent=0 // loop_header
    %s9 = sphi 0, %s13
    %p10 = scmp.ge.s32.totalorder %s9, 4
    %s19 = sphi 0, %s21
    %s22 = sphi 0, %s19
    %s23 = sphi 0, %s22
    %s39 = sphi 0, %s23
    %s43 = sphi 0, %s43
    %s45 = sphi 0, %s43
    %s46 = sphi 0, %s45
    %s60 = sphi 0, %s46
    %s64 = sphi 0, %s64
    %s66 = sphi 0, %s64
    %s67 = sphi 0, %s66
    %s81 = sphi 0, %s67
    %s87 = sphi 0, %s89
    %s90 = sphi 0, %s87
    %s91 = sphi 0, %s90
    %s107 = sphi 0, %s91
  $region4: #{jump_forward_device.46} parent=0 // loop_header_branch
    %12 = sbr.rel (%p10) target = $region8
  $region5: #{jump_forward_device.46} parent=0 // loop_body
    %s14 = ssub.s32 %s9, 1
    %s15 = ssub.s32 %s9, 2
    %s16 = sadd.s32 %s9, 1
    %s17 = ssub.s32 %s9, %s16
    %p18 = scmp.eq.s32.totalorder %s17, 0
    %s20 = sadd.s32 %s19, 1
    %s21 = scalar_select %p18, %s19, %s20
    %p24 = pneg %p18
    %p25 = scmp.eq.s32.totalorder %s9, 1
    %p26 = por %p24, %p25
    %p27 = scmp.ne.s32.totalorder %s19, %s22
    %p28 = scmp.eq.s32.totalorder %s9, 0
    %p29 = por %p27, %p28
    %p30 = scmp.ne.s32.totalorder %s19, %s22
    %p31 = scmp.eq.s32.totalorder %s14, 1
    %p32 = por %p30, %p31
    %p33 = scmp.ne.s32.totalorder %s22, %s23
    %p34 = scmp.eq.s32.totalorder %s14, 0
    %p35 = por %p33, %p34
    %p36 = scmp.ne.s32.totalorder %s22, %s23
    %p37 = scmp.eq.s32.totalorder %s15, 1
    %p38 = por %p36, %p37
    %p40 = scmp.ne.s32.totalorder %s23, %s39
    %p41 = scmp.eq.s32.totalorder %s15, 0
    %p42 = por %p40, %p41
    %s44 = sadd.s32 %s43, 1
    %p47 = scmp.eq.s32.totalorder %s9, 1
    %p48 = scmp.ne.s32.totalorder %s43, %s45
    %p49 = scmp.eq.s32.totalorder %s9, 0
    %p50 = por %p48, %p49
    %p51 = scmp.ne.s32.totalorder %s43, %s45
    %p52 = scmp.eq.s32.totalorder %s14, 1
    %p53 = por %p51, %p52
    %p54 = scmp.ne.s32.totalorder %s45, %s46
    %p55 = scmp.eq.s32.totalorder %s14, 0
    %p56 = por %p54, %p55
    %p57 = scmp.ne.s32.totalorder %s45, %s46
    %p58 = scmp.eq.s32.totalorder %s15, 1
    %p59 = por %p57, %p58
    %p61 = scmp.ne.s32.totalorder %s46, %s60
    %p62 = scmp.eq.s32.totalorder %s15, 0
    %p63 = por %p61, %p62
    %s65 = sadd.s32 %s64, 1
    %p68 = scmp.eq.s32.totalorder %s9, 1
    %p69 = scmp.ne.s32.totalorder %s64, %s66
    %p70 = scmp.eq.s32.totalorder %s9, 0
    %p71 = por %p69, %p70
    %p72 = scmp.ne.s32.totalorder %s64, %s66
    %p73 = scmp.eq.s32.totalorder %s14, 1
    %p74 = por %p72, %p73
    %p75 = scmp.ne.s32.totalorder %s66, %s67
    %p76 = scmp.eq.s32.totalorder %s14, 0
    %p77 = por %p75, %p76
    %p78 = scmp.ne.s32.totalorder %s66, %s67
    %p79 = scmp.eq.s32.totalorder %s15, 1
    %p80 = por %p78, %p79
    %p82 = scmp.ne.s32.totalorder %s67, %s81
    %p83 = scmp.eq.s32.totalorder %s15, 0
    %p84 = por %p82, %p83
    %s85 = ssub.s32 %s9, %s16
    %p86 = scmp.eq.s32.totalorder %s85, 0
    %s88 = sadd.s32 %s87, 1
    %s89 = scalar_select %p86, %s87, %s88
    %p92 = pneg %p86
    %p93 = scmp.eq.s32.totalorder %s9, 1
    %p94 = por %p92, %p93
    %p95 = scmp.ne.s32.totalorder %s87, %s90
    %p96 = scmp.eq.s32.totalorder %s9, 0
    %p97 = por %p95, %p96
    %p98 = scmp.ne.s32.totalorder %s87, %s90
    %p99 = scmp.eq.s32.totalorder %s14, 1
    %p100 = por %p98, %p99
    %p101 = scmp.ne.s32.totalorder %s90, %s91
    %p102 = scmp.eq.s32.totalorder %s14, 0
    %p103 = por %p101, %p102
    %p104 = scmp.ne.s32.totalorder %s90, %s91
    %p105 = scmp.eq.s32.totalorder %s15, 1
    %p106 = por %p104, %p105
    %p108 = scmp.ne.s32.totalorder %s91, %s107
    %p109 = scmp.eq.s32.totalorder %s15, 0
    %p110 = por %p108, %p109
    %p111 = scmp.le.s32.totalorder 1, %s9
    %p112 = scmp.lt.s32.totalorder %s9, 3
    %p113 = pnand %p111, %p112
    %p114 = pneg %p113
    // Predicated region
    $region9: #{jump_forward_device.46} parent=5 // pred_check
      _
    $region10: #{jump_forward_device.46} parent=5 // pred_check_branch
      %116 = sbr.rel (%p113) target = $region12
    $region11: #{jump_forward_device.46} parent=5 // pred_region
      %s117 = ssub.s32 %s9, 1
      // Predicated region
      $region13: #{jump_forward_device.46} parent=11 // pred_check
        %p118 = pneg %p56
      $region14: #{jump_forward_device.46} parent=11 // pred_check_branch
        %120 = sbr.rel (%p118) target = $region16
      $region15: #{jump_forward_device.46} parent=11 // pred_region
        _
      $region16: #{jump_forward_device.46} parent=11 // pred_fallthru
        _
      // Predicated region
      $region17: #{jump_forward_device.46} parent=11 // pred_check
        %p121 = pneg %p77
      $region18: #{jump_forward_device.46} parent=11 // pred_check_branch
        %123 = sbr.rel (%p121) target = $region20
      $region19: #{jump_forward_device.46} parent=11 // pred_region
        _
      $region20: #{jump_forward_device.46} parent=11 // pred_fallthru
        _
    $region12: #{jump_forward_device.46} parent=5 // pred_fallthru
      _
    %p124 = scmp.lt.s32.totalorder %s9, 2
    // Predicated region
    $region21: #{jump_forward_device.46} parent=5 // pred_check
      %p125 = pneg %p124
    $region22: #{jump_forward_device.46} parent=5 // pred_check_branch
      %127 = sbr.rel (%p125) target = $region24
    $region23: #{jump_forward_device.46} parent=5 // pred_region
      // Predicated region
      $region25: #{jump_forward_device.46} parent=23 // pred_check
        %p128 = pneg %p29
      $region26: #{jump_forward_device.46} parent=23 // pred_check_branch
        %130 = sbr.rel (%p128) target = $region28
      $region27: #{jump_forward_device.46} parent=23 // pred_region
        %s131 = smul.u32 16, %s9
        %p132 = scmp.lt.s32.totalorder %s131, 31
        %s133 = scalar_select %p132, %s131, 31
        %s134 = smul.addr %s133, 4
        %s135 = scalar_lea.vmem %s0, %s134
        %s136 = smul.u32 16, %s9
      $region28: #{jump_forward_device.46} parent=23 // pred_fallthru
        _
    $region24: #{jump_forward_device.46} parent=5 // pred_fallthru
      _
    %p137 = scmp.le.s32.totalorder 1, %s9
    %p138 = scmp.lt.s32.totalorder %s9, 3
    %p139 = pnand %p137, %p138
    %p140 = pneg %p139
    // Predicated region
    $region29: #{jump_forward_device.46} parent=5 // pred_check
      _
    $region30: #{jump_forward_device.46} parent=5 // pred_check_branch
      %142 = sbr.rel (%p139) target = $region32
    $region31: #{jump_forward_device.46} parent=5 // pred_region
      %s143 = ssub.s32 %s9, 1
      %s144 = smul.u32 16, %s14
      %p145 = scmp.lt.s32.totalorder %s144, 31
      %s146 = scalar_select %p145, %s144, 31
      %s147 = smul.addr %s146, 4
      %s148 = scalar_lea.vmem %s0, %s147
      %p149 = pneg %p35
      %p150 = pneg %p32
      %p151 = pneg %p56
      %p152 = pneg %p53
      %p153 = pneg %p77
      %p154 = pneg %p74
      %p155 = pneg %p103
      %p156 = pneg %p100
      %s157 = smul.u32 16, %s14
      %p158 = scmp.lt.s32.totalorder %s157, 31
      %s159 = scalar_select %p158, %s157, 31
      %s160 = smul.addr %s159, 4
      %s161 = scalar_lea.vmem %s3, %s160
      %s162 = smul.u32 16, %s14
      %p163 = scmp.lt.s32.totalorder %s162, 31
      %s164 = scalar_select %p163, %s162, 31
      %s165 = smul.addr %s164, 4
      %s166 = scalar_lea.vmem %s0, %s165
      %s167 = smul.u32 16, %s14
      %s168 = smul.u32 16, %s14
      %p169 = scmp.lt.s32.totalorder %s168, 31
      %s170 = scalar_select %p169, %s168, 31
      %s171 = smul.addr %s170, 4
      %s172 = scalar_lea.vmem %s3, %s171
      %s173 = smul.u32 16, %s14
      %v175 = vld [vmem:[%s166] sm:$0xf]
      %v176 = vld [vmem:[%s166 + $0x4] sm:$0xf]
      %v177 = vld [vmem:[%s166 + $0x8] sm:$0xf]
      %v178 = vld [vmem:[%s166 + $0xc] sm:$0xf]
      %v179 = vld [vmem:[%s166 + $0x10] sm:$0xf]
      %v180 = vld [vmem:[%s166 + $0x14] sm:$0xf]
      %v181 = vld [vmem:[%s166 + $0x18] sm:$0xf]
      %v182 = vld [vmem:[%s166 + $0x1c] sm:$0xf]
      %v183 = vld [vmem:[%s166 + $0x20] sm:$0xf]
      %v184 = vld [vmem:[%s166 + $0x24] sm:$0xf]
      %v185 = vld [vmem:[%s166 + $0x28] sm:$0xf]
      %v186 = vld [vmem:[%s166 + $0x2c] sm:$0xf]
      %v187 = vld [vmem:[%s166 + $0x30] sm:$0xf]
      %v188 = vld [vmem:[%s166 + $0x34] sm:$0xf]
      %v189 = vld [vmem:[%s166 + $0x38] sm:$0xf]
      %v190 = vld [vmem:[%s166 + $0x3c] sm:$0xf]
      %v191 = vld [vmem:[%s1] sm:$0xf]
      %v192 = vld [vmem:[%s1 + $0x4] sm:$0xf]
      %v193 = vld [vmem:[%s1 + $0x8] sm:$0xf]
      %v194 = vld [vmem:[%s1 + $0xc] sm:$0xf]
      %v195 = vld [vmem:[%s1 + $0x10] sm:$0xf]
      %v196 = vld [vmem:[%s1 + $0x14] sm:$0xf]
      %v197 = vld [vmem:[%s1 + $0x18] sm:$0xf]
      %v198 = vld [vmem:[%s1 + $0x1c] sm:$0xf]
      %v199 = vld [vmem:[%s1 + $0x20] sm:$0xf]
      %v200 = vld [vmem:[%s1 + $0x24] sm:$0xf]
      %v201 = vld [vmem:[%s1 + $0x28] sm:$0xf]
      %v202 = vld [vmem:[%s1 + $0x2c] sm:$0xf]
      %v203 = vld [vmem:[%s1 + $0x30] sm:$0xf]
      %v204 = vld [vmem:[%s1 + $0x34] sm:$0xf]
      %v205 = vld [vmem:[%s1 + $0x38] sm:$0xf]
      %v206 = vld [vmem:[%s1 + $0x3c] sm:$0xf]
      %v207 = vld [vmem:[%s2] sm:$0x1]
      %v209 = vlaneseq
      %v210 = vshrl.u32 %v209, 7
      %v211 = vsub.s32 0, %v210
      %v212 = vrot.slane %v207, %v211
      %v230 = vunpack.c.l.b16 %v175
      %v231 = vunpack.c.l.b16 %v176
      %v232 = vunpack.c.l.b16 %v177
      %v233 = vunpack.c.l.b16 %v178
      %v234 = vunpack.c.l.b16 %v179
      %v235 = vunpack.c.l.b16 %v180
      %v236 = vunpack.c.l.b16 %v181
      %v237 = vunpack.c.l.b16 %v182
      %v238 = vunpack.c.l.b16 %v183
      %v239 = vunpack.c.l.b16 %v184
      %v240 = vunpack.c.l.b16 %v185
      %v241 = vunpack.c.l.b16 %v186
      %v242 = vunpack.c.l.b16 %v187
      %v243 = vunpack.c.l.b16 %v188
      %v244 = vunpack.c.l.b16 %v189
      %v245 = vunpack.c.l.b16 %v190
      %v246 = vpack.c.b16 %v231, %v230
      %v247 = vpack.c.b16 %v233, %v232
      %v248 = vpack.c.b16 %v235, %v234
      %v249 = vpack.c.b16 %v237, %v236
      %v250 = vpack.c.b16 %v239, %v238
      %v251 = vpack.c.b16 %v241, %v240
      %v252 = vpack.c.b16 %v243, %v242
      %v253 = vpack.c.b16 %v245, %v244
      %v278 = vunpack.c.l.b16 %v191
      %v279 = vunpack.c.l.b16 %v192
      %v280 = vunpack.c.l.b16 %v193
      %v281 = vunpack.c.l.b16 %v194
      %v282 = vunpack.c.l.b16 %v195
      %v283 = vunpack.c.l.b16 %v196
      %v284 = vunpack.c.l.b16 %v197
      %v285 = vunpack.c.l.b16 %v198
      %v286 = vunpack.c.l.b16 %v199
      %v287 = vunpack.c.l.b16 %v200
      %v288 = vunpack.c.l.b16 %v201
      %v289 = vunpack.c.l.b16 %v202
      %v290 = vunpack.c.l.b16 %v203
      %v291 = vunpack.c.l.b16 %v204
      %v292 = vunpack.c.l.b16 %v205
      %v293 = vunpack.c.l.b16 %v206
      %v294 = vpack.c.b16 %v279, %v278
      %v295 = vpack.c.b16 %v281, %v280
      %v296 = vpack.c.b16 %v283, %v282
      %v297 = vpack.c.b16 %v285, %v284
      %v298 = vpack.c.b16 %v287, %v286
      %v299 = vpack.c.b16 %v289, %v288
      %v300 = vpack.c.b16 %v291, %v290
      %v301 = vpack.c.b16 %v293, %v292
      %310 = vmatprep.subr.bf16.mxu0 0
      %311 = vmatpush1.bf16.msra.mxu0 %v294
      %312 = vmatprep.subr.bf16.mxu0 0
      %313 = vmatpush1.bf16.msra.mxu0 %v295
      %314 = vmatprep.subr.bf16.mxu0 0
      %315 = vmatpush1.bf16.msra.mxu0 %v296
      %316 = vmatprep.subr.bf16.mxu0 0
      %317 = vmatpush1.bf16.msra.mxu0 %v297
      %318 = vmatprep.subr.bf16.mxu0 0
      %319 = vmatpush1.bf16.msra.mxu0 %v298
      %320 = vmatprep.subr.bf16.mxu0 0
      %321 = vmatpush1.bf16.msra.mxu0 %v299
      %322 = vmatprep.subr.bf16.mxu0 0
      %323 = vmatpush1.bf16.msra.mxu0 %v300
      %324 = vmatprep.subr.bf16.mxu0 0
      %325 = vmatpush1.bf16.msra.mxu0 %v301
      %326 = vmatprep.subr.bf16.mxu0 0
      %327 = vmatpush1.bf16.msra.mxu0 0
      %328 = vmatprep.subr.bf16.mxu0 0
      %329 = vmatpush1.bf16.msra.mxu0 0
      %330 = vmatprep.subr.bf16.mxu0 0
      %331 = vmatpush1.bf16.msra.mxu0 0
      %332 = vmatprep.subr.bf16.mxu0 0
      %333 = vmatpush1.bf16.msra.mxu0 0
      %334 = vmatprep.subr.bf16.mxu0 0
      %335 = vmatpush1.bf16.msra.mxu0 0
      %336 = vmatprep.subr.bf16.mxu0 0
      %337 = vmatpush1.bf16.msra.mxu0 0
      %338 = vmatprep.subr.bf16.mxu0 0
      %339 = vmatpush1.bf16.msra.mxu0 0
      %340 = vmatprep.subr.bf16.mxu0 0
      %341 = vmatpush1.bf16.msra.mxu0 0
      %342 = vmatprep.mubr.bf16.mxu0 0
      %343 = vmatmul.mubr.bf16.gmra.mrb[0].mxu0 %v246
      %v344 = vpop.f32.mrb[0].mxu0
      %v345 = vadd.f32 %v212, %v344
      %v346 = vpop.f32.mrb[0].mxu0
      %v347 = vpop.f32.mrb[0].mxu0
      %v348 = vadd.f32 %v212, %v347
      %v349 = vpop.f32.mrb[0].mxu0
      %350 = vmatprep.mubr.bf16.mxu0 0
      %351 = vmatmul.mubr.bf16.gmra.mrb[0].mxu0 %v247
      %v352 = vpop.f32.mrb[0].mxu0
      %v353 = vadd.f32 %v212, %v352
      %v354 = vpop.f32.mrb[0].mxu0
      %v355 = vpop.f32.mrb[0].mxu0
      %v356 = vadd.f32 %v212, %v355
      %v357 = vpop.f32.mrb[0].mxu0
      %358 = vmatprep.mubr.bf16.mxu0 0
      %359 = vmatmul.mubr.bf16.gmra.mrb[0].mxu0 %v248
      %v360 = vpop.f32.mrb[0].mxu0
      %v361 = vadd.f32 %v212, %v360
      %v362 = vpop.f32.mrb[0].mxu0
      %v363 = vpop.f32.mrb[0].mxu0
      %v364 = vadd.f32 %v212, %v363
      %v365 = vpop.f32.mrb[0].mxu0
      %366 = vmatprep.mubr.bf16.mxu0 0
      %367 = vmatmul.mubr.bf16.gmra.mrb[0].mxu0 %v249
      %v368 = vpop.f32.mrb[0].mxu0
      %v369 = vadd.f32 %v212, %v368
      %v370 = vpop.f32.mrb[0].mxu0
      %v371 = vpop.f32.mrb[0].mxu0
      %v372 = vadd.f32 %v212, %v371
      %v373 = vpop.f32.mrb[0].mxu0
      %374 = vmatprep.mubr.bf16.mxu0 0
      %375 = vmatmul.mubr.bf16.gmra.mrb[0].mxu0 %v250
      %v376 = vpop.f32.mrb[0].mxu0
      %v377 = vadd.f32 %v212, %v376
      %v378 = vpop.f32.mrb[0].mxu0
      %v379 = vpop.f32.mrb[0].mxu0
      %v380 = vadd.f32 %v212, %v379
      %v381 = vpop.f32.mrb[0].mxu0
      %382 = vmatprep.mubr.bf16.mxu0 0
      %383 = vmatmul.mubr.bf16.gmra.mrb[0].mxu0 %v251
      %v384 = vpop.f32.mrb[0].mxu0
      %v385 = vadd.f32 %v212, %v384
      %v386 = vpop.f32.mrb[0].mxu0
      %v387 = vpop.f32.mrb[0].mxu0
      %v388 = vadd.f32 %v212, %v387
      %v389 = vpop.f32.mrb[0].mxu0
      %390 = vmatprep.mubr.bf16.mxu0 0
      %391 = vmatmul.mubr.bf16.gmra.mrb[0].mxu0 %v252
      %v392 = vpop.f32.mrb[0].mxu0
      %v393 = vadd.f32 %v212, %v392
      %v394 = vpop.f32.mrb[0].mxu0
      %v395 = vpop.f32.mrb[0].mxu0
      %v396 = vadd.f32 %v212, %v395
      %v397 = vpop.f32.mrb[0].mxu0
      %398 = vmatprep.mubr.bf16.mxu0 0
      %399 = vmatmul.mubr.bf16.gmra.mrb[0].mxu0 %v253
      %v400 = vpop.f32.mrb[0].mxu0
      %v401 = vadd.f32 %v212, %v400
      %v402 = vpop.f32.mrb[0].mxu0
      %v403 = vpop.f32.mrb[0].mxu0
      %v404 = vadd.f32 %v212, %v403
      %v405 = vpop.f32.mrb[0].mxu0
      %406 = vdwg.mxu0
      %v407 = vmax.f32 %v345, 0.0
      %v408 = vmax.f32 %v348, 0.0
      %v409 = vmax.f32 %v353, 0.0
      %v410 = vmax.f32 %v356, 0.0
      %v411 = vmax.f32 %v361, 0.0
      %v412 = vmax.f32 %v364, 0.0
      %v413 = vmax.f32 %v369, 0.0
      %v414 = vmax.f32 %v372, 0.0
      %v415 = vmax.f32 %v377, 0.0
      %v416 = vmax.f32 %v380, 0.0
      %v417 = vmax.f32 %v385, 0.0
      %v418 = vmax.f32 %v388, 0.0
      %v419 = vmax.f32 %v393, 0.0
      %v420 = vmax.f32 %v396, 0.0
      %v421 = vmax.f32 %v401, 0.0
      %v422 = vmax.f32 %v404, 0.0
      %v423 = vpack.c.bf16 %v408, %v407
      %v424 = vpack.c.bf16 %v410, %v409
      %v425 = vpack.c.bf16 %v412, %v411
      %v426 = vpack.c.bf16 %v414, %v413
      %v427 = vpack.c.bf16 %v416, %v415
      %v428 = vpack.c.bf16 %v418, %v417
      %v429 = vpack.c.bf16 %v420, %v419
      %v430 = vpack.c.bf16 %v422, %v421
      %v439 = vunpack.c.l.b16 %v423
      %v440 = vunpack.c.h.b16 %v423
      %v441 = vunpack.c.l.b16 %v424
      %v442 = vunpack.c.h.b16 %v424
      %v443 = vunpack.c.l.b16 %v425
      %v444 = vunpack.c.h.b16 %v425
      %v445 = vunpack.c.l.b16 %v426
      %v446 = vunpack.c.h.b16 %v426
      %v447 = vunpack.c.l.b16 %v427
      %v448 = vunpack.c.h.b16 %v427
      %v449 = vunpack.c.l.b16 %v428
      %v450 = vunpack.c.h.b16 %v428
      %v451 = vunpack.c.l.b16 %v429
      %v452 = vunpack.c.h.b16 %v429
      %v453 = vunpack.c.l.b16 %v430
      %v454 = vunpack.c.h.b16 %v430
      %v455 = vpack.c.b16 %v439, %v439
      %v456 = vpack.c.b16 %v440, %v440
      %v457 = vpack.c.b16 %v441, %v441
      %v458 = vpack.c.b16 %v442, %v442
      %v459 = vpack.c.b16 %v443, %v443
      %v460 = vpack.c.b16 %v444, %v444
      %v461 = vpack.c.b16 %v445, %v445
      %v462 = vpack.c.b16 %v446, %v446
      %v463 = vpack.c.b16 %v447, %v447
      %v464 = vpack.c.b16 %v448, %v448
      %v465 = vpack.c.b16 %v449, %v449
      %v466 = vpack.c.b16 %v450, %v450
      %v467 = vpack.c.b16 %v451, %v451
      %v468 = vpack.c.b16 %v452, %v452
      %v469 = vpack.c.b16 %v453, %v453
      %v470 = vpack.c.b16 %v454, %v454
      %487 = vst [vmem:[%s172] sm:$0xf] %v455
      %488 = vst [vmem:[%s172 + $0x4] sm:$0xf] %v456
      %489 = vst [vmem:[%s172 + $0x8] sm:$0xf] %v457
      %490 = vst [vmem:[%s172 + $0xc] sm:$0xf] %v458
      %491 = vst [vmem:[%s172 + $0x10] sm:$0xf] %v459
      %492 = vst [vmem:[%s172 + $0x14] sm:$0xf] %v460
      %493 = vst [vmem:[%s172 + $0x18] sm:$0xf] %v461
      %494 = vst [vmem:[%s172 + $0x1c] sm:$0xf] %v462
      %495 = vst [vmem:[%s172 + $0x20] sm:$0xf] %v463
      %496 = vst [vmem:[%s172 + $0x24] sm:$0xf] %v464
      %497 = vst [vmem:[%s172 + $0x28] sm:$0xf] %v465
      %498 = vst [vmem:[%s172 + $0x2c] sm:$0xf] %v466
      %499 = vst [vmem:[%s172 + $0x30] sm:$0xf] %v467
      %500 = vst [vmem:[%s172 + $0x34] sm:$0xf] %v468
      %501 = vst [vmem:[%s172 + $0x38] sm:$0xf] %v469
      %502 = vst [vmem:[%s172 + $0x3c] sm:$0xf] %v470
      %s503 = smul.u32 16, %s14
      %p504 = scmp.lt.s32.totalorder %s503, 31
      %s505 = scalar_select %p504, %s503, 31
      %s506 = smul.addr %s505, 4
      %s507 = scalar_lea.vmem %s3, %s506
      // Predicated region
      $region33: #{jump_forward_device.46} parent=31 // pred_check
        %p508 = pneg %p100
      $region34: #{jump_forward_device.46} parent=31 // pred_check_branch
        %510 = sbr.rel (%p508) target = $region36
      $region35: #{jump_forward_device.46} parent=31 // pred_region
        %s511 = smul.u32 16, %s14
      $region36: #{jump_forward_device.46} parent=31 // pred_fallthru
        _
    $region32: #{jump_forward_device.46} parent=5 // pred_fallthru
      _
    %p512 = scmp.le.s32.totalorder 2, %s9
    // Predicated region
    $region37: #{jump_forward_device.46} parent=5 // pred_check
      %p513 = pneg %p512
    $region38: #{jump_forward_device.46} parent=5 // pred_check_branch
      %515 = sbr.rel (%p513) target = $region40
    $region39: #{jump_forward_device.46} parent=5 // pred_region
      %s516 = ssub.s32 %s9, 2
      // Predicated region
      $region41: #{jump_forward_device.46} parent=39 // pred_check
        %p517 = pneg %p106
      $region42: #{jump_forward_device.46} parent=39 // pred_check_branch
        %519 = sbr.rel (%p517) target = $region44
      $region43: #{jump_forward_device.46} parent=39 // pred_region
        %s520 = smul.u32 16, %s15
        %p521 = scmp.lt.s32.totalorder %s520, 31
        %s522 = scalar_select %p521, %s520, 31
        %s523 = smul.addr %s522, 4
        %s524 = scalar_lea.vmem %s3, %s523
      $region44: #{jump_forward_device.46} parent=39 // pred_fallthru
        _
    $region40: #{jump_forward_device.46} parent=5 // pred_fallthru
      _
  $region6: #{jump_forward_device.46} parent=0 // loop_footer
    %s13 = sadd.s32 1, %s9
  $region7: #{jump_forward_device.46} parent=0 // loop_footer_branch
    %8 = sbr.rel target = $region3
  $region8: #{jump_forward_device.46} parent=0 // loop_exit
    _

// kernel: jump_forward_device.47
$region0: #{jump_forward_device.47}
  #allocation0 [shape = 'u32[]', space=smem, size = 0x4, offset = 0x4, fixed_abs, tag = 'smem constant byte address 0x4 - core index']
  #allocation1 [shape = 'u32[144,128]{1,0:T(1,128)}', space=vmem, size = 0x12000, scoped, tag = 'internal scratch']
  %s0 = inlined_call_operand.vmem [shape: bf16[64,640], index: 0, kind: input, shape index: {}]
  %s1 = inlined_call_operand.vmem [shape: bf16[640,128], index: 1, kind: input, shape index: {}]
  %s2 = inlined_call_operand.vmem [shape: f32[1,128], index: 2, kind: input, shape index: {}]
  %s3 = inlined_call_operand.vmem [shape: bf16[64,128], index: 3, kind: output, shape index: {}]
  %s4 = sld [smem:[#allocation0]]
  $region22: #{jump_forward_device.47} parent=0
    _
  %s6 = ssub.s32 1, %s4
  %s7 = scalar_select 0, %s6, %s4
  // Predicated region
  $region2: #{jump_forward_device.47} parent=0 // pred_check
    _
  $region3: #{jump_forward_device.47} parent=0 // pred_check_branch
    %9 = sbr.rel (0) target = $region5
  $region4: #{jump_forward_device.47} parent=0 // pred_region
    _
  $region5: #{jump_forward_device.47} parent=0 // pred_fallthru
    _
  // Predicated region
  $region6: #{jump_forward_device.47} parent=0 // pred_check
    _
  $region7: #{jump_forward_device.47} parent=0 // pred_check_branch
    %11 = sbr.rel (0) target = $region9
  $region8: #{jump_forward_device.47} parent=0 // pred_region
    _
  $region9: #{jump_forward_device.47} parent=0 // pred_fallthru
    _
  // Predicated region
  $region10: #{jump_forward_device.47} parent=0 // pred_check
    _
  $region11: #{jump_forward_device.47} parent=0 // pred_check_branch
    %13 = sbr.rel (0) target = $region13
  $region12: #{jump_forward_device.47} parent=0 // pred_region
    _
  $region13: #{jump_forward_device.47} parent=0 // pred_fallthru
    _
  %v15 = vld [vmem:[%s0] sm:$0xff]
  %v16 = vld [vmem:[%s0 + $0x8] sm:$0xff]
  %v17 = vld [vmem:[%s0 + $0x10] sm:$0xf]
  %v18 = vld [vmem:[%s0 + $0x14] sm:$0xff]
  %v19 = vld [vmem:[%s0 + $0x1c] sm:$0xff]
  %v20 = vld [vmem:[%s0 + $0x24] sm:$0xf]
  %v21 = vld [vmem:[%s0 + $0x28] sm:$0xff]
  %v22 = vld [vmem:[%s0 + $0x30] sm:$0xff]
  %v23 = vld [vmem:[%s0 + $0x38] sm:$0xf]
  %v24 = vld [vmem:[%s0 + $0x3c] sm:$0xff]
  %v25 = vld [vmem:[%s0 + $0x44] sm:$0xff]
  %v26 = vld [vmem:[%s0 + $0x4c] sm:$0xf]
  %v27 = vld [vmem:[%s0 + $0x50] sm:$0xff]
  %v28 = vld [vmem:[%s0 + $0x58] sm:$0xff]
  %v29 = vld [vmem:[%s0 + $0x60] sm:$0xf]
  %v30 = vld [vmem:[%s0 + $0x64] sm:$0xff]
  %v31 = vld [vmem:[%s0 + $0x6c] sm:$0xff]
  %v32 = vld [vmem:[%s0 + $0x74] sm:$0xf]
  %v33 = vld [vmem:[%s0 + $0x78] sm:$0xff]
  %v34 = vld [vmem:[%s0 + $0x80] sm:$0xff]
  %v35 = vld [vmem:[%s0 + $0x88] sm:$0xf]
  %v36 = vld [vmem:[%s0 + $0x8c] sm:$0xff]
  %v37 = vld [vmem:[%s0 + $0x94] sm:$0xff]
  %v38 = vld [vmem:[%s0 + $0x9c] sm:$0xf]
  %v39 = vld [vmem:[%s1] sm:$0xf]
  %v40 = vld [vmem:[%s1 + $0x4] sm:$0xf]
  %v41 = vld [vmem:[%s1 + $0x8] sm:$0xf]
  %v42 = vld [vmem:[%s1 + $0xc] sm:$0xf]
  %v43 = vld [vmem:[%s1 + $0x10] sm:$0xf]
  %v44 = vld [vmem:[%s1 + $0x14] sm:$0xf]
  %v45 = vld [vmem:[%s1 + $0x18] sm:$0xf]
  %v46 = vld [vmem:[%s1 + $0x1c] sm:$0xf]
  %v47 = vld [vmem:[%s1 + $0x20] sm:$0xf]
  %v48 = vld [vmem:[%s1 + $0x24] sm:$0xf]
  %v49 = vld [vmem:[%s1 + $0x28] sm:$0xf]
  %v50 = vld [vmem:[%s1 + $0x2c] sm:$0xf]
  %v51 = vld [vmem:[%s1 + $0x30] sm:$0xf]
  %v52 = vld [vmem:[%s1 + $0x34] sm:$0xf]
  %v53 = vld [vmem:[%s1 + $0x38] sm:$0xf]
  %v54 = vld [vmem:[%s1 + $0x3c] sm:$0xf]
  %v55 = vld [vmem:[%s1 + $0x40] sm:$0xf]
  %v56 = vld [vmem:[%s1 + $0x44] sm:$0xf]
  %v57 = vld [vmem:[%s1 + $0x48] sm:$0xf]
  %v58 = vld [vmem:[%s1 + $0x4c] sm:$0xf]
  %v59 = vld [vmem:[%s1 + $0x50] sm:$0xf]
  %v60 = vld [vmem:[%s1 + $0x54] sm:$0xf]
  %v61 = vld [vmem:[%s1 + $0x58] sm:$0xf]
  %v62 = vld [vmem:[%s1 + $0x5c] sm:$0xf]
  %v63 = vld [vmem:[%s1 + $0x60] sm:$0xf]
  %v64 = vld [vmem:[%s1 + $0x64] sm:$0xf]
  %v65 = vld [vmem:[%s1 + $0x68] sm:$0xf]
  %v66 = vld [vmem:[%s1 + $0x6c] sm:$0xf]
  %v67 = vld [vmem:[%s1 + $0x70] sm:$0xf]
  %v68 = vld [vmem:[%s1 + $0x74] sm:$0xf]
  %v69 = vld [vmem:[%s1 + $0x78] sm:$0xf]
  %v70 = vld [vmem:[%s1 + $0x7c] sm:$0xf]
  %v71 = vld [vmem:[%s1 + $0x80] sm:$0xf]
  %v72 = vld [vmem:[%s1 + $0x84] sm:$0xf]
  %v73 = vld [vmem:[%s1 + $0x88] sm:$0xf]
  %v74 = vld [vmem:[%s1 + $0x8c] sm:$0xf]
  %v75 = vld [vmem:[%s1 + $0x90] sm:$0xf]
  %v76 = vld [vmem:[%s1 + $0x94] sm:$0xf]
  %v77 = vld [vmem:[%s1 + $0x98] sm:$0xf]
  %v78 = vld [vmem:[%s1 + $0x9c] sm:$0xf]
  %v79 = vld [vmem:[%s1 + $0xa0] sm:$0xf]
  %v80 = vld [vmem:[%s1 + $0xa4] sm:$0xf]
  %v81 = vld [vmem:[%s1 + $0xa8] sm:$0xf]
  %v82 = vld [vmem:[%s1 + $0xac] sm:$0xf]
  %v83 = vld [vmem:[%s1 + $0xb0] sm:$0xf]
  %v84 = vld [vmem:[%s1 + $0xb4] sm:$0xf]
  %v85 = vld [vmem:[%s1 + $0xb8] sm:$0xf]
  %v86 = vld [vmem:[%s1 + $0xbc] sm:$0xf]
  %v87 = vld [vmem:[%s1 + $0xc0] sm:$0xf]
  %v88 = vld [vmem:[%s1 + $0xc4] sm:$0xf]
  %v89 = vld [vmem:[%s1 + $0xc8] sm:$0xf]
  %v90 = vld [vmem:[%s1 + $0xcc] sm:$0xf]
  %v91 = vld [vmem:[%s1 + $0xd0] sm:$0xf]
  %v92 = vld [vmem:[%s1 + $0xd4] sm:$0xf]
  %v93 = vld [vmem:[%s1 + $0xd8] sm:$0xf]
  %v94 = vld [vmem:[%s1 + $0xdc] sm:$0xf]
  %v95 = vld [vmem:[%s1 + $0xe0] sm:$0xf]
  %v96 = vld [vmem:[%s1 + $0xe4] sm:$0xf]
  %v97 = vld [vmem:[%s1 + $0xe8] sm:$0xf]
  %v98 = vld [vmem:[%s1 + $0xec] sm:$0xf]
  %v99 = vld [vmem:[%s1 + $0xf0] sm:$0xf]
  %v100 = vld [vmem:[%s1 + $0xf4] sm:$0xf]
  %v101 = vld [vmem:[%s1 + $0xf8] sm:$0xf]
  %v102 = vld [vmem:[%s1 + $0xfc] sm:$0xf]
  %v103 = vld [vmem:[%s1 + $0x100] sm:$0xf]
  %v104 = vld [vmem:[%s1 + $0x104] sm:$0xf]
  %v105 = vld [vmem:[%s1 + $0x108] sm:$0xf]
  %v106 = vld [vmem:[%s1 + $0x10c] sm:$0xf]
  %v107 = vld [vmem:[%s1 + $0x110] sm:$0xf]
  %v108 = vld [vmem:[%s1 + $0x114] sm:$0xf]
  %v109 = vld [vmem:[%s1 + $0x118] sm:$0xf]
  %v110 = vld [vmem:[%s1 + $0x11c] sm:$0xf]
  %v111 = vld [vmem:[%s1 + $0x120] sm:$0xf]
  %v112 = vld [vmem:[%s1 + $0x124] sm:$0xf]
  %v113 = vld [vmem:[%s1 + $0x128] sm:$0xf]
  %v114 = vld [vmem:[%s1 + $0x12c] sm:$0xf]
  %v115 = vld [vmem:[%s1 + $0x130] sm:$0xf]
  %v116 = vld [vmem:[%s1 + $0x134] sm:$0xf]
  %v117 = vld [vmem:[%s1 + $0x138] sm:$0xf]
  %v118 = vld [vmem:[%s1 + $0x13c] sm:$0xf]
  %v119 = vld [vmem:[%s2] sm:$0x1]
  %v121 = vlaneseq
  %v122 = vshrl.u32 %v121, 7
  %v123 = vsub.s32 0, %v122
  %v124 = vrot.slane %v119, %v123
  %v150 = vunpack.c.l.b16 %v15
  %v151 = vunpack.c.h.b16 %v15
  %v152 = vunpack.c.l.b16 %v16
  %v153 = vunpack.c.h.b16 %v16
  %v154 = vunpack.c.l.b16 %v17
  %v155 = vunpack.c.l.b16 %v18
  %v156 = vunpack.c.h.b16 %v18
  %v157 = vunpack.c.l.b16 %v19
  %v158 = vunpack.c.h.b16 %v19
  %v159 = vunpack.c.l.b16 %v20
  %v160 = vunpack.c.l.b16 %v21
  %v161 = vunpack.c.h.b16 %v21
  %v162 = vunpack.c.l.b16 %v22
  %v163 = vunpack.c.h.b16 %v22
  %v164 = vunpack.c.l.b16 %v23
  %v165 = vunpack.c.l.b16 %v24
  %v166 = vunpack.c.h.b16 %v24
  %v167 = vunpack.c.l.b16 %v25
  %v168 = vunpack.c.h.b16 %v25
  %v169 = vunpack.c.l.b16 %v26
  %v170 = vunpack.c.l.b16 %v27
  %v171 = vunpack.c.h.b16 %v27
  %v172 = vunpack.c.l.b16 %v28
  %v173 = vunpack.c.h.b16 %v28
  %v174 = vunpack.c.l.b16 %v29
  %v175 = vunpack.c.l.b16 %v30
  %v176 = vunpack.c.h.b16 %v30
  %v177 = vunpack.c.l.b16 %v31
  %v178 = vunpack.c.h.b16 %v31
  %v179 = vunpack.c.l.b16 %v32
  %v180 = vunpack.c.l.b16 %v33
  %v181 = vunpack.c.h.b16 %v33
  %v182 = vunpack.c.l.b16 %v34
  %v183 = vunpack.c.h.b16 %v34
  %v184 = vunpack.c.l.b16 %v35
  %v185 = vunpack.c.l.b16 %v36
  %v186 = vunpack.c.h.b16 %v36
  %v187 = vunpack.c.l.b16 %v37
  %v188 = vunpack.c.h.b16 %v37
  %v189 = vunpack.c.l.b16 %v38
  %v190 = vpack.c.b16 %v155, %v150
  %v191 = vpack.c.b16 %v156, %v151
  %v192 = vpack.c.b16 %v157, %v152
  %v193 = vpack.c.b16 %v158, %v153
  %v194 = vpack.c.b16 %v159, %v154
  %v195 = vpack.c.b16 %v165, %v160
  %v196 = vpack.c.b16 %v166, %v161
  %v197 = vpack.c.b16 %v167, %v162
  %v198 = vpack.c.b16 %v168, %v163
  %v199 = vpack.c.b16 %v169, %v164
  %v200 = vpack.c.b16 %v175, %v170
  %v201 = vpack.c.b16 %v176, %v171
  %v202 = vpack.c.b16 %v177, %v172
  %v203 = vpack.c.b16 %v178, %v173
  %v204 = vpack.c.b16 %v179, %v174
  %v205 = vpack.c.b16 %v185, %v180
  %v206 = vpack.c.b16 %v186, %v181
  %v207 = vpack.c.b16 %v187, %v182
  %v208 = vpack.c.b16 %v188, %v183
  %v209 = vpack.c.b16 %v189, %v184
  %v310 = vunpack.c.l.b16 %v39
  %v311 = vunpack.c.l.b16 %v40
  %v312 = vunpack.c.l.b16 %v41
  %v313 = vunpack.c.l.b16 %v42
  %v314 = vunpack.c.l.b16 %v43
  %v315 = vunpack.c.l.b16 %v44
  %v316 = vunpack.c.l.b16 %v45
  %v317 = vunpack.c.l.b16 %v46
  %v318 = vunpack.c.l.b16 %v47
  %v319 = vunpack.c.l.b16 %v48
  %v320 = vunpack.c.l.b16 %v49
  %v321 = vunpack.c.l.b16 %v50
  %v322 = vunpack.c.l.b16 %v51
  %v323 = vunpack.c.l.b16 %v52
  %v324 = vunpack.c.l.b16 %v53
  %v325 = vunpack.c.l.b16 %v54
  %v326 = vunpack.c.l.b16 %v55
  %v327 = vunpack.c.l.b16 %v56
  %v328 = vunpack.c.l.b16 %v57
  %v329 = vunpack.c.l.b16 %v58
  %v330 = vunpack.c.l.b16 %v59
  %v331 = vunpack.c.l.b16 %v60
  %v332 = vunpack.c.l.b16 %v61
  %v333 = vunpack.c.l.b16 %v62
  %v334 = vunpack.c.l.b16 %v63
  %v335 = vunpack.c.l.b16 %v64
  %v336 = vunpack.c.l.b16 %v65
  %v337 = vunpack.c.l.b16 %v66
  %v338 = vunpack.c.l.b16 %v67
  %v339 = vunpack.c.l.b16 %v68
  %v340 = vunpack.c.l.b16 %v69
  %v341 = vunpack.c.l.b16 %v70
  %v342 = vunpack.c.l.b16 %v71
  %v343 = vunpack.c.l.b16 %v72
  %v344 = vunpack.c.l.b16 %v73
  %v345 = vunpack.c.l.b16 %v74
  %v346 = vunpack.c.l.b16 %v75
  %v347 = vunpack.c.l.b16 %v76
  %v348 = vunpack.c.l.b16 %v77
  %v349 = vunpack.c.l.b16 %v78
  %v350 = vunpack.c.l.b16 %v79
  %v351 = vunpack.c.l.b16 %v80
  %v352 = vunpack.c.l.b16 %v81
  %v353 = vunpack.c.l.b16 %v82
  %v354 = vunpack.c.l.b16 %v83
  %v355 = vunpack.c.l.b16 %v84
  %v356 = vunpack.c.l.b16 %v85
  %v357 = vunpack.c.l.b16 %v86
  %v358 = vunpack.c.l.b16 %v87
  %v359 = vunpack.c.l.b16 %v88
  %v360 = vunpack.c.l.b16 %v89
  %v361 = vunpack.c.l.b16 %v90
  %v362 = vunpack.c.l.b16 %v91
  %v363 = vunpack.c.l.b16 %v92
  %v364 = vunpack.c.l.b16 %v93
  %v365 = vunpack.c.l.b16 %v94
  %v366 = vunpack.c.l.b16 %v95
  %v367 = vunpack.c.l.b16 %v96
  %v368 = vunpack.c.l.b16 %v97
  %v369 = vunpack.c.l.b16 %v98
  %v370 = vunpack.c.l.b16 %v99
  %v371 = vunpack.c.l.b16 %v100
  %v372 = vunpack.c.l.b16 %v101
  %v373 = vunpack.c.l.b16 %v102
  %v374 = vunpack.c.l.b16 %v103
  %v375 = vunpack.c.l.b16 %v104
  %v376 = vunpack.c.l.b16 %v105
  %v377 = vunpack.c.l.b16 %v106
  %v378 = vunpack.c.l.b16 %v107
  %v379 = vunpack.c.l.b16 %v108
  %v380 = vunpack.c.l.b16 %v109
  %v381 = vunpack.c.l.b16 %v110
  %v382 = vunpack.c.l.b16 %v111
  %v383 = vunpack.c.l.b16 %v112
  %v384 = vunpack.c.l.b16 %v113
  %v385 = vunpack.c.l.b16 %v114
  %v386 = vunpack.c.l.b16 %v115
  %v387 = vunpack.c.l.b16 %v116
  %v388 = vunpack.c.l.b16 %v117
  %v389 = vunpack.c.l.b16 %v118
  %v390 = vpack.c.b16 %v311, %v310
  %v391 = vpack.c.b16 %v313, %v312
  %v392 = vpack.c.b16 %v315, %v314
  %v393 = vpack.c.b16 %v317, %v316
  %v394 = vpack.c.b16 %v319, %v318
  %v395 = vpack.c.b16 %v321, %v320
  %v396 = vpack.c.b16 %v323, %v322
  %v397 = vpack.c.b16 %v325, %v324
  %v398 = vpack.c.b16 %v327, %v326
  %v399 = vpack.c.b16 %v329, %v328
  %v400 = vpack.c.b16 %v331, %v330
  %v401 = vpack.c.b16 %v333, %v332
  %v402 = vpack.c.b16 %v335, %v334
  %v403 = vpack.c.b16 %v337, %v336
  %v404 = vpack.c.b16 %v339, %v338
  %v405 = vpack.c.b16 %v341, %v340
  %v406 = vpack.c.b16 %v343, %v342
  %v407 = vpack.c.b16 %v345, %v344
  %v408 = vpack.c.b16 %v347, %v346
  %v409 = vpack.c.b16 %v349, %v348
  %v410 = vpack.c.b16 %v351, %v350
  %v411 = vpack.c.b16 %v353, %v352
  %v412 = vpack.c.b16 %v355, %v354
  %v413 = vpack.c.b16 %v357, %v356
  %v414 = vpack.c.b16 %v359, %v358
  %v415 = vpack.c.b16 %v361, %v360
  %v416 = vpack.c.b16 %v363, %v362
  %v417 = vpack.c.b16 %v365, %v364
  %v418 = vpack.c.b16 %v367, %v366
  %v419 = vpack.c.b16 %v369, %v368
  %v420 = vpack.c.b16 %v371, %v370
  %v421 = vpack.c.b16 %v373, %v372
  %v422 = vpack.c.b16 %v375, %v374
  %v423 = vpack.c.b16 %v377, %v376
  %v424 = vpack.c.b16 %v379, %v378
  %v425 = vpack.c.b16 %v381, %v380
  %v426 = vpack.c.b16 %v383, %v382
  %v427 = vpack.c.b16 %v385, %v384
  %v428 = vpack.c.b16 %v387, %v386
  %v429 = vpack.c.b16 %v389, %v388
  %470 = vmatprep.subr.bf16.mxu0 0
  %471 = vmatpush1.bf16.msra.mxu0 %v390
  %472 = vmatprep.subr.bf16.mxu0 0
  %473 = vmatpush1.bf16.msra.mxu0 %v391
  %474 = vmatprep.subr.bf16.mxu0 0
  %475 = vmatpush1.bf16.msra.mxu0 %v392
  %476 = vmatprep.subr.bf16.mxu0 0
  %477 = vmatpush1.bf16.msra.mxu0 %v393
  %478 = vmatprep.subr.bf16.mxu0 0
  %479 = vmatpush1.bf16.msra.mxu0 %v394
  %480 = vmatprep.subr.bf16.mxu0 0
  %481 = vmatpush1.bf16.msra.mxu0 %v395
  %482 = vmatprep.subr.bf16.mxu0 0
  %483 = vmatpush1.bf16.msra.mxu0 %v396
  %484 = vmatprep.subr.bf16.mxu0 0
  %485 = vmatpush1.bf16.msra.mxu0 %v397
  %486 = vmatprep.subr.bf16.mxu0 0
  %487 = vmatpush1.bf16.msra.mxu0 %v398
  %488 = vmatprep.subr.bf16.mxu0 0
  %489 = vmatpush1.bf16.msra.mxu0 %v399
  %490 = vmatprep.subr.bf16.mxu0 0
  %491 = vmatpush1.bf16.msra.mxu0 %v400
  %492 = vmatprep.subr.bf16.mxu0 0
  %493 = vmatpush1.bf16.msra.mxu0 %v401
  %494 = vmatprep.subr.bf16.mxu0 0
  %495 = vmatpush1.bf16.msra.mxu0 %v402
  %496 = vmatprep.subr.bf16.mxu0 0
  %497 = vmatpush1.bf16.msra.mxu0 %v403
  %498 = vmatprep.subr.bf16.mxu0 0
  %499 = vmatpush1.bf16.msra.mxu0 %v404
  %500 = vmatprep.subr.bf16.mxu0 0
  %501 = vmatpush1.bf16.msra.mxu0 %v405
  %502 = vmatprep.mubr.bf16.mxu0 %v191
  %503 = vmatmul.mubr.bf16.gmra.mrb[0].mxu0 %v190
  %v504 = vpop.f32.mrb[0].mxu0
  %v505 = vadd.f32 %v124, %v504
  %v506 = vpop.f32.mrb[0].mxu0
  %v507 = vpop.f32.mrb[0].mxu0
  %v508 = vadd.f32 %v124, %v507
  %v509 = vpop.f32.mrb[0].mxu0
  %510 = vmatprep.mubr.bf16.mxu0 %v196
  %511 = vmatmul.mubr.bf16.gmra.mrb[0].mxu0 %v195
  %v512 = vpop.f32.mrb[0].mxu0
  %v513 = vadd.f32 %v124, %v512
  %v514 = vpop.f32.mrb[0].mxu0
  %v515 = vpop.f32.mrb[0].mxu0
  %v516 = vadd.f32 %v124, %v515
  %v517 = vpop.f32.mrb[0].mxu0
  %518 = vmatprep.mubr.bf16.mxu0 %v201
  %519 = vmatmul.mubr.bf16.gmra.mrb[0].mxu0 %v200
  %v520 = vpop.f32.mrb[0].mxu0
  %v521 = vadd.f32 %v124, %v520
  %v522 = vpop.f32.mrb[0].mxu0
  %v523 = vpop.f32.mrb[0].mxu0
  %v524 = vadd.f32 %v124, %v523
  %v525 = vpop.f32.mrb[0].mxu0
  %526 = vmatprep.mubr.bf16.mxu0 %v206
  %527 = vmatmul.mubr.bf16.gmra.mrb[0].mxu0 %v205
  %v528 = vpop.f32.mrb[0].mxu0
  %v529 = vadd.f32 %v124, %v528
  %v530 = vpop.f32.mrb[0].mxu0
  %v531 = vpop.f32.mrb[0].mxu0
  %v532 = vadd.f32 %v124, %v531
  %v533 = vpop.f32.mrb[0].mxu0
  %534 = vdwg.mxu0
  %535 = vmatprep.subr.bf16.mxu0 0
  %536 = vmatpush1.bf16.msra.mxu0 %v406
  %537 = vmatprep.subr.bf16.mxu0 0
  %538 = vmatpush1.bf16.msra.mxu0 %v407
  %539 = vmatprep.subr.bf16.mxu0 0
  %540 = vmatpush1.bf16.msra.mxu0 %v408
  %541 = vmatprep.subr.bf16.mxu0 0
  %542 = vmatpush1.bf16.msra.mxu0 %v409
  %543 = vmatprep.subr.bf16.mxu0 0
  %544 = vmatpush1.bf16.msra.mxu0 %v410
  %545 = vmatprep.subr.bf16.mxu0 0
  %546 = vmatpush1.bf16.msra.mxu0 %v411
  %547 = vmatprep.subr.bf16.mxu0 0
  %548 = vmatpush1.bf16.msra.mxu0 %v412
  %549 = vmatprep.subr.bf16.mxu0 0
  %550 = vmatpush1.bf16.msra.mxu0 %v413
  %551 = vmatprep.subr.bf16.mxu0 0
  %552 = vmatpush1.bf16.msra.mxu0 %v414
  %553 = vmatprep.subr.bf16.mxu0 0
  %554 = vmatpush1.bf16.msra.mxu0 %v415
  %555 = vmatprep.subr.bf16.mxu0 0
  %556 = vmatpush1.bf16.msra.mxu0 %v416
  %557 = vmatprep.subr.bf16.mxu0 0
  %558 = vmatpush1.bf16.msra.mxu0 %v417
  %559 = vmatprep.subr.bf16.mxu0 0
  %560 = vmatpush1.bf16.msra.mxu0 %v418
  %561 = vmatprep.subr.bf16.mxu0 0
  %562 = vmatpush1.bf16.msra.mxu0 %v419
  %563 = vmatprep.subr.bf16.mxu0 0
  %564 = vmatpush1.bf16.msra.mxu0 %v420
  %565 = vmatprep.subr.bf16.mxu0 0
  %566 = vmatpush1.bf16.msra.mxu0 %v421
  %567 = vmatprep.mubr.bf16.mxu0 %v193
  %568 = vmatmul.mubr.bf16.gmra.mrb[0].mxu0 %v192
  %v569 = vpop.f32.mrb[0].mxu0
  %v570 = vadd.f32 %v505, %v569
  %v571 = vpop.f32.mrb[0].mxu0
  %v572 = vpop.f32.mrb[0].mxu0
  %v573 = vadd.f32 %v508, %v572
  %v574 = vpop.f32.mrb[0].mxu0
  %575 = vmatprep.mubr.bf16.mxu0 %v198
  %576 = vmatmul.mubr.bf16.gmra.mrb[0].mxu0 %v197
  %v577 = vpop.f32.mrb[0].mxu0
  %v578 = vadd.f32 %v513, %v577
  %v579 = vpop.f32.mrb[0].mxu0
  %v580 = vpop.f32.mrb[0].mxu0
  %v581 = vadd.f32 %v516, %v580
  %v582 = vpop.f32.mrb[0].mxu0
  %583 = vmatprep.mubr.bf16.mxu0 %v203
  %584 = vmatmul.mubr.bf16.gmra.mrb[0].mxu0 %v202
  %v585 = vpop.f32.mrb[0].mxu0
  %v586 = vadd.f32 %v521, %v585
  %v587 = vpop.f32.mrb[0].mxu0
  %v588 = vpop.f32.mrb[0].mxu0
  %v589 = vadd.f32 %v524, %v588
  %v590 = vpop.f32.mrb[0].mxu0
  %591 = vmatprep.mubr.bf16.mxu0 %v208
  %592 = vmatmul.mubr.bf16.gmra.mrb[0].mxu0 %v207
  %v593 = vpop.f32.mrb[0].mxu0
  %v594 = vadd.f32 %v529, %v593
  %v595 = vpop.f32.mrb[0].mxu0
  %v596 = vpop.f32.mrb[0].mxu0
  %v597 = vadd.f32 %v532, %v596
  %v598 = vpop.f32.mrb[0].mxu0
  %599 = vdwg.mxu0
  %600 = vmatprep.subr.bf16.mxu0 0
  %601 = vmatpush1.bf16.msra.mxu0 %v422
  %602 = vmatprep.subr.bf16.mxu0 0
  %603 = vmatpush1.bf16.msra.mxu0 %v423
  %604 = vmatprep.subr.bf16.mxu0 0
  %605 = vmatpush1.bf16.msra.mxu0 %v424
  %606 = vmatprep.subr.bf16.mxu0 0
  %607 = vmatpush1.bf16.msra.mxu0 %v425
  %608 = vmatprep.subr.bf16.mxu0 0
  %609 = vmatpush1.bf16.msra.mxu0 %v426
  %610 = vmatprep.subr.bf16.mxu0 0
  %611 = vmatpush1.bf16.msra.mxu0 %v427
  %612 = vmatprep.subr.bf16.mxu0 0
  %613 = vmatpush1.bf16.msra.mxu0 %v428
  %614 = vmatprep.subr.bf16.mxu0 0
  %615 = vmatpush1.bf16.msra.mxu0 %v429
  %616 = vmatprep.subr.bf16.mxu0 0
  %617 = vmatpush1.bf16.msra.mxu0 0
  %618 = vmatprep.subr.bf16.mxu0 0
  %619 = vmatpush1.bf16.msra.mxu0 0
  %620 = vmatprep.subr.bf16.mxu0 0
  %621 = vmatpush1.bf16.msra.mxu0 0
  %622 = vmatprep.subr.bf16.mxu0 0
  %623 = vmatpush1.bf16.msra.mxu0 0
  %624 = vmatprep.subr.bf16.mxu0 0
  %625 = vmatpush1.bf16.msra.mxu0 0
  %626 = vmatprep.subr.bf16.mxu0 0
  %627 = vmatpush1.bf16.msra.mxu0 0
  %628 = vmatprep.subr.bf16.mxu0 0
  %629 = vmatpush1.bf16.msra.mxu0 0
  %630 = vmatprep.subr.bf16.mxu0 0
  %631 = vmatpush1.bf16.msra.mxu0 0
  %632 = vmatprep.mubr.bf16.mxu0 0
  %633 = vmatmul.mubr.bf16.gmra.mrb[0].mxu0 %v194
  %v634 = vpop.f32.mrb[0].mxu0
  %v635 = vadd.f32 %v570, %v634
  %v636 = vpop.f32.mrb[0].mxu0
  %v637 = vpop.f32.mrb[0].mxu0
  %v638 = vadd.f32 %v573, %v637
  %v639 = vpop.f32.mrb[0].mxu0
  %640 = vmatprep.mubr.bf16.mxu0 0
  %641 = vmatmul.mubr.bf16.gmra.mrb[0].mxu0 %v199
  %v642 = vpop.f32.mrb[0].mxu0
  %v643 = vadd.f32 %v578, %v642
  %v644 = vpop.f32.mrb[0].mxu0
  %v645 = vpop.f32.mrb[0].mxu0
  %v646 = vadd.f32 %v581, %v645
  %v647 = vpop.f32.mrb[0].mxu0
  %648 = vmatprep.mubr.bf16.mxu0 0
  %649 = vmatmul.mubr.bf16.gmra.mrb[0].mxu0 %v204
  %v650 = vpop.f32.mrb[0].mxu0
  %v651 = vadd.f32 %v586, %v650
  %v652 = vpop.f32.mrb[0].mxu0
  %v653 = vpop.f32.mrb[0].mxu0
  %v654 = vadd.f32 %v589, %v653
  %v655 = vpop.f32.mrb[0].mxu0
  %656 = vmatprep.mubr.bf16.mxu0 0
  %657 = vmatmul.mubr.bf16.gmra.mrb[0].mxu0 %v209
  %v658 = vpop.f32.mrb[0].mxu0
  %v659 = vadd.f32 %v594, %v658
  %v660 = vpop.f32.mrb[0].mxu0
  %v661 = vpop.f32.mrb[0].mxu0
  %v662 = vadd.f32 %v597, %v661
  %v663 = vpop.f32.mrb[0].mxu0
  %664 = vdwg.mxu0
  %v665 = vmax.f32 %v635, 0.0
  %v666 = vmax.f32 %v638, 0.0
  %v667 = vmax.f32 %v643, 0.0
  %v668 = vmax.f32 %v646, 0.0
  %v669 = vmax.f32 %v651, 0.0
  %v670 = vmax.f32 %v654, 0.0
  %v671 = vmax.f32 %v659, 0.0
  %v672 = vmax.f32 %v662, 0.0
  %v673 = vpack.c.bf16 %v666, %v665
  %v674 = vpack.c.bf16 %v668, %v667
  %v675 = vpack.c.bf16 %v670, %v669
  %v676 = vpack.c.bf16 %v672, %v671
  %v681 = vunpack.c.l.b16 %v673
  %v682 = vunpack.c.h.b16 %v673
  %v683 = vunpack.c.l.b16 %v674
  %v684 = vunpack.c.h.b16 %v674
  %v685 = vunpack.c.l.b16 %v675
  %v686 = vunpack.c.h.b16 %v675
  %v687 = vunpack.c.l.b16 %v676
  %v688 = vunpack.c.h.b16 %v676
  %v689 = vpack.c.b16 %v681, %v681
  %v690 = vpack.c.b16 %v682, %v682
  %v691 = vpack.c.b16 %v683, %v683
  %v692 = vpack.c.b16 %v684, %v684
  %v693 = vpack.c.b16 %v685, %v685
  %v694 = vpack.c.b16 %v686, %v686
  %v695 = vpack.c.b16 %v687, %v687
  %v696 = vpack.c.b16 %v688, %v688
  %705 = vst [vmem:[%s3] sm:$0xf] %v689
  %706 = vst [vmem:[%s3 + $0x4] sm:$0xf] %v690
  %707 = vst [vmem:[%s3 + $0x8] sm:$0xf] %v691
  %708 = vst [vmem:[%s3 + $0xc] sm:$0xf] %v692
  %709 = vst [vmem:[%s3 + $0x10] sm:$0xf] %v693
  %710 = vst [vmem:[%s3 + $0x14] sm:$0xf] %v694
  %711 = vst [vmem:[%s3 + $0x18] sm:$0xf] %v695
  %712 = vst [vmem:[%s3 + $0x1c] sm:$0xf] %v696
  // Predicated region
  $region14: #{jump_forward_device.47} parent=0 // pred_check
    _
  $region15: #{jump_forward_device.47} parent=0 // pred_check_branch
    %714 = sbr.rel (0) target = $region17
  $region16: #{jump_forward_device.47} parent=0 // pred_region
    _
  $region17: #{jump_forward_device.47} parent=0 // pred_fallthru
    _
  // Predicated region
  $region18: #{jump_forward_device.47} parent=0 // pred_check
    _
  $region19: #{jump_forward_device.47} parent=0 // pred_check_branch
    %716 = sbr.rel (0) target = $region21
  $region20: #{jump_forward_device.47} parent=0 // pred_region
    _
  $region21: #{jump_forward_device.47} parent=0 // pred_fallthru
    _

// kernel: jump_forward_device.49
$region0: #{jump_forward_device.49}
  #allocation0 [shape = 'u32[]', space=smem, size = 0x4, offset = 0x4, fixed_abs, tag = 'smem constant byte address 0x4 - core index']
  #allocation1 [shape = 'u32[144,128]{1,0:T(1,128)}', space=vmem, size = 0x12000, scoped, tag = 'internal scratch']
  %s0 = inlined_call_operand.vmem [shape: bf16[8,256], index: 0, kind: input, shape index: {}]
  %s1 = inlined_call_operand.vmem [shape: bf16[256,128], index: 1, kind: input, shape index: {}]
  %s2 = inlined_call_operand.vmem [shape: f32[1,128], index: 2, kind: input, shape index: {}]
  %s3 = inlined_call_operand.vmem [shape: bf16[8,128], index: 3, kind: output, shape index: {}]
  %s4 = sld [smem:[#allocation0]]
  $region22: #{jump_forward_device.49} parent=0
    _
  %s6 = ssub.s32 1, %s4
  %s7 = scalar_select 0, %s6, %s4
  // Predicated region
  $region2: #{jump_forward_device.49} parent=0 // pred_check
    _
  $region3: #{jump_forward_device.49} parent=0 // pred_check_branch
    %9 = sbr.rel (0) target = $region5
  $region4: #{jump_forward_device.49} parent=0 // pred_region
    _
  $region5: #{jump_forward_device.49} parent=0 // pred_fallthru
    _
  // Predicated region
  $region6: #{jump_forward_device.49} parent=0 // pred_check
    _
  $region7: #{jump_forward_device.49} parent=0 // pred_check_branch
    %11 = sbr.rel (0) target = $region9
  $region8: #{jump_forward_device.49} parent=0 // pred_region
    _
  $region9: #{jump_forward_device.49} parent=0 // pred_fallthru
    _
  // Predicated region
  $region10: #{jump_forward_device.49} parent=0 // pred_check
    _
  $region11: #{jump_forward_device.49} parent=0 // pred_check_branch
    %13 = sbr.rel (0) target = $region13
  $region12: #{jump_forward_device.49} parent=0 // pred_region
    _
  $region13: #{jump_forward_device.49} parent=0 // pred_fallthru
    _
  %v15 = vld [vmem:[%s0] sm:$0xff]
  %v16 = vld [vmem:[%s1] sm:$0xf]
  %v17 = vld [vmem:[%s1 + $0x4] sm:$0xf]
  %v18 = vld [vmem:[%s1 + $0x8] sm:$0xf]
  %v19 = vld [vmem:[%s1 + $0xc] sm:$0xf]
  %v20 = vld [vmem:[%s1 + $0x10] sm:$0xf]
  %v21 = vld [vmem:[%s1 + $0x14] sm:$0xf]
  %v22 = vld [vmem:[%s1 + $0x18] sm:$0xf]
  %v23 = vld [vmem:[%s1 + $0x1c] sm:$0xf]
  %v24 = vld [vmem:[%s1 + $0x20] sm:$0xf]
  %v25 = vld [vmem:[%s1 + $0x24] sm:$0xf]
  %v26 = vld [vmem:[%s1 + $0x28] sm:$0xf]
  %v27 = vld [vmem:[%s1 + $0x2c] sm:$0xf]
  %v28 = vld [vmem:[%s1 + $0x30] sm:$0xf]
  %v29 = vld [vmem:[%s1 + $0x34] sm:$0xf]
  %v30 = vld [vmem:[%s1 + $0x38] sm:$0xf]
  %v31 = vld [vmem:[%s1 + $0x3c] sm:$0xf]
  %v32 = vld [vmem:[%s1 + $0x40] sm:$0xf]
  %v33 = vld [vmem:[%s1 + $0x44] sm:$0xf]
  %v34 = vld [vmem:[%s1 + $0x48] sm:$0xf]
  %v35 = vld [vmem:[%s1 + $0x4c] sm:$0xf]
  %v36 = vld [vmem:[%s1 + $0x50] sm:$0xf]
  %v37 = vld [vmem:[%s1 + $0x54] sm:$0xf]
  %v38 = vld [vmem:[%s1 + $0x58] sm:$0xf]
  %v39 = vld [vmem:[%s1 + $0x5c] sm:$0xf]
  %v40 = vld [vmem:[%s1 + $0x60] sm:$0xf]
  %v41 = vld [vmem:[%s1 + $0x64] sm:$0xf]
  %v42 = vld [vmem:[%s1 + $0x68] sm:$0xf]
  %v43 = vld [vmem:[%s1 + $0x6c] sm:$0xf]
  %v44 = vld [vmem:[%s1 + $0x70] sm:$0xf]
  %v45 = vld [vmem:[%s1 + $0x74] sm:$0xf]
  %v46 = vld [vmem:[%s1 + $0x78] sm:$0xf]
  %v47 = vld [vmem:[%s1 + $0x7c] sm:$0xf]
  %v48 = vld [vmem:[%s2] sm:$0x1]
  %v50 = vlaneseq
  %v51 = vshrl.u32 %v50, 7
  %v52 = vsub.s32 0, %v51
  %v53 = vrot.slane %v48, %v52
  %v56 = vunpack.c.l.b16 %v15
  %v57 = vunpack.c.h.b16 %v15
  %v58 = vpack.c.b16 %v56, %v56
  %v59 = vpack.c.b16 %v57, %v57
  %v94 = vunpack.c.l.b16 %v16
  %v95 = vunpack.c.l.b16 %v17
  %v96 = vunpack.c.l.b16 %v18
  %v97 = vunpack.c.l.b16 %v19
  %v98 = vunpack.c.l.b16 %v20
  %v99 = vunpack.c.l.b16 %v21
  %v100 = vunpack.c.l.b16 %v22
  %v101 = vunpack.c.l.b16 %v23
  %v102 = vunpack.c.l.b16 %v24
  %v103 = vunpack.c.l.b16 %v25
  %v104 = vunpack.c.l.b16 %v26
  %v105 = vunpack.c.l.b16 %v27
  %v106 = vunpack.c.l.b16 %v28
  %v107 = vunpack.c.l.b16 %v29
  %v108 = vunpack.c.l.b16 %v30
  %v109 = vunpack.c.l.b16 %v31
  %v110 = vunpack.c.l.b16 %v32
  %v111 = vunpack.c.l.b16 %v33
  %v112 = vunpack.c.l.b16 %v34
  %v113 = vunpack.c.l.b16 %v35
  %v114 = vunpack.c.l.b16 %v36
  %v115 = vunpack.c.l.b16 %v37
  %v116 = vunpack.c.l.b16 %v38
  %v117 = vunpack.c.l.b16 %v39
  %v118 = vunpack.c.l.b16 %v40
  %v119 = vunpack.c.l.b16 %v41
  %v120 = vunpack.c.l.b16 %v42
  %v121 = vunpack.c.l.b16 %v43
  %v122 = vunpack.c.l.b16 %v44
  %v123 = vunpack.c.l.b16 %v45
  %v124 = vunpack.c.l.b16 %v46
  %v125 = vunpack.c.l.b16 %v47
  %v126 = vpack.c.b16 %v95, %v94
  %v127 = vpack.c.b16 %v97, %v96
  %v128 = vpack.c.b16 %v99, %v98
  %v129 = vpack.c.b16 %v101, %v100
  %v130 = vpack.c.b16 %v103, %v102
  %v131 = vpack.c.b16 %v105, %v104
  %v132 = vpack.c.b16 %v107, %v106
  %v133 = vpack.c.b16 %v109, %v108
  %v134 = vpack.c.b16 %v111, %v110
  %v135 = vpack.c.b16 %v113, %v112
  %v136 = vpack.c.b16 %v115, %v114
  %v137 = vpack.c.b16 %v117, %v116
  %v138 = vpack.c.b16 %v119, %v118
  %v139 = vpack.c.b16 %v121, %v120
  %v140 = vpack.c.b16 %v123, %v122
  %v141 = vpack.c.b16 %v125, %v124
  %158 = vmatprep.subr.bf16.mxu0 0
  %159 = vmatpush1.bf16.msra.mxu0 %v126
  %160 = vmatprep.subr.bf16.mxu0 0
  %161 = vmatpush1.bf16.msra.mxu0 %v127
  %162 = vmatprep.subr.bf16.mxu0 0
  %163 = vmatpush1.bf16.msra.mxu0 %v128
  %164 = vmatprep.subr.bf16.mxu0 0
  %165 = vmatpush1.bf16.msra.mxu0 %v129
  %166 = vmatprep.subr.bf16.mxu0 0
  %167 = vmatpush1.bf16.msra.mxu0 %v130
  %168 = vmatprep.subr.bf16.mxu0 0
  %169 = vmatpush1.bf16.msra.mxu0 %v131
  %170 = vmatprep.subr.bf16.mxu0 0
  %171 = vmatpush1.bf16.msra.mxu0 %v132
  %172 = vmatprep.subr.bf16.mxu0 0
  %173 = vmatpush1.bf16.msra.mxu0 %v133
  %174 = vmatprep.subr.bf16.mxu0 0
  %175 = vmatpush1.bf16.msra.mxu0 %v134
  %176 = vmatprep.subr.bf16.mxu0 0
  %177 = vmatpush1.bf16.msra.mxu0 %v135
  %178 = vmatprep.subr.bf16.mxu0 0
  %179 = vmatpush1.bf16.msra.mxu0 %v136
  %180 = vmatprep.subr.bf16.mxu0 0
  %181 = vmatpush1.bf16.msra.mxu0 %v137
  %182 = vmatprep.subr.bf16.mxu0 0
  %183 = vmatpush1.bf16.msra.mxu0 %v138
  %184 = vmatprep.subr.bf16.mxu0 0
  %185 = vmatpush1.bf16.msra.mxu0 %v139
  %186 = vmatprep.subr.bf16.mxu0 0
  %187 = vmatpush1.bf16.msra.mxu0 %v140
  %188 = vmatprep.subr.bf16.mxu0 0
  %189 = vmatpush1.bf16.msra.mxu0 %v141
  %190 = vmatprep.mubr.bf16.mxu0 %v59
  %191 = vmatmul.mubr.bf16.gmra.mrb[0].mxu0 %v58
  %v192 = vpop.f32.mrb[0].mxu0
  %v193 = vadd.f32 %v53, %v192
  %v194 = vpop.f32.mrb[0].mxu0
  %v195 = vpop.f32.mrb[0].mxu0
  %v196 = vpop.f32.mrb[0].mxu0
  %197 = vdwg.mxu0
  %v198 = vpack.c.bf16 %v193, %v193
  %199 = vst [vmem:[%s3] sm:$0xf] %v198
  // Predicated region
  $region14: #{jump_forward_device.49} parent=0 // pred_check
    _
  $region15: #{jump_forward_device.49} parent=0 // pred_check_branch
    %201 = sbr.rel (0) target = $region17
  $region16: #{jump_forward_device.49} parent=0 // pred_region
    _
  $region17: #{jump_forward_device.49} parent=0 // pred_fallthru
    _
  // Predicated region
  $region18: #{jump_forward_device.49} parent=0 // pred_check
    _
  $region19: #{jump_forward_device.49} parent=0 // pred_check_branch
    %203 = sbr.rel (0) target = $region21
  $region20: #{jump_forward_device.49} parent=0 // pred_region
    _
  $region21: #{jump_forward_device.49} parent=0 // pred_fallthru
    _

// kernel: jump_forward_device.48
$region0: #{jump_forward_device.48}
  #allocation0 [shape = 'u32[]', space=smem, size = 0x4, offset = 0x4, fixed_abs, tag = 'smem constant byte address 0x4 - core index']
  #allocation1 [shape = 'u32[144,128]{1,0:T(1,128)}', space=vmem, size = 0x12000, scoped, tag = 'internal scratch']
  %s0 = inlined_call_operand.vmem [shape: bf16[64,1152], index: 0, kind: input, shape index: {}]
  %s1 = inlined_call_operand.vmem [shape: bf16[1152,128], index: 1, kind: input, shape index: {}]
  %s2 = inlined_call_operand.vmem [shape: f32[1,128], index: 2, kind: input, shape index: {}]
  %s3 = inlined_call_operand.vmem [shape: bf16[64,128], index: 3, kind: output, shape index: {}]
  %s4 = sld [smem:[#allocation0]]
  $region22: #{jump_forward_device.48} parent=0
    _
  %s6 = ssub.s32 1, %s4
  %s7 = scalar_select 0, %s6, %s4
  // Predicated region
  $region2: #{jump_forward_device.48} parent=0 // pred_check
    _
  $region3: #{jump_forward_device.48} parent=0 // pred_check_branch
    %9 = sbr.rel (0) target = $region5
  $region4: #{jump_forward_device.48} parent=0 // pred_region
    _
  $region5: #{jump_forward_device.48} parent=0 // pred_fallthru
    _
  // Predicated region
  $region6: #{jump_forward_device.48} parent=0 // pred_check
    _
  $region7: #{jump_forward_device.48} parent=0 // pred_check_branch
    %11 = sbr.rel (0) target = $region9
  $region8: #{jump_forward_device.48} parent=0 // pred_region
    _
  $region9: #{jump_forward_device.48} parent=0 // pred_fallthru
    _
  // Predicated region
  $region10: #{jump_forward_device.48} parent=0 // pred_check
    _
  $region11: #{jump_forward_device.48} parent=0 // pred_check_branch
    %13 = sbr.rel (0) target = $region13
  $region12: #{jump_forward_device.48} parent=0 // pred_region
    _
  $region13: #{jump_forward_device.48} parent=0 // pred_fallthru
    _
  %v15 = vld [vmem:[%s0] sm:$0xff]
  %v16 = vld [vmem:[%s0 + $0x8] sm:$0xff]
  %v17 = vld [vmem:[%s0 + $0x10] sm:$0xff]
  %v18 = vld [vmem:[%s0 + $0x18] sm:$0xff]
  %v19 = vld [vmem:[%s0 + $0x20] sm:$0xf]
  %v20 = vld [vmem:[%s0 + $0x24] sm:$0xff]
  %v21 = vld [vmem:[%s0 + $0x2c] sm:$0xff]
  %v22 = vld [vmem:[%s0 + $0x34] sm:$0xff]
  %v23 = vld [vmem:[%s0 + $0x3c] sm:$0xff]
  %v24 = vld [vmem:[%s0 + $0x44] sm:$0xf]
  %v25 = vld [vmem:[%s0 + $0x48] sm:$0xff]
  %v26 = vld [vmem:[%s0 + $0x50] sm:$0xff]
  %v27 = vld [vmem:[%s0 + $0x58] sm:$0xff]
  %v28 = vld [vmem:[%s0 + $0x60] sm:$0xff]
  %v29 = vld [vmem:[%s0 + $0x68] sm:$0xf]
  %v30 = vld [vmem:[%s0 + $0x6c] sm:$0xff]
  %v31 = vld [vmem:[%s0 + $0x74] sm:$0xff]
  %v32 = vld [vmem:[%s0 + $0x7c] sm:$0xff]
  %v33 = vld [vmem:[%s0 + $0x84] sm:$0xff]
  %v34 = vld [vmem:[%s0 + $0x8c] sm:$0xf]
  %v35 = vld [vmem:[%s0 + $0x90] sm:$0xff]
  %v36 = vld [vmem:[%s0 + $0x98] sm:$0xff]
  %v37 = vld [vmem:[%s0 + $0xa0] sm:$0xff]
  %v38 = vld [vmem:[%s0 + $0xa8] sm:$0xff]
  %v39 = vld [vmem:[%s0 + $0xb0] sm:$0xf]
  %v40 = vld [vmem:[%s0 + $0xb4] sm:$0xff]
  %v41 = vld [vmem:[%s0 + $0xbc] sm:$0xff]
  %v42 = vld [vmem:[%s0 + $0xc4] sm:$0xff]
  %v43 = vld [vmem:[%s0 + $0xcc] sm:$0xff]
  %v44 = vld [vmem:[%s0 + $0xd4] sm:$0xf]
  %v45 = vld [vmem:[%s0 + $0xd8] sm:$0xff]
  %v46 = vld [vmem:[%s0 + $0xe0] sm:$0xff]
  %v47 = vld [vmem:[%s0 + $0xe8] sm:$0xff]
  %v48 = vld [vmem:[%s0 + $0xf0] sm:$0xff]
  %v49 = vld [vmem:[%s0 + $0xf8] sm:$0xf]
  %v50 = vld [vmem:[%s0 + $0xfc] sm:$0xff]
  %v51 = vld [vmem:[%s0 + $0x104] sm:$0xff]
  %v52 = vld [vmem:[%s0 + $0x10c] sm:$0xff]
  %v53 = vld [vmem:[%s0 + $0x114] sm:$0xff]
  %v54 = vld [vmem:[%s0 + $0x11c] sm:$0xf]
  %v55 = vld [vmem:[%s1] sm:$0xf]
  %v56 = vld [vmem:[%s1 + $0x4] sm:$0xf]
  %v57 = vld [vmem:[%s1 + $0x8] sm:$0xf]
  %v58 = vld [vmem:[%s1 + $0xc] sm:$0xf]
  %v59 = vld [vmem:[%s1 + $0x10] sm:$0xf]
  %v60 = vld [vmem:[%s1 + $0x14] sm:$0xf]
  %v61 = vld [vmem:[%s1 + $0x18] sm:$0xf]
  %v62 = vld [vmem:[%s1 + $0x1c] sm:$0xf]
  %v63 = vld [vmem:[%s1 + $0x20] sm:$0xf]
  %v64 = vld [vmem:[%s1 + $0x24] sm:$0xf]
  %v65 = vld [vmem:[%s1 + $0x28] sm:$0xf]
  %v66 = vld [vmem:[%s1 + $0x2c] sm:$0xf]
  %v67 = vld [vmem:[%s1 + $0x30] sm:$0xf]
  %v68 = vld [vmem:[%s1 + $0x34] sm:$0xf]
  %v69 = vld [vmem:[%s1 + $0x38] sm:$0xf]
  %v70 = vld [vmem:[%s1 + $0x3c] sm:$0xf]
  %v71 = vld [vmem:[%s1 + $0x40] sm:$0xf]
  %v72 = vld [vmem:[%s1 + $0x44] sm:$0xf]
  %v73 = vld [vmem:[%s1 + $0x48] sm:$0xf]
  %v74 = vld [vmem:[%s1 + $0x4c] sm:$0xf]
  %v75 = vld [vmem:[%s1 + $0x50] sm:$0xf]
  %v76 = vld [vmem:[%s1 + $0x54] sm:$0xf]
  %v77 = vld [vmem:[%s1 + $0x58] sm:$0xf]
  %v78 = vld [vmem:[%s1 + $0x5c] sm:$0xf]
  %v79 = vld [vmem:[%s1 + $0x60] sm:$0xf]
  %v80 = vld [vmem:[%s1 + $0x64] sm:$0xf]
  %v81 = vld [vmem:[%s1 + $0x68] sm:$0xf]
  %v82 = vld [vmem:[%s1 + $0x6c] sm:$0xf]
  %v83 = vld [vmem:[%s1 + $0x70] sm:$0xf]
  %v84 = vld [vmem:[%s1 + $0x74] sm:$0xf]
  %v85 = vld [vmem:[%s1 + $0x78] sm:$0xf]
  %v86 = vld [vmem:[%s1 + $0x7c] sm:$0xf]
  %v87 = vld [vmem:[%s1 + $0x80] sm:$0xf]
  %v88 = vld [vmem:[%s1 + $0x84] sm:$0xf]
  %v89 = vld [vmem:[%s1 + $0x88] sm:$0xf]
  %v90 = vld [vmem:[%s1 + $0x8c] sm:$0xf]
  %v91 = vld [vmem:[%s1 + $0x90] sm:$0xf]
  %v92 = vld [vmem:[%s1 + $0x94] sm:$0xf]
  %v93 = vld [vmem:[%s1 + $0x98] sm:$0xf]
  %v94 = vld [vmem:[%s1 + $0x9c] sm:$0xf]
  %v95 = vld [vmem:[%s1 + $0xa0] sm:$0xf]
  %v96 = vld [vmem:[%s1 + $0xa4] sm:$0xf]
  %v97 = vld [vmem:[%s1 + $0xa8] sm:$0xf]
  %v98 = vld [vmem:[%s1 + $0xac] sm:$0xf]
  %v99 = vld [vmem:[%s1 + $0xb0] sm:$0xf]
  %v100 = vld [vmem:[%s1 + $0xb4] sm:$0xf]
  %v101 = vld [vmem:[%s1 + $0xb8] sm:$0xf]
  %v102 = vld [vmem:[%s1 + $0xbc] sm:$0xf]
  %v103 = vld [vmem:[%s1 + $0xc0] sm:$0xf]
  %v104 = vld [vmem:[%s1 + $0xc4] sm:$0xf]
  %v105 = vld [vmem:[%s1 + $0xc8] sm:$0xf]
  %v106 = vld [vmem:[%s1 + $0xcc] sm:$0xf]
  %v107 = vld [vmem:[%s1 + $0xd0] sm:$0xf]
  %v108 = vld [vmem:[%s1 + $0xd4] sm:$0xf]
  %v109 = vld [vmem:[%s1 + $0xd8] sm:$0xf]
  %v110 = vld [vmem:[%s1 + $0xdc] sm:$0xf]
  %v111 = vld [vmem:[%s1 + $0xe0] sm:$0xf]
  %v112 = vld [vmem:[%s1 + $0xe4] sm:$0xf]
  %v113 = vld [vmem:[%s1 + $0xe8] sm:$0xf]
  %v114 = vld [vmem:[%s1 + $0xec] sm:$0xf]
  %v115 = vld [vmem:[%s1 + $0xf0] sm:$0xf]
  %v116 = vld [vmem:[%s1 + $0xf4] sm:$0xf]
  %v117 = vld [vmem:[%s1 + $0xf8] sm:$0xf]
  %v118 = vld [vmem:[%s1 + $0xfc] sm:$0xf]
  %v119 = vld [vmem:[%s1 + $0x100] sm:$0xf]
  %v120 = vld [vmem:[%s1 + $0x104] sm:$0xf]
  %v121 = vld [vmem:[%s1 + $0x108] sm:$0xf]
  %v122 = vld [vmem:[%s1 + $0x10c] sm:$0xf]
  %v123 = vld [vmem:[%s1 + $0x110] sm:$0xf]
  %v124 = vld [vmem:[%s1 + $0x114] sm:$0xf]
  %v125 = vld [vmem:[%s1 + $0x118] sm:$0xf]
  %v126 = vld [vmem:[%s1 + $0x11c] sm:$0xf]
  %v127 = vld [vmem:[%s1 + $0x120] sm:$0xf]
  %v128 = vld [vmem:[%s1 + $0x124] sm:$0xf]
  %v129 = vld [vmem:[%s1 + $0x128] sm:$0xf]
  %v130 = vld [vmem:[%s1 + $0x12c] sm:$0xf]
  %v131 = vld [vmem:[%s1 + $0x130] sm:$0xf]
  %v132 = vld [vmem:[%s1 + $0x134] sm:$0xf]
  %v133 = vld [vmem:[%s1 + $0x138] sm:$0xf]
  %v134 = vld [vmem:[%s1 + $0x13c] sm:$0xf]
  %v135 = vld [vmem:[%s1 + $0x140] sm:$0xf]
  %v136 = vld [vmem:[%s1 + $0x144] sm:$0xf]
  %v137 = vld [vmem:[%s1 + $0x148] sm:$0xf]
  %v138 = vld [vmem:[%s1 + $0x14c] sm:$0xf]
  %v139 = vld [vmem:[%s1 + $0x150] sm:$0xf]
  %v140 = vld [vmem:[%s1 + $0x154] sm:$0xf]
  %v141 = vld [vmem:[%s1 + $0x158] sm:$0xf]
  %v142 = vld [vmem:[%s1 + $0x15c] sm:$0xf]
  %v143 = vld [vmem:[%s1 + $0x160] sm:$0xf]
  %v144 = vld [vmem:[%s1 + $0x164] sm:$0xf]
  %v145 = vld [vmem:[%s1 + $0x168] sm:$0xf]
  %v146 = vld [vmem:[%s1 + $0x16c] sm:$0xf]
  %v147 = vld [vmem:[%s1 + $0x170] sm:$0xf]
  %v148 = vld [vmem:[%s1 + $0x174] sm:$0xf]
  %v149 = vld [vmem:[%s1 + $0x178] sm:$0xf]
  %v150 = vld [vmem:[%s1 + $0x17c] sm:$0xf]
  %v151 = vld [vmem:[%s1 + $0x180] sm:$0xf]
  %v152 = vld [vmem:[%s1 + $0x184] sm:$0xf]
  %v153 = vld [vmem:[%s1 + $0x188] sm:$0xf]
  %v154 = vld [vmem:[%s1 + $0x18c] sm:$0xf]
  %v155 = vld [vmem:[%s1 + $0x190] sm:$0xf]
  %v156 = vld [vmem:[%s1 + $0x194] sm:$0xf]
  %v157 = vld [vmem:[%s1 + $0x198] sm:$0xf]
  %v158 = vld [vmem:[%s1 + $0x19c] sm:$0xf]
  %v159 = vld [vmem:[%s1 + $0x1a0] sm:$0xf]
  %v160 = vld [vmem:[%s1 + $0x1a4] sm:$0xf]
  %v161 = vld [vmem:[%s1 + $0x1a8] sm:$0xf]
  %v162 = vld [vmem:[%s1 + $0x1ac] sm:$0xf]
  %v163 = vld [vmem:[%s1 + $0x1b0] sm:$0xf]
  %v164 = vld [vmem:[%s1 + $0x1b4] sm:$0xf]
  %v165 = vld [vmem:[%s1 + $0x1b8] sm:$0xf]
  %v166 = vld [vmem:[%s1 + $0x1bc] sm:$0xf]
  %v167 = vld [vmem:[%s1 + $0x1c0] sm:$0xf]
  %v168 = vld [vmem:[%s1 + $0x1c4] sm:$0xf]
  %v169 = vld [vmem:[%s1 + $0x1c8] sm:$0xf]
  %v170 = vld [vmem:[%s1 + $0x1cc] sm:$0xf]
  %v171 = vld [vmem:[%s1 + $0x1d0] sm:$0xf]
  %v172 = vld [vmem:[%s1 + $0x1d4] sm:$0xf]
  %v173 = vld [vmem:[%s1 + $0x1d8] sm:$0xf]
  %v174 = vld [vmem:[%s1 + $0x1dc] sm:$0xf]
  %v175 = vld [vmem:[%s1 + $0x1e0] sm:$0xf]
  %v176 = vld [vmem:[%s1 + $0x1e4] sm:$0xf]
  %v177 = vld [vmem:[%s1 + $0x1e8] sm:$0xf]
  %v178 = vld [vmem:[%s1 + $0x1ec] sm:$0xf]
  %v179 = vld [vmem:[%s1 + $0x1f0] sm:$0xf]
  %v180 = vld [vmem:[%s1 + $0x1f4] sm:$0xf]
  %v181 = vld [vmem:[%s1 + $0x1f8] sm:$0xf]
  %v182 = vld [vmem:[%s1 + $0x1fc] sm:$0xf]
  %v183 = vld [vmem:[%s1 + $0x200] sm:$0xf]
  %v184 = vld [vmem:[%s1 + $0x204] sm:$0xf]
  %v185 = vld [vmem:[%s1 + $0x208] sm:$0xf]
  %v186 = vld [vmem:[%s1 + $0x20c] sm:$0xf]
  %v187 = vld [vmem:[%s1 + $0x210] sm:$0xf]
  %v188 = vld [vmem:[%s1 + $0x214] sm:$0xf]
  %v189 = vld [vmem:[%s1 + $0x218] sm:$0xf]
  %v190 = vld [vmem:[%s1 + $0x21c] sm:$0xf]
  %v191 = vld [vmem:[%s1 + $0x220] sm:$0xf]
  %v192 = vld [vmem:[%s1 + $0x224] sm:$0xf]
  %v193 = vld [vmem:[%s1 + $0x228] sm:$0xf]
  %v194 = vld [vmem:[%s1 + $0x22c] sm:$0xf]
  %v195 = vld [vmem:[%s1 + $0x230] sm:$0xf]
  %v196 = vld [vmem:[%s1 + $0x234] sm:$0xf]
  %v197 = vld [vmem:[%s1 + $0x238] sm:$0xf]
  %v198 = vld [vmem:[%s1 + $0x23c] sm:$0xf]
  %v199 = vld [vmem:[%s2] sm:$0x1]
  %v201 = vlaneseq
  %v202 = vshrl.u32 %v201, 7
  %v203 = vsub.s32 0, %v202
  %v204 = vrot.slane %v199, %v203
  %v246 = vunpack.c.l.b16 %v15
  %v247 = vunpack.c.h.b16 %v15
  %v248 = vunpack.c.l.b16 %v16
  %v249 = vunpack.c.h.b16 %v16
  %v250 = vunpack.c.l.b16 %v17
  %v251 = vunpack.c.h.b16 %v17
  %v252 = vunpack.c.l.b16 %v18
  %v253 = vunpack.c.h.b16 %v18
  %v254 = vunpack.c.l.b16 %v19
  %v255 = vunpack.c.l.b16 %v20
  %v256 = vunpack.c.h.b16 %v20
  %v257 = vunpack.c.l.b16 %v21
  %v258 = vunpack.c.h.b16 %v21
  %v259 = vunpack.c.l.b16 %v22
  %v260 = vunpack.c.h.b16 %v22
  %v261 = vunpack.c.l.b16 %v23
  %v262 = vunpack.c.h.b16 %v23
  %v263 = vunpack.c.l.b16 %v24
  %v264 = vunpack.c.l.b16 %v25
  %v265 = vunpack.c.h.b16 %v25
  %v266 = vunpack.c.l.b16 %v26
  %v267 = vunpack.c.h.b16 %v26
  %v268 = vunpack.c.l.b16 %v27
  %v269 = vunpack.c.h.b16 %v27
  %v270 = vunpack.c.l.b16 %v28
  %v271 = vunpack.c.h.b16 %v28
  %v272 = vunpack.c.l.b16 %v29
  %v273 = vunpack.c.l.b16 %v30
  %v274 = vunpack.c.h.b16 %v30
  %v275 = vunpack.c.l.b16 %v31
  %v276 = vunpack.c.h.b16 %v31
  %v277 = vunpack.c.l.b16 %v32
  %v278 = vunpack.c.h.b16 %v32
  %v279 = vunpack.c.l.b16 %v33
  %v280 = vunpack.c.h.b16 %v33
  %v281 = vunpack.c.l.b16 %v34
  %v282 = vunpack.c.l.b16 %v35
  %v283 = vunpack.c.h.b16 %v35
  %v284 = vunpack.c.l.b16 %v36
  %v285 = vunpack.c.h.b16 %v36
  %v286 = vunpack.c.l.b16 %v37
  %v287 = vunpack.c.h.b16 %v37
  %v288 = vunpack.c.l.b16 %v38
  %v289 = vunpack.c.h.b16 %v38
  %v290 = vunpack.c.l.b16 %v39
  %v291 = vunpack.c.l.b16 %v40
  %v292 = vunpack.c.h.b16 %v40
  %v293 = vunpack.c.l.b16 %v41
  %v294 = vunpack.c.h.b16 %v41
  %v295 = vunpack.c.l.b16 %v42
  %v296 = vunpack.c.h.b16 %v42
  %v297 = vunpack.c.l.b16 %v43
  %v298 = vunpack.c.h.b16 %v43
  %v299 = vunpack.c.l.b16 %v44
  %v300 = vunpack.c.l.b16 %v45
  %v301 = vunpack.c.h.b16 %v45
  %v302 = vunpack.c.l.b16 %v46
  %v303 = vunpack.c.h.b16 %v46
  %v304 = vunpack.c.l.b16 %v47
  %v305 = vunpack.c.h.b16 %v47
  %v306 = vunpack.c.l.b16 %v48
  %v307 = vunpack.c.h.b16 %v48
  %v308 = vunpack.c.l.b16 %v49
  %v309 = vunpack.c.l.b16 %v50
  %v310 = vunpack.c.h.b16 %v50
  %v311 = vunpack.c.l.b16 %v51
  %v312 = vunpack.c.h.b16 %v51
  %v313 = vunpack.c.l.b16 %v52
  %v314 = vunpack.c.h.b16 %v52
  %v315 = vunpack.c.l.b16 %v53
  %v316 = vunpack.c.h.b16 %v53
  %v317 = vunpack.c.l.b16 %v54
  %v318 = vpack.c.b16 %v255, %v246
  %v319 = vpack.c.b16 %v256, %v247
  %v320 = vpack.c.b16 %v257, %v248
  %v321 = vpack.c.b16 %v258, %v249
  %v322 = vpack.c.b16 %v259, %v250
  %v323 = vpack.c.b16 %v260, %v251
  %v324 = vpack.c.b16 %v261, %v252
  %v325 = vpack.c.b16 %v262, %v253
  %v326 = vpack.c.b16 %v263, %v254
  %v327 = vpack.c.b16 %v273, %v264
  %v328 = vpack.c.b16 %v274, %v265
  %v329 = vpack.c.b16 %v275, %v266
  %v330 = vpack.c.b16 %v276, %v267
  %v331 = vpack.c.b16 %v277, %v268
  %v332 = vpack.c.b16 %v278, %v269
  %v333 = vpack.c.b16 %v279, %v270
  %v334 = vpack.c.b16 %v280, %v271
  %v335 = vpack.c.b16 %v281, %v272
  %v336 = vpack.c.b16 %v291, %v282
  %v337 = vpack.c.b16 %v292, %v283
  %v338 = vpack.c.b16 %v293, %v284
  %v339 = vpack.c.b16 %v294, %v285
  %v340 = vpack.c.b16 %v295, %v286
  %v341 = vpack.c.b16 %v296, %v287
  %v342 = vpack.c.b16 %v297, %v288
  %v343 = vpack.c.b16 %v298, %v289
  %v344 = vpack.c.b16 %v299, %v290
  %v345 = vpack.c.b16 %v309, %v300
  %v346 = vpack.c.b16 %v310, %v301
  %v347 = vpack.c.b16 %v311, %v302
  %v348 = vpack.c.b16 %v312, %v303
  %v349 = vpack.c.b16 %v313, %v304
  %v350 = vpack.c.b16 %v314, %v305
  %v351 = vpack.c.b16 %v315, %v306
  %v352 = vpack.c.b16 %v316, %v307
  %v353 = vpack.c.b16 %v317, %v308
  %v534 = vunpack.c.l.b16 %v55
  %v535 = vunpack.c.l.b16 %v56
  %v536 = vunpack.c.l.b16 %v57
  %v537 = vunpack.c.l.b16 %v58
  %v538 = vunpack.c.l.b16 %v59
  %v539 = vunpack.c.l.b16 %v60
  %v540 = vunpack.c.l.b16 %v61
  %v541 = vunpack.c.l.b16 %v62
  %v542 = vunpack.c.l.b16 %v63
  %v543 = vunpack.c.l.b16 %v64
  %v544 = vunpack.c.l.b16 %v65
  %v545 = vunpack.c.l.b16 %v66
  %v546 = vunpack.c.l.b16 %v67
  %v547 = vunpack.c.l.b16 %v68
  %v548 = vunpack.c.l.b16 %v69
  %v549 = vunpack.c.l.b16 %v70
  %v550 = vunpack.c.l.b16 %v71
  %v551 = vunpack.c.l.b16 %v72
  %v552 = vunpack.c.l.b16 %v73
  %v553 = vunpack.c.l.b16 %v74
  %v554 = vunpack.c.l.b16 %v75
  %v555 = vunpack.c.l.b16 %v76
  %v556 = vunpack.c.l.b16 %v77
  %v557 = vunpack.c.l.b16 %v78
  %v558 = vunpack.c.l.b16 %v79
  %v559 = vunpack.c.l.b16 %v80
  %v560 = vunpack.c.l.b16 %v81
  %v561 = vunpack.c.l.b16 %v82
  %v562 = vunpack.c.l.b16 %v83
  %v563 = vunpack.c.l.b16 %v84
  %v564 = vunpack.c.l.b16 %v85
  %v565 = vunpack.c.l.b16 %v86
  %v566 = vunpack.c.l.b16 %v87
  %v567 = vunpack.c.l.b16 %v88
  %v568 = vunpack.c.l.b16 %v89
  %v569 = vunpack.c.l.b16 %v90
  %v570 = vunpack.c.l.b16 %v91
  %v571 = vunpack.c.l.b16 %v92
  %v572 = vunpack.c.l.b16 %v93
  %v573 = vunpack.c.l.b16 %v94
  %v574 = vunpack.c.l.b16 %v95
  %v575 = vunpack.c.l.b16 %v96
  %v576 = vunpack.c.l.b16 %v97
  %v577 = vunpack.c.l.b16 %v98
  %v578 = vunpack.c.l.b16 %v99
  %v579 = vunpack.c.l.b16 %v100
  %v580 = vunpack.c.l.b16 %v101
  %v581 = vunpack.c.l.b16 %v102
  %v582 = vunpack.c.l.b16 %v103
  %v583 = vunpack.c.l.b16 %v104
  %v584 = vunpack.c.l.b16 %v105
  %v585 = vunpack.c.l.b16 %v106
  %v586 = vunpack.c.l.b16 %v107
  %v587 = vunpack.c.l.b16 %v108
  %v588 = vunpack.c.l.b16 %v109
  %v589 = vunpack.c.l.b16 %v110
  %v590 = vunpack.c.l.b16 %v111
  %v591 = vunpack.c.l.b16 %v112
  %v592 = vunpack.c.l.b16 %v113
  %v593 = vunpack.c.l.b16 %v114
  %v594 = vunpack.c.l.b16 %v115
  %v595 = vunpack.c.l.b16 %v116
  %v596 = vunpack.c.l.b16 %v117
  %v597 = vunpack.c.l.b16 %v118
  %v598 = vunpack.c.l.b16 %v119
  %v599 = vunpack.c.l.b16 %v120
  %v600 = vunpack.c.l.b16 %v121
  %v601 = vunpack.c.l.b16 %v122
  %v602 = vunpack.c.l.b16 %v123
  %v603 = vunpack.c.l.b16 %v124
  %v604 = vunpack.c.l.b16 %v125
  %v605 = vunpack.c.l.b16 %v126
  %v606 = vunpack.c.l.b16 %v127
  %v607 = vunpack.c.l.b16 %v128
  %v608 = vunpack.c.l.b16 %v129
  %v609 = vunpack.c.l.b16 %v130
  %v610 = vunpack.c.l.b16 %v131
  %v611 = vunpack.c.l.b16 %v132
  %v612 = vunpack.c.l.b16 %v133
  %v613 = vunpack.c.l.b16 %v134
  %v614 = vunpack.c.l.b16 %v135
  %v615 = vunpack.c.l.b16 %v136
  %v616 = vunpack.c.l.b16 %v137
  %v617 = vunpack.c.l.b16 %v138
  %v618 = vunpack.c.l.b16 %v139
  %v619 = vunpack.c.l.b16 %v140
  %v620 = vunpack.c.l.b16 %v141
  %v621 = vunpack.c.l.b16 %v142
  %v622 = vunpack.c.l.b16 %v143
  %v623 = vunpack.c.l.b16 %v144
  %v624 = vunpack.c.l.b16 %v145
  %v625 = vunpack.c.l.b16 %v146
  %v626 = vunpack.c.l.b16 %v147
  %v627 = vunpack.c.l.b16 %v148
  %v628 = vunpack.c.l.b16 %v149
  %v629 = vunpack.c.l.b16 %v150
  %v630 = vunpack.c.l.b16 %v151
  %v631 = vunpack.c.l.b16 %v152
  %v632 = vunpack.c.l.b16 %v153
  %v633 = vunpack.c.l.b16 %v154
  %v634 = vunpack.c.l.b16 %v155
  %v635 = vunpack.c.l.b16 %v156
  %v636 = vunpack.c.l.b16 %v157
  %v637 = vunpack.c.l.b16 %v158
  %v638 = vunpack.c.l.b16 %v159
  %v639 = vunpack.c.l.b16 %v160
  %v640 = vunpack.c.l.b16 %v161
  %v641 = vunpack.c.l.b16 %v162
  %v642 = vunpack.c.l.b16 %v163
  %v643 = vunpack.c.l.b16 %v164
  %v644 = vunpack.c.l.b16 %v165
  %v645 = vunpack.c.l.b16 %v166
  %v646 = vunpack.c.l.b16 %v167
  %v647 = vunpack.c.l.b16 %v168
  %v648 = vunpack.c.l.b16 %v169
  %v649 = vunpack.c.l.b16 %v170
  %v650 = vunpack.c.l.b16 %v171
  %v651 = vunpack.c.l.b16 %v172
  %v652 = vunpack.c.l.b16 %v173
  %v653 = vunpack.c.l.b16 %v174
  %v654 = vunpack.c.l.b16 %v175
  %v655 = vunpack.c.l.b16 %v176
  %v656 = vunpack.c.l.b16 %v177
  %v657 = vunpack.c.l.b16 %v178
  %v658 = vunpack.c.l.b16 %v179
  %v659 = vunpack.c.l.b16 %v180
  %v660 = vunpack.c.l.b16 %v181
  %v661 = vunpack.c.l.b16 %v182
  %v662 = vunpack.c.l.b16 %v183
  %v663 = vunpack.c.l.b16 %v184
  %v664 = vunpack.c.l.b16 %v185
  %v665 = vunpack.c.l.b16 %v186
  %v666 = vunpack.c.l.b16 %v187
  %v667 = vunpack.c.l.b16 %v188
  %v668 = vunpack.c.l.b16 %v189
  %v669 = vunpack.c.l.b16 %v190
  %v670 = vunpack.c.l.b16 %v191
  %v671 = vunpack.c.l.b16 %v192
  %v672 = vunpack.c.l.b16 %v193
  %v673 = vunpack.c.l.b16 %v194
  %v674 = vunpack.c.l.b16 %v195
  %v675 = vunpack.c.l.b16 %v196
  %v676 = vunpack.c.l.b16 %v197
  %v677 = vunpack.c.l.b16 %v198
  %v678 = vpack.c.b16 %v535, %v534
  %v679 = vpack.c.b16 %v537, %v536
  %v680 = vpack.c.b16 %v539, %v538
  %v681 = vpack.c.b16 %v541, %v540
  %v682 = vpack.c.b16 %v543, %v542
  %v683 = vpack.c.b16 %v545, %v544
  %v684 = vpack.c.b16 %v547, %v546
  %v685 = vpack.c.b16 %v549, %v548
  %v686 = vpack.c.b16 %v551, %v550
  %v687 = vpack.c.b16 %v553, %v552
  %v688 = vpack.c.b16 %v555, %v554
  %v689 = vpack.c.b16 %v557, %v556
  %v690 = vpack.c.b16 %v559, %v558
  %v691 = vpack.c.b16 %v561, %v560
  %v692 = vpack.c.b16 %v563, %v562
  %v693 = vpack.c.b16 %v565, %v564
  %v694 = vpack.c.b16 %v567, %v566
  %v695 = vpack.c.b16 %v569, %v568
  %v696 = vpack.c.b16 %v571, %v570
  %v697 = vpack.c.b16 %v573, %v572
  %v698 = vpack.c.b16 %v575, %v574
  %v699 = vpack.c.b16 %v577, %v576
  %v700 = vpack.c.b16 %v579, %v578
  %v701 = vpack.c.b16 %v581, %v580
  %v702 = vpack.c.b16 %v583, %v582
  %v703 = vpack.c.b16 %v585, %v584
  %v704 = vpack.c.b16 %v587, %v586
  %v705 = vpack.c.b16 %v589, %v588
  %v706 = vpack.c.b16 %v591, %v590
  %v707 = vpack.c.b16 %v593, %v592
  %v708 = vpack.c.b16 %v595, %v594
  %v709 = vpack.c.b16 %v597, %v596
  %v710 = vpack.c.b16 %v599, %v598
  %v711 = vpack.c.b16 %v601, %v600
  %v712 = vpack.c.b16 %v603, %v602
  %v713 = vpack.c.b16 %v605, %v604
  %v714 = vpack.c.b16 %v607, %v606
  %v715 = vpack.c.b16 %v609, %v608
  %v716 = vpack.c.b16 %v611, %v610
  %v717 = vpack.c.b16 %v613, %v612
  %v718 = vpack.c.b16 %v615, %v614
  %v719 = vpack.c.b16 %v617, %v616
  %v720 = vpack.c.b16 %v619, %v618
  %v721 = vpack.c.b16 %v621, %v620
  %v722 = vpack.c.b16 %v623, %v622
  %v723 = vpack.c.b16 %v625, %v624
  %v724 = vpack.c.b16 %v627, %v626
  %v725 = vpack.c.b16 %v629, %v628
  %v726 = vpack.c.b16 %v631, %v630
  %v727 = vpack.c.b16 %v633, %v632
  %v728 = vpack.c.b16 %v635, %v634
  %v729 = vpack.c.b16 %v637, %v636
  %v730 = vpack.c.b16 %v639, %v638
  %v731 = vpack.c.b16 %v641, %v640
  %v732 = vpack.c.b16 %v643, %v642
  %v733 = vpack.c.b16 %v645, %v644
  %v734 = vpack.c.b16 %v647, %v646
  %v735 = vpack.c.b16 %v649, %v648
  %v736 = vpack.c.b16 %v651, %v650
  %v737 = vpack.c.b16 %v653, %v652
  %v738 = vpack.c.b16 %v655, %v654
  %v739 = vpack.c.b16 %v657, %v656
  %v740 = vpack.c.b16 %v659, %v658
  %v741 = vpack.c.b16 %v661, %v660
  %v742 = vpack.c.b16 %v663, %v662
  %v743 = vpack.c.b16 %v665, %v664
  %v744 = vpack.c.b16 %v667, %v666
  %v745 = vpack.c.b16 %v669, %v668
  %v746 = vpack.c.b16 %v671, %v670
  %v747 = vpack.c.b16 %v673, %v672
  %v748 = vpack.c.b16 %v675, %v674
  %v749 = vpack.c.b16 %v677, %v676
  %822 = vmatprep.subr.bf16.mxu0 0
  %823 = vmatpush1.bf16.msra.mxu0 %v678
  %824 = vmatprep.subr.bf16.mxu0 0
  %825 = vmatpush1.bf16.msra.mxu0 %v679
  %826 = vmatprep.subr.bf16.mxu0 0
  %827 = vmatpush1.bf16.msra.mxu0 %v680
  %828 = vmatprep.subr.bf16.mxu0 0
  %829 = vmatpush1.bf16.msra.mxu0 %v681
  %830 = vmatprep.subr.bf16.mxu0 0
  %831 = vmatpush1.bf16.msra.mxu0 %v682
  %832 = vmatprep.subr.bf16.mxu0 0
  %833 = vmatpush1.bf16.msra.mxu0 %v683
  %834 = vmatprep.subr.bf16.mxu0 0
  %835 = vmatpush1.bf16.msra.mxu0 %v684
  %836 = vmatprep.subr.bf16.mxu0 0
  %837 = vmatpush1.bf16.msra.mxu0 %v685
  %838 = vmatprep.subr.bf16.mxu0 0
  %839 = vmatpush1.bf16.msra.mxu0 %v686
  %840 = vmatprep.subr.bf16.mxu0 0
  %841 = vmatpush1.bf16.msra.mxu0 %v687
  %842 = vmatprep.subr.bf16.mxu0 0
  %843 = vmatpush1.bf16.msra.mxu0 %v688
  %844 = vmatprep.subr.bf16.mxu0 0
  %845 = vmatpush1.bf16.msra.mxu0 %v689
  %846 = vmatprep.subr.bf16.mxu0 0
  %847 = vmatpush1.bf16.msra.mxu0 %v690
  %848 = vmatprep.subr.bf16.mxu0 0
  %849 = vmatpush1.bf16.msra.mxu0 %v691
  %850 = vmatprep.subr.bf16.mxu0 0
  %851 = vmatpush1.bf16.msra.mxu0 %v692
  %852 = vmatprep.subr.bf16.mxu0 0
  %853 = vmatpush1.bf16.msra.mxu0 %v693
  %854 = vmatprep.mubr.bf16.mxu0 %v319
  %855 = vmatmul.mubr.bf16.gmra.mrb[0].mxu0 %v318
  %v856 = vpop.f32.mrb[0].mxu0
  %v857 = vadd.f32 %v204, %v856
  %v858 = vpop.f32.mrb[0].mxu0
  %v859 = vpop.f32.mrb[0].mxu0
  %v860 = vadd.f32 %v204, %v859
  %v861 = vpop.f32.mrb[0].mxu0
  %862 = vmatprep.mubr.bf16.mxu0 %v328
  %863 = vmatmul.mubr.bf16.gmra.mrb[0].mxu0 %v327
  %v864 = vpop.f32.mrb[0].mxu0
  %v865 = vadd.f32 %v204, %v864
  %v866 = vpop.f32.mrb[0].mxu0
  %v867 = vpop.f32.mrb[0].mxu0
  %v868 = vadd.f32 %v204, %v867
  %v869 = vpop.f32.mrb[0].mxu0
  %870 = vmatprep.mubr.bf16.mxu0 %v337
  %871 = vmatmul.mubr.bf16.gmra.mrb[0].mxu0 %v336
  %v872 = vpop.f32.mrb[0].mxu0
  %v873 = vadd.f32 %v204, %v872
  %v874 = vpop.f32.mrb[0].mxu0
  %v875 = vpop.f32.mrb[0].mxu0
  %v876 = vadd.f32 %v204, %v875
  %v877 = vpop.f32.mrb[0].mxu0
  %878 = vmatprep.mubr.bf16.mxu0 %v346
  %879 = vmatmul.mubr.bf16.gmra.mrb[0].mxu0 %v345
  %v880 = vpop.f32.mrb[0].mxu0
  %v881 = vadd.f32 %v204, %v880
  %v882 = vpop.f32.mrb[0].mxu0
  %v883 = vpop.f32.mrb[0].mxu0
  %v884 = vadd.f32 %v204, %v883
  %v885 = vpop.f32.mrb[0].mxu0
  %886 = vdwg.mxu0
  %887 = vmatprep.subr.bf16.mxu0 0
  %888 = vmatpush1.bf16.msra.mxu0 %v694
  %889 = vmatprep.subr.bf16.mxu0 0
  %890 = vmatpush1.bf16.msra.mxu0 %v695
  %891 = vmatprep.subr.bf16.mxu0 0
  %892 = vmatpush1.bf16.msra.mxu0 %v696
  %893 = vmatprep.subr.bf16.mxu0 0
  %894 = vmatpush1.bf16.msra.mxu0 %v697
  %895 = vmatprep.subr.bf16.mxu0 0
  %896 = vmatpush1.bf16.msra.mxu0 %v698
  %897 = vmatprep.subr.bf16.mxu0 0
  %898 = vmatpush1.bf16.msra.mxu0 %v699
  %899 = vmatprep.subr.bf16.mxu0 0
  %900 = vmatpush1.bf16.msra.mxu0 %v700
  %901 = vmatprep.subr.bf16.mxu0 0
  %902 = vmatpush1.bf16.msra.mxu0 %v701
  %903 = vmatprep.subr.bf16.mxu0 0
  %904 = vmatpush1.bf16.msra.mxu0 %v702
  %905 = vmatprep.subr.bf16.mxu0 0
  %906 = vmatpush1.bf16.msra.mxu0 %v703
  %907 = vmatprep.subr.bf16.mxu0 0
  %908 = vmatpush1.bf16.msra.mxu0 %v704
  %909 = vmatprep.subr.bf16.mxu0 0
  %910 = vmatpush1.bf16.msra.mxu0 %v705
  %911 = vmatprep.subr.bf16.mxu0 0
  %912 = vmatpush1.bf16.msra.mxu0 %v706
  %913 = vmatprep.subr.bf16.mxu0 0
  %914 = vmatpush1.bf16.msra.mxu0 %v707
  %915 = vmatprep.subr.bf16.mxu0 0
  %916 = vmatpush1.bf16.msra.mxu0 %v708
  %917 = vmatprep.subr.bf16.mxu0 0
  %918 = vmatpush1.bf16.msra.mxu0 %v709
  %919 = vmatprep.mubr.bf16.mxu0 %v321
  %920 = vmatmul.mubr.bf16.gmra.mrb[0].mxu0 %v320
  %v921 = vpop.f32.mrb[0].mxu0
  %v922 = vadd.f32 %v857, %v921
  %v923 = vpop.f32.mrb[0].mxu0
  %v924 = vpop.f32.mrb[0].mxu0
  %v925 = vadd.f32 %v860, %v924
  %v926 = vpop.f32.mrb[0].mxu0
  %927 = vmatprep.mubr.bf16.mxu0 %v330
  %928 = vmatmul.mubr.bf16.gmra.mrb[0].mxu0 %v329
  %v929 = vpop.f32.mrb[0].mxu0
  %v930 = vadd.f32 %v865, %v929
  %v931 = vpop.f32.mrb[0].mxu0
  %v932 = vpop.f32.mrb[0].mxu0
  %v933 = vadd.f32 %v868, %v932
  %v934 = vpop.f32.mrb[0].mxu0
  %935 = vmatprep.mubr.bf16.mxu0 %v339
  %936 = vmatmul.mubr.bf16.gmra.mrb[0].mxu0 %v338
  %v937 = vpop.f32.mrb[0].mxu0
  %v938 = vadd.f32 %v873, %v937
  %v939 = vpop.f32.mrb[0].mxu0
  %v940 = vpop.f32.mrb[0].mxu0
  %v941 = vadd.f32 %v876, %v940
  %v942 = vpop.f32.mrb[0].mxu0
  %943 = vmatprep.mubr.bf16.mxu0 %v348
  %944 = vmatmul.mubr.bf16.gmra.mrb[0].mxu0 %v347
  %v945 = vpop.f32.mrb[0].mxu0
  %v946 = vadd.f32 %v881, %v945
  %v947 = vpop.f32.mrb[0].mxu0
  %v948 = vpop.f32.mrb[0].mxu0
  %v949 = vadd.f32 %v884, %v948
  %v950 = vpop.f32.mrb[0].mxu0
  %951 = vdwg.mxu0
  %952 = vmatprep.subr.bf16.mxu0 0
  %953 = vmatpush1.bf16.msra.mxu0 %v710
  %954 = vmatprep.subr.bf16.mxu0 0
  %955 = vmatpush1.bf16.msra.mxu0 %v711
  %956 = vmatprep.subr.bf16.mxu0 0
  %957 = vmatpush1.bf16.msra.mxu0 %v712
  %958 = vmatprep.subr.bf16.mxu0 0
  %959 = vmatpush1.bf16.msra.mxu0 %v713
  %960 = vmatprep.subr.bf16.mxu0 0
  %961 = vmatpush1.bf16.msra.mxu0 %v714
  %962 = vmatprep.subr.bf16.mxu0 0
  %963 = vmatpush1.bf16.msra.mxu0 %v715
  %964 = vmatprep.subr.bf16.mxu0 0
  %965 = vmatpush1.bf16.msra.mxu0 %v716
  %966 = vmatprep.subr.bf16.mxu0 0
  %967 = vmatpush1.bf16.msra.mxu0 %v717
  %968 = vmatprep.subr.bf16.mxu0 0
  %969 = vmatpush1.bf16.msra.mxu0 %v718
  %970 = vmatprep.subr.bf16.mxu0 0
  %971 = vmatpush1.bf16.msra.mxu0 %v719
  %972 = vmatprep.subr.bf16.mxu0 0
  %973 = vmatpush1.bf16.msra.mxu0 %v720
  %974 = vmatprep.subr.bf16.mxu0 0
  %975 = vmatpush1.bf16.msra.mxu0 %v721
  %976 = vmatprep.subr.bf16.mxu0 0
  %977 = vmatpush1.bf16.msra.mxu0 %v722
  %978 = vmatprep.subr.bf16.mxu0 0
  %979 = vmatpush1.bf16.msra.mxu0 %v723
  %980 = vmatprep.subr.bf16.mxu0 0
  %981 = vmatpush1.bf16.msra.mxu0 %v724
  %982 = vmatprep.subr.bf16.mxu0 0
  %983 = vmatpush1.bf16.msra.mxu0 %v725
  %984 = vmatprep.mubr.bf16.mxu0 %v323
  %985 = vmatmul.mubr.bf16.gmra.mrb[0].mxu0 %v322
  %v986 = vpop.f32.mrb[0].mxu0
  %v987 = vadd.f32 %v922, %v986
  %v988 = vpop.f32.mrb[0].mxu0
  %v989 = vpop.f32.mrb[0].mxu0
  %v990 = vadd.f32 %v925, %v989
  %v991 = vpop.f32.mrb[0].mxu0
  %992 = vmatprep.mubr.bf16.mxu0 %v332
  %993 = vmatmul.mubr.bf16.gmra.mrb[0].mxu0 %v331
  %v994 = vpop.f32.mrb[0].mxu0
  %v995 = vadd.f32 %v930, %v994
  %v996 = vpop.f32.mrb[0].mxu0
  %v997 = vpop.f32.mrb[0].mxu0
  %v998 = vadd.f32 %v933, %v997
  %v999 = vpop.f32.mrb[0].mxu0
  %1000 = vmatprep.mubr.bf16.mxu0 %v341
  %1001 = vmatmul.mubr.bf16.gmra.mrb[0].mxu0 %v340
  %v1002 = vpop.f32.mrb[0].mxu0
  %v1003 = vadd.f32 %v938, %v1002
  %v1004 = vpop.f32.mrb[0].mxu0
  %v1005 = vpop.f32.mrb[0].mxu0
  %v1006 = vadd.f32 %v941, %v1005
  %v1007 = vpop.f32.mrb[0].mxu0
  %1008 = vmatprep.mubr.bf16.mxu0 %v350
  %1009 = vmatmul.mubr.bf16.gmra.mrb[0].mxu0 %v349
  %v1010 = vpop.f32.mrb[0].mxu0
  %v1011 = vadd.f32 %v946, %v1010
  %v1012 = vpop.f32.mrb[0].mxu0
  %v1013 = vpop.f32.mrb[0].mxu0
  %v1014 = vadd.f32 %v949, %v1013
  %v1015 = vpop.f32.mrb[0].mxu0
  %1016 = vdwg.mxu0
  %1017 = vmatprep.subr.bf16.mxu0 0
  %1018 = vmatpush1.bf16.msra.mxu0 %v726
  %1019 = vmatprep.subr.bf16.mxu0 0
  %1020 = vmatpush1.bf16.msra.mxu0 %v727
  %1021 = vmatprep.subr.bf16.mxu0 0
  %1022 = vmatpush1.bf16.msra.mxu0 %v728
  %1023 = vmatprep.subr.bf16.mxu0 0
  %1024 = vmatpush1.bf16.msra.mxu0 %v729
  %1025 = vmatprep.subr.bf16.mxu0 0
  %1026 = vmatpush1.bf16.msra.mxu0 %v730
  %1027 = vmatprep.subr.bf16.mxu0 0
  %1028 = vmatpush1.bf16.msra.mxu0 %v731
  %1029 = vmatprep.subr.bf16.mxu0 0
  %1030 = vmatpush1.bf16.msra.mxu0 %v732
  %1031 = vmatprep.subr.bf16.mxu0 0
  %1032 = vmatpush1.bf16.msra.mxu0 %v733
  %1033 = vmatprep.subr.bf16.mxu0 0
  %1034 = vmatpush1.bf16.msra.mxu0 %v734
  %1035 = vmatprep.subr.bf16.mxu0 0
  %1036 = vmatpush1.bf16.msra.mxu0 %v735
  %1037 = vmatprep.subr.bf16.mxu0 0
  %1038 = vmatpush1.bf16.msra.mxu0 %v736
  %1039 = vmatprep.subr.bf16.mxu0 0
  %1040 = vmatpush1.bf16.msra.mxu0 %v737
  %1041 = vmatprep.subr.bf16.mxu0 0
  %1042 = vmatpush1.bf16.msra.mxu0 %v738
  %1043 = vmatprep.subr.bf16.mxu0 0
  %1044 = vmatpush1.bf16.msra.mxu0 %v739
  %1045 = vmatprep.subr.bf16.mxu0 0
  %1046 = vmatpush1.bf16.msra.mxu0 %v740
  %1047 = vmatprep.subr.bf16.mxu0 0
  %1048 = vmatpush1.bf16.msra.mxu0 %v741
  %1049 = vmatprep.mubr.bf16.mxu0 %v325
  %1050 = vmatmul.mubr.bf16.gmra.mrb[0].mxu0 %v324
  %v1051 = vpop.f32.mrb[0].mxu0
  %v1052 = vadd.f32 %v987, %v1051
  %v1053 = vpop.f32.mrb[0].mxu0
  %v1054 = vpop.f32.mrb[0].mxu0
  %v1055 = vadd.f32 %v990, %v1054
  %v1056 = vpop.f32.mrb[0].mxu0
  %1057 = vmatprep.mubr.bf16.mxu0 %v334
  %1058 = vmatmul.mubr.bf16.gmra.mrb[0].mxu0 %v333
  %v1059 = vpop.f32.mrb[0].mxu0
  %v1060 = vadd.f32 %v995, %v1059
  %v1061 = vpop.f32.mrb[0].mxu0
  %v1062 = vpop.f32.mrb[0].mxu0
  %v1063 = vadd.f32 %v998, %v1062
  %v1064 = vpop.f32.mrb[0].mxu0
  %1065 = vmatprep.mubr.bf16.mxu0 %v343
  %1066 = vmatmul.mubr.bf16.gmra.mrb[0].mxu0 %v342
  %v1067 = vpop.f32.mrb[0].mxu0
  %v1068 = vadd.f32 %v1003, %v1067
  %v1069 = vpop.f32.mrb[0].mxu0
  %v1070 = vpop.f32.mrb[0].mxu0
  %v1071 = vadd.f32 %v1006, %v1070
  %v1072 = vpop.f32.mrb[0].mxu0
  %1073 = vmatprep.mubr.bf16.mxu0 %v352
  %1074 = vmatmul.mubr.bf16.gmra.mrb[0].mxu0 %v351
  %v1075 = vpop.f32.mrb[0].mxu0
  %v1076 = vadd.f32 %v1011, %v1075
  %v1077 = vpop.f32.mrb[0].mxu0
  %v1078 = vpop.f32.mrb[0].mxu0
  %v1079 = vadd.f32 %v1014, %v1078
  %v1080 = vpop.f32.mrb[0].mxu0
  %1081 = vdwg.mxu0
  %1082 = vmatprep.subr.bf16.mxu0 0
  %1083 = vmatpush1.bf16.msra.mxu0 %v742
  %1084 = vmatprep.subr.bf16.mxu0 0
  %1085 = vmatpush1.bf16.msra.mxu0 %v743
  %1086 = vmatprep.subr.bf16.mxu0 0
  %1087 = vmatpush1.bf16.msra.mxu0 %v744
  %1088 = vmatprep.subr.bf16.mxu0 0
  %1089 = vmatpush1.bf16.msra.mxu0 %v745
  %1090 = vmatprep.subr.bf16.mxu0 0
  %1091 = vmatpush1.bf16.msra.mxu0 %v746
  %1092 = vmatprep.subr.bf16.mxu0 0
  %1093 = vmatpush1.bf16.msra.mxu0 %v747
  %1094 = vmatprep.subr.bf16.mxu0 0
  %1095 = vmatpush1.bf16.msra.mxu0 %v748
  %1096 = vmatprep.subr.bf16.mxu0 0
  %1097 = vmatpush1.bf16.msra.mxu0 %v749
  %1098 = vmatprep.subr.bf16.mxu0 0
  %1099 = vmatpush1.bf16.msra.mxu0 0
  %1100 = vmatprep.subr.bf16.mxu0 0
  %1101 = vmatpush1.bf16.msra.mxu0 0
  %1102 = vmatprep.subr.bf16.mxu0 0
  %1103 = vmatpush1.bf16.msra.mxu0 0
  %1104 = vmatprep.subr.bf16.mxu0 0
  %1105 = vmatpush1.bf16.msra.mxu0 0
  %1106 = vmatprep.subr.bf16.mxu0 0
  %1107 = vmatpush1.bf16.msra.mxu0 0
  %1108 = vmatprep.subr.bf16.mxu0 0
  %1109 = vmatpush1.bf16.msra.mxu0 0
  %1110 = vmatprep.subr.bf16.mxu0 0
  %1111 = vmatpush1.bf16.msra.mxu0 0
  %1112 = vmatprep.subr.bf16.mxu0 0
  %1113 = vmatpush1.bf16.msra.mxu0 0
  %1114 = vmatprep.mubr.bf16.mxu0 0
  %1115 = vmatmul.mubr.bf16.gmra.mrb[0].mxu0 %v326
  %v1116 = vpop.f32.mrb[0].mxu0
  %v1117 = vadd.f32 %v1052, %v1116
  %v1118 = vpop.f32.mrb[0].mxu0
  %v1119 = vpop.f32.mrb[0].mxu0
  %v1120 = vadd.f32 %v1055, %v1119
  %v1121 = vpop.f32.mrb[0].mxu0
  %1122 = vmatprep.mubr.bf16.mxu0 0
  %1123 = vmatmul.mubr.bf16.gmra.mrb[0].mxu0 %v335
  %v1124 = vpop.f32.mrb[0].mxu0
  %v1125 = vadd.f32 %v1060, %v1124
  %v1126 = vpop.f32.mrb[0].mxu0
  %v1127 = vpop.f32.mrb[0].mxu0
  %v1128 = vadd.f32 %v1063, %v1127
  %v1129 = vpop.f32.mrb[0].mxu0
  %1130 = vmatprep.mubr.bf16.mxu0 0
  %1131 = vmatmul.mubr.bf16.gmra.mrb[0].mxu0 %v344
  %v1132 = vpop.f32.mrb[0].mxu0
  %v1133 = vadd.f32 %v1068, %v1132
  %v1134 = vpop.f32.mrb[0].mxu0
  %v1135 = vpop.f32.mrb[0].mxu0
  %v1136 = vadd.f32 %v1071, %v1135
  %v1137 = vpop.f32.mrb[0].mxu0
  %1138 = vmatprep.mubr.bf16.mxu0 0
  %1139 = vmatmul.mubr.bf16.gmra.mrb[0].mxu0 %v353
  %v1140 = vpop.f32.mrb[0].mxu0
  %v1141 = vadd.f32 %v1076, %v1140
  %v1142 = vpop.f32.mrb[0].mxu0
  %v1143 = vpop.f32.mrb[0].mxu0
  %v1144 = vadd.f32 %v1079, %v1143
  %v1145 = vpop.f32.mrb[0].mxu0
  %1146 = vdwg.mxu0
  %v1147 = vpack.c.bf16 %v1120, %v1117
  %v1148 = vpack.c.bf16 %v1128, %v1125
  %v1149 = vpack.c.bf16 %v1136, %v1133
  %v1150 = vpack.c.bf16 %v1144, %v1141
  %v1155 = vunpack.c.l.b16 %v1147
  %v1156 = vunpack.c.h.b16 %v1147
  %v1157 = vunpack.c.l.b16 %v1148
  %v1158 = vunpack.c.h.b16 %v1148
  %v1159 = vunpack.c.l.b16 %v1149
  %v1160 = vunpack.c.h.b16 %v1149
  %v1161 = vunpack.c.l.b16 %v1150
  %v1162 = vunpack.c.h.b16 %v1150
  %v1163 = vpack.c.b16 %v1155, %v1155
  %v1164 = vpack.c.b16 %v1156, %v1156
  %v1165 = vpack.c.b16 %v1157, %v1157
  %v1166 = vpack.c.b16 %v1158, %v1158
  %v1167 = vpack.c.b16 %v1159, %v1159
  %v1168 = vpack.c.b16 %v1160, %v1160
  %v1169 = vpack.c.b16 %v1161, %v1161
  %v1170 = vpack.c.b16 %v1162, %v1162
  %1179 = vst [vmem:[%s3] sm:$0xf] %v1163
  %1180 = vst [vmem:[%s3 + $0x4] sm:$0xf] %v1164
  %1181 = vst [vmem:[%s3 + $0x8] sm:$0xf] %v1165
  %1182 = vst [vmem:[%s3 + $0xc] sm:$0xf] %v1166
  %1183 = vst [vmem:[%s3 + $0x10] sm:$0xf] %v1167
  %1184 = vst [vmem:[%s3 + $0x14] sm:$0xf] %v1168
  %1185 = vst [vmem:[%s3 + $0x18] sm:$0xf] %v1169
  %1186 = vst [vmem:[%s3 + $0x1c] sm:$0xf] %v1170
  // Predicated region
  $region14: #{jump_forward_device.48} parent=0 // pred_check
    _
  $region15: #{jump_forward_device.48} parent=0 // pred_check_branch
    %1188 = sbr.rel (0) target = $region17
  $region16: #{jump_forward_device.48} parent=0 // pred_region
    _
  $region17: #{jump_forward_device.48} parent=0 // pred_fallthru
    _
  // Predicated region
  $region18: #{jump_forward_device.48} parent=0 // pred_check
    _
  $region19: #{jump_forward_device.48} parent=0 // pred_check_branch
    %1190 = sbr.rel (0) target = $region21
  $region20: #{jump_forward_device.48} parent=0 // pred_region
    _
  $region21: #{jump_forward_device.48} parent=0 // pred_fallthru
    _

// kernel: jump_forward_device.51
$region0: #{jump_forward_device.51}
  #allocation0 [shape = 'u32[]', space=smem, size = 0x4, offset = 0x4, fixed_abs, tag = 'smem constant byte address 0x4 - core index']
  #allocation1 [shape = 'u32[144,128]{1,0:T(1,128)}', space=vmem, size = 0x12000, scoped, tag = 'internal scratch']
  %s0 = inlined_call_operand.vmem [shape: bf16[8,640], index: 0, kind: input, shape index: {}]
  %s1 = inlined_call_operand.vmem [shape: bf16[640,128], index: 1, kind: input, shape index: {}]
  %s2 = inlined_call_operand.vmem [shape: f32[1,128], index: 2, kind: input, shape index: {}]
  %s3 = inlined_call_operand.vmem [shape: f32[8,128], index: 3, kind: output, shape index: {}]
  %s4 = sld [smem:[#allocation0]]
  $region22: #{jump_forward_device.51} parent=0
    _
  %s6 = ssub.s32 1, %s4
  %s7 = scalar_select 0, %s6, %s4
  // Predicated region
  $region2: #{jump_forward_device.51} parent=0 // pred_check
    _
  $region3: #{jump_forward_device.51} parent=0 // pred_check_branch
    %9 = sbr.rel (0) target = $region5
  $region4: #{jump_forward_device.51} parent=0 // pred_region
    _
  $region5: #{jump_forward_device.51} parent=0 // pred_fallthru
    _
  // Predicated region
  $region6: #{jump_forward_device.51} parent=0 // pred_check
    _
  $region7: #{jump_forward_device.51} parent=0 // pred_check_branch
    %11 = sbr.rel (0) target = $region9
  $region8: #{jump_forward_device.51} parent=0 // pred_region
    _
  $region9: #{jump_forward_device.51} parent=0 // pred_fallthru
    _
  // Predicated region
  $region10: #{jump_forward_device.51} parent=0 // pred_check
    _
  $region11: #{jump_forward_device.51} parent=0 // pred_check_branch
    %13 = sbr.rel (0) target = $region13
  $region12: #{jump_forward_device.51} parent=0 // pred_region
    _
  $region13: #{jump_forward_device.51} parent=0 // pred_fallthru
    _
  %v15 = vld [vmem:[%s0] sm:$0xff]
  %v16 = vld [vmem:[%s0 + $0x8] sm:$0xff]
  %v17 = vld [vmem:[%s0 + $0x10] sm:$0xf]
  %v18 = vld [vmem:[%s1] sm:$0xf]
  %v19 = vld [vmem:[%s1 + $0x4] sm:$0xf]
  %v20 = vld [vmem:[%s1 + $0x8] sm:$0xf]
  %v21 = vld [vmem:[%s1 + $0xc] sm:$0xf]
  %v22 = vld [vmem:[%s1 + $0x10] sm:$0xf]
  %v23 = vld [vmem:[%s1 + $0x14] sm:$0xf]
  %v24 = vld [vmem:[%s1 + $0x18] sm:$0xf]
  %v25 = vld [vmem:[%s1 + $0x1c] sm:$0xf]
  %v26 = vld [vmem:[%s1 + $0x20] sm:$0xf]
  %v27 = vld [vmem:[%s1 + $0x24] sm:$0xf]
  %v28 = vld [vmem:[%s1 + $0x28] sm:$0xf]
  %v29 = vld [vmem:[%s1 + $0x2c] sm:$0xf]
  %v30 = vld [vmem:[%s1 + $0x30] sm:$0xf]
  %v31 = vld [vmem:[%s1 + $0x34] sm:$0xf]
  %v32 = vld [vmem:[%s1 + $0x38] sm:$0xf]
  %v33 = vld [vmem:[%s1 + $0x3c] sm:$0xf]
  %v34 = vld [vmem:[%s1 + $0x40] sm:$0xf]
  %v35 = vld [vmem:[%s1 + $0x44] sm:$0xf]
  %v36 = vld [vmem:[%s1 + $0x48] sm:$0xf]
  %v37 = vld [vmem:[%s1 + $0x4c] sm:$0xf]
  %v38 = vld [vmem:[%s1 + $0x50] sm:$0xf]
  %v39 = vld [vmem:[%s1 + $0x54] sm:$0xf]
  %v40 = vld [vmem:[%s1 + $0x58] sm:$0xf]
  %v41 = vld [vmem:[%s1 + $0x5c] sm:$0xf]
  %v42 = vld [vmem:[%s1 + $0x60] sm:$0xf]
  %v43 = vld [vmem:[%s1 + $0x64] sm:$0xf]
  %v44 = vld [vmem:[%s1 + $0x68] sm:$0xf]
  %v45 = vld [vmem:[%s1 + $0x6c] sm:$0xf]
  %v46 = vld [vmem:[%s1 + $0x70] sm:$0xf]
  %v47 = vld [vmem:[%s1 + $0x74] sm:$0xf]
  %v48 = vld [vmem:[%s1 + $0x78] sm:$0xf]
  %v49 = vld [vmem:[%s1 + $0x7c] sm:$0xf]
  %v50 = vld [vmem:[%s1 + $0x80] sm:$0xf]
  %v51 = vld [vmem:[%s1 + $0x84] sm:$0xf]
  %v52 = vld [vmem:[%s1 + $0x88] sm:$0xf]
  %v53 = vld [vmem:[%s1 + $0x8c] sm:$0xf]
  %v54 = vld [vmem:[%s1 + $0x90] sm:$0xf]
  %v55 = vld [vmem:[%s1 + $0x94] sm:$0xf]
  %v56 = vld [vmem:[%s1 + $0x98] sm:$0xf]
  %v57 = vld [vmem:[%s1 + $0x9c] sm:$0xf]
  %v58 = vld [vmem:[%s1 + $0xa0] sm:$0xf]
  %v59 = vld [vmem:[%s1 + $0xa4] sm:$0xf]
  %v60 = vld [vmem:[%s1 + $0xa8] sm:$0xf]
  %v61 = vld [vmem:[%s1 + $0xac] sm:$0xf]
  %v62 = vld [vmem:[%s1 + $0xb0] sm:$0xf]
  %v63 = vld [vmem:[%s1 + $0xb4] sm:$0xf]
  %v64 = vld [vmem:[%s1 + $0xb8] sm:$0xf]
  %v65 = vld [vmem:[%s1 + $0xbc] sm:$0xf]
  %v66 = vld [vmem:[%s1 + $0xc0] sm:$0xf]
  %v67 = vld [vmem:[%s1 + $0xc4] sm:$0xf]
  %v68 = vld [vmem:[%s1 + $0xc8] sm:$0xf]
  %v69 = vld [vmem:[%s1 + $0xcc] sm:$0xf]
  %v70 = vld [vmem:[%s1 + $0xd0] sm:$0xf]
  %v71 = vld [vmem:[%s1 + $0xd4] sm:$0xf]
  %v72 = vld [vmem:[%s1 + $0xd8] sm:$0xf]
  %v73 = vld [vmem:[%s1 + $0xdc] sm:$0xf]
  %v74 = vld [vmem:[%s1 + $0xe0] sm:$0xf]
  %v75 = vld [vmem:[%s1 + $0xe4] sm:$0xf]
  %v76 = vld [vmem:[%s1 + $0xe8] sm:$0xf]
  %v77 = vld [vmem:[%s1 + $0xec] sm:$0xf]
  %v78 = vld [vmem:[%s1 + $0xf0] sm:$0xf]
  %v79 = vld [vmem:[%s1 + $0xf4] sm:$0xf]
  %v80 = vld [vmem:[%s1 + $0xf8] sm:$0xf]
  %v81 = vld [vmem:[%s1 + $0xfc] sm:$0xf]
  %v82 = vld [vmem:[%s1 + $0x100] sm:$0xf]
  %v83 = vld [vmem:[%s1 + $0x104] sm:$0xf]
  %v84 = vld [vmem:[%s1 + $0x108] sm:$0xf]
  %v85 = vld [vmem:[%s1 + $0x10c] sm:$0xf]
  %v86 = vld [vmem:[%s1 + $0x110] sm:$0xf]
  %v87 = vld [vmem:[%s1 + $0x114] sm:$0xf]
  %v88 = vld [vmem:[%s1 + $0x118] sm:$0xf]
  %v89 = vld [vmem:[%s1 + $0x11c] sm:$0xf]
  %v90 = vld [vmem:[%s1 + $0x120] sm:$0xf]
  %v91 = vld [vmem:[%s1 + $0x124] sm:$0xf]
  %v92 = vld [vmem:[%s1 + $0x128] sm:$0xf]
  %v93 = vld [vmem:[%s1 + $0x12c] sm:$0xf]
  %v94 = vld [vmem:[%s1 + $0x130] sm:$0xf]
  %v95 = vld [vmem:[%s1 + $0x134] sm:$0xf]
  %v96 = vld [vmem:[%s1 + $0x138] sm:$0xf]
  %v97 = vld [vmem:[%s1 + $0x13c] sm:$0xf]
  %v98 = vld [vmem:[%s2] sm:$0x1]
  %v100 = vlaneseq
  %v101 = vshrl.u32 %v100, 7
  %v102 = vsub.s32 0, %v101
  %v103 = vrot.slane %v98, %v102
  %v108 = vunpack.c.l.b16 %v15
  %v109 = vunpack.c.h.b16 %v15
  %v110 = vunpack.c.l.b16 %v16
  %v111 = vunpack.c.h.b16 %v16
  %v112 = vunpack.c.l.b16 %v17
  %v113 = vpack.c.b16 %v108, %v108
  %v114 = vpack.c.b16 %v109, %v109
  %v115 = vpack.c.b16 %v110, %v110
  %v116 = vpack.c.b16 %v111, %v111
  %v117 = vpack.c.b16 %v112, %v112
  %v203 = vunpack.c.l.b16 %v18
  %v204 = vunpack.c.l.b16 %v19
  %v205 = vunpack.c.l.b16 %v20
  %v206 = vunpack.c.l.b16 %v21
  %v207 = vunpack.c.l.b16 %v22
  %v208 = vunpack.c.l.b16 %v23
  %v209 = vunpack.c.l.b16 %v24
  %v210 = vunpack.c.l.b16 %v25
  %v211 = vunpack.c.l.b16 %v26
  %v212 = vunpack.c.l.b16 %v27
  %v213 = vunpack.c.l.b16 %v28
  %v214 = vunpack.c.l.b16 %v29
  %v215 = vunpack.c.l.b16 %v30
  %v216 = vunpack.c.l.b16 %v31
  %v217 = vunpack.c.l.b16 %v32
  %v218 = vunpack.c.l.b16 %v33
  %v219 = vunpack.c.l.b16 %v34
  %v220 = vunpack.c.l.b16 %v35
  %v221 = vunpack.c.l.b16 %v36
  %v222 = vunpack.c.l.b16 %v37
  %v223 = vunpack.c.l.b16 %v38
  %v224 = vunpack.c.l.b16 %v39
  %v225 = vunpack.c.l.b16 %v40
  %v226 = vunpack.c.l.b16 %v41
  %v227 = vunpack.c.l.b16 %v42
  %v228 = vunpack.c.l.b16 %v43
  %v229 = vunpack.c.l.b16 %v44
  %v230 = vunpack.c.l.b16 %v45
  %v231 = vunpack.c.l.b16 %v46
  %v232 = vunpack.c.l.b16 %v47
  %v233 = vunpack.c.l.b16 %v48
  %v234 = vunpack.c.l.b16 %v49
  %v235 = vunpack.c.l.b16 %v50
  %v236 = vunpack.c.l.b16 %v51
  %v237 = vunpack.c.l.b16 %v52
  %v238 = vunpack.c.l.b16 %v53
  %v239 = vunpack.c.l.b16 %v54
  %v240 = vunpack.c.l.b16 %v55
  %v241 = vunpack.c.l.b16 %v56
  %v242 = vunpack.c.l.b16 %v57
  %v243 = vunpack.c.l.b16 %v58
  %v244 = vunpack.c.l.b16 %v59
  %v245 = vunpack.c.l.b16 %v60
  %v246 = vunpack.c.l.b16 %v61
  %v247 = vunpack.c.l.b16 %v62
  %v248 = vunpack.c.l.b16 %v63
  %v249 = vunpack.c.l.b16 %v64
  %v250 = vunpack.c.l.b16 %v65
  %v251 = vunpack.c.l.b16 %v66
  %v252 = vunpack.c.l.b16 %v67
  %v253 = vunpack.c.l.b16 %v68
  %v254 = vunpack.c.l.b16 %v69
  %v255 = vunpack.c.l.b16 %v70
  %v256 = vunpack.c.l.b16 %v71
  %v257 = vunpack.c.l.b16 %v72
  %v258 = vunpack.c.l.b16 %v73
  %v259 = vunpack.c.l.b16 %v74
  %v260 = vunpack.c.l.b16 %v75
  %v261 = vunpack.c.l.b16 %v76
  %v262 = vunpack.c.l.b16 %v77
  %v263 = vunpack.c.l.b16 %v78
  %v264 = vunpack.c.l.b16 %v79
  %v265 = vunpack.c.l.b16 %v80
  %v266 = vunpack.c.l.b16 %v81
  %v267 = vunpack.c.l.b16 %v82
  %v268 = vunpack.c.l.b16 %v83
  %v269 = vunpack.c.l.b16 %v84
  %v270 = vunpack.c.l.b16 %v85
  %v271 = vunpack.c.l.b16 %v86
  %v272 = vunpack.c.l.b16 %v87
  %v273 = vunpack.c.l.b16 %v88
  %v274 = vunpack.c.l.b16 %v89
  %v275 = vunpack.c.l.b16 %v90
  %v276 = vunpack.c.l.b16 %v91
  %v277 = vunpack.c.l.b16 %v92
  %v278 = vunpack.c.l.b16 %v93
  %v279 = vunpack.c.l.b16 %v94
  %v280 = vunpack.c.l.b16 %v95
  %v281 = vunpack.c.l.b16 %v96
  %v282 = vunpack.c.l.b16 %v97
  %v283 = vpack.c.b16 %v204, %v203
  %v284 = vpack.c.b16 %v206, %v205
  %v285 = vpack.c.b16 %v208, %v207
  %v286 = vpack.c.b16 %v210, %v209
  %v287 = vpack.c.b16 %v212, %v211
  %v288 = vpack.c.b16 %v214, %v213
  %v289 = vpack.c.b16 %v216, %v215
  %v290 = vpack.c.b16 %v218, %v217
  %v291 = vpack.c.b16 %v220, %v219
  %v292 = vpack.c.b16 %v222, %v221
  %v293 = vpack.c.b16 %v224, %v223
  %v294 = vpack.c.b16 %v226, %v225
  %v295 = vpack.c.b16 %v228, %v227
  %v296 = vpack.c.b16 %v230, %v229
  %v297 = vpack.c.b16 %v232, %v231
  %v298 = vpack.c.b16 %v234, %v233
  %v299 = vpack.c.b16 %v236, %v235
  %v300 = vpack.c.b16 %v238, %v237
  %v301 = vpack.c.b16 %v240, %v239
  %v302 = vpack.c.b16 %v242, %v241
  %v303 = vpack.c.b16 %v244, %v243
  %v304 = vpack.c.b16 %v246, %v245
  %v305 = vpack.c.b16 %v248, %v247
  %v306 = vpack.c.b16 %v250, %v249
  %v307 = vpack.c.b16 %v252, %v251
  %v308 = vpack.c.b16 %v254, %v253
  %v309 = vpack.c.b16 %v256, %v255
  %v310 = vpack.c.b16 %v258, %v257
  %v311 = vpack.c.b16 %v260, %v259
  %v312 = vpack.c.b16 %v262, %v261
  %v313 = vpack.c.b16 %v264, %v263
  %v314 = vpack.c.b16 %v266, %v265
  %v315 = vpack.c.b16 %v268, %v267
  %v316 = vpack.c.b16 %v270, %v269
  %v317 = vpack.c.b16 %v272, %v271
  %v318 = vpack.c.b16 %v274, %v273
  %v319 = vpack.c.b16 %v276, %v275
  %v320 = vpack.c.b16 %v278, %v277
  %v321 = vpack.c.b16 %v280, %v279
  %v322 = vpack.c.b16 %v282, %v281
  %363 = vmatprep.subr.bf16.mxu0 0
  %364 = vmatpush1.bf16.msra.mxu0 %v283
  %365 = vmatprep.subr.bf16.mxu0 0
  %366 = vmatpush1.bf16.msra.mxu0 %v284
  %367 = vmatprep.subr.bf16.mxu0 0
  %368 = vmatpush1.bf16.msra.mxu0 %v285
  %369 = vmatprep.subr.bf16.mxu0 0
  %370 = vmatpush1.bf16.msra.mxu0 %v286
  %371 = vmatprep.subr.bf16.mxu0 0
  %372 = vmatpush1.bf16.msra.mxu0 %v287
  %373 = vmatprep.subr.bf16.mxu0 0
  %374 = vmatpush1.bf16.msra.mxu0 %v288
  %375 = vmatprep.subr.bf16.mxu0 0
  %376 = vmatpush1.bf16.msra.mxu0 %v289
  %377 = vmatprep.subr.bf16.mxu0 0
  %378 = vmatpush1.bf16.msra.mxu0 %v290
  %379 = vmatprep.subr.bf16.mxu0 0
  %380 = vmatpush1.bf16.msra.mxu0 %v291
  %381 = vmatprep.subr.bf16.mxu0 0
  %382 = vmatpush1.bf16.msra.mxu0 %v292
  %383 = vmatprep.subr.bf16.mxu0 0
  %384 = vmatpush1.bf16.msra.mxu0 %v293
  %385 = vmatprep.subr.bf16.mxu0 0
  %386 = vmatpush1.bf16.msra.mxu0 %v294
  %387 = vmatprep.subr.bf16.mxu0 0
  %388 = vmatpush1.bf16.msra.mxu0 %v295
  %389 = vmatprep.subr.bf16.mxu0 0
  %390 = vmatpush1.bf16.msra.mxu0 %v296
  %391 = vmatprep.subr.bf16.mxu0 0
  %392 = vmatpush1.bf16.msra.mxu0 %v297
  %393 = vmatprep.subr.bf16.mxu0 0
  %394 = vmatpush1.bf16.msra.mxu0 %v298
  %395 = vmatprep.mubr.bf16.mxu0 %v114
  %396 = vmatmul.mubr.bf16.gmra.mrb[0].mxu0 %v113
  %v397 = vpop.f32.mrb[0].mxu0
  %v398 = vadd.f32 %v103, %v397
  %v399 = vpop.f32.mrb[0].mxu0
  %v400 = vpop.f32.mrb[0].mxu0
  %v401 = vpop.f32.mrb[0].mxu0
  %402 = vdwg.mxu0
  %403 = vmatprep.subr.bf16.mxu0 0
  %404 = vmatpush1.bf16.msra.mxu0 %v299
  %405 = vmatprep.subr.bf16.mxu0 0
  %406 = vmatpush1.bf16.msra.mxu0 %v300
  %407 = vmatprep.subr.bf16.mxu0 0
  %408 = vmatpush1.bf16.msra.mxu0 %v301
  %409 = vmatprep.subr.bf16.mxu0 0
  %410 = vmatpush1.bf16.msra.mxu0 %v302
  %411 = vmatprep.subr.bf16.mxu0 0
  %412 = vmatpush1.bf16.msra.mxu0 %v303
  %413 = vmatprep.subr.bf16.mxu0 0
  %414 = vmatpush1.bf16.msra.mxu0 %v304
  %415 = vmatprep.subr.bf16.mxu0 0
  %416 = vmatpush1.bf16.msra.mxu0 %v305
  %417 = vmatprep.subr.bf16.mxu0 0
  %418 = vmatpush1.bf16.msra.mxu0 %v306
  %419 = vmatprep.subr.bf16.mxu0 0
  %420 = vmatpush1.bf16.msra.mxu0 %v307
  %421 = vmatprep.subr.bf16.mxu0 0
  %422 = vmatpush1.bf16.msra.mxu0 %v308
  %423 = vmatprep.subr.bf16.mxu0 0
  %424 = vmatpush1.bf16.msra.mxu0 %v309
  %425 = vmatprep.subr.bf16.mxu0 0
  %426 = vmatpush1.bf16.msra.mxu0 %v310
  %427 = vmatprep.subr.bf16.mxu0 0
  %428 = vmatpush1.bf16.msra.mxu0 %v311
  %429 = vmatprep.subr.bf16.mxu0 0
  %430 = vmatpush1.bf16.msra.mxu0 %v312
  %431 = vmatprep.subr.bf16.mxu0 0
  %432 = vmatpush1.bf16.msra.mxu0 %v313
  %433 = vmatprep.subr.bf16.mxu0 0
  %434 = vmatpush1.bf16.msra.mxu0 %v314
  %435 = vmatprep.mubr.bf16.mxu0 %v116
  %436 = vmatmul.mubr.bf16.gmra.mrb[0].mxu0 %v115
  %v437 = vpop.f32.mrb[0].mxu0
  %v438 = vadd.f32 %v398, %v437
  %v439 = vpop.f32.mrb[0].mxu0
  %v440 = vpop.f32.mrb[0].mxu0
  %v441 = vpop.f32.mrb[0].mxu0
  %442 = vdwg.mxu0
  %443 = vmatprep.subr.bf16.mxu0 0
  %444 = vmatpush1.bf16.msra.mxu0 %v315
  %445 = vmatprep.subr.bf16.mxu0 0
  %446 = vmatpush1.bf16.msra.mxu0 %v316
  %447 = vmatprep.subr.bf16.mxu0 0
  %448 = vmatpush1.bf16.msra.mxu0 %v317
  %449 = vmatprep.subr.bf16.mxu0 0
  %450 = vmatpush1.bf16.msra.mxu0 %v318
  %451 = vmatprep.subr.bf16.mxu0 0
  %452 = vmatpush1.bf16.msra.mxu0 %v319
  %453 = vmatprep.subr.bf16.mxu0 0
  %454 = vmatpush1.bf16.msra.mxu0 %v320
  %455 = vmatprep.subr.bf16.mxu0 0
  %456 = vmatpush1.bf16.msra.mxu0 %v321
  %457 = vmatprep.subr.bf16.mxu0 0
  %458 = vmatpush1.bf16.msra.mxu0 %v322
  %459 = vmatprep.subr.bf16.mxu0 0
  %460 = vmatpush1.bf16.msra.mxu0 0
  %461 = vmatprep.subr.bf16.mxu0 0
  %462 = vmatpush1.bf16.msra.mxu0 0
  %463 = vmatprep.subr.bf16.mxu0 0
  %464 = vmatpush1.bf16.msra.mxu0 0
  %465 = vmatprep.subr.bf16.mxu0 0
  %466 = vmatpush1.bf16.msra.mxu0 0
  %467 = vmatprep.subr.bf16.mxu0 0
  %468 = vmatpush1.bf16.msra.mxu0 0
  %469 = vmatprep.subr.bf16.mxu0 0
  %470 = vmatpush1.bf16.msra.mxu0 0
  %471 = vmatprep.subr.bf16.mxu0 0
  %472 = vmatpush1.bf16.msra.mxu0 0
  %473 = vmatprep.subr.bf16.mxu0 0
  %474 = vmatpush1.bf16.msra.mxu0 0
  %475 = vmatprep.mubr.bf16.mxu0 0
  %476 = vmatmul.mubr.bf16.gmra.mrb[0].mxu0 %v117
  %v477 = vpop.f32.mrb[0].mxu0
  %v478 = vadd.f32 %v438, %v477
  %v479 = vpop.f32.mrb[0].mxu0
  %v480 = vpop.f32.mrb[0].mxu0
  %v481 = vpop.f32.mrb[0].mxu0
  %482 = vdwg.mxu0
  %v483 = vlaneseq
  %v484 = vand.u32 %v483, 127
  %v485 = vmax.f32 %v478, 0.0
  %v486 = vand.u32 2147483647, %v478
  %v487 = vsub.f32 0.0, %v486
  %v488 = vmul.f32 %v487, 1.442695
  %v489 = vpow.pop %v488
  %v490 = vadd.f32 %v489, 1.0
  %v491 = vlog2.pop %v490
  %v492 = vmul.f32 %v491, 0.6931472
  %v493 = vadd.f32 %v485, %v492
  %vm494 = vcmp.lt.s32.totalorder %v484, 3
  %v495 = vadd.f32 %v493, 0.0001
  %v496 = vsel %vm494, %v478, %v495
  %497 = vst [vmem:[%s3] sm:$0xff] %v496
  // Predicated region
  $region14: #{jump_forward_device.51} parent=0 // pred_check
    _
  $region15: #{jump_forward_device.51} parent=0 // pred_check_branch
    %499 = sbr.rel (0) target = $region17
  $region16: #{jump_forward_device.51} parent=0 // pred_region
    _
  $region17: #{jump_forward_device.51} parent=0 // pred_fallthru
    _
  // Predicated region
  $region18: #{jump_forward_device.51} parent=0 // pred_check
    _
  $region19: #{jump_forward_device.51} parent=0 // pred_check_branch
    %501 = sbr.rel (0) target = $region21
  $region20: #{jump_forward_device.51} parent=0 // pred_region
    _
  $region21: #{jump_forward_device.51} parent=0 // pred_fallthru
    _

// kernel: jump_forward_device.43
$region0: #{jump_forward_device.43}
  #allocation0 [shape = 'u32[]', space=smem, size = 0x4, offset = 0x4, fixed_abs, tag = 'smem constant byte address 0x4 - core index']
  #allocation1 [shape = 'u32[144,128]{1,0:T(1,128)}', space=vmem, size = 0x12000, scoped, tag = 'internal scratch']
  %s0 = inlined_call_operand.vmem [shape: bf16[8,128], index: 0, kind: input, shape index: {}]
  %s1 = inlined_call_operand.vmem [shape: bf16[128,128], index: 1, kind: input, shape index: {}]
  %s2 = inlined_call_operand.vmem [shape: f32[1,128], index: 2, kind: input, shape index: {}]
  %s3 = inlined_call_operand.vmem [shape: bf16[8,128], index: 3, kind: output, shape index: {}]
  %s4 = sld [smem:[#allocation0]]
  $region22: #{jump_forward_device.43} parent=0
    _
  %s6 = ssub.s32 1, %s4
  %s7 = scalar_select 0, %s6, %s4
  // Predicated region
  $region2: #{jump_forward_device.43} parent=0 // pred_check
    _
  $region3: #{jump_forward_device.43} parent=0 // pred_check_branch
    %9 = sbr.rel (0) target = $region5
  $region4: #{jump_forward_device.43} parent=0 // pred_region
    _
  $region5: #{jump_forward_device.43} parent=0 // pred_fallthru
    _
  // Predicated region
  $region6: #{jump_forward_device.43} parent=0 // pred_check
    _
  $region7: #{jump_forward_device.43} parent=0 // pred_check_branch
    %11 = sbr.rel (0) target = $region9
  $region8: #{jump_forward_device.43} parent=0 // pred_region
    _
  $region9: #{jump_forward_device.43} parent=0 // pred_fallthru
    _
  // Predicated region
  $region10: #{jump_forward_device.43} parent=0 // pred_check
    _
  $region11: #{jump_forward_device.43} parent=0 // pred_check_branch
    %13 = sbr.rel (0) target = $region13
  $region12: #{jump_forward_device.43} parent=0 // pred_region
    _
  $region13: #{jump_forward_device.43} parent=0 // pred_fallthru
    _
  %v15 = vld [vmem:[%s0] sm:$0xf]
  %v16 = vld [vmem:[%s1] sm:$0xf]
  %v17 = vld [vmem:[%s1 + $0x4] sm:$0xf]
  %v18 = vld [vmem:[%s1 + $0x8] sm:$0xf]
  %v19 = vld [vmem:[%s1 + $0xc] sm:$0xf]
  %v20 = vld [vmem:[%s1 + $0x10] sm:$0xf]
  %v21 = vld [vmem:[%s1 + $0x14] sm:$0xf]
  %v22 = vld [vmem:[%s1 + $0x18] sm:$0xf]
  %v23 = vld [vmem:[%s1 + $0x1c] sm:$0xf]
  %v24 = vld [vmem:[%s1 + $0x20] sm:$0xf]
  %v25 = vld [vmem:[%s1 + $0x24] sm:$0xf]
  %v26 = vld [vmem:[%s1 + $0x28] sm:$0xf]
  %v27 = vld [vmem:[%s1 + $0x2c] sm:$0xf]
  %v28 = vld [vmem:[%s1 + $0x30] sm:$0xf]
  %v29 = vld [vmem:[%s1 + $0x34] sm:$0xf]
  %v30 = vld [vmem:[%s1 + $0x38] sm:$0xf]
  %v31 = vld [vmem:[%s1 + $0x3c] sm:$0xf]
  %v32 = vld [vmem:[%s2] sm:$0x1]
  %v34 = vlaneseq
  %v35 = vshrl.u32 %v34, 7
  %v36 = vsub.s32 0, %v35
  %v37 = vrot.slane %v32, %v36
  %v55 = vunpack.c.l.b16 %v16
  %v56 = vunpack.c.l.b16 %v17
  %v57 = vunpack.c.l.b16 %v18
  %v58 = vunpack.c.l.b16 %v19
  %v59 = vunpack.c.l.b16 %v20
  %v60 = vunpack.c.l.b16 %v21
  %v61 = vunpack.c.l.b16 %v22
  %v62 = vunpack.c.l.b16 %v23
  %v63 = vunpack.c.l.b16 %v24
  %v64 = vunpack.c.l.b16 %v25
  %v65 = vunpack.c.l.b16 %v26
  %v66 = vunpack.c.l.b16 %v27
  %v67 = vunpack.c.l.b16 %v28
  %v68 = vunpack.c.l.b16 %v29
  %v69 = vunpack.c.l.b16 %v30
  %v70 = vunpack.c.l.b16 %v31
  %v71 = vpack.c.b16 %v56, %v55
  %v72 = vpack.c.b16 %v58, %v57
  %v73 = vpack.c.b16 %v60, %v59
  %v74 = vpack.c.b16 %v62, %v61
  %v75 = vpack.c.b16 %v64, %v63
  %v76 = vpack.c.b16 %v66, %v65
  %v77 = vpack.c.b16 %v68, %v67
  %v78 = vpack.c.b16 %v70, %v69
  %87 = vmatprep.subr.bf16.mxu0 0
  %88 = vmatpush1.bf16.msra.mxu0 %v71
  %89 = vmatprep.subr.bf16.mxu0 0
  %90 = vmatpush1.bf16.msra.mxu0 %v72
  %91 = vmatprep.subr.bf16.mxu0 0
  %92 = vmatpush1.bf16.msra.mxu0 %v73
  %93 = vmatprep.subr.bf16.mxu0 0
  %94 = vmatpush1.bf16.msra.mxu0 %v74
  %95 = vmatprep.subr.bf16.mxu0 0
  %96 = vmatpush1.bf16.msra.mxu0 %v75
  %97 = vmatprep.subr.bf16.mxu0 0
  %98 = vmatpush1.bf16.msra.mxu0 %v76
  %99 = vmatprep.subr.bf16.mxu0 0
  %100 = vmatpush1.bf16.msra.mxu0 %v77
  %101 = vmatprep.subr.bf16.mxu0 0
  %102 = vmatpush1.bf16.msra.mxu0 %v78
  %103 = vmatprep.subr.bf16.mxu0 0
  %104 = vmatpush1.bf16.msra.mxu0 0
  %105 = vmatprep.subr.bf16.mxu0 0
  %106 = vmatpush1.bf16.msra.mxu0 0
  %107 = vmatprep.subr.bf16.mxu0 0
  %108 = vmatpush1.bf16.msra.mxu0 0
  %109 = vmatprep.subr.bf16.mxu0 0
  %110 = vmatpush1.bf16.msra.mxu0 0
  %111 = vmatprep.subr.bf16.mxu0 0
  %112 = vmatpush1.bf16.msra.mxu0 0
  %113 = vmatprep.subr.bf16.mxu0 0
  %114 = vmatpush1.bf16.msra.mxu0 0
  %115 = vmatprep.subr.bf16.mxu0 0
  %116 = vmatpush1.bf16.msra.mxu0 0
  %117 = vmatprep.subr.bf16.mxu0 0
  %118 = vmatpush1.bf16.msra.mxu0 0
  %119 = vmatprep.mubr.bf16.mxu0 0
  %120 = vmatmul.mubr.bf16.gmra.mrb[0].mxu0 %v15
  %v121 = vpop.f32.mrb[0].mxu0
  %v122 = vadd.f32 %v37, %v121
  %v123 = vpop.f32.mrb[0].mxu0
  %v124 = vpop.f32.mrb[0].mxu0
  %v125 = vpop.f32.mrb[0].mxu0
  %126 = vdwg.mxu0
  %v127 = vpack.c.bf16 %v122, %v122
  %128 = vst [vmem:[%s3] sm:$0xf] %v127
  // Predicated region
  $region14: #{jump_forward_device.43} parent=0 // pred_check
    _
  $region15: #{jump_forward_device.43} parent=0 // pred_check_branch
    %130 = sbr.rel (0) target = $region17
  $region16: #{jump_forward_device.43} parent=0 // pred_region
    _
  $region17: #{jump_forward_device.43} parent=0 // pred_fallthru
    _
  // Predicated region
  $region18: #{jump_forward_device.43} parent=0 // pred_check
    _
  $region19: #{jump_forward_device.43} parent=0 // pred_check_branch
    %132 = sbr.rel (0) target = $region21
  $region20: #{jump_forward_device.43} parent=0 // pred_region
    _
  $region21: #{jump_forward_device.43} parent=0 // pred_fallthru
    _

// kernel: jump_forward_device.50
$region0: #{jump_forward_device.50}
  #allocation0 [shape = 'u32[]', space=smem, size = 0x4, offset = 0x4, fixed_abs, tag = 'smem constant byte address 0x4 - core index']
  #allocation1 [shape = 'u32[144,128]{1,0:T(1,128)}', space=vmem, size = 0x12000, scoped, tag = 'internal scratch']
  %s0 = inlined_call_operand.vmem [shape: bf16[8,1280], index: 0, kind: input, shape index: {}]
  %s1 = inlined_call_operand.vmem [shape: bf16[1280,256], index: 1, kind: input, shape index: {}]
  %s2 = inlined_call_operand.vmem [shape: f32[1,256], index: 2, kind: input, shape index: {}]
  %s3 = inlined_call_operand.vmem [shape: f32[8,128], index: 3, kind: input, shape index: {}]
  %s4 = inlined_call_operand.vmem [shape: f32[8,128], index: 4, kind: output, shape index: {}]
  %s5 = sld [smem:[#allocation0]]
  $region26: #{jump_forward_device.50} parent=0
    _
  %s7 = ssub.s32 1, %s5
  %s8 = scalar_select 0, %s7, %s5
  // Predicated region
  $region2: #{jump_forward_device.50} parent=0 // pred_check
    _
  $region3: #{jump_forward_device.50} parent=0 // pred_check_branch
    %10 = sbr.rel (0) target = $region5
  $region4: #{jump_forward_device.50} parent=0 // pred_region
    _
  $region5: #{jump_forward_device.50} parent=0 // pred_fallthru
    _
  // Predicated region
  $region6: #{jump_forward_device.50} parent=0 // pred_check
    _
  $region7: #{jump_forward_device.50} parent=0 // pred_check_branch
    %12 = sbr.rel (0) target = $region9
  $region8: #{jump_forward_device.50} parent=0 // pred_region
    _
  $region9: #{jump_forward_device.50} parent=0 // pred_fallthru
    _
  // Predicated region
  $region10: #{jump_forward_device.50} parent=0 // pred_check
    _
  $region11: #{jump_forward_device.50} parent=0 // pred_check_branch
    %14 = sbr.rel (0) target = $region13
  $region12: #{jump_forward_device.50} parent=0 // pred_region
    _
  $region13: #{jump_forward_device.50} parent=0 // pred_fallthru
    _
  // Predicated region
  $region14: #{jump_forward_device.50} parent=0 // pred_check
    _
  $region15: #{jump_forward_device.50} parent=0 // pred_check_branch
    %16 = sbr.rel (0) target = $region17
  $region16: #{jump_forward_device.50} parent=0 // pred_region
    _
  $region17: #{jump_forward_device.50} parent=0 // pred_fallthru
    _
  %v17 = vld [vmem:[%s0] sm:$0xff]
  %v18 = vld [vmem:[%s0 + $0x8] sm:$0xff]
  %v19 = vld [vmem:[%s0 + $0x10] sm:$0xff]
  %v20 = vld [vmem:[%s0 + $0x18] sm:$0xff]
  %v21 = vld [vmem:[%s0 + $0x20] sm:$0xff]
  %v22 = vld [vmem:[%s1] sm:$0xff]
  %v23 = vld [vmem:[%s1 + $0x8] sm:$0xff]
  %v24 = vld [vmem:[%s1 + $0x10] sm:$0xff]
  %v25 = vld [vmem:[%s1 + $0x18] sm:$0xff]
  %v26 = vld [vmem:[%s1 + $0x20] sm:$0xff]
  %v27 = vld [vmem:[%s1 + $0x28] sm:$0xff]
  %v28 = vld [vmem:[%s1 + $0x30] sm:$0xff]
  %v29 = vld [vmem:[%s1 + $0x38] sm:$0xff]
  %v30 = vld [vmem:[%s1 + $0x40] sm:$0xff]
  %v31 = vld [vmem:[%s1 + $0x48] sm:$0xff]
  %v32 = vld [vmem:[%s1 + $0x50] sm:$0xff]
  %v33 = vld [vmem:[%s1 + $0x58] sm:$0xff]
  %v34 = vld [vmem:[%s1 + $0x60] sm:$0xff]
  %v35 = vld [vmem:[%s1 + $0x68] sm:$0xff]
  %v36 = vld [vmem:[%s1 + $0x70] sm:$0xff]
  %v37 = vld [vmem:[%s1 + $0x78] sm:$0xff]
  %v38 = vld [vmem:[%s1 + $0x80] sm:$0xff]
  %v39 = vld [vmem:[%s1 + $0x88] sm:$0xff]
  %v40 = vld [vmem:[%s1 + $0x90] sm:$0xff]
  %v41 = vld [vmem:[%s1 + $0x98] sm:$0xff]
  %v42 = vld [vmem:[%s1 + $0xa0] sm:$0xff]
  %v43 = vld [vmem:[%s1 + $0xa8] sm:$0xff]
  %v44 = vld [vmem:[%s1 + $0xb0] sm:$0xff]
  %v45 = vld [vmem:[%s1 + $0xb8] sm:$0xff]
  %v46 = vld [vmem:[%s1 + $0xc0] sm:$0xff]
  %v47 = vld [vmem:[%s1 + $0xc8] sm:$0xff]
  %v48 = vld [vmem:[%s1 + $0xd0] sm:$0xff]
  %v49 = vld [vmem:[%s1 + $0xd8] sm:$0xff]
  %v50 = vld [vmem:[%s1 + $0xe0] sm:$0xff]
  %v51 = vld [vmem:[%s1 + $0xe8] sm:$0xff]
  %v52 = vld [vmem:[%s1 + $0xf0] sm:$0xff]
  %v53 = vld [vmem:[%s1 + $0xf8] sm:$0xff]
  %v54 = vld [vmem:[%s1 + $0x100] sm:$0xff]
  %v55 = vld [vmem:[%s1 + $0x108] sm:$0xff]
  %v56 = vld [vmem:[%s1 + $0x110] sm:$0xff]
  %v57 = vld [vmem:[%s1 + $0x118] sm:$0xff]
  %v58 = vld [vmem:[%s1 + $0x120] sm:$0xff]
  %v59 = vld [vmem:[%s1 + $0x128] sm:$0xff]
  %v60 = vld [vmem:[%s1 + $0x130] sm:$0xff]
  %v61 = vld [vmem:[%s1 + $0x138] sm:$0xff]
  %v62 = vld [vmem:[%s1 + $0x140] sm:$0xff]
  %v63 = vld [vmem:[%s1 + $0x148] sm:$0xff]
  %v64 = vld [vmem:[%s1 + $0x150] sm:$0xff]
  %v65 = vld [vmem:[%s1 + $0x158] sm:$0xff]
  %v66 = vld [vmem:[%s1 + $0x160] sm:$0xff]
  %v67 = vld [vmem:[%s1 + $0x168] sm:$0xff]
  %v68 = vld [vmem:[%s1 + $0x170] sm:$0xff]
  %v69 = vld [vmem:[%s1 + $0x178] sm:$0xff]
  %v70 = vld [vmem:[%s1 + $0x180] sm:$0xff]
  %v71 = vld [vmem:[%s1 + $0x188] sm:$0xff]
  %v72 = vld [vmem:[%s1 + $0x190] sm:$0xff]
  %v73 = vld [vmem:[%s1 + $0x198] sm:$0xff]
  %v74 = vld [vmem:[%s1 + $0x1a0] sm:$0xff]
  %v75 = vld [vmem:[%s1 + $0x1a8] sm:$0xff]
  %v76 = vld [vmem:[%s1 + $0x1b0] sm:$0xff]
  %v77 = vld [vmem:[%s1 + $0x1b8] sm:$0xff]
  %v78 = vld [vmem:[%s1 + $0x1c0] sm:$0xff]
  %v79 = vld [vmem:[%s1 + $0x1c8] sm:$0xff]
  %v80 = vld [vmem:[%s1 + $0x1d0] sm:$0xff]
  %v81 = vld [vmem:[%s1 + $0x1d8] sm:$0xff]
  %v82 = vld [vmem:[%s1 + $0x1e0] sm:$0xff]
  %v83 = vld [vmem:[%s1 + $0x1e8] sm:$0xff]
  %v84 = vld [vmem:[%s1 + $0x1f0] sm:$0xff]
  %v85 = vld [vmem:[%s1 + $0x1f8] sm:$0xff]
  %v86 = vld [vmem:[%s1 + $0x200] sm:$0xff]
  %v87 = vld [vmem:[%s1 + $0x208] sm:$0xff]
  %v88 = vld [vmem:[%s1 + $0x210] sm:$0xff]
  %v89 = vld [vmem:[%s1 + $0x218] sm:$0xff]
  %v90 = vld [vmem:[%s1 + $0x220] sm:$0xff]
  %v91 = vld [vmem:[%s1 + $0x228] sm:$0xff]
  %v92 = vld [vmem:[%s1 + $0x230] sm:$0xff]
  %v93 = vld [vmem:[%s1 + $0x238] sm:$0xff]
  %v94 = vld [vmem:[%s1 + $0x240] sm:$0xff]
  %v95 = vld [vmem:[%s1 + $0x248] sm:$0xff]
  %v96 = vld [vmem:[%s1 + $0x250] sm:$0xff]
  %v97 = vld [vmem:[%s1 + $0x258] sm:$0xff]
  %v98 = vld [vmem:[%s1 + $0x260] sm:$0xff]
  %v99 = vld [vmem:[%s1 + $0x268] sm:$0xff]
  %v100 = vld [vmem:[%s1 + $0x270] sm:$0xff]
  %v101 = vld [vmem:[%s1 + $0x278] sm:$0xff]
  %v102 = vld [vmem:[%s1 + $0x280] sm:$0xff]
  %v103 = vld [vmem:[%s1 + $0x288] sm:$0xff]
  %v104 = vld [vmem:[%s1 + $0x290] sm:$0xff]
  %v105 = vld [vmem:[%s1 + $0x298] sm:$0xff]
  %v106 = vld [vmem:[%s1 + $0x2a0] sm:$0xff]
  %v107 = vld [vmem:[%s1 + $0x2a8] sm:$0xff]
  %v108 = vld [vmem:[%s1 + $0x2b0] sm:$0xff]
  %v109 = vld [vmem:[%s1 + $0x2b8] sm:$0xff]
  %v110 = vld [vmem:[%s1 + $0x2c0] sm:$0xff]
  %v111 = vld [vmem:[%s1 + $0x2c8] sm:$0xff]
  %v112 = vld [vmem:[%s1 + $0x2d0] sm:$0xff]
  %v113 = vld [vmem:[%s1 + $0x2d8] sm:$0xff]
  %v114 = vld [vmem:[%s1 + $0x2e0] sm:$0xff]
  %v115 = vld [vmem:[%s1 + $0x2e8] sm:$0xff]
  %v116 = vld [vmem:[%s1 + $0x2f0] sm:$0xff]
  %v117 = vld [vmem:[%s1 + $0x2f8] sm:$0xff]
  %v118 = vld [vmem:[%s1 + $0x300] sm:$0xff]
  %v119 = vld [vmem:[%s1 + $0x308] sm:$0xff]
  %v120 = vld [vmem:[%s1 + $0x310] sm:$0xff]
  %v121 = vld [vmem:[%s1 + $0x318] sm:$0xff]
  %v122 = vld [vmem:[%s1 + $0x320] sm:$0xff]
  %v123 = vld [vmem:[%s1 + $0x328] sm:$0xff]
  %v124 = vld [vmem:[%s1 + $0x330] sm:$0xff]
  %v125 = vld [vmem:[%s1 + $0x338] sm:$0xff]
  %v126 = vld [vmem:[%s1 + $0x340] sm:$0xff]
  %v127 = vld [vmem:[%s1 + $0x348] sm:$0xff]
  %v128 = vld [vmem:[%s1 + $0x350] sm:$0xff]
  %v129 = vld [vmem:[%s1 + $0x358] sm:$0xff]
  %v130 = vld [vmem:[%s1 + $0x360] sm:$0xff]
  %v131 = vld [vmem:[%s1 + $0x368] sm:$0xff]
  %v132 = vld [vmem:[%s1 + $0x370] sm:$0xff]
  %v133 = vld [vmem:[%s1 + $0x378] sm:$0xff]
  %v134 = vld [vmem:[%s1 + $0x380] sm:$0xff]
  %v135 = vld [vmem:[%s1 + $0x388] sm:$0xff]
  %v136 = vld [vmem:[%s1 + $0x390] sm:$0xff]
  %v137 = vld [vmem:[%s1 + $0x398] sm:$0xff]
  %v138 = vld [vmem:[%s1 + $0x3a0] sm:$0xff]
  %v139 = vld [vmem:[%s1 + $0x3a8] sm:$0xff]
  %v140 = vld [vmem:[%s1 + $0x3b0] sm:$0xff]
  %v141 = vld [vmem:[%s1 + $0x3b8] sm:$0xff]
  %v142 = vld [vmem:[%s1 + $0x3c0] sm:$0xff]
  %v143 = vld [vmem:[%s1 + $0x3c8] sm:$0xff]
  %v144 = vld [vmem:[%s1 + $0x3d0] sm:$0xff]
  %v145 = vld [vmem:[%s1 + $0x3d8] sm:$0xff]
  %v146 = vld [vmem:[%s1 + $0x3e0] sm:$0xff]
  %v147 = vld [vmem:[%s1 + $0x3e8] sm:$0xff]
  %v148 = vld [vmem:[%s1 + $0x3f0] sm:$0xff]
  %v149 = vld [vmem:[%s1 + $0x3f8] sm:$0xff]
  %v150 = vld [vmem:[%s1 + $0x400] sm:$0xff]
  %v151 = vld [vmem:[%s1 + $0x408] sm:$0xff]
  %v152 = vld [vmem:[%s1 + $0x410] sm:$0xff]
  %v153 = vld [vmem:[%s1 + $0x418] sm:$0xff]
  %v154 = vld [vmem:[%s1 + $0x420] sm:$0xff]
  %v155 = vld [vmem:[%s1 + $0x428] sm:$0xff]
  %v156 = vld [vmem:[%s1 + $0x430] sm:$0xff]
  %v157 = vld [vmem:[%s1 + $0x438] sm:$0xff]
  %v158 = vld [vmem:[%s1 + $0x440] sm:$0xff]
  %v159 = vld [vmem:[%s1 + $0x448] sm:$0xff]
  %v160 = vld [vmem:[%s1 + $0x450] sm:$0xff]
  %v161 = vld [vmem:[%s1 + $0x458] sm:$0xff]
  %v162 = vld [vmem:[%s1 + $0x460] sm:$0xff]
  %v163 = vld [vmem:[%s1 + $0x468] sm:$0xff]
  %v164 = vld [vmem:[%s1 + $0x470] sm:$0xff]
  %v165 = vld [vmem:[%s1 + $0x478] sm:$0xff]
  %v166 = vld [vmem:[%s1 + $0x480] sm:$0xff]
  %v167 = vld [vmem:[%s1 + $0x488] sm:$0xff]
  %v168 = vld [vmem:[%s1 + $0x490] sm:$0xff]
  %v169 = vld [vmem:[%s1 + $0x498] sm:$0xff]
  %v170 = vld [vmem:[%s1 + $0x4a0] sm:$0xff]
  %v171 = vld [vmem:[%s1 + $0x4a8] sm:$0xff]
  %v172 = vld [vmem:[%s1 + $0x4b0] sm:$0xff]
  %v173 = vld [vmem:[%s1 + $0x4b8] sm:$0xff]
  %v174 = vld [vmem:[%s1 + $0x4c0] sm:$0xff]
  %v175 = vld [vmem:[%s1 + $0x4c8] sm:$0xff]
  %v176 = vld [vmem:[%s1 + $0x4d0] sm:$0xff]
  %v177 = vld [vmem:[%s1 + $0x4d8] sm:$0xff]
  %v178 = vld [vmem:[%s1 + $0x4e0] sm:$0xff]
  %v179 = vld [vmem:[%s1 + $0x4e8] sm:$0xff]
  %v180 = vld [vmem:[%s1 + $0x4f0] sm:$0xff]
  %v181 = vld [vmem:[%s1 + $0x4f8] sm:$0xff]
  %v182 = vld [vmem:[%s2] sm:$0x3]
  %v184 = vlaneseq
  %v185 = vshrl.u32 %v184, 7
  %v186 = vsub.s32 0, %v185
  %v187 = vrot.slane %v182, %v186
  %v188 = vlaneseq
  %v189 = vshrl.u32 %v188, 7
  %v190 = vsub.s32 1, %v189
  %v191 = vrot.slane %v182, %v190
  %v199 = vunpack.c.l.b16 %v17
  %v200 = vunpack.c.h.b16 %v17
  %v201 = vunpack.c.l.b16 %v18
  %v202 = vunpack.c.h.b16 %v18
  %v203 = vunpack.c.l.b16 %v19
  %v204 = vunpack.c.h.b16 %v19
  %v205 = vunpack.c.l.b16 %v20
  %v206 = vunpack.c.h.b16 %v20
  %v207 = vunpack.c.l.b16 %v21
  %v208 = vunpack.c.h.b16 %v21
  %v209 = vpack.c.b16 %v199, %v199
  %v210 = vpack.c.b16 %v200, %v200
  %v211 = vpack.c.b16 %v201, %v201
  %v212 = vpack.c.b16 %v202, %v202
  %v213 = vpack.c.b16 %v203, %v203
  %v214 = vpack.c.b16 %v204, %v204
  %v215 = vpack.c.b16 %v205, %v205
  %v216 = vpack.c.b16 %v206, %v206
  %v217 = vpack.c.b16 %v207, %v207
  %v218 = vpack.c.b16 %v208, %v208
  %v389 = vunpack.c.l.b16 %v22
  %v390 = vunpack.c.h.b16 %v22
  %v391 = vunpack.c.l.b16 %v23
  %v392 = vunpack.c.h.b16 %v23
  %v393 = vunpack.c.l.b16 %v24
  %v394 = vunpack.c.h.b16 %v24
  %v395 = vunpack.c.l.b16 %v25
  %v396 = vunpack.c.h.b16 %v25
  %v397 = vunpack.c.l.b16 %v26
  %v398 = vunpack.c.h.b16 %v26
  %v399 = vunpack.c.l.b16 %v27
  %v400 = vunpack.c.h.b16 %v27
  %v401 = vunpack.c.l.b16 %v28
  %v402 = vunpack.c.h.b16 %v28
  %v403 = vunpack.c.l.b16 %v29
  %v404 = vunpack.c.h.b16 %v29
  %v405 = vunpack.c.l.b16 %v30
  %v406 = vunpack.c.h.b16 %v30
  %v407 = vunpack.c.l.b16 %v31
  %v408 = vunpack.c.h.b16 %v31
  %v409 = vunpack.c.l.b16 %v32
  %v410 = vunpack.c.h.b16 %v32
  %v411 = vunpack.c.l.b16 %v33
  %v412 = vunpack.c.h.b16 %v33
  %v413 = vunpack.c.l.b16 %v34
  %v414 = vunpack.c.h.b16 %v34
  %v415 = vunpack.c.l.b16 %v35
  %v416 = vunpack.c.h.b16 %v35
  %v417 = vunpack.c.l.b16 %v36
  %v418 = vunpack.c.h.b16 %v36
  %v419 = vunpack.c.l.b16 %v37
  %v420 = vunpack.c.h.b16 %v37
  %v421 = vunpack.c.l.b16 %v38
  %v422 = vunpack.c.h.b16 %v38
  %v423 = vunpack.c.l.b16 %v39
  %v424 = vunpack.c.h.b16 %v39
  %v425 = vunpack.c.l.b16 %v40
  %v426 = vunpack.c.h.b16 %v40
  %v427 = vunpack.c.l.b16 %v41
  %v428 = vunpack.c.h.b16 %v41
  %v429 = vunpack.c.l.b16 %v42
  %v430 = vunpack.c.h.b16 %v42
  %v431 = vunpack.c.l.b16 %v43
  %v432 = vunpack.c.h.b16 %v43
  %v433 = vunpack.c.l.b16 %v44
  %v434 = vunpack.c.h.b16 %v44
  %v435 = vunpack.c.l.b16 %v45
  %v436 = vunpack.c.h.b16 %v45
  %v437 = vunpack.c.l.b16 %v46
  %v438 = vunpack.c.h.b16 %v46
  %v439 = vunpack.c.l.b16 %v47
  %v440 = vunpack.c.h.b16 %v47
  %v441 = vunpack.c.l.b16 %v48
  %v442 = vunpack.c.h.b16 %v48
  %v443 = vunpack.c.l.b16 %v49
  %v444 = vunpack.c.h.b16 %v49
  %v445 = vunpack.c.l.b16 %v50
  %v446 = vunpack.c.h.b16 %v50
  %v447 = vunpack.c.l.b16 %v51
  %v448 = vunpack.c.h.b16 %v51
  %v449 = vunpack.c.l.b16 %v52
  %v450 = vunpack.c.h.b16 %v52
  %v451 = vunpack.c.l.b16 %v53
  %v452 = vunpack.c.h.b16 %v53
  %v453 = vunpack.c.l.b16 %v54
  %v454 = vunpack.c.h.b16 %v54
  %v455 = vunpack.c.l.b16 %v55
  %v456 = vunpack.c.h.b16 %v55
  %v457 = vunpack.c.l.b16 %v56
  %v458 = vunpack.c.h.b16 %v56
  %v459 = vunpack.c.l.b16 %v57
  %v460 = vunpack.c.h.b16 %v57
  %v461 = vunpack.c.l.b16 %v58
  %v462 = vunpack.c.h.b16 %v58
  %v463 = vunpack.c.l.b16 %v59
  %v464 = vunpack.c.h.b16 %v59
  %v465 = vunpack.c.l.b16 %v60
  %v466 = vunpack.c.h.b16 %v60
  %v467 = vunpack.c.l.b16 %v61
  %v468 = vunpack.c.h.b16 %v61
  %v469 = vunpack.c.l.b16 %v62
  %v470 = vunpack.c.h.b16 %v62
  %v471 = vunpack.c.l.b16 %v63
  %v472 = vunpack.c.h.b16 %v63
  %v473 = vunpack.c.l.b16 %v64
  %v474 = vunpack.c.h.b16 %v64
  %v475 = vunpack.c.l.b16 %v65
  %v476 = vunpack.c.h.b16 %v65
  %v477 = vunpack.c.l.b16 %v66
  %v478 = vunpack.c.h.b16 %v66
  %v479 = vunpack.c.l.b16 %v67
  %v480 = vunpack.c.h.b16 %v67
  %v481 = vunpack.c.l.b16 %v68
  %v482 = vunpack.c.h.b16 %v68
  %v483 = vunpack.c.l.b16 %v69
  %v484 = vunpack.c.h.b16 %v69
  %v485 = vunpack.c.l.b16 %v70
  %v486 = vunpack.c.h.b16 %v70
  %v487 = vunpack.c.l.b16 %v71
  %v488 = vunpack.c.h.b16 %v71
  %v489 = vunpack.c.l.b16 %v72
  %v490 = vunpack.c.h.b16 %v72
  %v491 = vunpack.c.l.b16 %v73
  %v492 = vunpack.c.h.b16 %v73
  %v493 = vunpack.c.l.b16 %v74
  %v494 = vunpack.c.h.b16 %v74
  %v495 = vunpack.c.l.b16 %v75
  %v496 = vunpack.c.h.b16 %v75
  %v497 = vunpack.c.l.b16 %v76
  %v498 = vunpack.c.h.b16 %v76
  %v499 = vunpack.c.l.b16 %v77
  %v500 = vunpack.c.h.b16 %v77
  %v501 = vunpack.c.l.b16 %v78
  %v502 = vunpack.c.h.b16 %v78
  %v503 = vunpack.c.l.b16 %v79
  %v504 = vunpack.c.h.b16 %v79
  %v505 = vunpack.c.l.b16 %v80
  %v506 = vunpack.c.h.b16 %v80
  %v507 = vunpack.c.l.b16 %v81
  %v508 = vunpack.c.h.b16 %v81
  %v509 = vunpack.c.l.b16 %v82
  %v510 = vunpack.c.h.b16 %v82
  %v511 = vunpack.c.l.b16 %v83
  %v512 = vunpack.c.h.b16 %v83
  %v513 = vunpack.c.l.b16 %v84
  %v514 = vunpack.c.h.b16 %v84
  %v515 = vunpack.c.l.b16 %v85
  %v516 = vunpack.c.h.b16 %v85
  %v517 = vunpack.c.l.b16 %v86
  %v518 = vunpack.c.h.b16 %v86
  %v519 = vunpack.c.l.b16 %v87
  %v520 = vunpack.c.h.b16 %v87
  %v521 = vunpack.c.l.b16 %v88
  %v522 = vunpack.c.h.b16 %v88
  %v523 = vunpack.c.l.b16 %v89
  %v524 = vunpack.c.h.b16 %v89
  %v525 = vunpack.c.l.b16 %v90
  %v526 = vunpack.c.h.b16 %v90
  %v527 = vunpack.c.l.b16 %v91
  %v528 = vunpack.c.h.b16 %v91
  %v529 = vunpack.c.l.b16 %v92
  %v530 = vunpack.c.h.b16 %v92
  %v531 = vunpack.c.l.b16 %v93
  %v532 = vunpack.c.h.b16 %v93
  %v533 = vunpack.c.l.b16 %v94
  %v534 = vunpack.c.h.b16 %v94
  %v535 = vunpack.c.l.b16 %v95
  %v536 = vunpack.c.h.b16 %v95
  %v537 = vunpack.c.l.b16 %v96
  %v538 = vunpack.c.h.b16 %v96
  %v539 = vunpack.c.l.b16 %v97
  %v540 = vunpack.c.h.b16 %v97
  %v541 = vunpack.c.l.b16 %v98
  %v542 = vunpack.c.h.b16 %v98
  %v543 = vunpack.c.l.b16 %v99
  %v544 = vunpack.c.h.b16 %v99
  %v545 = vunpack.c.l.b16 %v100
  %v546 = vunpack.c.h.b16 %v100
  %v547 = vunpack.c.l.b16 %v101
  %v548 = vunpack.c.h.b16 %v101
  %v549 = vunpack.c.l.b16 %v102
  %v550 = vunpack.c.h.b16 %v102
  %v551 = vunpack.c.l.b16 %v103
  %v552 = vunpack.c.h.b16 %v103
  %v553 = vunpack.c.l.b16 %v104
  %v554 = vunpack.c.h.b16 %v104
  %v555 = vunpack.c.l.b16 %v105
  %v556 = vunpack.c.h.b16 %v105
  %v557 = vunpack.c.l.b16 %v106
  %v558 = vunpack.c.h.b16 %v106
  %v559 = vunpack.c.l.b16 %v107
  %v560 = vunpack.c.h.b16 %v107
  %v561 = vunpack.c.l.b16 %v108
  %v562 = vunpack.c.h.b16 %v108
  %v563 = vunpack.c.l.b16 %v109
  %v564 = vunpack.c.h.b16 %v109
  %v565 = vunpack.c.l.b16 %v110
  %v566 = vunpack.c.h.b16 %v110
  %v567 = vunpack.c.l.b16 %v111
  %v568 = vunpack.c.h.b16 %v111
  %v569 = vunpack.c.l.b16 %v112
  %v570 = vunpack.c.h.b16 %v112
  %v571 = vunpack.c.l.b16 %v113
  %v572 = vunpack.c.h.b16 %v113
  %v573 = vunpack.c.l.b16 %v114
  %v574 = vunpack.c.h.b16 %v114
  %v575 = vunpack.c.l.b16 %v115
  %v576 = vunpack.c.h.b16 %v115
  %v577 = vunpack.c.l.b16 %v116
  %v578 = vunpack.c.h.b16 %v116
  %v579 = vunpack.c.l.b16 %v117
  %v580 = vunpack.c.h.b16 %v117
  %v581 = vunpack.c.l.b16 %v118
  %v582 = vunpack.c.h.b16 %v118
  %v583 = vunpack.c.l.b16 %v119
  %v584 = vunpack.c.h.b16 %v119
  %v585 = vunpack.c.l.b16 %v120
  %v586 = vunpack.c.h.b16 %v120
  %v587 = vunpack.c.l.b16 %v121
  %v588 = vunpack.c.h.b16 %v121
  %v589 = vunpack.c.l.b16 %v122
  %v590 = vunpack.c.h.b16 %v122
  %v591 = vunpack.c.l.b16 %v123
  %v592 = vunpack.c.h.b16 %v123
  %v593 = vunpack.c.l.b16 %v124
  %v594 = vunpack.c.h.b16 %v124
  %v595 = vunpack.c.l.b16 %v125
  %v596 = vunpack.c.h.b16 %v125
  %v597 = vunpack.c.l.b16 %v126
  %v598 = vunpack.c.h.b16 %v126
  %v599 = vunpack.c.l.b16 %v127
  %v600 = vunpack.c.h.b16 %v127
  %v601 = vunpack.c.l.b16 %v128
  %v602 = vunpack.c.h.b16 %v128
  %v603 = vunpack.c.l.b16 %v129
  %v604 = vunpack.c.h.b16 %v129
  %v605 = vunpack.c.l.b16 %v130
  %v606 = vunpack.c.h.b16 %v130
  %v607 = vunpack.c.l.b16 %v131
  %v608 = vunpack.c.h.b16 %v131
  %v609 = vunpack.c.l.b16 %v132
  %v610 = vunpack.c.h.b16 %v132
  %v611 = vunpack.c.l.b16 %v133
  %v612 = vunpack.c.h.b16 %v133
  %v613 = vunpack.c.l.b16 %v134
  %v614 = vunpack.c.h.b16 %v134
  %v615 = vunpack.c.l.b16 %v135
  %v616 = vunpack.c.h.b16 %v135
  %v617 = vunpack.c.l.b16 %v136
  %v618 = vunpack.c.h.b16 %v136
  %v619 = vunpack.c.l.b16 %v137
  %v620 = vunpack.c.h.b16 %v137
  %v621 = vunpack.c.l.b16 %v138
  %v622 = vunpack.c.h.b16 %v138
  %v623 = vunpack.c.l.b16 %v139
  %v624 = vunpack.c.h.b16 %v139
  %v625 = vunpack.c.l.b16 %v140
  %v626 = vunpack.c.h.b16 %v140
  %v627 = vunpack.c.l.b16 %v141
  %v628 = vunpack.c.h.b16 %v141
  %v629 = vunpack.c.l.b16 %v142
  %v630 = vunpack.c.h.b16 %v142
  %v631 = vunpack.c.l.b16 %v143
  %v632 = vunpack.c.h.b16 %v143
  %v633 = vunpack.c.l.b16 %v144
  %v634 = vunpack.c.h.b16 %v144
  %v635 = vunpack.c.l.b16 %v145
  %v636 = vunpack.c.h.b16 %v145
  %v637 = vunpack.c.l.b16 %v146
  %v638 = vunpack.c.h.b16 %v146
  %v639 = vunpack.c.l.b16 %v147
  %v640 = vunpack.c.h.b16 %v147
  %v641 = vunpack.c.l.b16 %v148
  %v642 = vunpack.c.h.b16 %v148
  %v643 = vunpack.c.l.b16 %v149
  %v644 = vunpack.c.h.b16 %v149
  %v645 = vunpack.c.l.b16 %v150
  %v646 = vunpack.c.h.b16 %v150
  %v647 = vunpack.c.l.b16 %v151
  %v648 = vunpack.c.h.b16 %v151
  %v649 = vunpack.c.l.b16 %v152
  %v650 = vunpack.c.h.b16 %v152
  %v651 = vunpack.c.l.b16 %v153
  %v652 = vunpack.c.h.b16 %v153
  %v653 = vunpack.c.l.b16 %v154
  %v654 = vunpack.c.h.b16 %v154
  %v655 = vunpack.c.l.b16 %v155
  %v656 = vunpack.c.h.b16 %v155
  %v657 = vunpack.c.l.b16 %v156
  %v658 = vunpack.c.h.b16 %v156
  %v659 = vunpack.c.l.b16 %v157
  %v660 = vunpack.c.h.b16 %v157
  %v661 = vunpack.c.l.b16 %v158
  %v662 = vunpack.c.h.b16 %v158
  %v663 = vunpack.c.l.b16 %v159
  %v664 = vunpack.c.h.b16 %v159
  %v665 = vunpack.c.l.b16 %v160
  %v666 = vunpack.c.h.b16 %v160
  %v667 = vunpack.c.l.b16 %v161
  %v668 = vunpack.c.h.b16 %v161
  %v669 = vunpack.c.l.b16 %v162
  %v670 = vunpack.c.h.b16 %v162
  %v671 = vunpack.c.l.b16 %v163
  %v672 = vunpack.c.h.b16 %v163
  %v673 = vunpack.c.l.b16 %v164
  %v674 = vunpack.c.h.b16 %v164
  %v675 = vunpack.c.l.b16 %v165
  %v676 = vunpack.c.h.b16 %v165
  %v677 = vunpack.c.l.b16 %v166
  %v678 = vunpack.c.h.b16 %v166
  %v679 = vunpack.c.l.b16 %v167
  %v680 = vunpack.c.h.b16 %v167
  %v681 = vunpack.c.l.b16 %v168
  %v682 = vunpack.c.h.b16 %v168
  %v683 = vunpack.c.l.b16 %v169
  %v684 = vunpack.c.h.b16 %v169
  %v685 = vunpack.c.l.b16 %v170
  %v686 = vunpack.c.h.b16 %v170
  %v687 = vunpack.c.l.b16 %v171
  %v688 = vunpack.c.h.b16 %v171
  %v689 = vunpack.c.l.b16 %v172
  %v690 = vunpack.c.h.b16 %v172
  %v691 = vunpack.c.l.b16 %v173
  %v692 = vunpack.c.h.b16 %v173
  %v693 = vunpack.c.l.b16 %v174
  %v694 = vunpack.c.h.b16 %v174
  %v695 = vunpack.c.l.b16 %v175
  %v696 = vunpack.c.h.b16 %v175
  %v697 = vunpack.c.l.b16 %v176
  %v698 = vunpack.c.h.b16 %v176
  %v699 = vunpack.c.l.b16 %v177
  %v700 = vunpack.c.h.b16 %v177
  %v701 = vunpack.c.l.b16 %v178
  %v702 = vunpack.c.h.b16 %v178
  %v703 = vunpack.c.l.b16 %v179
  %v704 = vunpack.c.h.b16 %v179
  %v705 = vunpack.c.l.b16 %v180
  %v706 = vunpack.c.h.b16 %v180
  %v707 = vunpack.c.l.b16 %v181
  %v708 = vunpack.c.h.b16 %v181
  %v709 = vpack.c.b16 %v391, %v389
  %v710 = vpack.c.b16 %v392, %v390
  %v711 = vpack.c.b16 %v395, %v393
  %v712 = vpack.c.b16 %v396, %v394
  %v713 = vpack.c.b16 %v399, %v397
  %v714 = vpack.c.b16 %v400, %v398
  %v715 = vpack.c.b16 %v403, %v401
  %v716 = vpack.c.b16 %v404, %v402
  %v717 = vpack.c.b16 %v407, %v405
  %v718 = vpack.c.b16 %v408, %v406
  %v719 = vpack.c.b16 %v411, %v409
  %v720 = vpack.c.b16 %v412, %v410
  %v721 = vpack.c.b16 %v415, %v413
  %v722 = vpack.c.b16 %v416, %v414
  %v723 = vpack.c.b16 %v419, %v417
  %v724 = vpack.c.b16 %v420, %v418
  %v725 = vpack.c.b16 %v423, %v421
  %v726 = vpack.c.b16 %v424, %v422
  %v727 = vpack.c.b16 %v427, %v425
  %v728 = vpack.c.b16 %v428, %v426
  %v729 = vpack.c.b16 %v431, %v429
  %v730 = vpack.c.b16 %v432, %v430
  %v731 = vpack.c.b16 %v435, %v433
  %v732 = vpack.c.b16 %v436, %v434
  %v733 = vpack.c.b16 %v439, %v437
  %v734 = vpack.c.b16 %v440, %v438
  %v735 = vpack.c.b16 %v443, %v441
  %v736 = vpack.c.b16 %v444, %v442
  %v737 = vpack.c.b16 %v447, %v445
  %v738 = vpack.c.b16 %v448, %v446
  %v739 = vpack.c.b16 %v451, %v449
  %v740 = vpack.c.b16 %v452, %v450
  %v741 = vpack.c.b16 %v455, %v453
  %v742 = vpack.c.b16 %v456, %v454
  %v743 = vpack.c.b16 %v459, %v457
  %v744 = vpack.c.b16 %v460, %v458
  %v745 = vpack.c.b16 %v463, %v461
  %v746 = vpack.c.b16 %v464, %v462
  %v747 = vpack.c.b16 %v467, %v465
  %v748 = vpack.c.b16 %v468, %v466
  %v749 = vpack.c.b16 %v471, %v469
  %v750 = vpack.c.b16 %v472, %v470
  %v751 = vpack.c.b16 %v475, %v473
  %v752 = vpack.c.b16 %v476, %v474
  %v753 = vpack.c.b16 %v479, %v477
  %v754 = vpack.c.b16 %v480, %v478
  %v755 = vpack.c.b16 %v483, %v481
  %v756 = vpack.c.b16 %v484, %v482
  %v757 = vpack.c.b16 %v487, %v485
  %v758 = vpack.c.b16 %v488, %v486
  %v759 = vpack.c.b16 %v491, %v489
  %v760 = vpack.c.b16 %v492, %v490
  %v761 = vpack.c.b16 %v495, %v493
  %v762 = vpack.c.b16 %v496, %v494
  %v763 = vpack.c.b16 %v499, %v497
  %v764 = vpack.c.b16 %v500, %v498
  %v765 = vpack.c.b16 %v503, %v501
  %v766 = vpack.c.b16 %v504, %v502
  %v767 = vpack.c.b16 %v507, %v505
  %v768 = vpack.c.b16 %v508, %v506
  %v769 = vpack.c.b16 %v511, %v509
  %v770 = vpack.c.b16 %v512, %v510
  %v771 = vpack.c.b16 %v515, %v513
  %v772 = vpack.c.b16 %v516, %v514
  %v773 = vpack.c.b16 %v519, %v517
  %v774 = vpack.c.b16 %v520, %v518
  %v775 = vpack.c.b16 %v523, %v521
  %v776 = vpack.c.b16 %v524, %v522
  %v777 = vpack.c.b16 %v527, %v525
  %v778 = vpack.c.b16 %v528, %v526
  %v779 = vpack.c.b16 %v531, %v529
  %v780 = vpack.c.b16 %v532, %v530
  %v781 = vpack.c.b16 %v535, %v533
  %v782 = vpack.c.b16 %v536, %v534
  %v783 = vpack.c.b16 %v539, %v537
  %v784 = vpack.c.b16 %v540, %v538
  %v785 = vpack.c.b16 %v543, %v541
  %v786 = vpack.c.b16 %v544, %v542
  %v787 = vpack.c.b16 %v547, %v545
  %v788 = vpack.c.b16 %v548, %v546
  %v789 = vpack.c.b16 %v551, %v549
  %v790 = vpack.c.b16 %v552, %v550
  %v791 = vpack.c.b16 %v555, %v553
  %v792 = vpack.c.b16 %v556, %v554
  %v793 = vpack.c.b16 %v559, %v557
  %v794 = vpack.c.b16 %v560, %v558
  %v795 = vpack.c.b16 %v563, %v561
  %v796 = vpack.c.b16 %v564, %v562
  %v797 = vpack.c.b16 %v567, %v565
  %v798 = vpack.c.b16 %v568, %v566
  %v799 = vpack.c.b16 %v571, %v569
  %v800 = vpack.c.b16 %v572, %v570
  %v801 = vpack.c.b16 %v575, %v573
  %v802 = vpack.c.b16 %v576, %v574
  %v803 = vpack.c.b16 %v579, %v577
  %v804 = vpack.c.b16 %v580, %v578
  %v805 = vpack.c.b16 %v583, %v581
  %v806 = vpack.c.b16 %v584, %v582
  %v807 = vpack.c.b16 %v587, %v585
  %v808 = vpack.c.b16 %v588, %v586
  %v809 = vpack.c.b16 %v591, %v589
  %v810 = vpack.c.b16 %v592, %v590
  %v811 = vpack.c.b16 %v595, %v593
  %v812 = vpack.c.b16 %v596, %v594
  %v813 = vpack.c.b16 %v599, %v597
  %v814 = vpack.c.b16 %v600, %v598
  %v815 = vpack.c.b16 %v603, %v601
  %v816 = vpack.c.b16 %v604, %v602
  %v817 = vpack.c.b16 %v607, %v605
  %v818 = vpack.c.b16 %v608, %v606
  %v819 = vpack.c.b16 %v611, %v609
  %v820 = vpack.c.b16 %v612, %v610
  %v821 = vpack.c.b16 %v615, %v613
  %v822 = vpack.c.b16 %v616, %v614
  %v823 = vpack.c.b16 %v619, %v617
  %v824 = vpack.c.b16 %v620, %v618
  %v825 = vpack.c.b16 %v623, %v621
  %v826 = vpack.c.b16 %v624, %v622
  %v827 = vpack.c.b16 %v627, %v625
  %v828 = vpack.c.b16 %v628, %v626
  %v829 = vpack.c.b16 %v631, %v629
  %v830 = vpack.c.b16 %v632, %v630
  %v831 = vpack.c.b16 %v635, %v633
  %v832 = vpack.c.b16 %v636, %v634
  %v833 = vpack.c.b16 %v639, %v637
  %v834 = vpack.c.b16 %v640, %v638
  %v835 = vpack.c.b16 %v643, %v641
  %v836 = vpack.c.b16 %v644, %v642
  %v837 = vpack.c.b16 %v647, %v645
  %v838 = vpack.c.b16 %v648, %v646
  %v839 = vpack.c.b16 %v651, %v649
  %v840 = vpack.c.b16 %v652, %v650
  %v841 = vpack.c.b16 %v655, %v653
  %v842 = vpack.c.b16 %v656, %v654
  %v843 = vpack.c.b16 %v659, %v657
  %v844 = vpack.c.b16 %v660, %v658
  %v845 = vpack.c.b16 %v663, %v661
  %v846 = vpack.c.b16 %v664, %v662
  %v847 = vpack.c.b16 %v667, %v665
  %v848 = vpack.c.b16 %v668, %v666
  %v849 = vpack.c.b16 %v671, %v669
  %v850 = vpack.c.b16 %v672, %v670
  %v851 = vpack.c.b16 %v675, %v673
  %v852 = vpack.c.b16 %v676, %v674
  %v853 = vpack.c.b16 %v679, %v677
  %v854 = vpack.c.b16 %v680, %v678
  %v855 = vpack.c.b16 %v683, %v681
  %v856 = vpack.c.b16 %v684, %v682
  %v857 = vpack.c.b16 %v687, %v685
  %v858 = vpack.c.b16 %v688, %v686
  %v859 = vpack.c.b16 %v691, %v689
  %v860 = vpack.c.b16 %v692, %v690
  %v861 = vpack.c.b16 %v695, %v693
  %v862 = vpack.c.b16 %v696, %v694
  %v863 = vpack.c.b16 %v699, %v697
  %v864 = vpack.c.b16 %v700, %v698
  %v865 = vpack.c.b16 %v703, %v701
  %v866 = vpack.c.b16 %v704, %v702
  %v867 = vpack.c.b16 %v707, %v705
  %v868 = vpack.c.b16 %v708, %v706
  %1029 = vmatprep.subr.bf16.mxu0 %v710
  %1030 = vmatpush1.bf16.msra.mxu0 %v709
  %1031 = vmatprep.subr.bf16.mxu0 %v712
  %1032 = vmatpush1.bf16.msra.mxu0 %v711
  %1033 = vmatprep.subr.bf16.mxu0 %v714
  %1034 = vmatpush1.bf16.msra.mxu0 %v713
  %1035 = vmatprep.subr.bf16.mxu0 %v716
  %1036 = vmatpush1.bf16.msra.mxu0 %v715
  %1037 = vmatprep.subr.bf16.mxu0 %v718
  %1038 = vmatpush1.bf16.msra.mxu0 %v717
  %1039 = vmatprep.subr.bf16.mxu0 %v720
  %1040 = vmatpush1.bf16.msra.mxu0 %v719
  %1041 = vmatprep.subr.bf16.mxu0 %v722
  %1042 = vmatpush1.bf16.msra.mxu0 %v721
  %1043 = vmatprep.subr.bf16.mxu0 %v724
  %1044 = vmatpush1.bf16.msra.mxu0 %v723
  %1045 = vmatprep.subr.bf16.mxu0 %v726
  %1046 = vmatpush1.bf16.msra.mxu0 %v725
  %1047 = vmatprep.subr.bf16.mxu0 %v728
  %1048 = vmatpush1.bf16.msra.mxu0 %v727
  %1049 = vmatprep.subr.bf16.mxu0 %v730
  %1050 = vmatpush1.bf16.msra.mxu0 %v729
  %1051 = vmatprep.subr.bf16.mxu0 %v732
  %1052 = vmatpush1.bf16.msra.mxu0 %v731
  %1053 = vmatprep.subr.bf16.mxu0 %v734
  %1054 = vmatpush1.bf16.msra.mxu0 %v733
  %1055 = vmatprep.subr.bf16.mxu0 %v736
  %1056 = vmatpush1.bf16.msra.mxu0 %v735
  %1057 = vmatprep.subr.bf16.mxu0 %v738
  %1058 = vmatpush1.bf16.msra.mxu0 %v737
  %1059 = vmatprep.subr.bf16.mxu0 %v740
  %1060 = vmatpush1.bf16.msra.mxu0 %v739
  %1061 = vmatprep.mubr.bf16.mxu0 %v210
  %1062 = vmatmul.mubr.bf16.gmra.mrb[0].mxu0 %v209
  %v1063 = vpop.f32.mrb[0].mxu0
  %v1064 = vadd.f32 %v187, %v1063
  %v1065 = vpop.f32.mrb[0].mxu0
  %v1066 = vadd.f32 %v191, %v1065
  %v1067 = vpop.f32.mrb[0].mxu0
  %v1068 = vpop.f32.mrb[0].mxu0
  %1069 = vdwg.mxu0
  %1070 = vmatprep.subr.bf16.mxu0 %v742
  %1071 = vmatpush1.bf16.msra.mxu0 %v741
  %1072 = vmatprep.subr.bf16.mxu0 %v744
  %1073 = vmatpush1.bf16.msra.mxu0 %v743
  %1074 = vmatprep.subr.bf16.mxu0 %v746
  %1075 = vmatpush1.bf16.msra.mxu0 %v745
  %1076 = vmatprep.subr.bf16.mxu0 %v748
  %1077 = vmatpush1.bf16.msra.mxu0 %v747
  %1078 = vmatprep.subr.bf16.mxu0 %v750
  %1079 = vmatpush1.bf16.msra.mxu0 %v749
  %1080 = vmatprep.subr.bf16.mxu0 %v752
  %1081 = vmatpush1.bf16.msra.mxu0 %v751
  %1082 = vmatprep.subr.bf16.mxu0 %v754
  %1083 = vmatpush1.bf16.msra.mxu0 %v753
  %1084 = vmatprep.subr.bf16.mxu0 %v756
  %1085 = vmatpush1.bf16.msra.mxu0 %v755
  %1086 = vmatprep.subr.bf16.mxu0 %v758
  %1087 = vmatpush1.bf16.msra.mxu0 %v757
  %1088 = vmatprep.subr.bf16.mxu0 %v760
  %1089 = vmatpush1.bf16.msra.mxu0 %v759
  %1090 = vmatprep.subr.bf16.mxu0 %v762
  %1091 = vmatpush1.bf16.msra.mxu0 %v761
  %1092 = vmatprep.subr.bf16.mxu0 %v764
  %1093 = vmatpush1.bf16.msra.mxu0 %v763
  %1094 = vmatprep.subr.bf16.mxu0 %v766
  %1095 = vmatpush1.bf16.msra.mxu0 %v765
  %1096 = vmatprep.subr.bf16.mxu0 %v768
  %1097 = vmatpush1.bf16.msra.mxu0 %v767
  %1098 = vmatprep.subr.bf16.mxu0 %v770
  %1099 = vmatpush1.bf16.msra.mxu0 %v769
  %1100 = vmatprep.subr.bf16.mxu0 %v772
  %1101 = vmatpush1.bf16.msra.mxu0 %v771
  %1102 = vmatprep.mubr.bf16.mxu0 %v212
  %1103 = vmatmul.mubr.bf16.gmra.mrb[0].mxu0 %v211
  %v1104 = vpop.f32.mrb[0].mxu0
  %v1105 = vadd.f32 %v1064, %v1104
  %v1106 = vpop.f32.mrb[0].mxu0
  %v1107 = vadd.f32 %v1066, %v1106
  %v1108 = vpop.f32.mrb[0].mxu0
  %v1109 = vpop.f32.mrb[0].mxu0
  %1110 = vdwg.mxu0
  %1111 = vmatprep.subr.bf16.mxu0 %v774
  %1112 = vmatpush1.bf16.msra.mxu0 %v773
  %1113 = vmatprep.subr.bf16.mxu0 %v776
  %1114 = vmatpush1.bf16.msra.mxu0 %v775
  %1115 = vmatprep.subr.bf16.mxu0 %v778
  %1116 = vmatpush1.bf16.msra.mxu0 %v777
  %1117 = vmatprep.subr.bf16.mxu0 %v780
  %1118 = vmatpush1.bf16.msra.mxu0 %v779
  %1119 = vmatprep.subr.bf16.mxu0 %v782
  %1120 = vmatpush1.bf16.msra.mxu0 %v781
  %1121 = vmatprep.subr.bf16.mxu0 %v784
  %1122 = vmatpush1.bf16.msra.mxu0 %v783
  %1123 = vmatprep.subr.bf16.mxu0 %v786
  %1124 = vmatpush1.bf16.msra.mxu0 %v785
  %1125 = vmatprep.subr.bf16.mxu0 %v788
  %1126 = vmatpush1.bf16.msra.mxu0 %v787
  %1127 = vmatprep.subr.bf16.mxu0 %v790
  %1128 = vmatpush1.bf16.msra.mxu0 %v789
  %1129 = vmatprep.subr.bf16.mxu0 %v792
  %1130 = vmatpush1.bf16.msra.mxu0 %v791
  %1131 = vmatprep.subr.bf16.mxu0 %v794
  %1132 = vmatpush1.bf16.msra.mxu0 %v793
  %1133 = vmatprep.subr.bf16.mxu0 %v796
  %1134 = vmatpush1.bf16.msra.mxu0 %v795
  %1135 = vmatprep.subr.bf16.mxu0 %v798
  %1136 = vmatpush1.bf16.msra.mxu0 %v797
  %1137 = vmatprep.subr.bf16.mxu0 %v800
  %1138 = vmatpush1.bf16.msra.mxu0 %v799
  %1139 = vmatprep.subr.bf16.mxu0 %v802
  %1140 = vmatpush1.bf16.msra.mxu0 %v801
  %1141 = vmatprep.subr.bf16.mxu0 %v804
  %1142 = vmatpush1.bf16.msra.mxu0 %v803
  %1143 = vmatprep.mubr.bf16.mxu0 %v214
  %1144 = vmatmul.mubr.bf16.gmra.mrb[0].mxu0 %v213
  %v1145 = vpop.f32.mrb[0].mxu0
  %v1146 = vadd.f32 %v1105, %v1145
  %v1147 = vpop.f32.mrb[0].mxu0
  %v1148 = vadd.f32 %v1107, %v1147
  %v1149 = vpop.f32.mrb[0].mxu0
  %v1150 = vpop.f32.mrb[0].mxu0
  %1151 = vdwg.mxu0
  %1152 = vmatprep.subr.bf16.mxu0 %v806
  %1153 = vmatpush1.bf16.msra.mxu0 %v805
  %1154 = vmatprep.subr.bf16.mxu0 %v808
  %1155 = vmatpush1.bf16.msra.mxu0 %v807
  %1156 = vmatprep.subr.bf16.mxu0 %v810
  %1157 = vmatpush1.bf16.msra.mxu0 %v809
  %1158 = vmatprep.subr.bf16.mxu0 %v812
  %1159 = vmatpush1.bf16.msra.mxu0 %v811
  %1160 = vmatprep.subr.bf16.mxu0 %v814
  %1161 = vmatpush1.bf16.msra.mxu0 %v813
  %1162 = vmatprep.subr.bf16.mxu0 %v816
  %1163 = vmatpush1.bf16.msra.mxu0 %v815
  %1164 = vmatprep.subr.bf16.mxu0 %v818
  %1165 = vmatpush1.bf16.msra.mxu0 %v817
  %1166 = vmatprep.subr.bf16.mxu0 %v820
  %1167 = vmatpush1.bf16.msra.mxu0 %v819
  %1168 = vmatprep.subr.bf16.mxu0 %v822
  %1169 = vmatpush1.bf16.msra.mxu0 %v821
  %1170 = vmatprep.subr.bf16.mxu0 %v824
  %1171 = vmatpush1.bf16.msra.mxu0 %v823
  %1172 = vmatprep.subr.bf16.mxu0 %v826
  %1173 = vmatpush1.bf16.msra.mxu0 %v825
  %1174 = vmatprep.subr.bf16.mxu0 %v828
  %1175 = vmatpush1.bf16.msra.mxu0 %v827
  %1176 = vmatprep.subr.bf16.mxu0 %v830
  %1177 = vmatpush1.bf16.msra.mxu0 %v829
  %1178 = vmatprep.subr.bf16.mxu0 %v832
  %1179 = vmatpush1.bf16.msra.mxu0 %v831
  %1180 = vmatprep.subr.bf16.mxu0 %v834
  %1181 = vmatpush1.bf16.msra.mxu0 %v833
  %1182 = vmatprep.subr.bf16.mxu0 %v836
  %1183 = vmatpush1.bf16.msra.mxu0 %v835
  %1184 = vmatprep.mubr.bf16.mxu0 %v216
  %1185 = vmatmul.mubr.bf16.gmra.mrb[0].mxu0 %v215
  %v1186 = vpop.f32.mrb[0].mxu0
  %v1187 = vadd.f32 %v1146, %v1186
  %v1188 = vpop.f32.mrb[0].mxu0
  %v1189 = vadd.f32 %v1148, %v1188
  %v1190 = vpop.f32.mrb[0].mxu0
  %v1191 = vpop.f32.mrb[0].mxu0
  %1192 = vdwg.mxu0
  %1193 = vmatprep.subr.bf16.mxu0 %v838
  %1194 = vmatpush1.bf16.msra.mxu0 %v837
  %1195 = vmatprep.subr.bf16.mxu0 %v840
  %1196 = vmatpush1.bf16.msra.mxu0 %v839
  %1197 = vmatprep.subr.bf16.mxu0 %v842
  %1198 = vmatpush1.bf16.msra.mxu0 %v841
  %1199 = vmatprep.subr.bf16.mxu0 %v844
  %1200 = vmatpush1.bf16.msra.mxu0 %v843
  %1201 = vmatprep.subr.bf16.mxu0 %v846
  %1202 = vmatpush1.bf16.msra.mxu0 %v845
  %1203 = vmatprep.subr.bf16.mxu0 %v848
  %1204 = vmatpush1.bf16.msra.mxu0 %v847
  %1205 = vmatprep.subr.bf16.mxu0 %v850
  %1206 = vmatpush1.bf16.msra.mxu0 %v849
  %1207 = vmatprep.subr.bf16.mxu0 %v852
  %1208 = vmatpush1.bf16.msra.mxu0 %v851
  %1209 = vmatprep.subr.bf16.mxu0 %v854
  %1210 = vmatpush1.bf16.msra.mxu0 %v853
  %1211 = vmatprep.subr.bf16.mxu0 %v856
  %1212 = vmatpush1.bf16.msra.mxu0 %v855
  %1213 = vmatprep.subr.bf16.mxu0 %v858
  %1214 = vmatpush1.bf16.msra.mxu0 %v857
  %1215 = vmatprep.subr.bf16.mxu0 %v860
  %1216 = vmatpush1.bf16.msra.mxu0 %v859
  %1217 = vmatprep.subr.bf16.mxu0 %v862
  %1218 = vmatpush1.bf16.msra.mxu0 %v861
  %1219 = vmatprep.subr.bf16.mxu0 %v864
  %1220 = vmatpush1.bf16.msra.mxu0 %v863
  %1221 = vmatprep.subr.bf16.mxu0 %v866
  %1222 = vmatpush1.bf16.msra.mxu0 %v865
  %1223 = vmatprep.subr.bf16.mxu0 %v868
  %1224 = vmatpush1.bf16.msra.mxu0 %v867
  %1225 = vmatprep.mubr.bf16.mxu0 %v218
  %1226 = vmatmul.mubr.bf16.gmra.mrb[0].mxu0 %v217
  %v1227 = vpop.f32.mrb[0].mxu0
  %v1228 = vadd.f32 %v1187, %v1227
  %v1229 = vpop.f32.mrb[0].mxu0
  %v1230 = vadd.f32 %v1189, %v1229
  %v1231 = vpop.f32.mrb[0].mxu0
  %v1232 = vpop.f32.mrb[0].mxu0
  %1233 = vdwg.mxu0
  %v1234 = vlaneseq
  %v1235 = vand.u32 %v1234, 127
  %vm1236 = vcmp.lt.s32.totalorder %v1235, 64
  %v1237 = vxor.u32 %v1228, 2147483648
  %v1238 = vmul.f32 %v1237, 1.442695
  %v1239 = vpow.pop %v1238
  %v1240 = vadd.f32 %v1239, 1.0
  %v1241 = vrcp.pop %v1240
  %v1242 = vmul.f32 1.0, %v1241
  %v1243 = vtanh.pop %v1228
  %v1244 = vsel %vm1236, %v1242, %v1243
  %v1245 = vxor.u32 %v1230, 2147483648
  %v1246 = vmul.f32 %v1245, 1.442695
  %v1247 = vpow.pop %v1246
  %v1248 = vadd.f32 %v1247, 1.0
  %v1249 = vrcp.pop %v1248
  %v1250 = vmul.f32 1.0, %v1249
  %v1251 = vld [vmem:[%s3] sm:$0xff]
  %1252 = vrot.lane.b32.xlu0 %v1251, 64
  %v1253 = vpop.permute.xlu0 %1252
  %v1254 = vmul.f32 %v1250, %v1253
  %1255 = vrot.lane.b32.xlu0 %v1244, 64
  %v1256 = vpop.permute.xlu0 %1255
  %v1257 = vmul.f32 %v1244, %v1256
  %v1258 = vadd.f32 %v1254, %v1257
  %1259 = vrot.lane.b32.xlu0 %v1250, 64
  %v1260 = vpop.permute.xlu0 %1259
  %v1261 = vtanh.pop %v1258
  %v1262 = vmul.f32 %v1260, %v1261
  %1263 = vrot.lane.b32.xlu0 %v1258, 64
  %v1264 = vpop.permute.xlu0 %1263
  %v1265 = vsel %vm1236, %v1262, %v1264
  %1266 = vst [vmem:[%s4] sm:$0xff] %v1265
  // Predicated region
  $region18: #{jump_forward_device.50} parent=0 // pred_check
    _
  $region19: #{jump_forward_device.50} parent=0 // pred_check_branch
    %1268 = sbr.rel (0) target = $region21
  $region20: #{jump_forward_device.50} parent=0 // pred_region
    _
  $region21: #{jump_forward_device.50} parent=0 // pred_fallthru
    _
  // Predicated region
  $region22: #{jump_forward_device.50} parent=0 // pred_check
    _
  $region23: #{jump_forward_device.50} parent=0 // pred_check_branch
    %1270 = sbr.rel (0) target = $region25
  $region24: #{jump_forward_device.50} parent=0 // pred_region
    _
  $region25: #{jump_forward_device.50} parent=0 // pred_fallthru
    _

// kernel: jump_forward_device.44
$region0: #{jump_forward_device.44}
  #allocation0 [shape = 'u32[]', space=smem, size = 0x4, offset = 0x4, fixed_abs, tag = 'smem constant byte address 0x4 - core index']
  #allocation1 [shape = 'u32[144,128]{1,0:T(1,128)}', space=vmem, size = 0x12000, scoped, tag = 'internal scratch']
  %s0 = inlined_call_operand.vmem [shape: bf16[8,896], index: 0, kind: input, shape index: {}]
  %s1 = inlined_call_operand.vmem [shape: bf16[896,256], index: 1, kind: input, shape index: {}]
  %s2 = inlined_call_operand.vmem [shape: f32[1,256], index: 2, kind: input, shape index: {}]
  %s3 = inlined_call_operand.vmem [shape: f32[8,128], index: 3, kind: input, shape index: {}]
  %s4 = inlined_call_operand.vmem [shape: f32[8,128], index: 4, kind: output, shape index: {}]
  %s5 = sld [smem:[#allocation0]]
  $region26: #{jump_forward_device.44} parent=0
    _
  %s7 = ssub.s32 1, %s5
  %s8 = scalar_select 0, %s7, %s5
  // Predicated region
  $region2: #{jump_forward_device.44} parent=0 // pred_check
    _
  $region3: #{jump_forward_device.44} parent=0 // pred_check_branch
    %10 = sbr.rel (0) target = $region5
  $region4: #{jump_forward_device.44} parent=0 // pred_region
    _
  $region5: #{jump_forward_device.44} parent=0 // pred_fallthru
    _
  // Predicated region
  $region6: #{jump_forward_device.44} parent=0 // pred_check
    _
  $region7: #{jump_forward_device.44} parent=0 // pred_check_branch
    %12 = sbr.rel (0) target = $region9
  $region8: #{jump_forward_device.44} parent=0 // pred_region
    _
  $region9: #{jump_forward_device.44} parent=0 // pred_fallthru
    _
  // Predicated region
  $region10: #{jump_forward_device.44} parent=0 // pred_check
    _
  $region11: #{jump_forward_device.44} parent=0 // pred_check_branch
    %14 = sbr.rel (0) target = $region13
  $region12: #{jump_forward_device.44} parent=0 // pred_region
    _
  $region13: #{jump_forward_device.44} parent=0 // pred_fallthru
    _
  // Predicated region
  $region14: #{jump_forward_device.44} parent=0 // pred_check
    _
  $region15: #{jump_forward_device.44} parent=0 // pred_check_branch
    %16 = sbr.rel (0) target = $region17
  $region16: #{jump_forward_device.44} parent=0 // pred_region
    _
  $region17: #{jump_forward_device.44} parent=0 // pred_fallthru
    _
  %v18 = vld [vmem:[%s0] sm:$0xff]
  %v19 = vld [vmem:[%s0 + $0x8] sm:$0xff]
  %v20 = vld [vmem:[%s0 + $0x10] sm:$0xff]
  %v21 = vld [vmem:[%s0 + $0x18] sm:$0xf]
  %v22 = vld [vmem:[%s1] sm:$0xff]
  %v23 = vld [vmem:[%s1 + $0x8] sm:$0xff]
  %v24 = vld [vmem:[%s1 + $0x10] sm:$0xff]
  %v25 = vld [vmem:[%s1 + $0x18] sm:$0xff]
  %v26 = vld [vmem:[%s1 + $0x20] sm:$0xff]
  %v27 = vld [vmem:[%s1 + $0x28] sm:$0xff]
  %v28 = vld [vmem:[%s1 + $0x30] sm:$0xff]
  %v29 = vld [vmem:[%s1 + $0x38] sm:$0xff]
  %v30 = vld [vmem:[%s1 + $0x40] sm:$0xff]
  %v31 = vld [vmem:[%s1 + $0x48] sm:$0xff]
  %v32 = vld [vmem:[%s1 + $0x50] sm:$0xff]
  %v33 = vld [vmem:[%s1 + $0x58] sm:$0xff]
  %v34 = vld [vmem:[%s1 + $0x60] sm:$0xff]
  %v35 = vld [vmem:[%s1 + $0x68] sm:$0xff]
  %v36 = vld [vmem:[%s1 + $0x70] sm:$0xff]
  %v37 = vld [vmem:[%s1 + $0x78] sm:$0xff]
  %v38 = vld [vmem:[%s1 + $0x80] sm:$0xff]
  %v39 = vld [vmem:[%s1 + $0x88] sm:$0xff]
  %v40 = vld [vmem:[%s1 + $0x90] sm:$0xff]
  %v41 = vld [vmem:[%s1 + $0x98] sm:$0xff]
  %v42 = vld [vmem:[%s1 + $0xa0] sm:$0xff]
  %v43 = vld [vmem:[%s1 + $0xa8] sm:$0xff]
  %v44 = vld [vmem:[%s1 + $0xb0] sm:$0xff]
  %v45 = vld [vmem:[%s1 + $0xb8] sm:$0xff]
  %v46 = vld [vmem:[%s1 + $0xc0] sm:$0xff]
  %v47 = vld [vmem:[%s1 + $0xc8] sm:$0xff]
  %v48 = vld [vmem:[%s1 + $0xd0] sm:$0xff]
  %v49 = vld [vmem:[%s1 + $0xd8] sm:$0xff]
  %v50 = vld [vmem:[%s1 + $0xe0] sm:$0xff]
  %v51 = vld [vmem:[%s1 + $0xe8] sm:$0xff]
  %v52 = vld [vmem:[%s1 + $0xf0] sm:$0xff]
  %v53 = vld [vmem:[%s1 + $0xf8] sm:$0xff]
  %v54 = vld [vmem:[%s1 + $0x100] sm:$0xff]
  %v55 = vld [vmem:[%s1 + $0x108] sm:$0xff]
  %v56 = vld [vmem:[%s1 + $0x110] sm:$0xff]
  %v57 = vld [vmem:[%s1 + $0x118] sm:$0xff]
  %v58 = vld [vmem:[%s1 + $0x120] sm:$0xff]
  %v59 = vld [vmem:[%s1 + $0x128] sm:$0xff]
  %v60 = vld [vmem:[%s1 + $0x130] sm:$0xff]
  %v61 = vld [vmem:[%s1 + $0x138] sm:$0xff]
  %v62 = vld [vmem:[%s1 + $0x140] sm:$0xff]
  %v63 = vld [vmem:[%s1 + $0x148] sm:$0xff]
  %v64 = vld [vmem:[%s1 + $0x150] sm:$0xff]
  %v65 = vld [vmem:[%s1 + $0x158] sm:$0xff]
  %v66 = vld [vmem:[%s1 + $0x160] sm:$0xff]
  %v67 = vld [vmem:[%s1 + $0x168] sm:$0xff]
  %v68 = vld [vmem:[%s1 + $0x170] sm:$0xff]
  %v69 = vld [vmem:[%s1 + $0x178] sm:$0xff]
  %v70 = vld [vmem:[%s1 + $0x180] sm:$0xff]
  %v71 = vld [vmem:[%s1 + $0x188] sm:$0xff]
  %v72 = vld [vmem:[%s1 + $0x190] sm:$0xff]
  %v73 = vld [vmem:[%s1 + $0x198] sm:$0xff]
  %v74 = vld [vmem:[%s1 + $0x1a0] sm:$0xff]
  %v75 = vld [vmem:[%s1 + $0x1a8] sm:$0xff]
  %v76 = vld [vmem:[%s1 + $0x1b0] sm:$0xff]
  %v77 = vld [vmem:[%s1 + $0x1b8] sm:$0xff]
  %v78 = vld [vmem:[%s1 + $0x1c0] sm:$0xff]
  %v79 = vld [vmem:[%s1 + $0x1c8] sm:$0xff]
  %v80 = vld [vmem:[%s1 + $0x1d0] sm:$0xff]
  %v81 = vld [vmem:[%s1 + $0x1d8] sm:$0xff]
  %v82 = vld [vmem:[%s1 + $0x1e0] sm:$0xff]
  %v83 = vld [vmem:[%s1 + $0x1e8] sm:$0xff]
  %v84 = vld [vmem:[%s1 + $0x1f0] sm:$0xff]
  %v85 = vld [vmem:[%s1 + $0x1f8] sm:$0xff]
  %v86 = vld [vmem:[%s1 + $0x200] sm:$0xff]
  %v87 = vld [vmem:[%s1 + $0x208] sm:$0xff]
  %v88 = vld [vmem:[%s1 + $0x210] sm:$0xff]
  %v89 = vld [vmem:[%s1 + $0x218] sm:$0xff]
  %v90 = vld [vmem:[%s1 + $0x220] sm:$0xff]
  %v91 = vld [vmem:[%s1 + $0x228] sm:$0xff]
  %v92 = vld [vmem:[%s1 + $0x230] sm:$0xff]
  %v93 = vld [vmem:[%s1 + $0x238] sm:$0xff]
  %v94 = vld [vmem:[%s1 + $0x240] sm:$0xff]
  %v95 = vld [vmem:[%s1 + $0x248] sm:$0xff]
  %v96 = vld [vmem:[%s1 + $0x250] sm:$0xff]
  %v97 = vld [vmem:[%s1 + $0x258] sm:$0xff]
  %v98 = vld [vmem:[%s1 + $0x260] sm:$0xff]
  %v99 = vld [vmem:[%s1 + $0x268] sm:$0xff]
  %v100 = vld [vmem:[%s1 + $0x270] sm:$0xff]
  %v101 = vld [vmem:[%s1 + $0x278] sm:$0xff]
  %v102 = vld [vmem:[%s1 + $0x280] sm:$0xff]
  %v103 = vld [vmem:[%s1 + $0x288] sm:$0xff]
  %v104 = vld [vmem:[%s1 + $0x290] sm:$0xff]
  %v105 = vld [vmem:[%s1 + $0x298] sm:$0xff]
  %v106 = vld [vmem:[%s1 + $0x2a0] sm:$0xff]
  %v107 = vld [vmem:[%s1 + $0x2a8] sm:$0xff]
  %v108 = vld [vmem:[%s1 + $0x2b0] sm:$0xff]
  %v109 = vld [vmem:[%s1 + $0x2b8] sm:$0xff]
  %v110 = vld [vmem:[%s1 + $0x2c0] sm:$0xff]
  %v111 = vld [vmem:[%s1 + $0x2c8] sm:$0xff]
  %v112 = vld [vmem:[%s1 + $0x2d0] sm:$0xff]
  %v113 = vld [vmem:[%s1 + $0x2d8] sm:$0xff]
  %v114 = vld [vmem:[%s1 + $0x2e0] sm:$0xff]
  %v115 = vld [vmem:[%s1 + $0x2e8] sm:$0xff]
  %v116 = vld [vmem:[%s1 + $0x2f0] sm:$0xff]
  %v117 = vld [vmem:[%s1 + $0x2f8] sm:$0xff]
  %v118 = vld [vmem:[%s1 + $0x300] sm:$0xff]
  %v119 = vld [vmem:[%s1 + $0x308] sm:$0xff]
  %v120 = vld [vmem:[%s1 + $0x310] sm:$0xff]
  %v121 = vld [vmem:[%s1 + $0x318] sm:$0xff]
  %v122 = vld [vmem:[%s1 + $0x320] sm:$0xff]
  %v123 = vld [vmem:[%s1 + $0x328] sm:$0xff]
  %v124 = vld [vmem:[%s1 + $0x330] sm:$0xff]
  %v125 = vld [vmem:[%s1 + $0x338] sm:$0xff]
  %v126 = vld [vmem:[%s1 + $0x340] sm:$0xff]
  %v127 = vld [vmem:[%s1 + $0x348] sm:$0xff]
  %v128 = vld [vmem:[%s1 + $0x350] sm:$0xff]
  %v129 = vld [vmem:[%s1 + $0x358] sm:$0xff]
  %v130 = vld [vmem:[%s1 + $0x360] sm:$0xff]
  %v131 = vld [vmem:[%s1 + $0x368] sm:$0xff]
  %v132 = vld [vmem:[%s1 + $0x370] sm:$0xff]
  %v133 = vld [vmem:[%s1 + $0x378] sm:$0xff]
  %v134 = vld [vmem:[%s2] sm:$0x3]
  %v136 = vlaneseq
  %v137 = vshrl.u32 %v136, 7
  %v138 = vsub.s32 0, %v137
  %v139 = vrot.slane %v134, %v138
  %v140 = vlaneseq
  %v141 = vshrl.u32 %v140, 7
  %v142 = vsub.s32 1, %v141
  %v143 = vrot.slane %v134, %v142
  %v150 = vunpack.c.l.b16 %v18
  %v151 = vunpack.c.h.b16 %v18
  %v152 = vunpack.c.l.b16 %v19
  %v153 = vunpack.c.h.b16 %v19
  %v154 = vunpack.c.l.b16 %v20
  %v155 = vunpack.c.h.b16 %v20
  %v156 = vunpack.c.l.b16 %v21
  %v157 = vpack.c.b16 %v150, %v150
  %v158 = vpack.c.b16 %v151, %v151
  %v159 = vpack.c.b16 %v152, %v152
  %v160 = vpack.c.b16 %v153, %v153
  %v161 = vpack.c.b16 %v154, %v154
  %v162 = vpack.c.b16 %v155, %v155
  %v163 = vpack.c.b16 %v156, %v156
  %v283 = vunpack.c.l.b16 %v22
  %v284 = vunpack.c.h.b16 %v22
  %v285 = vunpack.c.l.b16 %v23
  %v286 = vunpack.c.h.b16 %v23
  %v287 = vunpack.c.l.b16 %v24
  %v288 = vunpack.c.h.b16 %v24
  %v289 = vunpack.c.l.b16 %v25
  %v290 = vunpack.c.h.b16 %v25
  %v291 = vunpack.c.l.b16 %v26
  %v292 = vunpack.c.h.b16 %v26
  %v293 = vunpack.c.l.b16 %v27
  %v294 = vunpack.c.h.b16 %v27
  %v295 = vunpack.c.l.b16 %v28
  %v296 = vunpack.c.h.b16 %v28
  %v297 = vunpack.c.l.b16 %v29
  %v298 = vunpack.c.h.b16 %v29
  %v299 = vunpack.c.l.b16 %v30
  %v300 = vunpack.c.h.b16 %v30
  %v301 = vunpack.c.l.b16 %v31
  %v302 = vunpack.c.h.b16 %v31
  %v303 = vunpack.c.l.b16 %v32
  %v304 = vunpack.c.h.b16 %v32
  %v305 = vunpack.c.l.b16 %v33
  %v306 = vunpack.c.h.b16 %v33
  %v307 = vunpack.c.l.b16 %v34
  %v308 = vunpack.c.h.b16 %v34
  %v309 = vunpack.c.l.b16 %v35
  %v310 = vunpack.c.h.b16 %v35
  %v311 = vunpack.c.l.b16 %v36
  %v312 = vunpack.c.h.b16 %v36
  %v313 = vunpack.c.l.b16 %v37
  %v314 = vunpack.c.h.b16 %v37
  %v315 = vunpack.c.l.b16 %v38
  %v316 = vunpack.c.h.b16 %v38
  %v317 = vunpack.c.l.b16 %v39
  %v318 = vunpack.c.h.b16 %v39
  %v319 = vunpack.c.l.b16 %v40
  %v320 = vunpack.c.h.b16 %v40
  %v321 = vunpack.c.l.b16 %v41
  %v322 = vunpack.c.h.b16 %v41
  %v323 = vunpack.c.l.b16 %v42
  %v324 = vunpack.c.h.b16 %v42
  %v325 = vunpack.c.l.b16 %v43
  %v326 = vunpack.c.h.b16 %v43
  %v327 = vunpack.c.l.b16 %v44
  %v328 = vunpack.c.h.b16 %v44
  %v329 = vunpack.c.l.b16 %v45
  %v330 = vunpack.c.h.b16 %v45
  %v331 = vunpack.c.l.b16 %v46
  %v332 = vunpack.c.h.b16 %v46
  %v333 = vunpack.c.l.b16 %v47
  %v334 = vunpack.c.h.b16 %v47
  %v335 = vunpack.c.l.b16 %v48
  %v336 = vunpack.c.h.b16 %v48
  %v337 = vunpack.c.l.b16 %v49
  %v338 = vunpack.c.h.b16 %v49
  %v339 = vunpack.c.l.b16 %v50
  %v340 = vunpack.c.h.b16 %v50
  %v341 = vunpack.c.l.b16 %v51
  %v342 = vunpack.c.h.b16 %v51
  %v343 = vunpack.c.l.b16 %v52
  %v344 = vunpack.c.h.b16 %v52
  %v345 = vunpack.c.l.b16 %v53
  %v346 = vunpack.c.h.b16 %v53
  %v347 = vunpack.c.l.b16 %v54
  %v348 = vunpack.c.h.b16 %v54
  %v349 = vunpack.c.l.b16 %v55
  %v350 = vunpack.c.h.b16 %v55
  %v351 = vunpack.c.l.b16 %v56
  %v352 = vunpack.c.h.b16 %v56
  %v353 = vunpack.c.l.b16 %v57
  %v354 = vunpack.c.h.b16 %v57
  %v355 = vunpack.c.l.b16 %v58
  %v356 = vunpack.c.h.b16 %v58
  %v357 = vunpack.c.l.b16 %v59
  %v358 = vunpack.c.h.b16 %v59
  %v359 = vunpack.c.l.b16 %v60
  %v360 = vunpack.c.h.b16 %v60
  %v361 = vunpack.c.l.b16 %v61
  %v362 = vunpack.c.h.b16 %v61
  %v363 = vunpack.c.l.b16 %v62
  %v364 = vunpack.c.h.b16 %v62
  %v365 = vunpack.c.l.b16 %v63
  %v366 = vunpack.c.h.b16 %v63
  %v367 = vunpack.c.l.b16 %v64
  %v368 = vunpack.c.h.b16 %v64
  %v369 = vunpack.c.l.b16 %v65
  %v370 = vunpack.c.h.b16 %v65
  %v371 = vunpack.c.l.b16 %v66
  %v372 = vunpack.c.h.b16 %v66
  %v373 = vunpack.c.l.b16 %v67
  %v374 = vunpack.c.h.b16 %v67
  %v375 = vunpack.c.l.b16 %v68
  %v376 = vunpack.c.h.b16 %v68
  %v377 = vunpack.c.l.b16 %v69
  %v378 = vunpack.c.h.b16 %v69
  %v379 = vunpack.c.l.b16 %v70
  %v380 = vunpack.c.h.b16 %v70
  %v381 = vunpack.c.l.b16 %v71
  %v382 = vunpack.c.h.b16 %v71
  %v383 = vunpack.c.l.b16 %v72
  %v384 = vunpack.c.h.b16 %v72
  %v385 = vunpack.c.l.b16 %v73
  %v386 = vunpack.c.h.b16 %v73
  %v387 = vunpack.c.l.b16 %v74
  %v388 = vunpack.c.h.b16 %v74
  %v389 = vunpack.c.l.b16 %v75
  %v390 = vunpack.c.h.b16 %v75
  %v391 = vunpack.c.l.b16 %v76
  %v392 = vunpack.c.h.b16 %v76
  %v393 = vunpack.c.l.b16 %v77
  %v394 = vunpack.c.h.b16 %v77
  %v395 = vunpack.c.l.b16 %v78
  %v396 = vunpack.c.h.b16 %v78
  %v397 = vunpack.c.l.b16 %v79
  %v398 = vunpack.c.h.b16 %v79
  %v399 = vunpack.c.l.b16 %v80
  %v400 = vunpack.c.h.b16 %v80
  %v401 = vunpack.c.l.b16 %v81
  %v402 = vunpack.c.h.b16 %v81
  %v403 = vunpack.c.l.b16 %v82
  %v404 = vunpack.c.h.b16 %v82
  %v405 = vunpack.c.l.b16 %v83
  %v406 = vunpack.c.h.b16 %v83
  %v407 = vunpack.c.l.b16 %v84
  %v408 = vunpack.c.h.b16 %v84
  %v409 = vunpack.c.l.b16 %v85
  %v410 = vunpack.c.h.b16 %v85
  %v411 = vunpack.c.l.b16 %v86
  %v412 = vunpack.c.h.b16 %v86
  %v413 = vunpack.c.l.b16 %v87
  %v414 = vunpack.c.h.b16 %v87
  %v415 = vunpack.c.l.b16 %v88
  %v416 = vunpack.c.h.b16 %v88
  %v417 = vunpack.c.l.b16 %v89
  %v418 = vunpack.c.h.b16 %v89
  %v419 = vunpack.c.l.b16 %v90
  %v420 = vunpack.c.h.b16 %v90
  %v421 = vunpack.c.l.b16 %v91
  %v422 = vunpack.c.h.b16 %v91
  %v423 = vunpack.c.l.b16 %v92
  %v424 = vunpack.c.h.b16 %v92
  %v425 = vunpack.c.l.b16 %v93
  %v426 = vunpack.c.h.b16 %v93
  %v427 = vunpack.c.l.b16 %v94
  %v428 = vunpack.c.h.b16 %v94
  %v429 = vunpack.c.l.b16 %v95
  %v430 = vunpack.c.h.b16 %v95
  %v431 = vunpack.c.l.b16 %v96
  %v432 = vunpack.c.h.b16 %v96
  %v433 = vunpack.c.l.b16 %v97
  %v434 = vunpack.c.h.b16 %v97
  %v435 = vunpack.c.l.b16 %v98
  %v436 = vunpack.c.h.b16 %v98
  %v437 = vunpack.c.l.b16 %v99
  %v438 = vunpack.c.h.b16 %v99
  %v439 = vunpack.c.l.b16 %v100
  %v440 = vunpack.c.h.b16 %v100
  %v441 = vunpack.c.l.b16 %v101
  %v442 = vunpack.c.h.b16 %v101
  %v443 = vunpack.c.l.b16 %v102
  %v444 = vunpack.c.h.b16 %v102
  %v445 = vunpack.c.l.b16 %v103
  %v446 = vunpack.c.h.b16 %v103
  %v447 = vunpack.c.l.b16 %v104
  %v448 = vunpack.c.h.b16 %v104
  %v449 = vunpack.c.l.b16 %v105
  %v450 = vunpack.c.h.b16 %v105
  %v451 = vunpack.c.l.b16 %v106
  %v452 = vunpack.c.h.b16 %v106
  %v453 = vunpack.c.l.b16 %v107
  %v454 = vunpack.c.h.b16 %v107
  %v455 = vunpack.c.l.b16 %v108
  %v456 = vunpack.c.h.b16 %v108
  %v457 = vunpack.c.l.b16 %v109
  %v458 = vunpack.c.h.b16 %v109
  %v459 = vunpack.c.l.b16 %v110
  %v460 = vunpack.c.h.b16 %v110
  %v461 = vunpack.c.l.b16 %v111
  %v462 = vunpack.c.h.b16 %v111
  %v463 = vunpack.c.l.b16 %v112
  %v464 = vunpack.c.h.b16 %v112
  %v465 = vunpack.c.l.b16 %v113
  %v466 = vunpack.c.h.b16 %v113
  %v467 = vunpack.c.l.b16 %v114
  %v468 = vunpack.c.h.b16 %v114
  %v469 = vunpack.c.l.b16 %v115
  %v470 = vunpack.c.h.b16 %v115
  %v471 = vunpack.c.l.b16 %v116
  %v472 = vunpack.c.h.b16 %v116
  %v473 = vunpack.c.l.b16 %v117
  %v474 = vunpack.c.h.b16 %v117
  %v475 = vunpack.c.l.b16 %v118
  %v476 = vunpack.c.h.b16 %v118
  %v477 = vunpack.c.l.b16 %v119
  %v478 = vunpack.c.h.b16 %v119
  %v479 = vunpack.c.l.b16 %v120
  %v480 = vunpack.c.h.b16 %v120
  %v481 = vunpack.c.l.b16 %v121
  %v482 = vunpack.c.h.b16 %v121
  %v483 = vunpack.c.l.b16 %v122
  %v484 = vunpack.c.h.b16 %v122
  %v485 = vunpack.c.l.b16 %v123
  %v486 = vunpack.c.h.b16 %v123
  %v487 = vunpack.c.l.b16 %v124
  %v488 = vunpack.c.h.b16 %v124
  %v489 = vunpack.c.l.b16 %v125
  %v490 = vunpack.c.h.b16 %v125
  %v491 = vunpack.c.l.b16 %v126
  %v492 = vunpack.c.h.b16 %v126
  %v493 = vunpack.c.l.b16 %v127
  %v494 = vunpack.c.h.b16 %v127
  %v495 = vunpack.c.l.b16 %v128
  %v496 = vunpack.c.h.b16 %v128
  %v497 = vunpack.c.l.b16 %v129
  %v498 = vunpack.c.h.b16 %v129
  %v499 = vunpack.c.l.b16 %v130
  %v500 = vunpack.c.h.b16 %v130
  %v501 = vunpack.c.l.b16 %v131
  %v502 = vunpack.c.h.b16 %v131
  %v503 = vunpack.c.l.b16 %v132
  %v504 = vunpack.c.h.b16 %v132
  %v505 = vunpack.c.l.b16 %v133
  %v506 = vunpack.c.h.b16 %v133
  %v507 = vpack.c.b16 %v285, %v283
  %v508 = vpack.c.b16 %v286, %v284
  %v509 = vpack.c.b16 %v289, %v287
  %v510 = vpack.c.b16 %v290, %v288
  %v511 = vpack.c.b16 %v293, %v291
  %v512 = vpack.c.b16 %v294, %v292
  %v513 = vpack.c.b16 %v297, %v295
  %v514 = vpack.c.b16 %v298, %v296
  %v515 = vpack.c.b16 %v301, %v299
  %v516 = vpack.c.b16 %v302, %v300
  %v517 = vpack.c.b16 %v305, %v303
  %v518 = vpack.c.b16 %v306, %v304
  %v519 = vpack.c.b16 %v309, %v307
  %v520 = vpack.c.b16 %v310, %v308
  %v521 = vpack.c.b16 %v313, %v311
  %v522 = vpack.c.b16 %v314, %v312
  %v523 = vpack.c.b16 %v317, %v315
  %v524 = vpack.c.b16 %v318, %v316
  %v525 = vpack.c.b16 %v321, %v319
  %v526 = vpack.c.b16 %v322, %v320
  %v527 = vpack.c.b16 %v325, %v323
  %v528 = vpack.c.b16 %v326, %v324
  %v529 = vpack.c.b16 %v329, %v327
  %v530 = vpack.c.b16 %v330, %v328
  %v531 = vpack.c.b16 %v333, %v331
  %v532 = vpack.c.b16 %v334, %v332
  %v533 = vpack.c.b16 %v337, %v335
  %v534 = vpack.c.b16 %v338, %v336
  %v535 = vpack.c.b16 %v341, %v339
  %v536 = vpack.c.b16 %v342, %v340
  %v537 = vpack.c.b16 %v345, %v343
  %v538 = vpack.c.b16 %v346, %v344
  %v539 = vpack.c.b16 %v349, %v347
  %v540 = vpack.c.b16 %v350, %v348
  %v541 = vpack.c.b16 %v353, %v351
  %v542 = vpack.c.b16 %v354, %v352
  %v543 = vpack.c.b16 %v357, %v355
  %v544 = vpack.c.b16 %v358, %v356
  %v545 = vpack.c.b16 %v361, %v359
  %v546 = vpack.c.b16 %v362, %v360
  %v547 = vpack.c.b16 %v365, %v363
  %v548 = vpack.c.b16 %v366, %v364
  %v549 = vpack.c.b16 %v369, %v367
  %v550 = vpack.c.b16 %v370, %v368
  %v551 = vpack.c.b16 %v373, %v371
  %v552 = vpack.c.b16 %v374, %v372
  %v553 = vpack.c.b16 %v377, %v375
  %v554 = vpack.c.b16 %v378, %v376
  %v555 = vpack.c.b16 %v381, %v379
  %v556 = vpack.c.b16 %v382, %v380
  %v557 = vpack.c.b16 %v385, %v383
  %v558 = vpack.c.b16 %v386, %v384
  %v559 = vpack.c.b16 %v389, %v387
  %v560 = vpack.c.b16 %v390, %v388
  %v561 = vpack.c.b16 %v393, %v391
  %v562 = vpack.c.b16 %v394, %v392
  %v563 = vpack.c.b16 %v397, %v395
  %v564 = vpack.c.b16 %v398, %v396
  %v565 = vpack.c.b16 %v401, %v399
  %v566 = vpack.c.b16 %v402, %v400
  %v567 = vpack.c.b16 %v405, %v403
  %v568 = vpack.c.b16 %v406, %v404
  %v569 = vpack.c.b16 %v409, %v407
  %v570 = vpack.c.b16 %v410, %v408
  %v571 = vpack.c.b16 %v413, %v411
  %v572 = vpack.c.b16 %v414, %v412
  %v573 = vpack.c.b16 %v417, %v415
  %v574 = vpack.c.b16 %v418, %v416
  %v575 = vpack.c.b16 %v421, %v419
  %v576 = vpack.c.b16 %v422, %v420
  %v577 = vpack.c.b16 %v425, %v423
  %v578 = vpack.c.b16 %v426, %v424
  %v579 = vpack.c.b16 %v429, %v427
  %v580 = vpack.c.b16 %v430, %v428
  %v581 = vpack.c.b16 %v433, %v431
  %v582 = vpack.c.b16 %v434, %v432
  %v583 = vpack.c.b16 %v437, %v435
  %v584 = vpack.c.b16 %v438, %v436
  %v585 = vpack.c.b16 %v441, %v439
  %v586 = vpack.c.b16 %v442, %v440
  %v587 = vpack.c.b16 %v445, %v443
  %v588 = vpack.c.b16 %v446, %v444
  %v589 = vpack.c.b16 %v449, %v447
  %v590 = vpack.c.b16 %v450, %v448
  %v591 = vpack.c.b16 %v453, %v451
  %v592 = vpack.c.b16 %v454, %v452
  %v593 = vpack.c.b16 %v457, %v455
  %v594 = vpack.c.b16 %v458, %v456
  %v595 = vpack.c.b16 %v461, %v459
  %v596 = vpack.c.b16 %v462, %v460
  %v597 = vpack.c.b16 %v465, %v463
  %v598 = vpack.c.b16 %v466, %v464
  %v599 = vpack.c.b16 %v469, %v467
  %v600 = vpack.c.b16 %v470, %v468
  %v601 = vpack.c.b16 %v473, %v471
  %v602 = vpack.c.b16 %v474, %v472
  %v603 = vpack.c.b16 %v477, %v475
  %v604 = vpack.c.b16 %v478, %v476
  %v605 = vpack.c.b16 %v481, %v479
  %v606 = vpack.c.b16 %v482, %v480
  %v607 = vpack.c.b16 %v485, %v483
  %v608 = vpack.c.b16 %v486, %v484
  %v609 = vpack.c.b16 %v489, %v487
  %v610 = vpack.c.b16 %v490, %v488
  %v611 = vpack.c.b16 %v493, %v491
  %v612 = vpack.c.b16 %v494, %v492
  %v613 = vpack.c.b16 %v497, %v495
  %v614 = vpack.c.b16 %v498, %v496
  %v615 = vpack.c.b16 %v501, %v499
  %v616 = vpack.c.b16 %v502, %v500
  %v617 = vpack.c.b16 %v505, %v503
  %v618 = vpack.c.b16 %v506, %v504
  %731 = vmatprep.subr.bf16.mxu0 %v508
  %732 = vmatpush1.bf16.msra.mxu0 %v507
  %733 = vmatprep.subr.bf16.mxu0 %v510
  %734 = vmatpush1.bf16.msra.mxu0 %v509
  %735 = vmatprep.subr.bf16.mxu0 %v512
  %736 = vmatpush1.bf16.msra.mxu0 %v511
  %737 = vmatprep.subr.bf16.mxu0 %v514
  %738 = vmatpush1.bf16.msra.mxu0 %v513
  %739 = vmatprep.subr.bf16.mxu0 %v516
  %740 = vmatpush1.bf16.msra.mxu0 %v515
  %741 = vmatprep.subr.bf16.mxu0 %v518
  %742 = vmatpush1.bf16.msra.mxu0 %v517
  %743 = vmatprep.subr.bf16.mxu0 %v520
  %744 = vmatpush1.bf16.msra.mxu0 %v519
  %745 = vmatprep.subr.bf16.mxu0 %v522
  %746 = vmatpush1.bf16.msra.mxu0 %v521
  %747 = vmatprep.subr.bf16.mxu0 %v524
  %748 = vmatpush1.bf16.msra.mxu0 %v523
  %749 = vmatprep.subr.bf16.mxu0 %v526
  %750 = vmatpush1.bf16.msra.mxu0 %v525
  %751 = vmatprep.subr.bf16.mxu0 %v528
  %752 = vmatpush1.bf16.msra.mxu0 %v527
  %753 = vmatprep.subr.bf16.mxu0 %v530
  %754 = vmatpush1.bf16.msra.mxu0 %v529
  %755 = vmatprep.subr.bf16.mxu0 %v532
  %756 = vmatpush1.bf16.msra.mxu0 %v531
  %757 = vmatprep.subr.bf16.mxu0 %v534
  %758 = vmatpush1.bf16.msra.mxu0 %v533
  %759 = vmatprep.subr.bf16.mxu0 %v536
  %760 = vmatpush1.bf16.msra.mxu0 %v535
  %761 = vmatprep.subr.bf16.mxu0 %v538
  %762 = vmatpush1.bf16.msra.mxu0 %v537
  %763 = vmatprep.mubr.bf16.mxu0 %v158
  %764 = vmatmul.mubr.bf16.gmra.mrb[0].mxu0 %v157
  %v765 = vpop.f32.mrb[0].mxu0
  %v766 = vadd.f32 %v139, %v765
  %v767 = vpop.f32.mrb[0].mxu0
  %v768 = vadd.f32 %v143, %v767
  %v769 = vpop.f32.mrb[0].mxu0
  %v770 = vpop.f32.mrb[0].mxu0
  %771 = vdwg.mxu0
  %772 = vmatprep.subr.bf16.mxu0 %v540
  %773 = vmatpush1.bf16.msra.mxu0 %v539
  %774 = vmatprep.subr.bf16.mxu0 %v542
  %775 = vmatpush1.bf16.msra.mxu0 %v541
  %776 = vmatprep.subr.bf16.mxu0 %v544
  %777 = vmatpush1.bf16.msra.mxu0 %v543
  %778 = vmatprep.subr.bf16.mxu0 %v546
  %779 = vmatpush1.bf16.msra.mxu0 %v545
  %780 = vmatprep.subr.bf16.mxu0 %v548
  %781 = vmatpush1.bf16.msra.mxu0 %v547
  %782 = vmatprep.subr.bf16.mxu0 %v550
  %783 = vmatpush1.bf16.msra.mxu0 %v549
  %784 = vmatprep.subr.bf16.mxu0 %v552
  %785 = vmatpush1.bf16.msra.mxu0 %v551
  %786 = vmatprep.subr.bf16.mxu0 %v554
  %787 = vmatpush1.bf16.msra.mxu0 %v553
  %788 = vmatprep.subr.bf16.mxu0 %v556
  %789 = vmatpush1.bf16.msra.mxu0 %v555
  %790 = vmatprep.subr.bf16.mxu0 %v558
  %791 = vmatpush1.bf16.msra.mxu0 %v557
  %792 = vmatprep.subr.bf16.mxu0 %v560
  %793 = vmatpush1.bf16.msra.mxu0 %v559
  %794 = vmatprep.subr.bf16.mxu0 %v562
  %795 = vmatpush1.bf16.msra.mxu0 %v561
  %796 = vmatprep.subr.bf16.mxu0 %v564
  %797 = vmatpush1.bf16.msra.mxu0 %v563
  %798 = vmatprep.subr.bf16.mxu0 %v566
  %799 = vmatpush1.bf16.msra.mxu0 %v565
  %800 = vmatprep.subr.bf16.mxu0 %v568
  %801 = vmatpush1.bf16.msra.mxu0 %v567
  %802 = vmatprep.subr.bf16.mxu0 %v570
  %803 = vmatpush1.bf16.msra.mxu0 %v569
  %804 = vmatprep.mubr.bf16.mxu0 %v160
  %805 = vmatmul.mubr.bf16.gmra.mrb[0].mxu0 %v159
  %v806 = vpop.f32.mrb[0].mxu0
  %v807 = vadd.f32 %v766, %v806
  %v808 = vpop.f32.mrb[0].mxu0
  %v809 = vadd.f32 %v768, %v808
  %v810 = vpop.f32.mrb[0].mxu0
  %v811 = vpop.f32.mrb[0].mxu0
  %812 = vdwg.mxu0
  %813 = vmatprep.subr.bf16.mxu0 %v572
  %814 = vmatpush1.bf16.msra.mxu0 %v571
  %815 = vmatprep.subr.bf16.mxu0 %v574
  %816 = vmatpush1.bf16.msra.mxu0 %v573
  %817 = vmatprep.subr.bf16.mxu0 %v576
  %818 = vmatpush1.bf16.msra.mxu0 %v575
  %819 = vmatprep.subr.bf16.mxu0 %v578
  %820 = vmatpush1.bf16.msra.mxu0 %v577
  %821 = vmatprep.subr.bf16.mxu0 %v580
  %822 = vmatpush1.bf16.msra.mxu0 %v579
  %823 = vmatprep.subr.bf16.mxu0 %v582
  %824 = vmatpush1.bf16.msra.mxu0 %v581
  %825 = vmatprep.subr.bf16.mxu0 %v584
  %826 = vmatpush1.bf16.msra.mxu0 %v583
  %827 = vmatprep.subr.bf16.mxu0 %v586
  %828 = vmatpush1.bf16.msra.mxu0 %v585
  %829 = vmatprep.subr.bf16.mxu0 %v588
  %830 = vmatpush1.bf16.msra.mxu0 %v587
  %831 = vmatprep.subr.bf16.mxu0 %v590
  %832 = vmatpush1.bf16.msra.mxu0 %v589
  %833 = vmatprep.subr.bf16.mxu0 %v592
  %834 = vmatpush1.bf16.msra.mxu0 %v591
  %835 = vmatprep.subr.bf16.mxu0 %v594
  %836 = vmatpush1.bf16.msra.mxu0 %v593
  %837 = vmatprep.subr.bf16.mxu0 %v596
  %838 = vmatpush1.bf16.msra.mxu0 %v595
  %839 = vmatprep.subr.bf16.mxu0 %v598
  %840 = vmatpush1.bf16.msra.mxu0 %v597
  %841 = vmatprep.subr.bf16.mxu0 %v600
  %842 = vmatpush1.bf16.msra.mxu0 %v599
  %843 = vmatprep.subr.bf16.mxu0 %v602
  %844 = vmatpush1.bf16.msra.mxu0 %v601
  %845 = vmatprep.mubr.bf16.mxu0 %v162
  %846 = vmatmul.mubr.bf16.gmra.mrb[0].mxu0 %v161
  %v847 = vpop.f32.mrb[0].mxu0
  %v848 = vadd.f32 %v807, %v847
  %v849 = vpop.f32.mrb[0].mxu0
  %v850 = vadd.f32 %v809, %v849
  %v851 = vpop.f32.mrb[0].mxu0
  %v852 = vpop.f32.mrb[0].mxu0
  %853 = vdwg.mxu0
  %854 = vmatprep.subr.bf16.mxu0 %v604
  %855 = vmatpush1.bf16.msra.mxu0 %v603
  %856 = vmatprep.subr.bf16.mxu0 %v606
  %857 = vmatpush1.bf16.msra.mxu0 %v605
  %858 = vmatprep.subr.bf16.mxu0 %v608
  %859 = vmatpush1.bf16.msra.mxu0 %v607
  %860 = vmatprep.subr.bf16.mxu0 %v610
  %861 = vmatpush1.bf16.msra.mxu0 %v609
  %862 = vmatprep.subr.bf16.mxu0 %v612
  %863 = vmatpush1.bf16.msra.mxu0 %v611
  %864 = vmatprep.subr.bf16.mxu0 %v614
  %865 = vmatpush1.bf16.msra.mxu0 %v613
  %866 = vmatprep.subr.bf16.mxu0 %v616
  %867 = vmatpush1.bf16.msra.mxu0 %v615
  %868 = vmatprep.subr.bf16.mxu0 %v618
  %869 = vmatpush1.bf16.msra.mxu0 %v617
  %870 = vmatprep.subr.bf16.mxu0 0
  %871 = vmatpush1.bf16.msra.mxu0 0
  %872 = vmatprep.subr.bf16.mxu0 0
  %873 = vmatpush1.bf16.msra.mxu0 0
  %874 = vmatprep.subr.bf16.mxu0 0
  %875 = vmatpush1.bf16.msra.mxu0 0
  %876 = vmatprep.subr.bf16.mxu0 0
  %877 = vmatpush1.bf16.msra.mxu0 0
  %878 = vmatprep.subr.bf16.mxu0 0
  %879 = vmatpush1.bf16.msra.mxu0 0
  %880 = vmatprep.subr.bf16.mxu0 0
  %881 = vmatpush1.bf16.msra.mxu0 0
  %882 = vmatprep.subr.bf16.mxu0 0
  %883 = vmatpush1.bf16.msra.mxu0 0
  %884 = vmatprep.subr.bf16.mxu0 0
  %885 = vmatpush1.bf16.msra.mxu0 0
  %886 = vmatprep.mubr.bf16.mxu0 0
  %887 = vmatmul.mubr.bf16.gmra.mrb[0].mxu0 %v163
  %v888 = vpop.f32.mrb[0].mxu0
  %v889 = vadd.f32 %v848, %v888
  %v890 = vpop.f32.mrb[0].mxu0
  %v891 = vadd.f32 %v850, %v890
  %v892 = vpop.f32.mrb[0].mxu0
  %v893 = vpop.f32.mrb[0].mxu0
  %894 = vdwg.mxu0
  %v895 = vlaneseq
  %v896 = vand.u32 %v895, 127
  %vm897 = vcmp.lt.s32.totalorder %v896, 64
  %v898 = vxor.u32 %v889, 2147483648
  %v899 = vmul.f32 %v898, 1.442695
  %v900 = vpow.pop %v899
  %v901 = vadd.f32 %v900, 1.0
  %v902 = vrcp.pop %v901
  %v903 = vmul.f32 1.0, %v902
  %v904 = vtanh.pop %v889
  %v905 = vsel %vm897, %v903, %v904
  %v906 = vxor.u32 %v891, 2147483648
  %v907 = vmul.f32 %v906, 1.442695
  %v908 = vpow.pop %v907
  %v909 = vadd.f32 %v908, 1.0
  %v910 = vrcp.pop %v909
  %v911 = vmul.f32 1.0, %v910
  %v912 = vld [vmem:[%s3] sm:$0xff]
  %913 = vrot.lane.b32.xlu0 %v912, 64
  %v914 = vpop.permute.xlu0 %913
  %v915 = vmul.f32 %v911, %v914
  %916 = vrot.lane.b32.xlu0 %v905, 64
  %v917 = vpop.permute.xlu0 %916
  %v918 = vmul.f32 %v905, %v917
  %v919 = vadd.f32 %v915, %v918
  %920 = vrot.lane.b32.xlu0 %v911, 64
  %v921 = vpop.permute.xlu0 %920
  %v922 = vtanh.pop %v919
  %v923 = vmul.f32 %v921, %v922
  %924 = vrot.lane.b32.xlu0 %v919, 64
  %v925 = vpop.permute.xlu0 %924
  %v926 = vsel %vm897, %v923, %v925
  %927 = vst [vmem:[%s4] sm:$0xff] %v926
  // Predicated region
  $region18: #{jump_forward_device.44} parent=0 // pred_check
    _
  $region19: #{jump_forward_device.44} parent=0 // pred_check_branch
    %929 = sbr.rel (0) target = $region21
  $region20: #{jump_forward_device.44} parent=0 // pred_region
    _
  $region21: #{jump_forward_device.44} parent=0 // pred_fallthru
    _
  // Predicated region
  $region22: #{jump_forward_device.44} parent=0 // pred_check
    _
  $region23: #{jump_forward_device.44} parent=0 // pred_check_branch
    %931 = sbr.rel (0) target = $region25
  $region24: #{jump_forward_device.44} parent=0 // pred_region
    _
  $region25: #{jump_forward_device.44} parent=0 // pred_fallthru
    _

// kernel: jump_forward_device.64
$region0: #{jump_forward_device.64}
  #allocation0 [shape = 'u32[]', space=smem, size = 0x4, offset = 0x4, fixed_abs, tag = 'smem constant byte address 0x4 - core index']
  #allocation1 [shape = 'u32[144,128]{1,0:T(1,128)}', space=vmem, size = 0x12000, scoped, tag = 'internal scratch']
  %s0 = inlined_call_operand.vmem [shape: bf16[16,512], index: 0, kind: input, shape index: {}]
  %s1 = inlined_call_operand.vmem [shape: bf16[512,128], index: 1, kind: input, shape index: {}]
  %s2 = inlined_call_operand.vmem [shape: f32[1,128], index: 2, kind: input, shape index: {}]
  %s3 = inlined_call_operand.vmem [shape: bf16[16,128], index: 3, kind: output, shape index: {}]
  %s4 = sld [smem:[#allocation0]]
  $region22: #{jump_forward_device.64} parent=0
    _
  %s6 = ssub.s32 1, %s4
  %s7 = scalar_select 0, %s6, %s4
  // Predicated region
  $region2: #{jump_forward_device.64} parent=0 // pred_check
    _
  $region3: #{jump_forward_device.64} parent=0 // pred_check_branch
    %9 = sbr.rel (0) target = $region5
  $region4: #{jump_forward_device.64} parent=0 // pred_region
    _
  $region5: #{jump_forward_device.64} parent=0 // pred_fallthru
    _
  // Predicated region
  $region6: #{jump_forward_device.64} parent=0 // pred_check
    _
  $region7: #{jump_forward_device.64} parent=0 // pred_check_branch
    %11 = sbr.rel (0) target = $region9
  $region8: #{jump_forward_device.64} parent=0 // pred_region
    _
  $region9: #{jump_forward_device.64} parent=0 // pred_fallthru
    _
  // Predicated region
  $region10: #{jump_forward_device.64} parent=0 // pred_check
    _
  $region11: #{jump_forward_device.64} parent=0 // pred_check_branch
    %13 = sbr.rel (0) target = $region13
  $region12: #{jump_forward_device.64} parent=0 // pred_region
    _
  $region13: #{jump_forward_device.64} parent=0 // pred_fallthru
    _
  %v15 = vld [vmem:[%s0] sm:$0xff]
  %v16 = vld [vmem:[%s0 + $0x8] sm:$0xff]
  %v17 = vld [vmem:[%s0 + $0x10] sm:$0xff]
  %v18 = vld [vmem:[%s0 + $0x18] sm:$0xff]
  %v19 = vld [vmem:[%s1] sm:$0xf]
  %v20 = vld [vmem:[%s1 + $0x4] sm:$0xf]
  %v21 = vld [vmem:[%s1 + $0x8] sm:$0xf]
  %v22 = vld [vmem:[%s1 + $0xc] sm:$0xf]
  %v23 = vld [vmem:[%s1 + $0x10] sm:$0xf]
  %v24 = vld [vmem:[%s1 + $0x14] sm:$0xf]
  %v25 = vld [vmem:[%s1 + $0x18] sm:$0xf]
  %v26 = vld [vmem:[%s1 + $0x1c] sm:$0xf]
  %v27 = vld [vmem:[%s1 + $0x20] sm:$0xf]
  %v28 = vld [vmem:[%s1 + $0x24] sm:$0xf]
  %v29 = vld [vmem:[%s1 + $0x28] sm:$0xf]
  %v30 = vld [vmem:[%s1 + $0x2c] sm:$0xf]
  %v31 = vld [vmem:[%s1 + $0x30] sm:$0xf]
  %v32 = vld [vmem:[%s1 + $0x34] sm:$0xf]
  %v33 = vld [vmem:[%s1 + $0x38] sm:$0xf]
  %v34 = vld [vmem:[%s1 + $0x3c] sm:$0xf]
  %v35 = vld [vmem:[%s1 + $0x40] sm:$0xf]
  %v36 = vld [vmem:[%s1 + $0x44] sm:$0xf]
  %v37 = vld [vmem:[%s1 + $0x48] sm:$0xf]
  %v38 = vld [vmem:[%s1 + $0x4c] sm:$0xf]
  %v39 = vld [vmem:[%s1 + $0x50] sm:$0xf]
  %v40 = vld [vmem:[%s1 + $0x54] sm:$0xf]
  %v41 = vld [vmem:[%s1 + $0x58] sm:$0xf]
  %v42 = vld [vmem:[%s1 + $0x5c] sm:$0xf]
  %v43 = vld [vmem:[%s1 + $0x60] sm:$0xf]
  %v44 = vld [vmem:[%s1 + $0x64] sm:$0xf]
  %v45 = vld [vmem:[%s1 + $0x68] sm:$0xf]
  %v46 = vld [vmem:[%s1 + $0x6c] sm:$0xf]
  %v47 = vld [vmem:[%s1 + $0x70] sm:$0xf]
  %v48 = vld [vmem:[%s1 + $0x74] sm:$0xf]
  %v49 = vld [vmem:[%s1 + $0x78] sm:$0xf]
  %v50 = vld [vmem:[%s1 + $0x7c] sm:$0xf]
  %v51 = vld [vmem:[%s1 + $0x80] sm:$0xf]
  %v52 = vld [vmem:[%s1 + $0x84] sm:$0xf]
  %v53 = vld [vmem:[%s1 + $0x88] sm:$0xf]
  %v54 = vld [vmem:[%s1 + $0x8c] sm:$0xf]
  %v55 = vld [vmem:[%s1 + $0x90] sm:$0xf]
  %v56 = vld [vmem:[%s1 + $0x94] sm:$0xf]
  %v57 = vld [vmem:[%s1 + $0x98] sm:$0xf]
  %v58 = vld [vmem:[%s1 + $0x9c] sm:$0xf]
  %v59 = vld [vmem:[%s1 + $0xa0] sm:$0xf]
  %v60 = vld [vmem:[%s1 + $0xa4] sm:$0xf]
  %v61 = vld [vmem:[%s1 + $0xa8] sm:$0xf]
  %v62 = vld [vmem:[%s1 + $0xac] sm:$0xf]
  %v63 = vld [vmem:[%s1 + $0xb0] sm:$0xf]
  %v64 = vld [vmem:[%s1 + $0xb4] sm:$0xf]
  %v65 = vld [vmem:[%s1 + $0xb8] sm:$0xf]
  %v66 = vld [vmem:[%s1 + $0xbc] sm:$0xf]
  %v67 = vld [vmem:[%s1 + $0xc0] sm:$0xf]
  %v68 = vld [vmem:[%s1 + $0xc4] sm:$0xf]
  %v69 = vld [vmem:[%s1 + $0xc8] sm:$0xf]
  %v70 = vld [vmem:[%s1 + $0xcc] sm:$0xf]
  %v71 = vld [vmem:[%s1 + $0xd0] sm:$0xf]
  %v72 = vld [vmem:[%s1 + $0xd4] sm:$0xf]
  %v73 = vld [vmem:[%s1 + $0xd8] sm:$0xf]
  %v74 = vld [vmem:[%s1 + $0xdc] sm:$0xf]
  %v75 = vld [vmem:[%s1 + $0xe0] sm:$0xf]
  %v76 = vld [vmem:[%s1 + $0xe4] sm:$0xf]
  %v77 = vld [vmem:[%s1 + $0xe8] sm:$0xf]
  %v78 = vld [vmem:[%s1 + $0xec] sm:$0xf]
  %v79 = vld [vmem:[%s1 + $0xf0] sm:$0xf]
  %v80 = vld [vmem:[%s1 + $0xf4] sm:$0xf]
  %v81 = vld [vmem:[%s1 + $0xf8] sm:$0xf]
  %v82 = vld [vmem:[%s1 + $0xfc] sm:$0xf]
  %v83 = vld [vmem:[%s2] sm:$0x1]
  %v85 = vlaneseq
  %v86 = vshrl.u32 %v85, 7
  %v87 = vsub.s32 0, %v86
  %v88 = vrot.slane %v83, %v87
  %v94 = vunpack.c.l.b16 %v15
  %v95 = vunpack.c.h.b16 %v15
  %v96 = vunpack.c.l.b16 %v16
  %v97 = vunpack.c.h.b16 %v16
  %v98 = vunpack.c.l.b16 %v17
  %v99 = vunpack.c.h.b16 %v17
  %v100 = vunpack.c.l.b16 %v18
  %v101 = vunpack.c.h.b16 %v18
  %v102 = vpack.c.b16 %v98, %v94
  %v103 = vpack.c.b16 %v99, %v95
  %v104 = vpack.c.b16 %v100, %v96
  %v105 = vpack.c.b16 %v101, %v97
  %v174 = vunpack.c.l.b16 %v19
  %v175 = vunpack.c.l.b16 %v20
  %v176 = vunpack.c.l.b16 %v21
  %v177 = vunpack.c.l.b16 %v22
  %v178 = vunpack.c.l.b16 %v23
  %v179 = vunpack.c.l.b16 %v24
  %v180 = vunpack.c.l.b16 %v25
  %v181 = vunpack.c.l.b16 %v26
  %v182 = vunpack.c.l.b16 %v27
  %v183 = vunpack.c.l.b16 %v28
  %v184 = vunpack.c.l.b16 %v29
  %v185 = vunpack.c.l.b16 %v30
  %v186 = vunpack.c.l.b16 %v31
  %v187 = vunpack.c.l.b16 %v32
  %v188 = vunpack.c.l.b16 %v33
  %v189 = vunpack.c.l.b16 %v34
  %v190 = vunpack.c.l.b16 %v35
  %v191 = vunpack.c.l.b16 %v36
  %v192 = vunpack.c.l.b16 %v37
  %v193 = vunpack.c.l.b16 %v38
  %v194 = vunpack.c.l.b16 %v39
  %v195 = vunpack.c.l.b16 %v40
  %v196 = vunpack.c.l.b16 %v41
  %v197 = vunpack.c.l.b16 %v42
  %v198 = vunpack.c.l.b16 %v43
  %v199 = vunpack.c.l.b16 %v44
  %v200 = vunpack.c.l.b16 %v45
  %v201 = vunpack.c.l.b16 %v46
  %v202 = vunpack.c.l.b16 %v47
  %v203 = vunpack.c.l.b16 %v48
  %v204 = vunpack.c.l.b16 %v49
  %v205 = vunpack.c.l.b16 %v50
  %v206 = vunpack.c.l.b16 %v51
  %v207 = vunpack.c.l.b16 %v52
  %v208 = vunpack.c.l.b16 %v53
  %v209 = vunpack.c.l.b16 %v54
  %v210 = vunpack.c.l.b16 %v55
  %v211 = vunpack.c.l.b16 %v56
  %v212 = vunpack.c.l.b16 %v57
  %v213 = vunpack.c.l.b16 %v58
  %v214 = vunpack.c.l.b16 %v59
  %v215 = vunpack.c.l.b16 %v60
  %v216 = vunpack.c.l.b16 %v61
  %v217 = vunpack.c.l.b16 %v62
  %v218 = vunpack.c.l.b16 %v63
  %v219 = vunpack.c.l.b16 %v64
  %v220 = vunpack.c.l.b16 %v65
  %v221 = vunpack.c.l.b16 %v66
  %v222 = vunpack.c.l.b16 %v67
  %v223 = vunpack.c.l.b16 %v68
  %v224 = vunpack.c.l.b16 %v69
  %v225 = vunpack.c.l.b16 %v70
  %v226 = vunpack.c.l.b16 %v71
  %v227 = vunpack.c.l.b16 %v72
  %v228 = vunpack.c.l.b16 %v73
  %v229 = vunpack.c.l.b16 %v74
  %v230 = vunpack.c.l.b16 %v75
  %v231 = vunpack.c.l.b16 %v76
  %v232 = vunpack.c.l.b16 %v77
  %v233 = vunpack.c.l.b16 %v78
  %v234 = vunpack.c.l.b16 %v79
  %v235 = vunpack.c.l.b16 %v80
  %v236 = vunpack.c.l.b16 %v81
  %v237 = vunpack.c.l.b16 %v82
  %v238 = vpack.c.b16 %v175, %v174
  %v239 = vpack.c.b16 %v177, %v176
  %v240 = vpack.c.b16 %v179, %v178
  %v241 = vpack.c.b16 %v181, %v180
  %v242 = vpack.c.b16 %v183, %v182
  %v243 = vpack.c.b16 %v185, %v184
  %v244 = vpack.c.b16 %v187, %v186
  %v245 = vpack.c.b16 %v189, %v188
  %v246 = vpack.c.b16 %v191, %v190
  %v247 = vpack.c.b16 %v193, %v192
  %v248 = vpack.c.b16 %v195, %v194
  %v249 = vpack.c.b16 %v197, %v196
  %v250 = vpack.c.b16 %v199, %v198
  %v251 = vpack.c.b16 %v201, %v200
  %v252 = vpack.c.b16 %v203, %v202
  %v253 = vpack.c.b16 %v205, %v204
  %v254 = vpack.c.b16 %v207, %v206
  %v255 = vpack.c.b16 %v209, %v208
  %v256 = vpack.c.b16 %v211, %v210
  %v257 = vpack.c.b16 %v213, %v212
  %v258 = vpack.c.b16 %v215, %v214
  %v259 = vpack.c.b16 %v217, %v216
  %v260 = vpack.c.b16 %v219, %v218
  %v261 = vpack.c.b16 %v221, %v220
  %v262 = vpack.c.b16 %v223, %v222
  %v263 = vpack.c.b16 %v225, %v224
  %v264 = vpack.c.b16 %v227, %v226
  %v265 = vpack.c.b16 %v229, %v228
  %v266 = vpack.c.b16 %v231, %v230
  %v267 = vpack.c.b16 %v233, %v232
  %v268 = vpack.c.b16 %v235, %v234
  %v269 = vpack.c.b16 %v237, %v236
  %302 = vmatprep.subr.bf16.mxu0 0
  %303 = vmatpush1.bf16.msra.mxu0 %v238
  %304 = vmatprep.subr.bf16.mxu0 0
  %305 = vmatpush1.bf16.msra.mxu0 %v239
  %306 = vmatprep.subr.bf16.mxu0 0
  %307 = vmatpush1.bf16.msra.mxu0 %v240
  %308 = vmatprep.subr.bf16.mxu0 0
  %309 = vmatpush1.bf16.msra.mxu0 %v241
  %310 = vmatprep.subr.bf16.mxu0 0
  %311 = vmatpush1.bf16.msra.mxu0 %v242
  %312 = vmatprep.subr.bf16.mxu0 0
  %313 = vmatpush1.bf16.msra.mxu0 %v243
  %314 = vmatprep.subr.bf16.mxu0 0
  %315 = vmatpush1.bf16.msra.mxu0 %v244
  %316 = vmatprep.subr.bf16.mxu0 0
  %317 = vmatpush1.bf16.msra.mxu0 %v245
  %318 = vmatprep.subr.bf16.mxu0 0
  %319 = vmatpush1.bf16.msra.mxu0 %v246
  %320 = vmatprep.subr.bf16.mxu0 0
  %321 = vmatpush1.bf16.msra.mxu0 %v247
  %322 = vmatprep.subr.bf16.mxu0 0
  %323 = vmatpush1.bf16.msra.mxu0 %v248
  %324 = vmatprep.subr.bf16.mxu0 0
  %325 = vmatpush1.bf16.msra.mxu0 %v249
  %326 = vmatprep.subr.bf16.mxu0 0
  %327 = vmatpush1.bf16.msra.mxu0 %v250
  %328 = vmatprep.subr.bf16.mxu0 0
  %329 = vmatpush1.bf16.msra.mxu0 %v251
  %330 = vmatprep.subr.bf16.mxu0 0
  %331 = vmatpush1.bf16.msra.mxu0 %v252
  %332 = vmatprep.subr.bf16.mxu0 0
  %333 = vmatpush1.bf16.msra.mxu0 %v253
  %334 = vmatprep.mubr.bf16.mxu0 %v103
  %335 = vmatmul.mubr.bf16.gmra.mrb[0].mxu0 %v102
  %v336 = vpop.f32.mrb[0].mxu0
  %v337 = vadd.f32 %v88, %v336
  %v338 = vpop.f32.mrb[0].mxu0
  %v339 = vpop.f32.mrb[0].mxu0
  %v340 = vadd.f32 %v88, %v339
  %v341 = vpop.f32.mrb[0].mxu0
  %342 = vdwg.mxu0
  %343 = vmatprep.subr.bf16.mxu0 0
  %344 = vmatpush1.bf16.msra.mxu0 %v254
  %345 = vmatprep.subr.bf16.mxu0 0
  %346 = vmatpush1.bf16.msra.mxu0 %v255
  %347 = vmatprep.subr.bf16.mxu0 0
  %348 = vmatpush1.bf16.msra.mxu0 %v256
  %349 = vmatprep.subr.bf16.mxu0 0
  %350 = vmatpush1.bf16.msra.mxu0 %v257
  %351 = vmatprep.subr.bf16.mxu0 0
  %352 = vmatpush1.bf16.msra.mxu0 %v258
  %353 = vmatprep.subr.bf16.mxu0 0
  %354 = vmatpush1.bf16.msra.mxu0 %v259
  %355 = vmatprep.subr.bf16.mxu0 0
  %356 = vmatpush1.bf16.msra.mxu0 %v260
  %357 = vmatprep.subr.bf16.mxu0 0
  %358 = vmatpush1.bf16.msra.mxu0 %v261
  %359 = vmatprep.subr.bf16.mxu0 0
  %360 = vmatpush1.bf16.msra.mxu0 %v262
  %361 = vmatprep.subr.bf16.mxu0 0
  %362 = vmatpush1.bf16.msra.mxu0 %v263
  %363 = vmatprep.subr.bf16.mxu0 0
  %364 = vmatpush1.bf16.msra.mxu0 %v264
  %365 = vmatprep.subr.bf16.mxu0 0
  %366 = vmatpush1.bf16.msra.mxu0 %v265
  %367 = vmatprep.subr.bf16.mxu0 0
  %368 = vmatpush1.bf16.msra.mxu0 %v266
  %369 = vmatprep.subr.bf16.mxu0 0
  %370 = vmatpush1.bf16.msra.mxu0 %v267
  %371 = vmatprep.subr.bf16.mxu0 0
  %372 = vmatpush1.bf16.msra.mxu0 %v268
  %373 = vmatprep.subr.bf16.mxu0 0
  %374 = vmatpush1.bf16.msra.mxu0 %v269
  %375 = vmatprep.mubr.bf16.mxu0 %v105
  %376 = vmatmul.mubr.bf16.gmra.mrb[0].mxu0 %v104
  %v377 = vpop.f32.mrb[0].mxu0
  %v378 = vadd.f32 %v337, %v377
  %v379 = vpop.f32.mrb[0].mxu0
  %v380 = vpop.f32.mrb[0].mxu0
  %v381 = vadd.f32 %v340, %v380
  %v382 = vpop.f32.mrb[0].mxu0
  %383 = vdwg.mxu0
  %v384 = vpack.c.bf16 %v381, %v378
  %v386 = vunpack.c.l.b16 %v384
  %v387 = vunpack.c.h.b16 %v384
  %v388 = vpack.c.b16 %v386, %v386
  %v389 = vpack.c.b16 %v387, %v387
  %392 = vst [vmem:[%s3] sm:$0xf] %v388
  %393 = vst [vmem:[%s3 + $0x4] sm:$0xf] %v389
  // Predicated region
  $region14: #{jump_forward_device.64} parent=0 // pred_check
    _
  $region15: #{jump_forward_device.64} parent=0 // pred_check_branch
    %395 = sbr.rel (0) target = $region17
  $region16: #{jump_forward_device.64} parent=0 // pred_region
    _
  $region17: #{jump_forward_device.64} parent=0 // pred_fallthru
    _
  // Predicated region
  $region18: #{jump_forward_device.64} parent=0 // pred_check
    _
  $region19: #{jump_forward_device.64} parent=0 // pred_check_branch
    %397 = sbr.rel (0) target = $region21
  $region20: #{jump_forward_device.64} parent=0 // pred_region
    _
  $region21: #{jump_forward_device.64} parent=0 // pred_fallthru
    _

// kernel: jump_forward_device.66
$region0: #{jump_forward_device.66}
  #allocation0 [shape = 'u32[]', space=smem, size = 0x4, offset = 0x4, fixed_abs, tag = 'smem constant byte address 0x4 - core index']
  #allocation1 [shape = 'u32[144,128]{1,0:T(1,128)}', space=vmem, size = 0x12000, scoped, tag = 'internal scratch']
  %s0 = inlined_call_operand.vmem [shape: bf16[16,64], index: 0, kind: input, shape index: {}]
  %s1 = inlined_call_operand.vmem [shape: bf16[64,512], index: 1, kind: input, shape index: {}]
  %s2 = inlined_call_operand.vmem [shape: f32[1,512], index: 2, kind: input, shape index: {}]
  %s3 = inlined_call_operand.vmem [shape: f32[16,512], index: 3, kind: output, shape index: {}]
  %s4 = sld [smem:[#allocation0]]
  $region22: #{jump_forward_device.66} parent=0
    _
  %s6 = ssub.s32 1, %s4
  %s7 = scalar_select 0, %s6, %s4
  // Predicated region
  $region2: #{jump_forward_device.66} parent=0 // pred_check
    _
  $region3: #{jump_forward_device.66} parent=0 // pred_check_branch
    %9 = sbr.rel (0) target = $region5
  $region4: #{jump_forward_device.66} parent=0 // pred_region
    _
  $region5: #{jump_forward_device.66} parent=0 // pred_fallthru
    _
  // Predicated region
  $region6: #{jump_forward_device.66} parent=0 // pred_check
    _
  $region7: #{jump_forward_device.66} parent=0 // pred_check_branch
    %11 = sbr.rel (0) target = $region9
  $region8: #{jump_forward_device.66} parent=0 // pred_region
    _
  $region9: #{jump_forward_device.66} parent=0 // pred_fallthru
    _
  // Predicated region
  $region10: #{jump_forward_device.66} parent=0 // pred_check
    _
  $region11: #{jump_forward_device.66} parent=0 // pred_check_branch
    %13 = sbr.rel (0) target = $region13
  $region12: #{jump_forward_device.66} parent=0 // pred_region
    _
  $region13: #{jump_forward_device.66} parent=0 // pred_fallthru
    _
  %v15 = vld [vmem:[%s0] sm:$0xf]
  %v16 = vld [vmem:[%s0 + $0x4] sm:$0xf]
  %v17 = vld [vmem:[%s1] sm:$0xff]
  %v18 = vld [vmem:[%s1 + $0x8] sm:$0xff]
  %v19 = vld [vmem:[%s1 + $0x10] sm:$0xff]
  %v20 = vld [vmem:[%s1 + $0x18] sm:$0xff]
  %v21 = vld [vmem:[%s1 + $0x20] sm:$0xff]
  %v22 = vld [vmem:[%s1 + $0x28] sm:$0xff]
  %v23 = vld [vmem:[%s1 + $0x30] sm:$0xff]
  %v24 = vld [vmem:[%s1 + $0x38] sm:$0xff]
  %v25 = vld [vmem:[%s1 + $0x40] sm:$0xff]
  %v26 = vld [vmem:[%s1 + $0x48] sm:$0xff]
  %v27 = vld [vmem:[%s1 + $0x50] sm:$0xff]
  %v28 = vld [vmem:[%s1 + $0x58] sm:$0xff]
  %v29 = vld [vmem:[%s1 + $0x60] sm:$0xff]
  %v30 = vld [vmem:[%s1 + $0x68] sm:$0xff]
  %v31 = vld [vmem:[%s1 + $0x70] sm:$0xff]
  %v32 = vld [vmem:[%s1 + $0x78] sm:$0xff]
  %v33 = vld [vmem:[%s2] sm:$0xf]
  %v35 = vlaneseq
  %v36 = vshrl.u32 %v35, 7
  %v37 = vsub.s32 0, %v36
  %v38 = vrot.slane %v33, %v37
  %v39 = vlaneseq
  %v40 = vshrl.u32 %v39, 7
  %v41 = vsub.s32 1, %v40
  %v42 = vrot.slane %v33, %v41
  %v43 = vlaneseq
  %v44 = vshrl.u32 %v43, 7
  %v45 = vsub.s32 2, %v44
  %v46 = vrot.slane %v33, %v45
  %v47 = vlaneseq
  %v48 = vshrl.u32 %v47, 7
  %v49 = vsub.s32 3, %v48
  %v50 = vrot.slane %v33, %v49
  %v57 = vunpack.c.l.b16 %v15
  %v58 = vunpack.c.l.b16 %v16
  %v59 = vpack.c.b16 %v58, %v57
  %v76 = vunpack.c.l.b16 %v17
  %v77 = vunpack.c.h.b16 %v17
  %v78 = vunpack.c.l.b16 %v18
  %v79 = vunpack.c.h.b16 %v18
  %v80 = vunpack.c.l.b16 %v19
  %v81 = vunpack.c.h.b16 %v19
  %v82 = vunpack.c.l.b16 %v20
  %v83 = vunpack.c.h.b16 %v20
  %v84 = vunpack.c.l.b16 %v21
  %v85 = vunpack.c.h.b16 %v21
  %v86 = vunpack.c.l.b16 %v22
  %v87 = vunpack.c.h.b16 %v22
  %v88 = vunpack.c.l.b16 %v23
  %v89 = vunpack.c.h.b16 %v23
  %v90 = vunpack.c.l.b16 %v24
  %v91 = vunpack.c.h.b16 %v24
  %v92 = vunpack.c.l.b16 %v25
  %v93 = vunpack.c.h.b16 %v25
  %v94 = vunpack.c.l.b16 %v26
  %v95 = vunpack.c.h.b16 %v26
  %v96 = vunpack.c.l.b16 %v27
  %v97 = vunpack.c.h.b16 %v27
  %v98 = vunpack.c.l.b16 %v28
  %v99 = vunpack.c.h.b16 %v28
  %v100 = vunpack.c.l.b16 %v29
  %v101 = vunpack.c.h.b16 %v29
  %v102 = vunpack.c.l.b16 %v30
  %v103 = vunpack.c.h.b16 %v30
  %v104 = vunpack.c.l.b16 %v31
  %v105 = vunpack.c.h.b16 %v31
  %v106 = vunpack.c.l.b16 %v32
  %v107 = vunpack.c.h.b16 %v32
  %v108 = vpack.c.b16 %v80, %v76
  %v109 = vpack.c.b16 %v81, %v77
  %v110 = vpack.c.b16 %v82, %v78
  %v111 = vpack.c.b16 %v83, %v79
  %v112 = vpack.c.b16 %v88, %v84
  %v113 = vpack.c.b16 %v89, %v85
  %v114 = vpack.c.b16 %v90, %v86
  %v115 = vpack.c.b16 %v91, %v87
  %v116 = vpack.c.b16 %v96, %v92
  %v117 = vpack.c.b16 %v97, %v93
  %v118 = vpack.c.b16 %v98, %v94
  %v119 = vpack.c.b16 %v99, %v95
  %v120 = vpack.c.b16 %v104, %v100
  %v121 = vpack.c.b16 %v105, %v101
  %v122 = vpack.c.b16 %v106, %v102
  %v123 = vpack.c.b16 %v107, %v103
  %vm140 = vcmask 523264
  %v142 = vsel %vm140, %v59, 0
  %144 = vmatprep.subr.bf16.mxu0 %v109
  %145 = vmatpush1.bf16.msra.mxu0 %v108
  %146 = vmatprep.subr.bf16.mxu0 %v113
  %147 = vmatpush1.bf16.msra.mxu0 %v112
  %148 = vmatprep.subr.bf16.mxu0 %v117
  %149 = vmatpush1.bf16.msra.mxu0 %v116
  %150 = vmatprep.subr.bf16.mxu0 %v121
  %151 = vmatpush1.bf16.msra.mxu0 %v120
  %152 = vmatprep.subr.bf16.mxu0 0
  %153 = vmatpush1.bf16.msra.mxu0 0
  %154 = vmatprep.subr.bf16.mxu0 0
  %155 = vmatpush1.bf16.msra.mxu0 0
  %156 = vmatprep.subr.bf16.mxu0 0
  %157 = vmatpush1.bf16.msra.mxu0 0
  %158 = vmatprep.subr.bf16.mxu0 0
  %159 = vmatpush1.bf16.msra.mxu0 0
  %160 = vmatprep.subr.bf16.mxu0 0
  %161 = vmatpush1.bf16.msra.mxu0 0
  %162 = vmatprep.subr.bf16.mxu0 0
  %163 = vmatpush1.bf16.msra.mxu0 0
  %164 = vmatprep.subr.bf16.mxu0 0
  %165 = vmatpush1.bf16.msra.mxu0 0
  %166 = vmatprep.subr.bf16.mxu0 0
  %167 = vmatpush1.bf16.msra.mxu0 0
  %168 = vmatprep.subr.bf16.mxu0 0
  %169 = vmatpush1.bf16.msra.mxu0 0
  %170 = vmatprep.subr.bf16.mxu0 0
  %171 = vmatpush1.bf16.msra.mxu0 0
  %172 = vmatprep.subr.bf16.mxu0 0
  %173 = vmatpush1.bf16.msra.mxu0 0
  %174 = vmatprep.subr.bf16.mxu0 0
  %175 = vmatpush1.bf16.msra.mxu0 0
  %176 = vmatprep.mubr.bf16.mxu0 0
  %177 = vmatmul.mubr.bf16.gmra.mrb[0].mxu0 %v142
  %v178 = vpop.f32.mrb[0].mxu0
  %v179 = vadd.f32 %v38, %v178
  %v180 = vpop.f32.mrb[0].mxu0
  %v181 = vadd.f32 %v42, %v180
  %v182 = vpop.f32.mrb[0].mxu0
  %v183 = vadd.f32 %v38, %v182
  %v184 = vpop.f32.mrb[0].mxu0
  %v185 = vadd.f32 %v42, %v184
  %186 = vdwg.mxu0
  %187 = vmatprep.subr.bf16.mxu0 %v111
  %188 = vmatpush1.bf16.msra.mxu0 %v110
  %189 = vmatprep.subr.bf16.mxu0 %v115
  %190 = vmatpush1.bf16.msra.mxu0 %v114
  %191 = vmatprep.subr.bf16.mxu0 %v119
  %192 = vmatpush1.bf16.msra.mxu0 %v118
  %193 = vmatprep.subr.bf16.mxu0 %v123
  %194 = vmatpush1.bf16.msra.mxu0 %v122
  %195 = vmatprep.subr.bf16.mxu0 0
  %196 = vmatpush1.bf16.msra.mxu0 0
  %197 = vmatprep.subr.bf16.mxu0 0
  %198 = vmatpush1.bf16.msra.mxu0 0
  %199 = vmatprep.subr.bf16.mxu0 0
  %200 = vmatpush1.bf16.msra.mxu0 0
  %201 = vmatprep.subr.bf16.mxu0 0
  %202 = vmatpush1.bf16.msra.mxu0 0
  %203 = vmatprep.subr.bf16.mxu0 0
  %204 = vmatpush1.bf16.msra.mxu0 0
  %205 = vmatprep.subr.bf16.mxu0 0
  %206 = vmatpush1.bf16.msra.mxu0 0
  %207 = vmatprep.subr.bf16.mxu0 0
  %208 = vmatpush1.bf16.msra.mxu0 0
  %209 = vmatprep.subr.bf16.mxu0 0
  %210 = vmatpush1.bf16.msra.mxu0 0
  %211 = vmatprep.subr.bf16.mxu0 0
  %212 = vmatpush1.bf16.msra.mxu0 0
  %213 = vmatprep.subr.bf16.mxu0 0
  %214 = vmatpush1.bf16.msra.mxu0 0
  %215 = vmatprep.subr.bf16.mxu0 0
  %216 = vmatpush1.bf16.msra.mxu0 0
  %217 = vmatprep.subr.bf16.mxu0 0
  %218 = vmatpush1.bf16.msra.mxu0 0
  %219 = vmatprep.mubr.bf16.mxu0 0
  %220 = vmatmul.mubr.bf16.gmra.mrb[0].mxu0 %v142
  %v221 = vpop.f32.mrb[0].mxu0
  %v222 = vadd.f32 %v46, %v221
  %v223 = vpop.f32.mrb[0].mxu0
  %v224 = vadd.f32 %v50, %v223
  %v225 = vpop.f32.mrb[0].mxu0
  %v226 = vadd.f32 %v46, %v225
  %v227 = vpop.f32.mrb[0].mxu0
  %v228 = vadd.f32 %v50, %v227
  %229 = vdwg.mxu0
  %230 = vst [vmem:[%s3] sm:$0xff] %v179
  %231 = vst [vmem:[%s3 + $0x8] sm:$0xff] %v181
  %232 = vst [vmem:[%s3 + $0x10] sm:$0xff] %v222
  %233 = vst [vmem:[%s3 + $0x18] sm:$0xff] %v224
  %234 = vst [vmem:[%s3 + $0x20] sm:$0xff] %v183
  %235 = vst [vmem:[%s3 + $0x28] sm:$0xff] %v185
  %236 = vst [vmem:[%s3 + $0x30] sm:$0xff] %v226
  %237 = vst [vmem:[%s3 + $0x38] sm:$0xff] %v228
  // Predicated region
  $region14: #{jump_forward_device.66} parent=0 // pred_check
    _
  $region15: #{jump_forward_device.66} parent=0 // pred_check_branch
    %239 = sbr.rel (0) target = $region17
  $region16: #{jump_forward_device.66} parent=0 // pred_region
    _
  $region17: #{jump_forward_device.66} parent=0 // pred_fallthru
    _
  // Predicated region
  $region18: #{jump_forward_device.66} parent=0 // pred_check
    _
  $region19: #{jump_forward_device.66} parent=0 // pred_check_branch
    %241 = sbr.rel (0) target = $region21
  $region20: #{jump_forward_device.66} parent=0 // pred_region
    _
  $region21: #{jump_forward_device.66} parent=0 // pred_fallthru
    _

// kernel: jump_forward_device.65
$region0: #{jump_forward_device.65}
  #allocation0 [shape = 'u32[]', space=smem, size = 0x4, offset = 0x4, fixed_abs, tag = 'smem constant byte address 0x4 - core index']
  #allocation1 [shape = 'u32[144,128]{1,0:T(1,128)}', space=vmem, size = 0x12000, scoped, tag = 'internal scratch']
  %s0 = inlined_call_operand.vmem [shape: bf16[16,1280], index: 0, kind: input, shape index: {}]
  %s1 = inlined_call_operand.vmem [shape: bf16[1280,256], index: 1, kind: input, shape index: {}]
  %s2 = inlined_call_operand.vmem [shape: f32[1,256], index: 2, kind: input, shape index: {}]
  %s3 = inlined_call_operand.vmem [shape: f32[16,128], index: 3, kind: input, shape index: {}]
  %s4 = inlined_call_operand.vmem [shape: f32[16,128], index: 4, kind: output, shape index: {}]
  %s5 = sld [smem:[#allocation0]]
  $region26: #{jump_forward_device.65} parent=0
    _
  %s7 = ssub.s32 1, %s5
  %s8 = scalar_select 0, %s7, %s5
  // Predicated region
  $region2: #{jump_forward_device.65} parent=0 // pred_check
    _
  $region3: #{jump_forward_device.65} parent=0 // pred_check_branch
    %10 = sbr.rel (0) target = $region5
  $region4: #{jump_forward_device.65} parent=0 // pred_region
    _
  $region5: #{jump_forward_device.65} parent=0 // pred_fallthru
    _
  // Predicated region
  $region6: #{jump_forward_device.65} parent=0 // pred_check
    _
  $region7: #{jump_forward_device.65} parent=0 // pred_check_branch
    %12 = sbr.rel (0) target = $region9
  $region8: #{jump_forward_device.65} parent=0 // pred_region
    _
  $region9: #{jump_forward_device.65} parent=0 // pred_fallthru
    _
  // Predicated region
  $region10: #{jump_forward_device.65} parent=0 // pred_check
    _
  $region11: #{jump_forward_device.65} parent=0 // pred_check_branch
    %14 = sbr.rel (0) target = $region13
  $region12: #{jump_forward_device.65} parent=0 // pred_region
    _
  $region13: #{jump_forward_device.65} parent=0 // pred_fallthru
    _
  // Predicated region
  $region14: #{jump_forward_device.65} parent=0 // pred_check
    _
  $region15: #{jump_forward_device.65} parent=0 // pred_check_branch
    %16 = sbr.rel (0) target = $region17
  $region16: #{jump_forward_device.65} parent=0 // pred_region
    _
  $region17: #{jump_forward_device.65} parent=0 // pred_fallthru
    _
  %v17 = vld [vmem:[%s0] sm:$0xff]
  %v18 = vld [vmem:[%s0 + $0x8] sm:$0xff]
  %v19 = vld [vmem:[%s0 + $0x10] sm:$0xff]
  %v20 = vld [vmem:[%s0 + $0x18] sm:$0xff]
  %v21 = vld [vmem:[%s0 + $0x20] sm:$0xff]
  %v22 = vld [vmem:[%s0 + $0x28] sm:$0xff]
  %v23 = vld [vmem:[%s0 + $0x30] sm:$0xff]
  %v24 = vld [vmem:[%s0 + $0x38] sm:$0xff]
  %v25 = vld [vmem:[%s0 + $0x40] sm:$0xff]
  %v26 = vld [vmem:[%s0 + $0x48] sm:$0xff]
  %v27 = vld [vmem:[%s1] sm:$0xff]
  %v28 = vld [vmem:[%s1 + $0x8] sm:$0xff]
  %v29 = vld [vmem:[%s1 + $0x10] sm:$0xff]
  %v30 = vld [vmem:[%s1 + $0x18] sm:$0xff]
  %v31 = vld [vmem:[%s1 + $0x20] sm:$0xff]
  %v32 = vld [vmem:[%s1 + $0x28] sm:$0xff]
  %v33 = vld [vmem:[%s1 + $0x30] sm:$0xff]
  %v34 = vld [vmem:[%s1 + $0x38] sm:$0xff]
  %v35 = vld [vmem:[%s1 + $0x40] sm:$0xff]
  %v36 = vld [vmem:[%s1 + $0x48] sm:$0xff]
  %v37 = vld [vmem:[%s1 + $0x50] sm:$0xff]
  %v38 = vld [vmem:[%s1 + $0x58] sm:$0xff]
  %v39 = vld [vmem:[%s1 + $0x60] sm:$0xff]
  %v40 = vld [vmem:[%s1 + $0x68] sm:$0xff]
  %v41 = vld [vmem:[%s1 + $0x70] sm:$0xff]
  %v42 = vld [vmem:[%s1 + $0x78] sm:$0xff]
  %v43 = vld [vmem:[%s1 + $0x80] sm:$0xff]
  %v44 = vld [vmem:[%s1 + $0x88] sm:$0xff]
  %v45 = vld [vmem:[%s1 + $0x90] sm:$0xff]
  %v46 = vld [vmem:[%s1 + $0x98] sm:$0xff]
  %v47 = vld [vmem:[%s1 + $0xa0] sm:$0xff]
  %v48 = vld [vmem:[%s1 + $0xa8] sm:$0xff]
  %v49 = vld [vmem:[%s1 + $0xb0] sm:$0xff]
  %v50 = vld [vmem:[%s1 + $0xb8] sm:$0xff]
  %v51 = vld [vmem:[%s1 + $0xc0] sm:$0xff]
  %v52 = vld [vmem:[%s1 + $0xc8] sm:$0xff]
  %v53 = vld [vmem:[%s1 + $0xd0] sm:$0xff]
  %v54 = vld [vmem:[%s1 + $0xd8] sm:$0xff]
  %v55 = vld [vmem:[%s1 + $0xe0] sm:$0xff]
  %v56 = vld [vmem:[%s1 + $0xe8] sm:$0xff]
  %v57 = vld [vmem:[%s1 + $0xf0] sm:$0xff]
  %v58 = vld [vmem:[%s1 + $0xf8] sm:$0xff]
  %v59 = vld [vmem:[%s1 + $0x100] sm:$0xff]
  %v60 = vld [vmem:[%s1 + $0x108] sm:$0xff]
  %v61 = vld [vmem:[%s1 + $0x110] sm:$0xff]
  %v62 = vld [vmem:[%s1 + $0x118] sm:$0xff]
  %v63 = vld [vmem:[%s1 + $0x120] sm:$0xff]
  %v64 = vld [vmem:[%s1 + $0x128] sm:$0xff]
  %v65 = vld [vmem:[%s1 + $0x130] sm:$0xff]
  %v66 = vld [vmem:[%s1 + $0x138] sm:$0xff]
  %v67 = vld [vmem:[%s1 + $0x140] sm:$0xff]
  %v68 = vld [vmem:[%s1 + $0x148] sm:$0xff]
  %v69 = vld [vmem:[%s1 + $0x150] sm:$0xff]
  %v70 = vld [vmem:[%s1 + $0x158] sm:$0xff]
  %v71 = vld [vmem:[%s1 + $0x160] sm:$0xff]
  %v72 = vld [vmem:[%s1 + $0x168] sm:$0xff]
  %v73 = vld [vmem:[%s1 + $0x170] sm:$0xff]
  %v74 = vld [vmem:[%s1 + $0x178] sm:$0xff]
  %v75 = vld [vmem:[%s1 + $0x180] sm:$0xff]
  %v76 = vld [vmem:[%s1 + $0x188] sm:$0xff]
  %v77 = vld [vmem:[%s1 + $0x190] sm:$0xff]
  %v78 = vld [vmem:[%s1 + $0x198] sm:$0xff]
  %v79 = vld [vmem:[%s1 + $0x1a0] sm:$0xff]
  %v80 = vld [vmem:[%s1 + $0x1a8] sm:$0xff]
  %v81 = vld [vmem:[%s1 + $0x1b0] sm:$0xff]
  %v82 = vld [vmem:[%s1 + $0x1b8] sm:$0xff]
  %v83 = vld [vmem:[%s1 + $0x1c0] sm:$0xff]
  %v84 = vld [vmem:[%s1 + $0x1c8] sm:$0xff]
  %v85 = vld [vmem:[%s1 + $0x1d0] sm:$0xff]
  %v86 = vld [vmem:[%s1 + $0x1d8] sm:$0xff]
  %v87 = vld [vmem:[%s1 + $0x1e0] sm:$0xff]
  %v88 = vld [vmem:[%s1 + $0x1e8] sm:$0xff]
  %v89 = vld [vmem:[%s1 + $0x1f0] sm:$0xff]
  %v90 = vld [vmem:[%s1 + $0x1f8] sm:$0xff]
  %v91 = vld [vmem:[%s1 + $0x200] sm:$0xff]
  %v92 = vld [vmem:[%s1 + $0x208] sm:$0xff]
  %v93 = vld [vmem:[%s1 + $0x210] sm:$0xff]
  %v94 = vld [vmem:[%s1 + $0x218] sm:$0xff]
  %v95 = vld [vmem:[%s1 + $0x220] sm:$0xff]
  %v96 = vld [vmem:[%s1 + $0x228] sm:$0xff]
  %v97 = vld [vmem:[%s1 + $0x230] sm:$0xff]
  %v98 = vld [vmem:[%s1 + $0x238] sm:$0xff]
  %v99 = vld [vmem:[%s1 + $0x240] sm:$0xff]
  %v100 = vld [vmem:[%s1 + $0x248] sm:$0xff]
  %v101 = vld [vmem:[%s1 + $0x250] sm:$0xff]
  %v102 = vld [vmem:[%s1 + $0x258] sm:$0xff]
  %v103 = vld [vmem:[%s1 + $0x260] sm:$0xff]
  %v104 = vld [vmem:[%s1 + $0x268] sm:$0xff]
  %v105 = vld [vmem:[%s1 + $0x270] sm:$0xff]
  %v106 = vld [vmem:[%s1 + $0x278] sm:$0xff]
  %v107 = vld [vmem:[%s1 + $0x280] sm:$0xff]
  %v108 = vld [vmem:[%s1 + $0x288] sm:$0xff]
  %v109 = vld [vmem:[%s1 + $0x290] sm:$0xff]
  %v110 = vld [vmem:[%s1 + $0x298] sm:$0xff]
  %v111 = vld [vmem:[%s1 + $0x2a0] sm:$0xff]
  %v112 = vld [vmem:[%s1 + $0x2a8] sm:$0xff]
  %v113 = vld [vmem:[%s1 + $0x2b0] sm:$0xff]
  %v114 = vld [vmem:[%s1 + $0x2b8] sm:$0xff]
  %v115 = vld [vmem:[%s1 + $0x2c0] sm:$0xff]
  %v116 = vld [vmem:[%s1 + $0x2c8] sm:$0xff]
  %v117 = vld [vmem:[%s1 + $0x2d0] sm:$0xff]
  %v118 = vld [vmem:[%s1 + $0x2d8] sm:$0xff]
  %v119 = vld [vmem:[%s1 + $0x2e0] sm:$0xff]
  %v120 = vld [vmem:[%s1 + $0x2e8] sm:$0xff]
  %v121 = vld [vmem:[%s1 + $0x2f0] sm:$0xff]
  %v122 = vld [vmem:[%s1 + $0x2f8] sm:$0xff]
  %v123 = vld [vmem:[%s1 + $0x300] sm:$0xff]
  %v124 = vld [vmem:[%s1 + $0x308] sm:$0xff]
  %v125 = vld [vmem:[%s1 + $0x310] sm:$0xff]
  %v126 = vld [vmem:[%s1 + $0x318] sm:$0xff]
  %v127 = vld [vmem:[%s1 + $0x320] sm:$0xff]
  %v128 = vld [vmem:[%s1 + $0x328] sm:$0xff]
  %v129 = vld [vmem:[%s1 + $0x330] sm:$0xff]
  %v130 = vld [vmem:[%s1 + $0x338] sm:$0xff]
  %v131 = vld [vmem:[%s1 + $0x340] sm:$0xff]
  %v132 = vld [vmem:[%s1 + $0x348] sm:$0xff]
  %v133 = vld [vmem:[%s1 + $0x350] sm:$0xff]
  %v134 = vld [vmem:[%s1 + $0x358] sm:$0xff]
  %v135 = vld [vmem:[%s1 + $0x360] sm:$0xff]
  %v136 = vld [vmem:[%s1 + $0x368] sm:$0xff]
  %v137 = vld [vmem:[%s1 + $0x370] sm:$0xff]
  %v138 = vld [vmem:[%s1 + $0x378] sm:$0xff]
  %v139 = vld [vmem:[%s1 + $0x380] sm:$0xff]
  %v140 = vld [vmem:[%s1 + $0x388] sm:$0xff]
  %v141 = vld [vmem:[%s1 + $0x390] sm:$0xff]
  %v142 = vld [vmem:[%s1 + $0x398] sm:$0xff]
  %v143 = vld [vmem:[%s1 + $0x3a0] sm:$0xff]
  %v144 = vld [vmem:[%s1 + $0x3a8] sm:$0xff]
  %v145 = vld [vmem:[%s1 + $0x3b0] sm:$0xff]
  %v146 = vld [vmem:[%s1 + $0x3b8] sm:$0xff]
  %v147 = vld [vmem:[%s1 + $0x3c0] sm:$0xff]
  %v148 = vld [vmem:[%s1 + $0x3c8] sm:$0xff]
  %v149 = vld [vmem:[%s1 + $0x3d0] sm:$0xff]
  %v150 = vld [vmem:[%s1 + $0x3d8] sm:$0xff]
  %v151 = vld [vmem:[%s1 + $0x3e0] sm:$0xff]
  %v152 = vld [vmem:[%s1 + $0x3e8] sm:$0xff]
  %v153 = vld [vmem:[%s1 + $0x3f0] sm:$0xff]
  %v154 = vld [vmem:[%s1 + $0x3f8] sm:$0xff]
  %v155 = vld [vmem:[%s1 + $0x400] sm:$0xff]
  %v156 = vld [vmem:[%s1 + $0x408] sm:$0xff]
  %v157 = vld [vmem:[%s1 + $0x410] sm:$0xff]
  %v158 = vld [vmem:[%s1 + $0x418] sm:$0xff]
  %v159 = vld [vmem:[%s1 + $0x420] sm:$0xff]
  %v160 = vld [vmem:[%s1 + $0x428] sm:$0xff]
  %v161 = vld [vmem:[%s1 + $0x430] sm:$0xff]
  %v162 = vld [vmem:[%s1 + $0x438] sm:$0xff]
  %v163 = vld [vmem:[%s1 + $0x440] sm:$0xff]
  %v164 = vld [vmem:[%s1 + $0x448] sm:$0xff]
  %v165 = vld [vmem:[%s1 + $0x450] sm:$0xff]
  %v166 = vld [vmem:[%s1 + $0x458] sm:$0xff]
  %v167 = vld [vmem:[%s1 + $0x460] sm:$0xff]
  %v168 = vld [vmem:[%s1 + $0x468] sm:$0xff]
  %v169 = vld [vmem:[%s1 + $0x470] sm:$0xff]
  %v170 = vld [vmem:[%s1 + $0x478] sm:$0xff]
  %v171 = vld [vmem:[%s1 + $0x480] sm:$0xff]
  %v172 = vld [vmem:[%s1 + $0x488] sm:$0xff]
  %v173 = vld [vmem:[%s1 + $0x490] sm:$0xff]
  %v174 = vld [vmem:[%s1 + $0x498] sm:$0xff]
  %v175 = vld [vmem:[%s1 + $0x4a0] sm:$0xff]
  %v176 = vld [vmem:[%s1 + $0x4a8] sm:$0xff]
  %v177 = vld [vmem:[%s1 + $0x4b0] sm:$0xff]
  %v178 = vld [vmem:[%s1 + $0x4b8] sm:$0xff]
  %v179 = vld [vmem:[%s1 + $0x4c0] sm:$0xff]
  %v180 = vld [vmem:[%s1 + $0x4c8] sm:$0xff]
  %v181 = vld [vmem:[%s1 + $0x4d0] sm:$0xff]
  %v182 = vld [vmem:[%s1 + $0x4d8] sm:$0xff]
  %v183 = vld [vmem:[%s1 + $0x4e0] sm:$0xff]
  %v184 = vld [vmem:[%s1 + $0x4e8] sm:$0xff]
  %v185 = vld [vmem:[%s1 + $0x4f0] sm:$0xff]
  %v186 = vld [vmem:[%s1 + $0x4f8] sm:$0xff]
  %v187 = vld [vmem:[%s2] sm:$0x3]
  %v189 = vlaneseq
  %v190 = vshrl.u32 %v189, 7
  %v191 = vsub.s32 0, %v190
  %v192 = vrot.slane %v187, %v191
  %v193 = vlaneseq
  %v194 = vshrl.u32 %v193, 7
  %v195 = vsub.s32 1, %v194
  %v196 = vrot.slane %v187, %v195
  %v209 = vunpack.c.l.b16 %v17
  %v210 = vunpack.c.h.b16 %v17
  %v211 = vunpack.c.l.b16 %v18
  %v212 = vunpack.c.h.b16 %v18
  %v213 = vunpack.c.l.b16 %v19
  %v214 = vunpack.c.h.b16 %v19
  %v215 = vunpack.c.l.b16 %v20
  %v216 = vunpack.c.h.b16 %v20
  %v217 = vunpack.c.l.b16 %v21
  %v218 = vunpack.c.h.b16 %v21
  %v219 = vunpack.c.l.b16 %v22
  %v220 = vunpack.c.h.b16 %v22
  %v221 = vunpack.c.l.b16 %v23
  %v222 = vunpack.c.h.b16 %v23
  %v223 = vunpack.c.l.b16 %v24
  %v224 = vunpack.c.h.b16 %v24
  %v225 = vunpack.c.l.b16 %v25
  %v226 = vunpack.c.h.b16 %v25
  %v227 = vunpack.c.l.b16 %v26
  %v228 = vunpack.c.h.b16 %v26
  %v229 = vpack.c.b16 %v219, %v209
  %v230 = vpack.c.b16 %v220, %v210
  %v231 = vpack.c.b16 %v221, %v211
  %v232 = vpack.c.b16 %v222, %v212
  %v233 = vpack.c.b16 %v223, %v213
  %v234 = vpack.c.b16 %v224, %v214
  %v235 = vpack.c.b16 %v225, %v215
  %v236 = vpack.c.b16 %v226, %v216
  %v237 = vpack.c.b16 %v227, %v217
  %v238 = vpack.c.b16 %v228, %v218
  %v409 = vunpack.c.l.b16 %v27
  %v410 = vunpack.c.h.b16 %v27
  %v411 = vunpack.c.l.b16 %v28
  %v412 = vunpack.c.h.b16 %v28
  %v413 = vunpack.c.l.b16 %v29
  %v414 = vunpack.c.h.b16 %v29
  %v415 = vunpack.c.l.b16 %v30
  %v416 = vunpack.c.h.b16 %v30
  %v417 = vunpack.c.l.b16 %v31
  %v418 = vunpack.c.h.b16 %v31
  %v419 = vunpack.c.l.b16 %v32
  %v420 = vunpack.c.h.b16 %v32
  %v421 = vunpack.c.l.b16 %v33
  %v422 = vunpack.c.h.b16 %v33
  %v423 = vunpack.c.l.b16 %v34
  %v424 = vunpack.c.h.b16 %v34
  %v425 = vunpack.c.l.b16 %v35
  %v426 = vunpack.c.h.b16 %v35
  %v427 = vunpack.c.l.b16 %v36
  %v428 = vunpack.c.h.b16 %v36
  %v429 = vunpack.c.l.b16 %v37
  %v430 = vunpack.c.h.b16 %v37
  %v431 = vunpack.c.l.b16 %v38
  %v432 = vunpack.c.h.b16 %v38
  %v433 = vunpack.c.l.b16 %v39
  %v434 = vunpack.c.h.b16 %v39
  %v435 = vunpack.c.l.b16 %v40
  %v436 = vunpack.c.h.b16 %v40
  %v437 = vunpack.c.l.b16 %v41
  %v438 = vunpack.c.h.b16 %v41
  %v439 = vunpack.c.l.b16 %v42
  %v440 = vunpack.c.h.b16 %v42
  %v441 = vunpack.c.l.b16 %v43
  %v442 = vunpack.c.h.b16 %v43
  %v443 = vunpack.c.l.b16 %v44
  %v444 = vunpack.c.h.b16 %v44
  %v445 = vunpack.c.l.b16 %v45
  %v446 = vunpack.c.h.b16 %v45
  %v447 = vunpack.c.l.b16 %v46
  %v448 = vunpack.c.h.b16 %v46
  %v449 = vunpack.c.l.b16 %v47
  %v450 = vunpack.c.h.b16 %v47
  %v451 = vunpack.c.l.b16 %v48
  %v452 = vunpack.c.h.b16 %v48
  %v453 = vunpack.c.l.b16 %v49
  %v454 = vunpack.c.h.b16 %v49
  %v455 = vunpack.c.l.b16 %v50
  %v456 = vunpack.c.h.b16 %v50
  %v457 = vunpack.c.l.b16 %v51
  %v458 = vunpack.c.h.b16 %v51
  %v459 = vunpack.c.l.b16 %v52
  %v460 = vunpack.c.h.b16 %v52
  %v461 = vunpack.c.l.b16 %v53
  %v462 = vunpack.c.h.b16 %v53
  %v463 = vunpack.c.l.b16 %v54
  %v464 = vunpack.c.h.b16 %v54
  %v465 = vunpack.c.l.b16 %v55
  %v466 = vunpack.c.h.b16 %v55
  %v467 = vunpack.c.l.b16 %v56
  %v468 = vunpack.c.h.b16 %v56
  %v469 = vunpack.c.l.b16 %v57
  %v470 = vunpack.c.h.b16 %v57
  %v471 = vunpack.c.l.b16 %v58
  %v472 = vunpack.c.h.b16 %v58
  %v473 = vunpack.c.l.b16 %v59
  %v474 = vunpack.c.h.b16 %v59
  %v475 = vunpack.c.l.b16 %v60
  %v476 = vunpack.c.h.b16 %v60
  %v477 = vunpack.c.l.b16 %v61
  %v478 = vunpack.c.h.b16 %v61
  %v479 = vunpack.c.l.b16 %v62
  %v480 = vunpack.c.h.b16 %v62
  %v481 = vunpack.c.l.b16 %v63
  %v482 = vunpack.c.h.b16 %v63
  %v483 = vunpack.c.l.b16 %v64
  %v484 = vunpack.c.h.b16 %v64
  %v485 = vunpack.c.l.b16 %v65
  %v486 = vunpack.c.h.b16 %v65
  %v487 = vunpack.c.l.b16 %v66
  %v488 = vunpack.c.h.b16 %v66
  %v489 = vunpack.c.l.b16 %v67
  %v490 = vunpack.c.h.b16 %v67
  %v491 = vunpack.c.l.b16 %v68
  %v492 = vunpack.c.h.b16 %v68
  %v493 = vunpack.c.l.b16 %v69
  %v494 = vunpack.c.h.b16 %v69
  %v495 = vunpack.c.l.b16 %v70
  %v496 = vunpack.c.h.b16 %v70
  %v497 = vunpack.c.l.b16 %v71
  %v498 = vunpack.c.h.b16 %v71
  %v499 = vunpack.c.l.b16 %v72
  %v500 = vunpack.c.h.b16 %v72
  %v501 = vunpack.c.l.b16 %v73
  %v502 = vunpack.c.h.b16 %v73
  %v503 = vunpack.c.l.b16 %v74
  %v504 = vunpack.c.h.b16 %v74
  %v505 = vunpack.c.l.b16 %v75
  %v506 = vunpack.c.h.b16 %v75
  %v507 = vunpack.c.l.b16 %v76
  %v508 = vunpack.c.h.b16 %v76
  %v509 = vunpack.c.l.b16 %v77
  %v510 = vunpack.c.h.b16 %v77
  %v511 = vunpack.c.l.b16 %v78
  %v512 = vunpack.c.h.b16 %v78
  %v513 = vunpack.c.l.b16 %v79
  %v514 = vunpack.c.h.b16 %v79
  %v515 = vunpack.c.l.b16 %v80
  %v516 = vunpack.c.h.b16 %v80
  %v517 = vunpack.c.l.b16 %v81
  %v518 = vunpack.c.h.b16 %v81
  %v519 = vunpack.c.l.b16 %v82
  %v520 = vunpack.c.h.b16 %v82
  %v521 = vunpack.c.l.b16 %v83
  %v522 = vunpack.c.h.b16 %v83
  %v523 = vunpack.c.l.b16 %v84
  %v524 = vunpack.c.h.b16 %v84
  %v525 = vunpack.c.l.b16 %v85
  %v526 = vunpack.c.h.b16 %v85
  %v527 = vunpack.c.l.b16 %v86
  %v528 = vunpack.c.h.b16 %v86
  %v529 = vunpack.c.l.b16 %v87
  %v530 = vunpack.c.h.b16 %v87
  %v531 = vunpack.c.l.b16 %v88
  %v532 = vunpack.c.h.b16 %v88
  %v533 = vunpack.c.l.b16 %v89
  %v534 = vunpack.c.h.b16 %v89
  %v535 = vunpack.c.l.b16 %v90
  %v536 = vunpack.c.h.b16 %v90
  %v537 = vunpack.c.l.b16 %v91
  %v538 = vunpack.c.h.b16 %v91
  %v539 = vunpack.c.l.b16 %v92
  %v540 = vunpack.c.h.b16 %v92
  %v541 = vunpack.c.l.b16 %v93
  %v542 = vunpack.c.h.b16 %v93
  %v543 = vunpack.c.l.b16 %v94
  %v544 = vunpack.c.h.b16 %v94
  %v545 = vunpack.c.l.b16 %v95
  %v546 = vunpack.c.h.b16 %v95
  %v547 = vunpack.c.l.b16 %v96
  %v548 = vunpack.c.h.b16 %v96
  %v549 = vunpack.c.l.b16 %v97
  %v550 = vunpack.c.h.b16 %v97
  %v551 = vunpack.c.l.b16 %v98
  %v552 = vunpack.c.h.b16 %v98
  %v553 = vunpack.c.l.b16 %v99
  %v554 = vunpack.c.h.b16 %v99
  %v555 = vunpack.c.l.b16 %v100
  %v556 = vunpack.c.h.b16 %v100
  %v557 = vunpack.c.l.b16 %v101
  %v558 = vunpack.c.h.b16 %v101
  %v559 = vunpack.c.l.b16 %v102
  %v560 = vunpack.c.h.b16 %v102
  %v561 = vunpack.c.l.b16 %v103
  %v562 = vunpack.c.h.b16 %v103
  %v563 = vunpack.c.l.b16 %v104
  %v564 = vunpack.c.h.b16 %v104
  %v565 = vunpack.c.l.b16 %v105
  %v566 = vunpack.c.h.b16 %v105
  %v567 = vunpack.c.l.b16 %v106
  %v568 = vunpack.c.h.b16 %v106
  %v569 = vunpack.c.l.b16 %v107
  %v570 = vunpack.c.h.b16 %v107
  %v571 = vunpack.c.l.b16 %v108
  %v572 = vunpack.c.h.b16 %v108
  %v573 = vunpack.c.l.b16 %v109
  %v574 = vunpack.c.h.b16 %v109
  %v575 = vunpack.c.l.b16 %v110
  %v576 = vunpack.c.h.b16 %v110
  %v577 = vunpack.c.l.b16 %v111
  %v578 = vunpack.c.h.b16 %v111
  %v579 = vunpack.c.l.b16 %v112
  %v580 = vunpack.c.h.b16 %v112
  %v581 = vunpack.c.l.b16 %v113
  %v582 = vunpack.c.h.b16 %v113
  %v583 = vunpack.c.l.b16 %v114
  %v584 = vunpack.c.h.b16 %v114
  %v585 = vunpack.c.l.b16 %v115
  %v586 = vunpack.c.h.b16 %v115
  %v587 = vunpack.c.l.b16 %v116
  %v588 = vunpack.c.h.b16 %v116
  %v589 = vunpack.c.l.b16 %v117
  %v590 = vunpack.c.h.b16 %v117
  %v591 = vunpack.c.l.b16 %v118
  %v592 = vunpack.c.h.b16 %v118
  %v593 = vunpack.c.l.b16 %v119
  %v594 = vunpack.c.h.b16 %v119
  %v595 = vunpack.c.l.b16 %v120
  %v596 = vunpack.c.h.b16 %v120
  %v597 = vunpack.c.l.b16 %v121
  %v598 = vunpack.c.h.b16 %v121
  %v599 = vunpack.c.l.b16 %v122
  %v600 = vunpack.c.h.b16 %v122
  %v601 = vunpack.c.l.b16 %v123
  %v602 = vunpack.c.h.b16 %v123
  %v603 = vunpack.c.l.b16 %v124
  %v604 = vunpack.c.h.b16 %v124
  %v605 = vunpack.c.l.b16 %v125
  %v606 = vunpack.c.h.b16 %v125
  %v607 = vunpack.c.l.b16 %v126
  %v608 = vunpack.c.h.b16 %v126
  %v609 = vunpack.c.l.b16 %v127
  %v610 = vunpack.c.h.b16 %v127
  %v611 = vunpack.c.l.b16 %v128
  %v612 = vunpack.c.h.b16 %v128
  %v613 = vunpack.c.l.b16 %v129
  %v614 = vunpack.c.h.b16 %v129
  %v615 = vunpack.c.l.b16 %v130
  %v616 = vunpack.c.h.b16 %v130
  %v617 = vunpack.c.l.b16 %v131
  %v618 = vunpack.c.h.b16 %v131
  %v619 = vunpack.c.l.b16 %v132
  %v620 = vunpack.c.h.b16 %v132
  %v621 = vunpack.c.l.b16 %v133
  %v622 = vunpack.c.h.b16 %v133
  %v623 = vunpack.c.l.b16 %v134
  %v624 = vunpack.c.h.b16 %v134
  %v625 = vunpack.c.l.b16 %v135
  %v626 = vunpack.c.h.b16 %v135
  %v627 = vunpack.c.l.b16 %v136
  %v628 = vunpack.c.h.b16 %v136
  %v629 = vunpack.c.l.b16 %v137
  %v630 = vunpack.c.h.b16 %v137
  %v631 = vunpack.c.l.b16 %v138
  %v632 = vunpack.c.h.b16 %v138
  %v633 = vunpack.c.l.b16 %v139
  %v634 = vunpack.c.h.b16 %v139
  %v635 = vunpack.c.l.b16 %v140
  %v636 = vunpack.c.h.b16 %v140
  %v637 = vunpack.c.l.b16 %v141
  %v638 = vunpack.c.h.b16 %v141
  %v639 = vunpack.c.l.b16 %v142
  %v640 = vunpack.c.h.b16 %v142
  %v641 = vunpack.c.l.b16 %v143
  %v642 = vunpack.c.h.b16 %v143
  %v643 = vunpack.c.l.b16 %v144
  %v644 = vunpack.c.h.b16 %v144
  %v645 = vunpack.c.l.b16 %v145
  %v646 = vunpack.c.h.b16 %v145
  %v647 = vunpack.c.l.b16 %v146
  %v648 = vunpack.c.h.b16 %v146
  %v649 = vunpack.c.l.b16 %v147
  %v650 = vunpack.c.h.b16 %v147
  %v651 = vunpack.c.l.b16 %v148
  %v652 = vunpack.c.h.b16 %v148
  %v653 = vunpack.c.l.b16 %v149
  %v654 = vunpack.c.h.b16 %v149
  %v655 = vunpack.c.l.b16 %v150
  %v656 = vunpack.c.h.b16 %v150
  %v657 = vunpack.c.l.b16 %v151
  %v658 = vunpack.c.h.b16 %v151
  %v659 = vunpack.c.l.b16 %v152
  %v660 = vunpack.c.h.b16 %v152
  %v661 = vunpack.c.l.b16 %v153
  %v662 = vunpack.c.h.b16 %v153
  %v663 = vunpack.c.l.b16 %v154
  %v664 = vunpack.c.h.b16 %v154
  %v665 = vunpack.c.l.b16 %v155
  %v666 = vunpack.c.h.b16 %v155
  %v667 = vunpack.c.l.b16 %v156
  %v668 = vunpack.c.h.b16 %v156
  %v669 = vunpack.c.l.b16 %v157
  %v670 = vunpack.c.h.b16 %v157
  %v671 = vunpack.c.l.b16 %v158
  %v672 = vunpack.c.h.b16 %v158
  %v673 = vunpack.c.l.b16 %v159
  %v674 = vunpack.c.h.b16 %v159
  %v675 = vunpack.c.l.b16 %v160
  %v676 = vunpack.c.h.b16 %v160
  %v677 = vunpack.c.l.b16 %v161
  %v678 = vunpack.c.h.b16 %v161
  %v679 = vunpack.c.l.b16 %v162
  %v680 = vunpack.c.h.b16 %v162
  %v681 = vunpack.c.l.b16 %v163
  %v682 = vunpack.c.h.b16 %v163
  %v683 = vunpack.c.l.b16 %v164
  %v684 = vunpack.c.h.b16 %v164
  %v685 = vunpack.c.l.b16 %v165
  %v686 = vunpack.c.h.b16 %v165
  %v687 = vunpack.c.l.b16 %v166
  %v688 = vunpack.c.h.b16 %v166
  %v689 = vunpack.c.l.b16 %v167
  %v690 = vunpack.c.h.b16 %v167
  %v691 = vunpack.c.l.b16 %v168
  %v692 = vunpack.c.h.b16 %v168
  %v693 = vunpack.c.l.b16 %v169
  %v694 = vunpack.c.h.b16 %v169
  %v695 = vunpack.c.l.b16 %v170
  %v696 = vunpack.c.h.b16 %v170
  %v697 = vunpack.c.l.b16 %v171
  %v698 = vunpack.c.h.b16 %v171
  %v699 = vunpack.c.l.b16 %v172
  %v700 = vunpack.c.h.b16 %v172
  %v701 = vunpack.c.l.b16 %v173
  %v702 = vunpack.c.h.b16 %v173
  %v703 = vunpack.c.l.b16 %v174
  %v704 = vunpack.c.h.b16 %v174
  %v705 = vunpack.c.l.b16 %v175
  %v706 = vunpack.c.h.b16 %v175
  %v707 = vunpack.c.l.b16 %v176
  %v708 = vunpack.c.h.b16 %v176
  %v709 = vunpack.c.l.b16 %v177
  %v710 = vunpack.c.h.b16 %v177
  %v711 = vunpack.c.l.b16 %v178
  %v712 = vunpack.c.h.b16 %v178
  %v713 = vunpack.c.l.b16 %v179
  %v714 = vunpack.c.h.b16 %v179
  %v715 = vunpack.c.l.b16 %v180
  %v716 = vunpack.c.h.b16 %v180
  %v717 = vunpack.c.l.b16 %v181
  %v718 = vunpack.c.h.b16 %v181
  %v719 = vunpack.c.l.b16 %v182
  %v720 = vunpack.c.h.b16 %v182
  %v721 = vunpack.c.l.b16 %v183
  %v722 = vunpack.c.h.b16 %v183
  %v723 = vunpack.c.l.b16 %v184
  %v724 = vunpack.c.h.b16 %v184
  %v725 = vunpack.c.l.b16 %v185
  %v726 = vunpack.c.h.b16 %v185
  %v727 = vunpack.c.l.b16 %v186
  %v728 = vunpack.c.h.b16 %v186
  %v729 = vpack.c.b16 %v411, %v409
  %v730 = vpack.c.b16 %v412, %v410
  %v731 = vpack.c.b16 %v415, %v413
  %v732 = vpack.c.b16 %v416, %v414
  %v733 = vpack.c.b16 %v419, %v417
  %v734 = vpack.c.b16 %v420, %v418
  %v735 = vpack.c.b16 %v423, %v421
  %v736 = vpack.c.b16 %v424, %v422
  %v737 = vpack.c.b16 %v427, %v425
  %v738 = vpack.c.b16 %v428, %v426
  %v739 = vpack.c.b16 %v431, %v429
  %v740 = vpack.c.b16 %v432, %v430
  %v741 = vpack.c.b16 %v435, %v433
  %v742 = vpack.c.b16 %v436, %v434
  %v743 = vpack.c.b16 %v439, %v437
  %v744 = vpack.c.b16 %v440, %v438
  %v745 = vpack.c.b16 %v443, %v441
  %v746 = vpack.c.b16 %v444, %v442
  %v747 = vpack.c.b16 %v447, %v445
  %v748 = vpack.c.b16 %v448, %v446
  %v749 = vpack.c.b16 %v451, %v449
  %v750 = vpack.c.b16 %v452, %v450
  %v751 = vpack.c.b16 %v455, %v453
  %v752 = vpack.c.b16 %v456, %v454
  %v753 = vpack.c.b16 %v459, %v457
  %v754 = vpack.c.b16 %v460, %v458
  %v755 = vpack.c.b16 %v463, %v461
  %v756 = vpack.c.b16 %v464, %v462
  %v757 = vpack.c.b16 %v467, %v465
  %v758 = vpack.c.b16 %v468, %v466
  %v759 = vpack.c.b16 %v471, %v469
  %v760 = vpack.c.b16 %v472, %v470
  %v761 = vpack.c.b16 %v475, %v473
  %v762 = vpack.c.b16 %v476, %v474
  %v763 = vpack.c.b16 %v479, %v477
  %v764 = vpack.c.b16 %v480, %v478
  %v765 = vpack.c.b16 %v483, %v481
  %v766 = vpack.c.b16 %v484, %v482
  %v767 = vpack.c.b16 %v487, %v485
  %v768 = vpack.c.b16 %v488, %v486
  %v769 = vpack.c.b16 %v491, %v489
  %v770 = vpack.c.b16 %v492, %v490
  %v771 = vpack.c.b16 %v495, %v493
  %v772 = vpack.c.b16 %v496, %v494
  %v773 = vpack.c.b16 %v499, %v497
  %v774 = vpack.c.b16 %v500, %v498
  %v775 = vpack.c.b16 %v503, %v501
  %v776 = vpack.c.b16 %v504, %v502
  %v777 = vpack.c.b16 %v507, %v505
  %v778 = vpack.c.b16 %v508, %v506
  %v779 = vpack.c.b16 %v511, %v509
  %v780 = vpack.c.b16 %v512, %v510
  %v781 = vpack.c.b16 %v515, %v513
  %v782 = vpack.c.b16 %v516, %v514
  %v783 = vpack.c.b16 %v519, %v517
  %v784 = vpack.c.b16 %v520, %v518
  %v785 = vpack.c.b16 %v523, %v521
  %v786 = vpack.c.b16 %v524, %v522
  %v787 = vpack.c.b16 %v527, %v525
  %v788 = vpack.c.b16 %v528, %v526
  %v789 = vpack.c.b16 %v531, %v529
  %v790 = vpack.c.b16 %v532, %v530
  %v791 = vpack.c.b16 %v535, %v533
  %v792 = vpack.c.b16 %v536, %v534
  %v793 = vpack.c.b16 %v539, %v537
  %v794 = vpack.c.b16 %v540, %v538
  %v795 = vpack.c.b16 %v543, %v541
  %v796 = vpack.c.b16 %v544, %v542
  %v797 = vpack.c.b16 %v547, %v545
  %v798 = vpack.c.b16 %v548, %v546
  %v799 = vpack.c.b16 %v551, %v549
  %v800 = vpack.c.b16 %v552, %v550
  %v801 = vpack.c.b16 %v555, %v553
  %v802 = vpack.c.b16 %v556, %v554
  %v803 = vpack.c.b16 %v559, %v557
  %v804 = vpack.c.b16 %v560, %v558
  %v805 = vpack.c.b16 %v563, %v561
  %v806 = vpack.c.b16 %v564, %v562
  %v807 = vpack.c.b16 %v567, %v565
  %v808 = vpack.c.b16 %v568, %v566
  %v809 = vpack.c.b16 %v571, %v569
  %v810 = vpack.c.b16 %v572, %v570
  %v811 = vpack.c.b16 %v575, %v573
  %v812 = vpack.c.b16 %v576, %v574
  %v813 = vpack.c.b16 %v579, %v577
  %v814 = vpack.c.b16 %v580, %v578
  %v815 = vpack.c.b16 %v583, %v581
  %v816 = vpack.c.b16 %v584, %v582
  %v817 = vpack.c.b16 %v587, %v585
  %v818 = vpack.c.b16 %v588, %v586
  %v819 = vpack.c.b16 %v591, %v589
  %v820 = vpack.c.b16 %v592, %v590
  %v821 = vpack.c.b16 %v595, %v593
  %v822 = vpack.c.b16 %v596, %v594
  %v823 = vpack.c.b16 %v599, %v597
  %v824 = vpack.c.b16 %v600, %v598
  %v825 = vpack.c.b16 %v603, %v601
  %v826 = vpack.c.b16 %v604, %v602
  %v827 = vpack.c.b16 %v607, %v605
  %v828 = vpack.c.b16 %v608, %v606
  %v829 = vpack.c.b16 %v611, %v609
  %v830 = vpack.c.b16 %v612, %v610
  %v831 = vpack.c.b16 %v615, %v613
  %v832 = vpack.c.b16 %v616, %v614
  %v833 = vpack.c.b16 %v619, %v617
  %v834 = vpack.c.b16 %v620, %v618
  %v835 = vpack.c.b16 %v623, %v621
  %v836 = vpack.c.b16 %v624, %v622
  %v837 = vpack.c.b16 %v627, %v625
  %v838 = vpack.c.b16 %v628, %v626
  %v839 = vpack.c.b16 %v631, %v629
  %v840 = vpack.c.b16 %v632, %v630
  %v841 = vpack.c.b16 %v635, %v633
  %v842 = vpack.c.b16 %v636, %v634
  %v843 = vpack.c.b16 %v639, %v637
  %v844 = vpack.c.b16 %v640, %v638
  %v845 = vpack.c.b16 %v643, %v641
  %v846 = vpack.c.b16 %v644, %v642
  %v847 = vpack.c.b16 %v647, %v645
  %v848 = vpack.c.b16 %v648, %v646
  %v849 = vpack.c.b16 %v651, %v649
  %v850 = vpack.c.b16 %v652, %v650
  %v851 = vpack.c.b16 %v655, %v653
  %v852 = vpack.c.b16 %v656, %v654
  %v853 = vpack.c.b16 %v659, %v657
  %v854 = vpack.c.b16 %v660, %v658
  %v855 = vpack.c.b16 %v663, %v661
  %v856 = vpack.c.b16 %v664, %v662
  %v857 = vpack.c.b16 %v667, %v665
  %v858 = vpack.c.b16 %v668, %v666
  %v859 = vpack.c.b16 %v671, %v669
  %v860 = vpack.c.b16 %v672, %v670
  %v861 = vpack.c.b16 %v675, %v673
  %v862 = vpack.c.b16 %v676, %v674
  %v863 = vpack.c.b16 %v679, %v677
  %v864 = vpack.c.b16 %v680, %v678
  %v865 = vpack.c.b16 %v683, %v681
  %v866 = vpack.c.b16 %v684, %v682
  %v867 = vpack.c.b16 %v687, %v685
  %v868 = vpack.c.b16 %v688, %v686
  %v869 = vpack.c.b16 %v691, %v689
  %v870 = vpack.c.b16 %v692, %v690
  %v871 = vpack.c.b16 %v695, %v693
  %v872 = vpack.c.b16 %v696, %v694
  %v873 = vpack.c.b16 %v699, %v697
  %v874 = vpack.c.b16 %v700, %v698
  %v875 = vpack.c.b16 %v703, %v701
  %v876 = vpack.c.b16 %v704, %v702
  %v877 = vpack.c.b16 %v707, %v705
  %v878 = vpack.c.b16 %v708, %v706
  %v879 = vpack.c.b16 %v711, %v709
  %v880 = vpack.c.b16 %v712, %v710
  %v881 = vpack.c.b16 %v715, %v713
  %v882 = vpack.c.b16 %v716, %v714
  %v883 = vpack.c.b16 %v719, %v717
  %v884 = vpack.c.b16 %v720, %v718
  %v885 = vpack.c.b16 %v723, %v721
  %v886 = vpack.c.b16 %v724, %v722
  %v887 = vpack.c.b16 %v727, %v725
  %v888 = vpack.c.b16 %v728, %v726
  %1049 = vmatprep.subr.bf16.mxu0 %v730
  %1050 = vmatpush1.bf16.msra.mxu0 %v729
  %1051 = vmatprep.subr.bf16.mxu0 %v732
  %1052 = vmatpush1.bf16.msra.mxu0 %v731
  %1053 = vmatprep.subr.bf16.mxu0 %v734
  %1054 = vmatpush1.bf16.msra.mxu0 %v733
  %1055 = vmatprep.subr.bf16.mxu0 %v736
  %1056 = vmatpush1.bf16.msra.mxu0 %v735
  %1057 = vmatprep.subr.bf16.mxu0 %v738
  %1058 = vmatpush1.bf16.msra.mxu0 %v737
  %1059 = vmatprep.subr.bf16.mxu0 %v740
  %1060 = vmatpush1.bf16.msra.mxu0 %v739
  %1061 = vmatprep.subr.bf16.mxu0 %v742
  %1062 = vmatpush1.bf16.msra.mxu0 %v741
  %1063 = vmatprep.subr.bf16.mxu0 %v744
  %1064 = vmatpush1.bf16.msra.mxu0 %v743
  %1065 = vmatprep.subr.bf16.mxu0 %v746
  %1066 = vmatpush1.bf16.msra.mxu0 %v745
  %1067 = vmatprep.subr.bf16.mxu0 %v748
  %1068 = vmatpush1.bf16.msra.mxu0 %v747
  %1069 = vmatprep.subr.bf16.mxu0 %v750
  %1070 = vmatpush1.bf16.msra.mxu0 %v749
  %1071 = vmatprep.subr.bf16.mxu0 %v752
  %1072 = vmatpush1.bf16.msra.mxu0 %v751
  %1073 = vmatprep.subr.bf16.mxu0 %v754
  %1074 = vmatpush1.bf16.msra.mxu0 %v753
  %1075 = vmatprep.subr.bf16.mxu0 %v756
  %1076 = vmatpush1.bf16.msra.mxu0 %v755
  %1077 = vmatprep.subr.bf16.mxu0 %v758
  %1078 = vmatpush1.bf16.msra.mxu0 %v757
  %1079 = vmatprep.subr.bf16.mxu0 %v760
  %1080 = vmatpush1.bf16.msra.mxu0 %v759
  %1081 = vmatprep.mubr.bf16.mxu0 %v230
  %1082 = vmatmul.mubr.bf16.gmra.mrb[0].mxu0 %v229
  %v1083 = vpop.f32.mrb[0].mxu0
  %v1084 = vadd.f32 %v192, %v1083
  %v1085 = vpop.f32.mrb[0].mxu0
  %v1086 = vadd.f32 %v196, %v1085
  %v1087 = vpop.f32.mrb[0].mxu0
  %v1088 = vadd.f32 %v192, %v1087
  %v1089 = vpop.f32.mrb[0].mxu0
  %v1090 = vadd.f32 %v196, %v1089
  %1091 = vdwg.mxu0
  %1092 = vmatprep.subr.bf16.mxu0 %v762
  %1093 = vmatpush1.bf16.msra.mxu0 %v761
  %1094 = vmatprep.subr.bf16.mxu0 %v764
  %1095 = vmatpush1.bf16.msra.mxu0 %v763
  %1096 = vmatprep.subr.bf16.mxu0 %v766
  %1097 = vmatpush1.bf16.msra.mxu0 %v765
  %1098 = vmatprep.subr.bf16.mxu0 %v768
  %1099 = vmatpush1.bf16.msra.mxu0 %v767
  %1100 = vmatprep.subr.bf16.mxu0 %v770
  %1101 = vmatpush1.bf16.msra.mxu0 %v769
  %1102 = vmatprep.subr.bf16.mxu0 %v772
  %1103 = vmatpush1.bf16.msra.mxu0 %v771
  %1104 = vmatprep.subr.bf16.mxu0 %v774
  %1105 = vmatpush1.bf16.msra.mxu0 %v773
  %1106 = vmatprep.subr.bf16.mxu0 %v776
  %1107 = vmatpush1.bf16.msra.mxu0 %v775
  %1108 = vmatprep.subr.bf16.mxu0 %v778
  %1109 = vmatpush1.bf16.msra.mxu0 %v777
  %1110 = vmatprep.subr.bf16.mxu0 %v780
  %1111 = vmatpush1.bf16.msra.mxu0 %v779
  %1112 = vmatprep.subr.bf16.mxu0 %v782
  %1113 = vmatpush1.bf16.msra.mxu0 %v781
  %1114 = vmatprep.subr.bf16.mxu0 %v784
  %1115 = vmatpush1.bf16.msra.mxu0 %v783
  %1116 = vmatprep.subr.bf16.mxu0 %v786
  %1117 = vmatpush1.bf16.msra.mxu0 %v785
  %1118 = vmatprep.subr.bf16.mxu0 %v788
  %1119 = vmatpush1.bf16.msra.mxu0 %v787
  %1120 = vmatprep.subr.bf16.mxu0 %v790
  %1121 = vmatpush1.bf16.msra.mxu0 %v789
  %1122 = vmatprep.subr.bf16.mxu0 %v792
  %1123 = vmatpush1.bf16.msra.mxu0 %v791
  %1124 = vmatprep.mubr.bf16.mxu0 %v232
  %1125 = vmatmul.mubr.bf16.gmra.mrb[0].mxu0 %v231
  %v1126 = vpop.f32.mrb[0].mxu0
  %v1127 = vadd.f32 %v1084, %v1126
  %v1128 = vpop.f32.mrb[0].mxu0
  %v1129 = vadd.f32 %v1086, %v1128
  %v1130 = vpop.f32.mrb[0].mxu0
  %v1131 = vadd.f32 %v1088, %v1130
  %v1132 = vpop.f32.mrb[0].mxu0
  %v1133 = vadd.f32 %v1090, %v1132
  %1134 = vdwg.mxu0
  %1135 = vmatprep.subr.bf16.mxu0 %v794
  %1136 = vmatpush1.bf16.msra.mxu0 %v793
  %1137 = vmatprep.subr.bf16.mxu0 %v796
  %1138 = vmatpush1.bf16.msra.mxu0 %v795
  %1139 = vmatprep.subr.bf16.mxu0 %v798
  %1140 = vmatpush1.bf16.msra.mxu0 %v797
  %1141 = vmatprep.subr.bf16.mxu0 %v800
  %1142 = vmatpush1.bf16.msra.mxu0 %v799
  %1143 = vmatprep.subr.bf16.mxu0 %v802
  %1144 = vmatpush1.bf16.msra.mxu0 %v801
  %1145 = vmatprep.subr.bf16.mxu0 %v804
  %1146 = vmatpush1.bf16.msra.mxu0 %v803
  %1147 = vmatprep.subr.bf16.mxu0 %v806
  %1148 = vmatpush1.bf16.msra.mxu0 %v805
  %1149 = vmatprep.subr.bf16.mxu0 %v808
  %1150 = vmatpush1.bf16.msra.mxu0 %v807
  %1151 = vmatprep.subr.bf16.mxu0 %v810
  %1152 = vmatpush1.bf16.msra.mxu0 %v809
  %1153 = vmatprep.subr.bf16.mxu0 %v812
  %1154 = vmatpush1.bf16.msra.mxu0 %v811
  %1155 = vmatprep.subr.bf16.mxu0 %v814
  %1156 = vmatpush1.bf16.msra.mxu0 %v813
  %1157 = vmatprep.subr.bf16.mxu0 %v816
  %1158 = vmatpush1.bf16.msra.mxu0 %v815
  %1159 = vmatprep.subr.bf16.mxu0 %v818
  %1160 = vmatpush1.bf16.msra.mxu0 %v817
  %1161 = vmatprep.subr.bf16.mxu0 %v820
  %1162 = vmatpush1.bf16.msra.mxu0 %v819
  %1163 = vmatprep.subr.bf16.mxu0 %v822
  %1164 = vmatpush1.bf16.msra.mxu0 %v821
  %1165 = vmatprep.subr.bf16.mxu0 %v824
  %1166 = vmatpush1.bf16.msra.mxu0 %v823
  %1167 = vmatprep.mubr.bf16.mxu0 %v234
  %1168 = vmatmul.mubr.bf16.gmra.mrb[0].mxu0 %v233
  %v1169 = vpop.f32.mrb[0].mxu0
  %v1170 = vadd.f32 %v1127, %v1169
  %v1171 = vpop.f32.mrb[0].mxu0
  %v1172 = vadd.f32 %v1129, %v1171
  %v1173 = vpop.f32.mrb[0].mxu0
  %v1174 = vadd.f32 %v1131, %v1173
  %v1175 = vpop.f32.mrb[0].mxu0
  %v1176 = vadd.f32 %v1133, %v1175
  %1177 = vdwg.mxu0
  %1178 = vmatprep.subr.bf16.mxu0 %v826
  %1179 = vmatpush1.bf16.msra.mxu0 %v825
  %1180 = vmatprep.subr.bf16.mxu0 %v828
  %1181 = vmatpush1.bf16.msra.mxu0 %v827
  %1182 = vmatprep.subr.bf16.mxu0 %v830
  %1183 = vmatpush1.bf16.msra.mxu0 %v829
  %1184 = vmatprep.subr.bf16.mxu0 %v832
  %1185 = vmatpush1.bf16.msra.mxu0 %v831
  %1186 = vmatprep.subr.bf16.mxu0 %v834
  %1187 = vmatpush1.bf16.msra.mxu0 %v833
  %1188 = vmatprep.subr.bf16.mxu0 %v836
  %1189 = vmatpush1.bf16.msra.mxu0 %v835
  %1190 = vmatprep.subr.bf16.mxu0 %v838
  %1191 = vmatpush1.bf16.msra.mxu0 %v837
  %1192 = vmatprep.subr.bf16.mxu0 %v840
  %1193 = vmatpush1.bf16.msra.mxu0 %v839
  %1194 = vmatprep.subr.bf16.mxu0 %v842
  %1195 = vmatpush1.bf16.msra.mxu0 %v841
  %1196 = vmatprep.subr.bf16.mxu0 %v844
  %1197 = vmatpush1.bf16.msra.mxu0 %v843
  %1198 = vmatprep.subr.bf16.mxu0 %v846
  %1199 = vmatpush1.bf16.msra.mxu0 %v845
  %1200 = vmatprep.subr.bf16.mxu0 %v848
  %1201 = vmatpush1.bf16.msra.mxu0 %v847
  %1202 = vmatprep.subr.bf16.mxu0 %v850
  %1203 = vmatpush1.bf16.msra.mxu0 %v849
  %1204 = vmatprep.subr.bf16.mxu0 %v852
  %1205 = vmatpush1.bf16.msra.mxu0 %v851
  %1206 = vmatprep.subr.bf16.mxu0 %v854
  %1207 = vmatpush1.bf16.msra.mxu0 %v853
  %1208 = vmatprep.subr.bf16.mxu0 %v856
  %1209 = vmatpush1.bf16.msra.mxu0 %v855
  %1210 = vmatprep.mubr.bf16.mxu0 %v236
  %1211 = vmatmul.mubr.bf16.gmra.mrb[0].mxu0 %v235
  %v1212 = vpop.f32.mrb[0].mxu0
  %v1213 = vadd.f32 %v1170, %v1212
  %v1214 = vpop.f32.mrb[0].mxu0
  %v1215 = vadd.f32 %v1172, %v1214
  %v1216 = vpop.f32.mrb[0].mxu0
  %v1217 = vadd.f32 %v1174, %v1216
  %v1218 = vpop.f32.mrb[0].mxu0
  %v1219 = vadd.f32 %v1176, %v1218
  %1220 = vdwg.mxu0
  %1221 = vmatprep.subr.bf16.mxu0 %v858
  %1222 = vmatpush1.bf16.msra.mxu0 %v857
  %1223 = vmatprep.subr.bf16.mxu0 %v860
  %1224 = vmatpush1.bf16.msra.mxu0 %v859
  %1225 = vmatprep.subr.bf16.mxu0 %v862
  %1226 = vmatpush1.bf16.msra.mxu0 %v861
  %1227 = vmatprep.subr.bf16.mxu0 %v864
  %1228 = vmatpush1.bf16.msra.mxu0 %v863
  %1229 = vmatprep.subr.bf16.mxu0 %v866
  %1230 = vmatpush1.bf16.msra.mxu0 %v865
  %1231 = vmatprep.subr.bf16.mxu0 %v868
  %1232 = vmatpush1.bf16.msra.mxu0 %v867
  %1233 = vmatprep.subr.bf16.mxu0 %v870
  %1234 = vmatpush1.bf16.msra.mxu0 %v869
  %1235 = vmatprep.subr.bf16.mxu0 %v872
  %1236 = vmatpush1.bf16.msra.mxu0 %v871
  %1237 = vmatprep.subr.bf16.mxu0 %v874
  %1238 = vmatpush1.bf16.msra.mxu0 %v873
  %1239 = vmatprep.subr.bf16.mxu0 %v876
  %1240 = vmatpush1.bf16.msra.mxu0 %v875
  %1241 = vmatprep.subr.bf16.mxu0 %v878
  %1242 = vmatpush1.bf16.msra.mxu0 %v877
  %1243 = vmatprep.subr.bf16.mxu0 %v880
  %1244 = vmatpush1.bf16.msra.mxu0 %v879
  %1245 = vmatprep.subr.bf16.mxu0 %v882
  %1246 = vmatpush1.bf16.msra.mxu0 %v881
  %1247 = vmatprep.subr.bf16.mxu0 %v884
  %1248 = vmatpush1.bf16.msra.mxu0 %v883
  %1249 = vmatprep.subr.bf16.mxu0 %v886
  %1250 = vmatpush1.bf16.msra.mxu0 %v885
  %1251 = vmatprep.subr.bf16.mxu0 %v888
  %1252 = vmatpush1.bf16.msra.mxu0 %v887
  %1253 = vmatprep.mubr.bf16.mxu0 %v238
  %1254 = vmatmul.mubr.bf16.gmra.mrb[0].mxu0 %v237
  %v1255 = vpop.f32.mrb[0].mxu0
  %v1256 = vadd.f32 %v1213, %v1255
  %v1257 = vpop.f32.mrb[0].mxu0
  %v1258 = vadd.f32 %v1215, %v1257
  %v1259 = vpop.f32.mrb[0].mxu0
  %v1260 = vadd.f32 %v1217, %v1259
  %v1261 = vpop.f32.mrb[0].mxu0
  %v1262 = vadd.f32 %v1219, %v1261
  %1263 = vdwg.mxu0
  %v1264 = vlaneseq
  %v1265 = vand.u32 %v1264, 127
  %vm1266 = vcmp.lt.s32.totalorder %v1265, 64
  %v1267 = vxor.u32 %v1256, 2147483648
  %v1268 = vxor.u32 %v1260, 2147483648
  %v1269 = vmul.f32 %v1267, 1.442695
  %v1270 = vpow.pop %v1269
  %v1271 = vmul.f32 %v1268, 1.442695
  %v1272 = vpow.pop %v1271
  %v1273 = vadd.f32 %v1270, 1.0
  %v1274 = vadd.f32 %v1272, 1.0
  %v1275 = vrcp.pop %v1273
  %v1276 = vmul.f32 1.0, %v1275
  %v1277 = vrcp.pop %v1274
  %v1278 = vmul.f32 1.0, %v1277
  %v1279 = vtanh.pop %v1256
  %v1280 = vtanh.pop %v1260
  %v1281 = vsel %vm1266, %v1276, %v1279
  %v1282 = vsel %vm1266, %v1278, %v1280
  %v1283 = vxor.u32 %v1258, 2147483648
  %v1284 = vxor.u32 %v1262, 2147483648
  %v1285 = vmul.f32 %v1283, 1.442695
  %v1286 = vpow.pop %v1285
  %v1287 = vmul.f32 %v1284, 1.442695
  %v1288 = vpow.pop %v1287
  %v1289 = vadd.f32 %v1286, 1.0
  %v1290 = vadd.f32 %v1288, 1.0
  %v1291 = vrcp.pop %v1289
  %v1292 = vmul.f32 1.0, %v1291
  %v1293 = vrcp.pop %v1290
  %v1294 = vmul.f32 1.0, %v1293
  %v1295 = vld [vmem:[%s3] sm:$0xff]
  %v1296 = vld [vmem:[%s3 + $0x8] sm:$0xff]
  %1297 = vrot.lane.b32.xlu0 %v1295, 64
  %v1298 = vpop.permute.xlu0 %1297
  %1299 = vrot.lane.b32.xlu0 %v1296, 64
  %v1300 = vpop.permute.xlu0 %1299
  %v1301 = vmul.f32 %v1292, %v1298
  %v1302 = vmul.f32 %v1294, %v1300
  %1303 = vrot.lane.b32.xlu0 %v1281, 64
  %v1304 = vpop.permute.xlu0 %1303
  %1305 = vrot.lane.b32.xlu0 %v1282, 64
  %v1306 = vpop.permute.xlu0 %1305
  %v1307 = vmul.f32 %v1281, %v1304
  %v1308 = vmul.f32 %v1282, %v1306
  %v1309 = vadd.f32 %v1301, %v1307
  %v1310 = vadd.f32 %v1302, %v1308
  %1311 = vrot.lane.b32.xlu0 %v1292, 64
  %v1312 = vpop.permute.xlu0 %1311
  %1313 = vrot.lane.b32.xlu0 %v1294, 64
  %v1314 = vpop.permute.xlu0 %1313
  %v1315 = vtanh.pop %v1309
  %v1316 = vtanh.pop %v1310
  %v1317 = vmul.f32 %v1312, %v1315
  %v1318 = vmul.f32 %v1314, %v1316
  %1319 = vrot.lane.b32.xlu0 %v1309, 64
  %v1320 = vpop.permute.xlu0 %1319
  %1321 = vrot.lane.b32.xlu0 %v1310, 64
  %v1322 = vpop.permute.xlu0 %1321
  %v1323 = vsel %vm1266, %v1317, %v1320
  %v1324 = vsel %vm1266, %v1318, %v1322
  %1325 = vst [vmem:[%s4] sm:$0xff] %v1323
  %1326 = vst [vmem:[%s4 + $0x8] sm:$0xff] %v1324
  // Predicated region
  $region18: #{jump_forward_device.65} parent=0 // pred_check
    _
  $region19: #{jump_forward_device.65} parent=0 // pred_check_branch
    %1328 = sbr.rel (0) target = $region21
  $region20: #{jump_forward_device.65} parent=0 // pred_region
    _
  $region21: #{jump_forward_device.65} parent=0 // pred_fallthru
    _
  // Predicated region
  $region22: #{jump_forward_device.65} parent=0 // pred_check
    _
  $region23: #{jump_forward_device.65} parent=0 // pred_check_branch
    %1330 = sbr.rel (0) target = $region25
  $region24: #{jump_forward_device.65} parent=0 // pred_region
    _
  $region25: #{jump_forward_device.65} parent=0 // pred_fallthru
    _

// kernel: jump_forward_device.76
$region0: #{jump_forward_device.76}
  #allocation0 [shape = 'u32[]', space=smem, size = 0x4, offset = 0x4, fixed_abs, tag = 'smem constant byte address 0x4 - core index']
  #allocation1 [shape = 'u32[144,128]{1,0:T(1,128)}', space=vmem, size = 0x12000, scoped, tag = 'internal scratch']
  %s0 = inlined_call_operand.vmem [shape: bf16[64,128], index: 0, kind: input, shape index: {}]
  %s1 = inlined_call_operand.vmem [shape: bf16[128,128], index: 1, kind: input, shape index: {}]
  %s2 = inlined_call_operand.vmem [shape: f32[1,128], index: 2, kind: input, shape index: {}]
  %s3 = inlined_call_operand.vmem [shape: f32[64,128], index: 3, kind: output, shape index: {}]
  %s4 = sld [smem:[#allocation0]]
  $region22: #{jump_forward_device.76} parent=0
    _
  %s6 = ssub.s32 1, %s4
  %s7 = scalar_select 0, %s6, %s4
  // Predicated region
  $region2: #{jump_forward_device.76} parent=0 // pred_check
    _
  $region3: #{jump_forward_device.76} parent=0 // pred_check_branch
    %9 = sbr.rel (0) target = $region5
  $region4: #{jump_forward_device.76} parent=0 // pred_region
    _
  $region5: #{jump_forward_device.76} parent=0 // pred_fallthru
    _
  // Predicated region
  $region6: #{jump_forward_device.76} parent=0 // pred_check
    _
  $region7: #{jump_forward_device.76} parent=0 // pred_check_branch
    %11 = sbr.rel (0) target = $region9
  $region8: #{jump_forward_device.76} parent=0 // pred_region
    _
  $region9: #{jump_forward_device.76} parent=0 // pred_fallthru
    _
  // Predicated region
  $region10: #{jump_forward_device.76} parent=0 // pred_check
    _
  $region11: #{jump_forward_device.76} parent=0 // pred_check_branch
    %13 = sbr.rel (0) target = $region13
  $region12: #{jump_forward_device.76} parent=0 // pred_region
    _
  $region13: #{jump_forward_device.76} parent=0 // pred_fallthru
    _
  %v15 = vld [vmem:[%s0] sm:$0xf]
  %v16 = vld [vmem:[%s0 + $0x4] sm:$0xf]
  %v17 = vld [vmem:[%s0 + $0x8] sm:$0xf]
  %v18 = vld [vmem:[%s0 + $0xc] sm:$0xf]
  %v19 = vld [vmem:[%s0 + $0x10] sm:$0xf]
  %v20 = vld [vmem:[%s0 + $0x14] sm:$0xf]
  %v21 = vld [vmem:[%s0 + $0x18] sm:$0xf]
  %v22 = vld [vmem:[%s0 + $0x1c] sm:$0xf]
  %v23 = vld [vmem:[%s1] sm:$0xf]
  %v24 = vld [vmem:[%s1 + $0x4] sm:$0xf]
  %v25 = vld [vmem:[%s1 + $0x8] sm:$0xf]
  %v26 = vld [vmem:[%s1 + $0xc] sm:$0xf]
  %v27 = vld [vmem:[%s1 + $0x10] sm:$0xf]
  %v28 = vld [vmem:[%s1 + $0x14] sm:$0xf]
  %v29 = vld [vmem:[%s1 + $0x18] sm:$0xf]
  %v30 = vld [vmem:[%s1 + $0x1c] sm:$0xf]
  %v31 = vld [vmem:[%s1 + $0x20] sm:$0xf]
  %v32 = vld [vmem:[%s1 + $0x24] sm:$0xf]
  %v33 = vld [vmem:[%s1 + $0x28] sm:$0xf]
  %v34 = vld [vmem:[%s1 + $0x2c] sm:$0xf]
  %v35 = vld [vmem:[%s1 + $0x30] sm:$0xf]
  %v36 = vld [vmem:[%s1 + $0x34] sm:$0xf]
  %v37 = vld [vmem:[%s1 + $0x38] sm:$0xf]
  %v38 = vld [vmem:[%s1 + $0x3c] sm:$0xf]
  %v39 = vld [vmem:[%s2] sm:$0x1]
  %v41 = vlaneseq
  %v42 = vshrl.u32 %v41, 7
  %v43 = vsub.s32 0, %v42
  %v44 = vrot.slane %v39, %v43
  %v54 = vunpack.c.l.b16 %v15
  %v55 = vunpack.c.l.b16 %v16
  %v56 = vunpack.c.l.b16 %v17
  %v57 = vunpack.c.l.b16 %v18
  %v58 = vunpack.c.l.b16 %v19
  %v59 = vunpack.c.l.b16 %v20
  %v60 = vunpack.c.l.b16 %v21
  %v61 = vunpack.c.l.b16 %v22
  %v62 = vpack.c.b16 %v55, %v54
  %v63 = vpack.c.b16 %v57, %v56
  %v64 = vpack.c.b16 %v59, %v58
  %v65 = vpack.c.b16 %v61, %v60
  %v86 = vunpack.c.l.b16 %v23
  %v87 = vunpack.c.l.b16 %v24
  %v88 = vunpack.c.l.b16 %v25
  %v89 = vunpack.c.l.b16 %v26
  %v90 = vunpack.c.l.b16 %v27
  %v91 = vunpack.c.l.b16 %v28
  %v92 = vunpack.c.l.b16 %v29
  %v93 = vunpack.c.l.b16 %v30
  %v94 = vunpack.c.l.b16 %v31
  %v95 = vunpack.c.l.b16 %v32
  %v96 = vunpack.c.l.b16 %v33
  %v97 = vunpack.c.l.b16 %v34
  %v98 = vunpack.c.l.b16 %v35
  %v99 = vunpack.c.l.b16 %v36
  %v100 = vunpack.c.l.b16 %v37
  %v101 = vunpack.c.l.b16 %v38
  %v102 = vpack.c.b16 %v87, %v86
  %v103 = vpack.c.b16 %v89, %v88
  %v104 = vpack.c.b16 %v91, %v90
  %v105 = vpack.c.b16 %v93, %v92
  %v106 = vpack.c.b16 %v95, %v94
  %v107 = vpack.c.b16 %v97, %v96
  %v108 = vpack.c.b16 %v99, %v98
  %v109 = vpack.c.b16 %v101, %v100
  %118 = vmatprep.subr.bf16.mxu0 0
  %119 = vmatpush1.bf16.msra.mxu0 %v102
  %120 = vmatprep.subr.bf16.mxu0 0
  %121 = vmatpush1.bf16.msra.mxu0 %v103
  %122 = vmatprep.subr.bf16.mxu0 0
  %123 = vmatpush1.bf16.msra.mxu0 %v104
  %124 = vmatprep.subr.bf16.mxu0 0
  %125 = vmatpush1.bf16.msra.mxu0 %v105
  %126 = vmatprep.subr.bf16.mxu0 0
  %127 = vmatpush1.bf16.msra.mxu0 %v106
  %128 = vmatprep.subr.bf16.mxu0 0
  %129 = vmatpush1.bf16.msra.mxu0 %v107
  %130 = vmatprep.subr.bf16.mxu0 0
  %131 = vmatpush1.bf16.msra.mxu0 %v108
  %132 = vmatprep.subr.bf16.mxu0 0
  %133 = vmatpush1.bf16.msra.mxu0 %v109
  %134 = vmatprep.subr.bf16.mxu0 0
  %135 = vmatpush1.bf16.msra.mxu0 0
  %136 = vmatprep.subr.bf16.mxu0 0
  %137 = vmatpush1.bf16.msra.mxu0 0
  %138 = vmatprep.subr.bf16.mxu0 0
  %139 = vmatpush1.bf16.msra.mxu0 0
  %140 = vmatprep.subr.bf16.mxu0 0
  %141 = vmatpush1.bf16.msra.mxu0 0
  %142 = vmatprep.subr.bf16.mxu0 0
  %143 = vmatpush1.bf16.msra.mxu0 0
  %144 = vmatprep.subr.bf16.mxu0 0
  %145 = vmatpush1.bf16.msra.mxu0 0
  %146 = vmatprep.subr.bf16.mxu0 0
  %147 = vmatpush1.bf16.msra.mxu0 0
  %148 = vmatprep.subr.bf16.mxu0 0
  %149 = vmatpush1.bf16.msra.mxu0 0
  %150 = vmatprep.mubr.bf16.mxu0 0
  %151 = vmatmul.mubr.bf16.gmra.mrb[0].mxu0 %v62
  %v152 = vpop.f32.mrb[0].mxu0
  %v153 = vadd.f32 %v44, %v152
  %v154 = vpop.f32.mrb[0].mxu0
  %v155 = vpop.f32.mrb[0].mxu0
  %v156 = vadd.f32 %v44, %v155
  %v157 = vpop.f32.mrb[0].mxu0
  %158 = vmatprep.mubr.bf16.mxu0 0
  %159 = vmatmul.mubr.bf16.gmra.mrb[0].mxu0 %v63
  %v160 = vpop.f32.mrb[0].mxu0
  %v161 = vadd.f32 %v44, %v160
  %v162 = vpop.f32.mrb[0].mxu0
  %v163 = vpop.f32.mrb[0].mxu0
  %v164 = vadd.f32 %v44, %v163
  %v165 = vpop.f32.mrb[0].mxu0
  %166 = vmatprep.mubr.bf16.mxu0 0
  %167 = vmatmul.mubr.bf16.gmra.mrb[0].mxu0 %v64
  %v168 = vpop.f32.mrb[0].mxu0
  %v169 = vadd.f32 %v44, %v168
  %v170 = vpop.f32.mrb[0].mxu0
  %v171 = vpop.f32.mrb[0].mxu0
  %v172 = vadd.f32 %v44, %v171
  %v173 = vpop.f32.mrb[0].mxu0
  %174 = vmatprep.mubr.bf16.mxu0 0
  %175 = vmatmul.mubr.bf16.gmra.mrb[0].mxu0 %v65
  %v176 = vpop.f32.mrb[0].mxu0
  %v177 = vadd.f32 %v44, %v176
  %v178 = vpop.f32.mrb[0].mxu0
  %v179 = vpop.f32.mrb[0].mxu0
  %v180 = vadd.f32 %v44, %v179
  %v181 = vpop.f32.mrb[0].mxu0
  %182 = vdwg.mxu0
  %183 = vst [vmem:[%s3] sm:$0xff] %v153
  %184 = vst [vmem:[%s3 + $0x8] sm:$0xff] %v156
  %185 = vst [vmem:[%s3 + $0x10] sm:$0xff] %v161
  %186 = vst [vmem:[%s3 + $0x18] sm:$0xff] %v164
  %187 = vst [vmem:[%s3 + $0x20] sm:$0xff] %v169
  %188 = vst [vmem:[%s3 + $0x28] sm:$0xff] %v172
  %189 = vst [vmem:[%s3 + $0x30] sm:$0xff] %v177
  %190 = vst [vmem:[%s3 + $0x38] sm:$0xff] %v180
  // Predicated region
  $region14: #{jump_forward_device.76} parent=0 // pred_check
    _
  $region15: #{jump_forward_device.76} parent=0 // pred_check_branch
    %192 = sbr.rel (0) target = $region17
  $region16: #{jump_forward_device.76} parent=0 // pred_region
    _
  $region17: #{jump_forward_device.76} parent=0 // pred_fallthru
    _
  // Predicated region
  $region18: #{jump_forward_device.76} parent=0 // pred_check
    _
  $region19: #{jump_forward_device.76} parent=0 // pred_check_branch
    %194 = sbr.rel (0) target = $region21
  $region20: #{jump_forward_device.76} parent=0 // pred_region
    _
  $region21: #{jump_forward_device.76} parent=0 // pred_fallthru
    _

// kernel: jump_forward_device.77
$region0: #{jump_forward_device.77}
  #allocation0 [shape = 'u32[]', space=smem, size = 0x4, offset = 0x4, fixed_abs, tag = 'smem constant byte address 0x4 - core index']
  #allocation1 [shape = 'u32[144,128]{1,0:T(1,128)}', space=vmem, size = 0x12000, scoped, tag = 'internal scratch']
  %s0 = inlined_call_operand.vmem [shape: f32[8,1536], index: 0, kind: input, shape index: {}]
  %s1 = inlined_call_operand.vmem [shape: f32[8,1536], index: 1, kind: input, shape index: {}]
  %s2 = inlined_call_operand.vmem [shape: f32[8,128], index: 2, kind: output, shape index: {}]
  %s3 = sld [smem:[#allocation0]]
  $region22: #{jump_forward_device.77} parent=0
    _
  %s5 = ssub.s32 1, %s3
  %s6 = scalar_select 0, %s5, %s3
  // Predicated region
  $region2: #{jump_forward_device.77} parent=0 // pred_check
    _
  $region3: #{jump_forward_device.77} parent=0 // pred_check_branch
    %8 = sbr.rel (0) target = $region5
  $region4: #{jump_forward_device.77} parent=0 // pred_region
    _
  $region5: #{jump_forward_device.77} parent=0 // pred_fallthru
    _
  // Predicated region
  $region6: #{jump_forward_device.77} parent=0 // pred_check
    _
  $region7: #{jump_forward_device.77} parent=0 // pred_check_branch
    %10 = sbr.rel (0) target = $region9
  $region8: #{jump_forward_device.77} parent=0 // pred_region
    _
  $region9: #{jump_forward_device.77} parent=0 // pred_fallthru
    _
  %p11 = scmp.eq.s32.totalorder 0, 0
  // Predicated region
  $region10: #{jump_forward_device.77} parent=0 // pred_check
    %p12 = pneg %p11
  $region11: #{jump_forward_device.77} parent=0 // pred_check_branch
    %14 = sbr.rel (%p12) target = $region13
  $region12: #{jump_forward_device.77} parent=0 // pred_region
    %15 = vst [vmem:[%s2] sm:$0xff] 0.0
  $region13: #{jump_forward_device.77} parent=0 // pred_fallthru
    _
  %v16 = vld [vmem:[%s0] sm:$0xff]
  %v17 = vld [vmem:[%s0 + $0x8] sm:$0xff]
  %v18 = vld [vmem:[%s0 + $0x10] sm:$0xff]
  %v19 = vld [vmem:[%s0 + $0x18] sm:$0xff]
  %v20 = vld [vmem:[%s0 + $0x20] sm:$0xff]
  %v21 = vld [vmem:[%s0 + $0x28] sm:$0xff]
  %v22 = vld [vmem:[%s0 + $0x30] sm:$0xff]
  %v23 = vld [vmem:[%s0 + $0x38] sm:$0xff]
  %v24 = vld [vmem:[%s0 + $0x40] sm:$0xff]
  %v25 = vld [vmem:[%s0 + $0x48] sm:$0xff]
  %v26 = vld [vmem:[%s0 + $0x50] sm:$0xff]
  %v27 = vld [vmem:[%s0 + $0x58] sm:$0xff]
  %v28 = vld [vmem:[%s1] sm:$0xff]
  %v29 = vld [vmem:[%s1 + $0x8] sm:$0xff]
  %v30 = vld [vmem:[%s1 + $0x10] sm:$0xff]
  %v31 = vld [vmem:[%s1 + $0x18] sm:$0xff]
  %v32 = vld [vmem:[%s1 + $0x20] sm:$0xff]
  %v33 = vld [vmem:[%s1 + $0x28] sm:$0xff]
  %v34 = vld [vmem:[%s1 + $0x30] sm:$0xff]
  %v35 = vld [vmem:[%s1 + $0x38] sm:$0xff]
  %v36 = vld [vmem:[%s1 + $0x40] sm:$0xff]
  %v37 = vld [vmem:[%s1 + $0x48] sm:$0xff]
  %v38 = vld [vmem:[%s1 + $0x50] sm:$0xff]
  %v39 = vld [vmem:[%s1 + $0x58] sm:$0xff]
  %v40 = vsub.f32 %v16, %v28
  %v41 = vsub.f32 %v17, %v29
  %v42 = vsub.f32 %v18, %v30
  %v43 = vsub.f32 %v19, %v31
  %v44 = vsub.f32 %v20, %v32
  %v45 = vsub.f32 %v21, %v33
  %v46 = vsub.f32 %v22, %v34
  %v47 = vsub.f32 %v23, %v35
  %v48 = vsub.f32 %v24, %v36
  %v49 = vsub.f32 %v25, %v37
  %v50 = vsub.f32 %v26, %v38
  %v51 = vsub.f32 %v27, %v39
  %v52 = vmul.f32 %v40, %v40
  %v53 = vmul.f32 %v41, %v41
  %v54 = vmul.f32 %v42, %v42
  %v55 = vmul.f32 %v43, %v43
  %v56 = vmul.f32 %v44, %v44
  %v57 = vmul.f32 %v45, %v45
  %v58 = vmul.f32 %v46, %v46
  %v59 = vmul.f32 %v47, %v47
  %v60 = vmul.f32 %v48, %v48
  %v61 = vmul.f32 %v49, %v49
  %v62 = vmul.f32 %v50, %v50
  %v63 = vmul.f32 %v51, %v51
  %v64 = vadd.f32 %v52, %v53
  %v65 = vadd.f32 %v64, %v54
  %v66 = vadd.f32 %v65, %v55
  %v67 = vadd.f32 %v66, %v56
  %v68 = vadd.f32 %v67, %v57
  %v69 = vadd.f32 %v68, %v58
  %v70 = vadd.f32 %v69, %v59
  %v71 = vadd.f32 %v70, %v60
  %v72 = vadd.f32 %v71, %v61
  %v73 = vadd.f32 %v72, %v62
  %v74 = vadd.f32 %v73, %v63
  %75 = vadd.xlane.f32.xlu0 %v74
  %v76 = vpop.xlane.xlu0 %75
  %v77 = vld [vmem:[%s2] sm:$0xff]
  %v78 = vadd.f32 %v77, %v76
  %79 = vst [vmem:[%s2] sm:$0xff] %v78
  // Predicated region
  $region14: #{jump_forward_device.77} parent=0 // pred_check
    _
  $region15: #{jump_forward_device.77} parent=0 // pred_check_branch
    %81 = sbr.rel (0) target = $region17
  $region16: #{jump_forward_device.77} parent=0 // pred_region
    _
  $region17: #{jump_forward_device.77} parent=0 // pred_fallthru
    _
  // Predicated region
  $region18: #{jump_forward_device.77} parent=0 // pred_check
    _
  $region19: #{jump_forward_device.77} parent=0 // pred_check_branch
    %83 = sbr.rel (0) target = $region21
  $region20: #{jump_forward_device.77} parent=0 // pred_region
    _
  $region21: #{jump_forward_device.77} parent=0 // pred_fallthru
    _

</llo_original>
